<compile_context>
chip_gen: v6e
topology: v6e:2x2x1
jax: 0.10.0
libtpu: 0.0.40
codegen_flags: <defaults>
</compile_context>

<pallas_src>
import functools
import math

import jax
import jax.numpy as jnp
from jax.experimental import pallas as pl
from jax.experimental.pallas import tpu as pltpu


# --------------------------------------------------------------------------
# BlockSpec helpers
# --------------------------------------------------------------------------
def _full_spec(arr):
    """Whole-array block, constant across the grid (weights / biases)."""
    shp = tuple(arr.shape)
    nd = len(shp)
    return pl.BlockSpec(shp, lambda *_: (0,) * nd)


def _tok_spec(Qn, C):
    """[B, Q, C] tokens, one batch element per grid step."""
    return pl.BlockSpec((1, Qn, C), lambda i: (i, 0, 0))


_PARALLEL = pltpu.CompilerParams(dimension_semantics=("parallel",))


# --------------------------------------------------------------------------
# Kernel 1: fused self-attention block
#   qk = (tgt+pos) @ Wqk ; v = tgt @ Wv ; per-head softmax attention ;
#   out-proj (accumulated per head -> no in-kernel concat) ; residual ; LN
# --------------------------------------------------------------------------
def _self_attn_block_kernel(tgt_ref, pos_ref, wqk_ref, bqk_ref, wv_ref, bv_ref,
                            wo_ref, bo_ref, g_ref, beta_ref, o_ref,
                            *, num_heads, eps):
    t = tgt_ref[0]                                          # [Q, C] f32
    Qn, C = t.shape
    D = C // num_heads
    scale = 1.0 / math.sqrt(D)

    x = (t + pos_ref[0]).astype(jnp.bfloat16)               # q/k input (with pos)
    qk = jnp.dot(x, wqk_ref[...].astype(jnp.bfloat16),
                 preferred_element_type=jnp.float32) + bqk_ref[...]      # [Q, 2C]
    v = jnp.dot(t.astype(jnp.bfloat16), wv_ref[...].astype(jnp.bfloat16),
                preferred_element_type=jnp.float32) + bv_ref[...]        # [Q, C]

    proj = jnp.zeros((Qn, C), jnp.float32)
    for h in range(num_heads):                              # static unroll over heads
        qh = qk[:, h * D:(h + 1) * D]                       # [Q, D]
        kh = qk[:, C + h * D:C + (h + 1) * D]               # [Q, D]
        vh = v[:, h * D:(h + 1) * D]                        # [Q, D]
        s = jax.lax.dot_general(qh, kh, (((1,), (1,)), ((), ())),
                                preferred_element_type=jnp.float32) * scale
        s = s - jnp.max(s, axis=-1, keepdims=True)
        p = jnp.exp(s)
        p = p * pl.reciprocal(jnp.sum(p, axis=-1, keepdims=True), approx=True)
        oh = jnp.dot(p, vh, preferred_element_type=jnp.float32)          # [Q, D]
        # out-proj accumulated per head: attn @ Wo == sum_h oh @ Wo[hD:(h+1)D]
        proj = proj + jnp.dot(oh.astype(jnp.bfloat16),
                              wo_ref[h * D:(h + 1) * D, :].astype(jnp.bfloat16),
                              preferred_element_type=jnp.float32)

    y = t + proj + bo_ref[...]
    mu = jnp.mean(y, axis=-1, keepdims=True)
    var = jnp.mean(jnp.square(y - mu), axis=-1, keepdims=True)
    yn = (y - mu) * jax.lax.rsqrt(var + eps)
    o_ref[0] = (yn * g_ref[...] + beta_ref[...]).astype(o_ref.dtype)


def self_attn_block(tgt, qpos, p, n_heads, eps=1e-5):
    B, Qn, C = tgt.shape
    tok = _tok_spec(Qn, C)
    args = (tgt, qpos, p["sa_wqk"], p["sa_bqk"], p["sa_wv"], p["sa_bv"],
            p["sa_wo"], p["sa_bo"], p["norm2_g"], p["norm2_b"])
    return pl.pallas_call(
        functools.partial(_self_attn_block_kernel, num_heads=n_heads, eps=eps),
        out_shape=jax.ShapeDtypeStruct((B, Qn, C), jnp.float32),
        grid=(B,),
        in_specs=[tok, tok] + [_full_spec(a) for a in args[2:]],
        out_specs=tok,
        compiler_params=_PARALLEL,
    )(*args)


# --------------------------------------------------------------------------
# Kernel 2: fused sampling-offset + attention-weight projection + softmax
# --------------------------------------------------------------------------
def _samp_proj_kernel(tgt_ref, pos_ref, w_ref, b_ref, off_ref, aw_ref,
                      *, num_heads, lp, n_off):
    x = (tgt_ref[0] + pos_ref[0]).astype(jnp.bfloat16)              # [Q, C]
    y = jnp.dot(x, w_ref[...].astype(jnp.bfloat16),
                preferred_element_type=jnp.float32) + b_ref[...]    # [Q, n_off + M*lp]
    off_ref[0] = y[:, :n_off].astype(off_ref.dtype)
    cols = []
    for m in range(num_heads):                                      # softmax over L*P per head
        lg = y[:, n_off + m * lp:n_off + (m + 1) * lp]              # [Q, lp]
        lg = lg - jnp.max(lg, axis=-1, keepdims=True)
        e = jnp.exp(lg)
        cols.append(e * pl.reciprocal(jnp.sum(e, axis=-1, keepdims=True),
                                      approx=True))
    aw_ref[0] = jnp.concatenate(cols, axis=-1).astype(aw_ref.dtype)


def sampling_proj_block(tgt, qpos, p, n_heads, n_levels, n_points):
    B, Qn, C = tgt.shape
    n_off = n_heads * n_levels * n_points * 2
    n_aw = n_heads * n_levels * n_points
    tok = _tok_spec(Qn, C)
    return pl.pallas_call(
        functools.partial(_samp_proj_kernel, num_heads=n_heads,
                          lp=n_levels * n_points, n_off=n_off),
        out_shape=(jax.ShapeDtypeStruct((B, Qn, n_off), jnp.float32),
                   jax.ShapeDtypeStruct((B, Qn, n_aw), jnp.float32)),
        grid=(B,),
        in_specs=[tok, tok, _full_spec(p["ca_wsamp"]), _full_spec(p["ca_bsamp"])],
        out_specs=[pl.BlockSpec((1, Qn, n_off), lambda i: (i, 0, 0)),
                   pl.BlockSpec((1, Qn, n_aw), lambda i: (i, 0, 0))],
        compiler_params=_PARALLEL,
    )(tgt, qpos, p["ca_wsamp"], p["ca_bsamp"])


# --------------------------------------------------------------------------
# Kernel 3: value projection of src
# --------------------------------------------------------------------------
def _value_proj_kernel(src_ref, w_ref, b_ref, o_ref):
    x = src_ref[0].astype(jnp.bfloat16)
    y = jnp.dot(x, w_ref[...].astype(jnp.bfloat16),
                preferred_element_type=jnp.float32) + b_ref[...]
    o_ref[0] = y.astype(o_ref.dtype)


def value_proj_block(src, p):
    B, S, C = src.shape
    spec = pl.BlockSpec((1, S, C), lambda i: (i, 0, 0))
    # TODO(synk): tile the S (row) axis with an extra grid dimension for
    # production-scale S (~13k) so blocks stay within scoped VMEM.
    return pl.pallas_call(
        _value_proj_kernel,
        out_shape=jax.ShapeDtypeStruct((B, S, C), jnp.float32),
        grid=(B,),
        in_specs=[spec, _full_spec(p["ca_wv"]), _full_spec(p["ca_bv"])],
        out_specs=spec,
        compiler_params=_PARALLEL,
    )(src, p["ca_wv"], p["ca_bv"])


# --------------------------------------------------------------------------
# Kernel 4: deformable aggregate (sum over corners) + out-proj + residual + LN
#   g, w : [B, Q, C, K] with C = M*D (head-major channel order), K = 4*L*P
# --------------------------------------------------------------------------
def _deform_agg_kernel(g_ref, w_ref, tgt_ref, wo_ref, bo_ref, gma_ref, bta_ref,
                       o_ref, *, eps):
    s = jnp.sum(g_ref[0] * w_ref[0], axis=-1)                       # [Q, C]
    proj = jnp.dot(s.astype(jnp.bfloat16), wo_ref[...].astype(jnp.bfloat16),
                   preferred_element_type=jnp.float32) + bo_ref[...]
    y = tgt_ref[0] + proj
    mu = jnp.mean(y, axis=-1, keepdims=True)
    var = jnp.mean(jnp.square(y - mu), axis=-1, keepdims=True)
    yn = (y - mu) * jax.lax.rsqrt(var + eps)
    o_ref[0] = (yn * gma_ref[...] + bta_ref[...]).astype(o_ref.dtype)


def deform_agg_block(g, wt, tgt, p, eps=1e-5):
    B, Qn, C, K = g.shape
    gk = pl.BlockSpec((1, Qn, C, K), lambda i: (i, 0, 0, 0))
    tok = _tok_spec(Qn, C)
    args = (g, wt, tgt, p["ca_wo"], p["ca_bo"], p["norm1_g"], p["norm1_b"])
    return pl.pallas_call(
        functools.partial(_deform_agg_kernel, eps=eps),
        out_shape=jax.ShapeDtypeStruct((B, Qn, C), jnp.float32),
        grid=(B,),
        in_specs=[gk, gk, tok] + [_full_spec(a) for a in args[3:]],
        out_specs=tok,
        compiler_params=_PARALLEL,
    )(*args)


# --------------------------------------------------------------------------
# Kernel 5: FFN + residual + LN
# --------------------------------------------------------------------------
def _ffn_kernel(x_ref, w1_ref, b1_ref, w2_ref, b2_ref, g_ref, b_ref, o_ref, *, eps):
    x = x_ref[0]                                                    # [Q, C]
    h = jnp.dot(x.astype(jnp.bfloat16), w1_ref[...].astype(jnp.bfloat16),
                preferred_element_type=jnp.float32) + b1_ref[...]
    h = jnp.maximum(h, 0.0)
    y = jnp.dot(h.astype(jnp.bfloat16), w2_ref[...].astype(jnp.bfloat16),
                preferred_element_type=jnp.float32) + b2_ref[...]
    y = x + y
    mu = jnp.mean(y, axis=-1, keepdims=True)
    var = jnp.mean(jnp.square(y - mu), axis=-1, keepdims=True)
    yn = (y - mu) * jax.lax.rsqrt(var + eps)
    o_ref[0] = (yn * g_ref[...] + b_ref[...]).astype(o_ref.dtype)


def ffn_block(x, p, eps=1e-5):
    B, Qn, C = x.shape
    tok = _tok_spec(Qn, C)
    args = (x, p["ffn_w1"], p["ffn_b1"], p["ffn_w2"], p["ffn_b2"],
            p["norm3_g"], p["norm3_b"])
    return pl.pallas_call(
        functools.partial(_ffn_kernel, eps=eps),
        out_shape=jax.ShapeDtypeStruct((B, Qn, C), jnp.float32),
        grid=(B,),
        in_specs=[tok] + [_full_spec(a) for a in args[1:]],
        out_specs=tok,
        compiler_params=_PARALLEL,
    )(*args)


# --------------------------------------------------------------------------
# Plain-JAX glue: bilinear corner tables + value gather
# (replaces the former dense one-hot sampling matrix + O(S) bmm)
# --------------------------------------------------------------------------
def build_corner_tables(sampling_locations, attention_weights,
                        spatial_shapes_static, level_start_static):
    """Returns idx, w of shape [B, Q, M, K] (K = 4*L*P).  w combines the
    bilinear corner weight, the validity mask (zeros padding), and the
    attention weight; idx is the flattened source index (clipped in-bounds)."""
    B, Qn, M, L, P, _ = sampling_locations.shape
    idx_list, w_list = [], []
    for l, (H, W) in enumerate(spatial_shapes_static):
        start = level_start_static[l]
        loc = sampling_locations[:, :, :, l]            # [B, Q, M, P, 2]
        aw = attention_weights[:, :, :, l]              # [B, Q, M, P]
        x = loc[..., 0] * W - 0.5                       # align_corners=False
        y = loc[..., 1] * H - 0.5
        x0 = jnp.floor(x)
        y0 = jnp.floor(y)
        fx = x - x0
        fy = y - y0
        x0i = x0.astype(jnp.int32)
        y0i = y0.astype(jnp.int32)
        corners = ((0, 0, (1.0 - fy) * (1.0 - fx)),
                   (0, 1, (1.0 - fy) * fx),
                   (1, 0, fy * (1.0 - fx)),
                   (1, 1, fy * fx))
        for dy, dx, wgt in corners:
            xi = x0i + dx
            yi = y0i + dy
            valid = (xi >= 0) & (xi < W) & (yi >= 0) & (yi < H)
            lin = start + jnp.clip(yi, 0, H - 1) * W + jnp.clip(xi, 0, W - 1)
            idx_list.append(lin)
            w_list.append(jnp.where(valid, wgt, 0.0) * aw)
    idx = jnp.stack(idx_list, axis=3).reshape(B, Qn, M, -1)      # [B, Q, M, K]
    w = jnp.stack(w_list, axis=3).reshape(B, Qn, M, -1)          # [B, Q, M, K]
    return idx, w


def gather_corners(value, idx, n_heads):
    """value: [B, S, C], idx: [B, Q, M, K] -> gathered [B, Q, C, K] with
    gathered[b, q, m*D+d, k] = value[b, idx[b,q,m,k], m*D+d]."""
    B, S, C = value.shape
    _, Qn, M, K = idx.shape
    D = C // n_heads
    v_heads = value.reshape(B, S, M, D)                              # [B, S, M, D]
    idx_r = idx.transpose(0, 1, 3, 2).reshape(B, Qn * K, M, 1)       # [B, Q*K, M, 1]
    # TODO(synk): at production sizes this gather could move in-kernel via a
    # scalar-prefetch index table + dynamic sublane slices on a VMEM-resident value.
    g = jnp.take_along_axis(v_heads, idx_r, axis=1)                  # [B, Q*K, M, D]
    g = g.reshape(B, Qn, K, M, D).transpose(0, 1, 3, 4, 2)           # [B, Q, M, D, K]
    return g.reshape(B, Qn, M * D, K)


def expand_corner_weights(w, D):
    B, Qn, M, K = w.shape
    wt = jnp.broadcast_to(w[:, :, :, None, :], (B, Qn, M, D, K))
    return wt.reshape(B, Qn, M * D, K)


# --------------------------------------------------------------------------
# Deformable-DETR decoder layer built from the fused kernels above
# --------------------------------------------------------------------------
def decoder_layer_forward(params, tgt, query_pos, reference_points_input, src,
                          src_padding_mask, spatial_shapes_static,
                          level_start_static, *, n_heads, n_levels, n_points):
    B, Qn, C = tgt.shape
    D = C // n_heads
    qpos = jnp.zeros_like(tgt) if query_pos is None else query_pos
    assert reference_points_input.shape[-1] == 2

    # ---- self attention (1 fused kernel) ----
    tgt = self_attn_block(tgt, qpos, params, n_heads)

    # ---- deformable cross attention ----
    off, aw = sampling_proj_block(tgt, qpos, params, n_heads, n_levels, n_points)
    samp_off = off.reshape(B, Qn, n_heads, n_levels, n_points, 2)
    attn_w = aw.reshape(B, Qn, n_heads, n_levels, n_points)

    value = value_proj_block(src, params)                            # [B, S, C]
    if src_padding_mask is not None:
        value = jnp.where(src_padding_mask[..., None], 0.0, value)

    # offset_normalizer = (W_l, H_l)
    offset_normalizer = jnp.array([(w_, h_) for (h_, w_) in spatial_shapes_static],
                                  jnp.float32)                        # [L, 2]
    sampling_locations = (
        reference_points_input[:, :, None, :, None, :]
        + samp_off / offset_normalizer[None, None, None, :, None, :])

    idx, w = build_corner_tables(sampling_locations, attn_w,
                                 spatial_shapes_static, level_start_static)
    g = gather_corners(value, idx, n_heads)                           # [B, Q, C, K]
    wt = expand_corner_weights(w, D)                                  # [B, Q, C, K]

    tgt = deform_agg_block(g, wt, tgt, params)

    # ---- FFN (1 fused kernel) ----
    tgt = ffn_block(tgt, params)
    return tgt


# --------------------------------------------------------------------------
# DeformableTransformerDecoder.forward
# (bbox_embed is None, return_intermediate=False, as in the module defaults)
# --------------------------------------------------------------------------
def deformable_transformer_decoder_forward(layers_params, tgt, reference_points,
                                           src, src_spatial_shapes,
                                           src_level_start_index,
                                           src_valid_ratios, query_pos=None,
                                           src_padding_mask=None, *,
                                           spatial_shapes_static,
                                           level_start_static,
                                           n_heads, n_levels, n_points):
    del src_spatial_shapes, src_level_start_index  # static copies are used instead
    output = tgt
    for lid, params in enumerate(layers_params):
        if reference_points.shape[-1] == 4:
            reference_points_input = reference_points[:, :, None] * jnp.concatenate(
                [src_valid_ratios, src_valid_ratios], -1)[:, None]
        else:
            assert reference_points.shape[-1] == 2
            reference_points_input = (reference_points[:, :, None]
                                      * src_valid_ratios[:, None])
        output = decoder_layer_forward(params, output, query_pos,
                                       reference_points_input, src,
                                       src_padding_mask, spatial_shapes_static,
                                       level_start_static, n_heads=n_heads,
                                       n_levels=n_levels, n_points=n_points)
        # TODO(synk): bbox_embed / return_intermediate branches are inactive
        # (self.bbox_embed is None, return_intermediate=False by default).
    return output, reference_points


# --------------------------------------------------------------------------
# Deterministic parameter init (fused-weight layouts)
# --------------------------------------------------------------------------
def init_layer_params(key, C, M, L, P, FFN):
    ks = jax.random.split(key, 12)

    def w(k, shape, scale=0.05):
        return (scale * jax.random.normal(k, shape)).astype(jnp.float32)

    p = {}
    # self attention: fused Q/K projection (both act on tgt + pos), V, out-proj
    p["sa_wqk"] = w(ks[0], (C, 2 * C))
    p["sa_bqk"] = w(ks[1], (1, 2 * C), 0.01)
    p["sa_wv"], p["sa_bv"] = w(ks[2], (C, C)), jnp.zeros((1, C), jnp.float32)
    p["sa_wo"], p["sa_bo"] = w(ks[3], (C, C)), jnp.zeros((1, C), jnp.float32)
    # MSDeformAttn: value proj, fused offsets+attn-weight proj, out-proj
    p["ca_wv"], p["ca_bv"] = w(ks[4], (C, C)), jnp.zeros((1, C), jnp.float32)
    n_off = M * L * P * 2
    n_aw = M * L * P
    woff, boff = w(ks[5], (C, n_off), 0.02), w(ks[6], (1, n_off), 0.5)
    wattn, battn = w(ks[7], (C, n_aw), 0.02), jnp.zeros((1, n_aw), jnp.float32)
    p["ca_wsamp"] = jnp.concatenate([woff, wattn], axis=1)
    p["ca_bsamp"] = jnp.concatenate([boff, battn], axis=1)
    p["ca_wo"], p["ca_bo"] = w(ks[8], (C, C)), jnp.zeros((1, C), jnp.float32)
    # FFN
    p["ffn_w1"], p["ffn_b1"] = w(ks[9], (C, FFN)), jnp.zeros((1, FFN), jnp.float32)
    p["ffn_w2"], p["ffn_b2"] = w(ks[10], (FFN, C)), jnp.zeros((1, C), jnp.float32)
    # LayerNorms
    for name in ("norm1", "norm2", "norm3"):
        p[name + "_g"] = jnp.ones((1, C), jnp.float32)
        p[name + "_b"] = jnp.zeros((1, C), jnp.float32)
    return p


# --------------------------------------------------------------------------
if __name__ == "__main__":
    B, Q, C = 2, 8, 32
    M_HEADS, N_LEVELS, N_POINTS, FFN = 4, 2, 4, 64
    NUM_LAYERS = 2
    spatial_shapes_static = ((8, 8), (4, 4))          # (H, W) per level
    level_start_static = (0, 64)
    S = sum(h * w for h, w in spatial_shapes_static)  # 80

    key = jax.random.PRNGKey(0)
    k_tgt, k_src, k_qp, k_ref, k_vr, k_par = jax.random.split(key, 6)
    tgt = jax.random.normal(k_tgt, (B, Q, C), jnp.float32)
    src = jax.random.normal(k_src, (B, S, C), jnp.float32)
    query_pos = jax.random.normal(k_qp, (B, Q, C), jnp.float32)
    reference_points = jax.random.uniform(k_ref, (B, Q, 2), jnp.float32, 0.05, 0.95)
    src_valid_ratios = jax.random.uniform(k_vr, (B, N_LEVELS, 2), jnp.float32, 0.6, 1.0)
    src_spatial_shapes = jnp.array(spatial_shapes_static, jnp.int32)
    src_level_start_index = jnp.array(level_start_static, jnp.int32)
    src_padding_mask = jnp.zeros((B, S), jnp.bool_)

    layer_keys = jax.random.split(k_par, NUM_LAYERS)
    layers_params = [init_layer_params(k, C, M_HEADS, N_LEVELS, N_POINTS, FFN)
                     for k in layer_keys]

    fwd = jax.jit(functools.partial(
        deformable_transformer_decoder_forward,
        spatial_shapes_static=spatial_shapes_static,
        level_start_static=level_start_static,
        n_heads=M_HEADS, n_levels=N_LEVELS, n_points=N_POINTS))

    out, ref_out = fwd(layers_params, tgt, reference_points, src,
                       src_spatial_shapes, src_level_start_index,
                       src_valid_ratios, query_pos, src_padding_mask)

    jax.block_until_ready(out)
    jax.block_until_ready(ref_out)
    assert out.shape == (B, Q, C)
    assert ref_out.shape == (B, Q, 2)
    assert bool(jnp.all(jnp.isfinite(out)))
    print("KERNEL_OK")
</pallas_src>

<mosaic_0001>
module attributes {stable_mosaic.version = 11 : i64} {
  func.func @_samp_proj_kernel(%arg0: i32, %arg1: memref<1x8x32xf32, #tpu.memory_space<vmem>>, %arg2: memref<1x8x32xf32, #tpu.memory_space<vmem>>, %arg3: memref<32x96xf32, #tpu.memory_space<vmem>>, %arg4: memref<1x96xf32, #tpu.memory_space<vmem>>, %arg5: memref<1x8x64xf32, #tpu.memory_space<vmem>>, %arg6: memref<1x8x32xf32, #tpu.memory_space<vmem>>) attributes {dimension_semantics = [#tpu.dimension_semantics<parallel>], iteration_bounds = array<i64: 2>, scalar_prefetch = 0 : i64, scratch_operands = 0 : i64, tpu.core_type = #tpu.core_type<tc>, window_params = [{transform_indices = @transform_0, window_bounds = array<i64: 1, 8, 32>}, {transform_indices = @transform_1, window_bounds = array<i64: 1, 8, 32>}, {pipeline_mode = #tpu.pipeline_mode<synchronous>, transform_indices = @transform_2, window_bounds = array<i64: 32, 96>}, {pipeline_mode = #tpu.pipeline_mode<synchronous>, transform_indices = @transform_3, window_bounds = array<i64: 1, 96>}, {transform_indices = @transform_4, window_bounds = array<i64: 1, 8, 64>}, {transform_indices = @transform_5, window_bounds = array<i64: 1, 8, 32>}]} {
    %c0 = arith.constant 0 : index
    %c0_0 = arith.constant 0 : index
    %c0_1 = arith.constant 0 : index
    %0 = vector.load %arg1[%c0, %c0_0, %c0_1] : memref<1x8x32xf32, #tpu.memory_space<vmem>>, vector<1x8x32xf32>
    %1 = vector.shape_cast %0 : vector<1x8x32xf32> to vector<8x32xf32>
    %c0_2 = arith.constant 0 : index
    %c0_3 = arith.constant 0 : index
    %c0_4 = arith.constant 0 : index
    %2 = vector.load %arg2[%c0_2, %c0_3, %c0_4] : memref<1x8x32xf32, #tpu.memory_space<vmem>>, vector<1x8x32xf32>
    %3 = vector.shape_cast %2 : vector<1x8x32xf32> to vector<8x32xf32>
    %4 = arith.addf %1, %3 : vector<8x32xf32>
    %5 = arith.truncf %4 : vector<8x32xf32> to vector<8x32xbf16>
    %c0_5 = arith.constant 0 : index
    %c0_6 = arith.constant 0 : index
    %6 = vector.load %arg3[%c0_5, %c0_6] : memref<32x96xf32, #tpu.memory_space<vmem>>, vector<32x96xf32>
    %7 = arith.truncf %6 : vector<32x96xf32> to vector<32x96xbf16>
    %cst = arith.constant dense<0.000000e+00> : vector<8x96xf32>
    %8 = tpu.matmul %5, %7, %cst {dimension_numbers = #tpu.dot_dimension_numbers<[1], [0], [0], [1], [0, 0, 1, 1], [], []>} : vector<8x32xbf16>, vector<32x96xbf16>, vector<8x96xf32> -> vector<8x96xf32>
    %c0_7 = arith.constant 0 : index
    %c0_8 = arith.constant 0 : index
    %9 = vector.load %arg4[%c0_7, %c0_8] : memref<1x96xf32, #tpu.memory_space<vmem>>, vector<1x96xf32>
    %10 = vector.broadcast %9 : vector<1x96xf32> to vector<8x96xf32>
    %11 = arith.addf %8, %10 : vector<8x96xf32>
    %12 = vector.extract_strided_slice %11 {offsets = [0, 0], sizes = [8, 64], strides = [1, 1]} : vector<8x96xf32> to vector<8x64xf32>
    %c0_9 = arith.constant 0 : index
    %c0_10 = arith.constant 0 : index
    %c0_11 = arith.constant 0 : index
    %13 = vector.load %arg5[%c0_9, %c0_10, %c0_11] : memref<1x8x64xf32, #tpu.memory_space<vmem>>, vector<1x8x64xf32>
    %14 = vector.shape_cast %13 : vector<1x8x64xf32> to vector<8x64xf32>
    %15 = vector.shape_cast %12 : vector<8x64xf32> to vector<1x8x64xf32>
    tpu.vector_store %arg5[%c0_9, %c0_10, %c0_11], %15 {strides = array<i32>} : memref<1x8x64xf32, #tpu.memory_space<vmem>>, vector<1x8x64xf32>,
    %16 = vector.extract_strided_slice %11 {offsets = [0, 64], sizes = [8, 8], strides = [1, 1]} : vector<8x96xf32> to vector<8x8xf32>
    %cst_12 = arith.constant dense<0xFF800000> : vector<8xf32>
    %17 = vector.multi_reduction <maximumf>, %16, %cst_12 [1] : vector<8x8xf32> to vector<8xf32>
    %18 = vector.shape_cast %17 : vector<8xf32> to vector<8x1xf32>
    %19 = vector.broadcast %18 : vector<8x1xf32> to vector<8x8xf32>
    %20 = arith.subf %16, %19 : vector<8x8xf32>
    %21 = math.exp %20 : vector<8x8xf32>
    %cst_13 = arith.constant dense<0.000000e+00> : vector<8xf32>
    %22 = vector.multi_reduction <add>, %21, %cst_13 [1] : vector<8x8xf32> to vector<8xf32>
    %23 = vector.shape_cast %22 : vector<8xf32> to vector<8x1xf32>
    %24 = tpu.reciprocal %23 {approx = true} : vector<8x1xf32> -> vector<8x1xf32>
    %25 = vector.broadcast %24 : vector<8x1xf32> to vector<8x8xf32>
    %26 = arith.mulf %21, %25 : vector<8x8xf32>
    %27 = vector.extract_strided_slice %11 {offsets = [0, 72], sizes = [8, 8], strides = [1, 1]} : vector<8x96xf32> to vector<8x8xf32>
    %cst_14 = arith.constant dense<0xFF800000> : vector<8xf32>
    %28 = vector.multi_reduction <maximumf>, %27, %cst_14 [1] : vector<8x8xf32> to vector<8xf32>
    %29 = vector.shape_cast %28 : vector<8xf32> to vector<8x1xf32>
    %30 = vector.broadcast %29 : vector<8x1xf32> to vector<8x8xf32>
    %31 = arith.subf %27, %30 : vector<8x8xf32>
    %32 = math.exp %31 : vector<8x8xf32>
    %cst_15 = arith.constant dense<0.000000e+00> : vector<8xf32>
    %33 = vector.multi_reduction <add>, %32, %cst_15 [1] : vector<8x8xf32> to vector<8xf32>
    %34 = vector.shape_cast %33 : vector<8xf32> to vector<8x1xf32>
    %35 = tpu.reciprocal %34 {approx = true} : vector<8x1xf32> -> vector<8x1xf32>
    %36 = vector.broadcast %35 : vector<8x1xf32> to vector<8x8xf32>
    %37 = arith.mulf %32, %36 : vector<8x8xf32>
    %38 = vector.extract_strided_slice %11 {offsets = [0, 80], sizes = [8, 8], strides = [1, 1]} : vector<8x96xf32> to vector<8x8xf32>
    %cst_16 = arith.constant dense<0xFF800000> : vector<8xf32>
    %39 = vector.multi_reduction <maximumf>, %38, %cst_16 [1] : vector<8x8xf32> to vector<8xf32>
    %40 = vector.shape_cast %39 : vector<8xf32> to vector<8x1xf32>
    %41 = vector.broadcast %40 : vector<8x1xf32> to vector<8x8xf32>
    %42 = arith.subf %38, %41 : vector<8x8xf32>
    %43 = math.exp %42 : vector<8x8xf32>
    %cst_17 = arith.constant dense<0.000000e+00> : vector<8xf32>
    %44 = vector.multi_reduction <add>, %43, %cst_17 [1] : vector<8x8xf32> to vector<8xf32>
    %45 = vector.shape_cast %44 : vector<8xf32> to vector<8x1xf32>
    %46 = tpu.reciprocal %45 {approx = true} : vector<8x1xf32> -> vector<8x1xf32>
    %47 = vector.broadcast %46 : vector<8x1xf32> to vector<8x8xf32>
    %48 = arith.mulf %43, %47 : vector<8x8xf32>
    %49 = vector.extract_strided_slice %11 {offsets = [0, 88], sizes = [8, 8], strides = [1, 1]} : vector<8x96xf32> to vector<8x8xf32>
    %cst_18 = arith.constant dense<0xFF800000> : vector<8xf32>
    %50 = vector.multi_reduction <maximumf>, %49, %cst_18 [1] : vector<8x8xf32> to vector<8xf32>
    %51 = vector.shape_cast %50 : vector<8xf32> to vector<8x1xf32>
    %52 = vector.broadcast %51 : vector<8x1xf32> to vector<8x8xf32>
    %53 = arith.subf %49, %52 : vector<8x8xf32>
    %54 = math.exp %53 : vector<8x8xf32>
    %cst_19 = arith.constant dense<0.000000e+00> : vector<8xf32>
    %55 = vector.multi_reduction <add>, %54, %cst_19 [1] : vector<8x8xf32> to vector<8xf32>
    %56 = vector.shape_cast %55 : vector<8xf32> to vector<8x1xf32>
    %57 = tpu.reciprocal %56 {approx = true} : vector<8x1xf32> -> vector<8x1xf32>
    %58 = vector.broadcast %57 : vector<8x1xf32> to vector<8x8xf32>
    %59 = arith.mulf %54, %58 : vector<8x8xf32>
    %60 = tpu.concatenate %26, %37, %48, %59 in 1 : vector<8x8xf32>, vector<8x8xf32>, vector<8x8xf32>, vector<8x8xf32> -> vector<8x32xf32>
    %c0_20 = arith.constant 0 : index
    %c0_21 = arith.constant 0 : index
    %c0_22 = arith.constant 0 : index
    %61 = vector.load %arg6[%c0_20, %c0_21, %c0_22] : memref<1x8x32xf32, #tpu.memory_space<vmem>>, vector<1x8x32xf32>
    %62 = vector.shape_cast %61 : vector<1x8x32xf32> to vector<8x32xf32>
    %63 = vector.shape_cast %60 : vector<8x32xf32> to vector<1x8x32xf32>
    tpu.vector_store %arg6[%c0_20, %c0_21, %c0_22], %63 {strides = array<i32>} : memref<1x8x32xf32, #tpu.memory_space<vmem>>, vector<1x8x32xf32>,
    return
  }
  func.func @transform_0(%arg0: i32) -> (i32, i32, i32) {
    %c0_i32 = arith.constant 0 : i32
    %c0_i32_0 = arith.constant 0 : i32
    %c0_i32_1 = arith.constant 0 : i32
    return %arg0, %c0_i32, %c0_i32_0 : i32, i32, i32
  }
  func.func @transform_1(%arg0: i32) -> (i32, i32, i32) {
    %c0_i32 = arith.constant 0 : i32
    %c0_i32_0 = arith.constant 0 : i32
    %c0_i32_1 = arith.constant 0 : i32
    return %arg0, %c0_i32, %c0_i32_0 : i32, i32, i32
  }
  func.func @transform_2(%arg0: i32) -> (i32, i32) {
    %c0_i32 = arith.constant 0 : i32
    %c0_i32_0 = arith.constant 0 : i32
    %c0_i32_1 = arith.constant 0 : i32
    return %c0_i32, %c0_i32_0 : i32, i32
  }
  func.func @transform_3(%arg0: i32) -> (i32, i32) {
    %c0_i32 = arith.constant 0 : i32
    %c0_i32_0 = arith.constant 0 : i32
    %c0_i32_1 = arith.constant 0 : i32
    return %c0_i32, %c0_i32_0 : i32, i32
  }
  func.func @transform_4(%arg0: i32) -> (i32, i32, i32) {
    %c0_i32 = arith.constant 0 : i32
    %c0_i32_0 = arith.constant 0 : i32
    %c0_i32_1 = arith.constant 0 : i32
    return %arg0, %c0_i32, %c0_i32_0 : i32, i32, i32
  }
  func.func @transform_5(%arg0: i32) -> (i32, i32, i32) {
    %c0_i32 = arith.constant 0 : i32
    %c0_i32_0 = arith.constant 0 : i32
    %c0_i32_1 = arith.constant 0 : i32
    return %arg0, %c0_i32, %c0_i32_0 : i32, i32, i32
  }
}

module attributes {stable_mosaic.version = 11 : i64} {
  func.func @_self_attn_block_kernel(%arg0: i32, %arg1: memref<1x8x32xf32, #tpu.memory_space<vmem>>, %arg2: memref<1x8x32xf32, #tpu.memory_space<vmem>>, %arg3: memref<32x64xf32, #tpu.memory_space<vmem>>, %arg4: memref<1x64xf32, #tpu.memory_space<vmem>>, %arg5: memref<32x32xf32, #tpu.memory_space<vmem>>, %arg6: memref<1x32xf32, #tpu.memory_space<vmem>>, %arg7: memref<32x32xf32, #tpu.memory_space<vmem>>, %arg8: memref<1x32xf32, #tpu.memory_space<vmem>>, %arg9: memref<1x32xf32, #tpu.memory_space<vmem>>, %arg10: memref<1x32xf32, #tpu.memory_space<vmem>>, %arg11: memref<1x8x32xf32, #tpu.memory_space<vmem>>) attributes {dimension_semantics = [#tpu.dimension_semantics<parallel>], iteration_bounds = array<i64: 2>, scalar_prefetch = 0 : i64, scratch_operands = 0 : i64, tpu.core_type = #tpu.core_type<tc>, window_params = [{transform_indices = @transform_0, window_bounds = array<i64: 1, 8, 32>}, {transform_indices = @transform_1, window_bounds = array<i64: 1, 8, 32>}, {pipeline_mode = #tpu.pipeline_mode<synchronous>, transform_indices = @transform_2, window_bounds = array<i64: 32, 64>}, {pipeline_mode = #tpu.pipeline_mode<synchronous>, transform_indices = @transform_3, window_bounds = array<i64: 1, 64>}, {pipeline_mode = #tpu.pipeline_mode<synchronous>, transform_indices = @transform_4, window_bounds = array<i64: 32, 32>}, {pipeline_mode = #tpu.pipeline_mode<synchronous>, transform_indices = @transform_5, window_bounds = array<i64: 1, 32>}, {pipeline_mode = #tpu.pipeline_mode<synchronous>, transform_indices = @transform_6, window_bounds = array<i64: 32, 32>}, {pipeline_mode = #tpu.pipeline_mode<synchronous>, transform_indices = @transform_7, window_bounds = array<i64: 1, 32>}, {pipeline_mode = #tpu.pipeline_mode<synchronous>, transform_indices = @transform_8, window_bounds = array<i64: 1, 32>}, {pipeline_mode = #tpu.pipeline_mode<synchronous>, transform_indices = @transform_9, window_bounds = array<i64: 1, 32>}, {transform_indices = @transform_10, window_bounds = array<i64: 1, 8, 32>}]} {
    %c0 = arith.constant 0 : index
    %c0_0 = arith.constant 0 : index
    %c0_1 = arith.constant 0 : index
    %0 = vector.load %arg1[%c0, %c0_0, %c0_1] : memref<1x8x32xf32, #tpu.memory_space<vmem>>, vector<1x8x32xf32>
    %1 = vector.shape_cast %0 : vector<1x8x32xf32> to vector<8x32xf32>
    %c0_2 = arith.constant 0 : index
    %c0_3 = arith.constant 0 : index
    %c0_4 = arith.constant 0 : index
    %2 = vector.load %arg2[%c0_2, %c0_3, %c0_4] : memref<1x8x32xf32, #tpu.memory_space<vmem>>, vector<1x8x32xf32>
    %3 = vector.shape_cast %2 : vector<1x8x32xf32> to vector<8x32xf32>
    %4 = arith.addf %1, %3 : vector<8x32xf32>
    %5 = arith.truncf %4 : vector<8x32xf32> to vector<8x32xbf16>
    %c0_5 = arith.constant 0 : index
    %c0_6 = arith.constant 0 : index
    %6 = vector.load %arg3[%c0_5, %c0_6] : memref<32x64xf32, #tpu.memory_space<vmem>>, vector<32x64xf32>
    %7 = arith.truncf %6 : vector<32x64xf32> to vector<32x64xbf16>
    %cst = arith.constant dense<0.000000e+00> : vector<8x64xf32>
    %8 = tpu.matmul %5, %7, %cst {dimension_numbers = #tpu.dot_dimension_numbers<[1], [0], [0], [1], [0, 0, 1, 1], [], []>} : vector<8x32xbf16>, vector<32x64xbf16>, vector<8x64xf32> -> vector<8x64xf32>
    %c0_7 = arith.constant 0 : index
    %c0_8 = arith.constant 0 : index
    %9 = vector.load %arg4[%c0_7, %c0_8] : memref<1x64xf32, #tpu.memory_space<vmem>>, vector<1x64xf32>
    %10 = vector.broadcast %9 : vector<1x64xf32> to vector<8x64xf32>
    %11 = arith.addf %8, %10 : vector<8x64xf32>
    %12 = arith.truncf %1 : vector<8x32xf32> to vector<8x32xbf16>
    %c0_9 = arith.constant 0 : index
    %c0_10 = arith.constant 0 : index
    %13 = vector.load %arg5[%c0_9, %c0_10] : memref<32x32xf32, #tpu.memory_space<vmem>>, vector<32x32xf32>
    %14 = arith.truncf %13 : vector<32x32xf32> to vector<32x32xbf16>
    %cst_11 = arith.constant dense<0.000000e+00> : vector<8x32xf32>
    %15 = tpu.matmul %12, %14, %cst_11 {dimension_numbers = #tpu.dot_dimension_numbers<[1], [0], [0], [1], [0, 0, 1, 1], [], []>} : vector<8x32xbf16>, vector<32x32xbf16>, vector<8x32xf32> -> vector<8x32xf32>
    %c0_12 = arith.constant 0 : index
    %c0_13 = arith.constant 0 : index
    %16 = vector.load %arg6[%c0_12, %c0_13] : memref<1x32xf32, #tpu.memory_space<vmem>>, vector<1x32xf32>
    %17 = vector.broadcast %16 : vector<1x32xf32> to vector<8x32xf32>
    %18 = arith.addf %15, %17 : vector<8x32xf32>
    %cst_14 = arith.constant 0.000000e+00 : f32
    %19 = vector.broadcast %cst_14 : f32 to vector<8x32xf32>
    %20 = vector.extract_strided_slice %11 {offsets = [0, 0], sizes = [8, 8], strides = [1, 1]} : vector<8x64xf32> to vector<8x8xf32>
    %21 = vector.extract_strided_slice %11 {offsets = [0, 32], sizes = [8, 8], strides = [1, 1]} : vector<8x64xf32> to vector<8x8xf32>
    %22 = vector.extract_strided_slice %18 {offsets = [0, 0], sizes = [8, 8], strides = [1, 1]} : vector<8x32xf32> to vector<8x8xf32>
    %cst_15 = arith.constant dense<0.000000e+00> : vector<8x8xf32>
    %23 = tpu.matmul %20, %21, %cst_15 {dimension_numbers = #tpu.dot_dimension_numbers<[1], [1], [0], [0], [0, 0, 1, 0], [], []>} : vector<8x8xf32>, vector<8x8xf32>, vector<8x8xf32> -> vector<8x8xf32>
    %cst_16 = arith.constant 0.353553385 : f32
    %24 = vector.broadcast %cst_16 : f32 to vector<8x8xf32>
    %25 = arith.mulf %23, %24 : vector<8x8xf32>
    %cst_17 = arith.constant dense<0xFF800000> : vector<8xf32>
    %26 = vector.multi_reduction <maximumf>, %25, %cst_17 [1] : vector<8x8xf32> to vector<8xf32>
    %27 = vector.shape_cast %26 : vector<8xf32> to vector<8x1xf32>
    %28 = vector.broadcast %27 : vector<8x1xf32> to vector<8x8xf32>
    %29 = arith.subf %25, %28 : vector<8x8xf32>
    %30 = math.exp %29 : vector<8x8xf32>
    %cst_18 = arith.constant dense<0.000000e+00> : vector<8xf32>
    %31 = vector.multi_reduction <add>, %30, %cst_18 [1] : vector<8x8xf32> to vector<8xf32>
    %32 = vector.shape_cast %31 : vector<8xf32> to vector<8x1xf32>
    %33 = tpu.reciprocal %32 {approx = true} : vector<8x1xf32> -> vector<8x1xf32>
    %34 = vector.broadcast %33 : vector<8x1xf32> to vector<8x8xf32>
    %35 = arith.mulf %30, %34 : vector<8x8xf32>
    %cst_19 = arith.constant dense<0.000000e+00> : vector<8x8xf32>
    %36 = tpu.matmul %35, %22, %cst_19 {dimension_numbers = #tpu.dot_dimension_numbers<[1], [0], [0], [1], [0, 0, 1, 1], [], []>} : vector<8x8xf32>, vector<8x8xf32>, vector<8x8xf32> -> vector<8x8xf32>
    %37 = arith.truncf %36 : vector<8x8xf32> to vector<8x8xbf16>
    %c0_20 = arith.constant 0 : index
    %c0_21 = arith.constant 0 : index
    %38 = vector.load %arg7[%c0_20, %c0_21] : memref<32x32xf32, #tpu.memory_space<vmem>>, vector<8x32xf32>
    %39 = arith.truncf %38 : vector<8x32xf32> to vector<8x32xbf16>
    %cst_22 = arith.constant dense<0.000000e+00> : vector<8x32xf32>
    %40 = tpu.matmul %37, %39, %cst_22 {dimension_numbers = #tpu.dot_dimension_numbers<[1], [0], [0], [1], [0, 0, 1, 1], [], []>} : vector<8x8xbf16>, vector<8x32xbf16>, vector<8x32xf32> -> vector<8x32xf32>
    %41 = arith.addf %19, %40 : vector<8x32xf32>
    %42 = vector.extract_strided_slice %11 {offsets = [0, 8], sizes = [8, 8], strides = [1, 1]} : vector<8x64xf32> to vector<8x8xf32>
    %43 = vector.extract_strided_slice %11 {offsets = [0, 40], sizes = [8, 8], strides = [1, 1]} : vector<8x64xf32> to vector<8x8xf32>
    %44 = vector.extract_strided_slice %18 {offsets = [0, 8], sizes = [8, 8], strides = [1, 1]} : vector<8x32xf32> to vector<8x8xf32>
    %cst_23 = arith.constant dense<0.000000e+00> : vector<8x8xf32>
    %45 = tpu.matmul %42, %43, %cst_23 {dimension_numbers = #tpu.dot_dimension_numbers<[1], [1], [0], [0], [0, 0, 1, 0], [], []>} : vector<8x8xf32>, vector<8x8xf32>, vector<8x8xf32> -> vector<8x8xf32>
    %cst_24 = arith.constant 0.353553385 : f32
    %46 = vector.broadcast %cst_24 : f32 to vector<8x8xf32>
    %47 = arith.mulf %45, %46 : vector<8x8xf32>
    %cst_25 = arith.constant dense<0xFF800000> : vector<8xf32>
    %48 = vector.multi_reduction <maximumf>, %47, %cst_25 [1] : vector<8x8xf32> to vector<8xf32>
    %49 = vector.shape_cast %48 : vector<8xf32> to vector<8x1xf32>
    %50 = vector.broadcast %49 : vector<8x1xf32> to vector<8x8xf32>
    %51 = arith.subf %47, %50 : vector<8x8xf32>
    %52 = math.exp %51 : vector<8x8xf32>
    %cst_26 = arith.constant dense<0.000000e+00> : vector<8xf32>
    %53 = vector.multi_reduction <add>, %52, %cst_26 [1] : vector<8x8xf32> to vector<8xf32>
    %54 = vector.shape_cast %53 : vector<8xf32> to vector<8x1xf32>
    %55 = tpu.reciprocal %54 {approx = true} : vector<8x1xf32> -> vector<8x1xf32>
    %56 = vector.broadcast %55 : vector<8x1xf32> to vector<8x8xf32>
    %57 = arith.mulf %52, %56 : vector<8x8xf32>
    %cst_27 = arith.constant dense<0.000000e+00> : vector<8x8xf32>
    %58 = tpu.matmul %57, %44, %cst_27 {dimension_numbers = #tpu.dot_dimension_numbers<[1], [0], [0], [1], [0, 0, 1, 1], [], []>} : vector<8x8xf32>, vector<8x8xf32>, vector<8x8xf32> -> vector<8x8xf32>
    %59 = arith.truncf %58 : vector<8x8xf32> to vector<8x8xbf16>
    %c8 = arith.constant 8 : index
    %c0_28 = arith.constant 0 : index
    %60 = vector.load %arg7[%c8, %c0_28] : memref<32x32xf32, #tpu.memory_space<vmem>>, vector<8x32xf32>
    %61 = arith.truncf %60 : vector<8x32xf32> to vector<8x32xbf16>
    %cst_29 = arith.constant dense<0.000000e+00> : vector<8x32xf32>
    %62 = tpu.matmul %59, %61, %cst_29 {dimension_numbers = #tpu.dot_dimension_numbers<[1], [0], [0], [1], [0, 0, 1, 1], [], []>} : vector<8x8xbf16>, vector<8x32xbf16>, vector<8x32xf32> -> vector<8x32xf32>
    %63 = arith.addf %41, %62 : vector<8x32xf32>
    %64 = vector.extract_strided_slice %11 {offsets = [0, 16], sizes = [8, 8], strides = [1, 1]} : vector<8x64xf32> to vector<8x8xf32>
    %65 = vector.extract_strided_slice %11 {offsets = [0, 48], sizes = [8, 8], strides = [1, 1]} : vector<8x64xf32> to vector<8x8xf32>
    %66 = vector.extract_strided_slice %18 {offsets = [0, 16], sizes = [8, 8], strides = [1, 1]} : vector<8x32xf32> to vector<8x8xf32>
    %cst_30 = arith.constant dense<0.000000e+00> : vector<8x8xf32>
    %67 = tpu.matmul %64, %65, %cst_30 {dimension_numbers = #tpu.dot_dimension_numbers<[1], [1], [0], [0], [0, 0, 1, 0], [], []>} : vector<8x8xf32>, vector<8x8xf32>, vector<8x8xf32> -> vector<8x8xf32>
    %cst_31 = arith.constant 0.353553385 : f32
    %68 = vector.broadcast %cst_31 : f32 to vector<8x8xf32>
    %69 = arith.mulf %67, %68 : vector<8x8xf32>
    %cst_32 = arith.constant dense<0xFF800000> : vector<8xf32>
    %70 = vector.multi_reduction <maximumf>, %69, %cst_32 [1] : vector<8x8xf32> to vector<8xf32>
    %71 = vector.shape_cast %70 : vector<8xf32> to vector<8x1xf32>
    %72 = vector.broadcast %71 : vector<8x1xf32> to vector<8x8xf32>
    %73 = arith.subf %69, %72 : vector<8x8xf32>
    %74 = math.exp %73 : vector<8x8xf32>
    %cst_33 = arith.constant dense<0.000000e+00> : vector<8xf32>
    %75 = vector.multi_reduction <add>, %74, %cst_33 [1] : vector<8x8xf32> to vector<8xf32>
    %76 = vector.shape_cast %75 : vector<8xf32> to vector<8x1xf32>
    %77 = tpu.reciprocal %76 {approx = true} : vector<8x1xf32> -> vector<8x1xf32>
    %78 = vector.broadcast %77 : vector<8x1xf32> to vector<8x8xf32>
    %79 = arith.mulf %74, %78 : vector<8x8xf32>
    %cst_34 = arith.constant dense<0.000000e+00> : vector<8x8xf32>
    %80 = tpu.matmul %79, %66, %cst_34 {dimension_numbers = #tpu.dot_dimension_numbers<[1], [0], [0], [1], [0, 0, 1, 1], [], []>} : vector<8x8xf32>, vector<8x8xf32>, vector<8x8xf32> -> vector<8x8xf32>
    %81 = arith.truncf %80 : vector<8x8xf32> to vector<8x8xbf16>
    %c16 = arith.constant 16 : index
    %c0_35 = arith.constant 0 : index
    %82 = vector.load %arg7[%c16, %c0_35] : memref<32x32xf32, #tpu.memory_space<vmem>>, vector<8x32xf32>
    %83 = arith.truncf %82 : vector<8x32xf32> to vector<8x32xbf16>
    %cst_36 = arith.constant dense<0.000000e+00> : vector<8x32xf32>
    %84 = tpu.matmul %81, %83, %cst_36 {dimension_numbers = #tpu.dot_dimension_numbers<[1], [0], [0], [1], [0, 0, 1, 1], [], []>} : vector<8x8xbf16>, vector<8x32xbf16>, vector<8x32xf32> -> vector<8x32xf32>
    %85 = arith.addf %63, %84 : vector<8x32xf32>
    %86 = vector.extract_strided_slice %11 {offsets = [0, 24], sizes = [8, 8], strides = [1, 1]} : vector<8x64xf32> to vector<8x8xf32>
    %87 = vector.extract_strided_slice %11 {offsets = [0, 56], sizes = [8, 8], strides = [1, 1]} : vector<8x64xf32> to vector<8x8xf32>
    %88 = vector.extract_strided_slice %18 {offsets = [0, 24], sizes = [8, 8], strides = [1, 1]} : vector<8x32xf32> to vector<8x8xf32>
    %cst_37 = arith.constant dense<0.000000e+00> : vector<8x8xf32>
    %89 = tpu.matmul %86, %87, %cst_37 {dimension_numbers = #tpu.dot_dimension_numbers<[1], [1], [0], [0], [0, 0, 1, 0], [], []>} : vector<8x8xf32>, vector<8x8xf32>, vector<8x8xf32> -> vector<8x8xf32>
    %cst_38 = arith.constant 0.353553385 : f32
    %90 = vector.broadcast %cst_38 : f32 to vector<8x8xf32>
    %91 = arith.mulf %89, %90 : vector<8x8xf32>
    %cst_39 = arith.constant dense<0xFF800000> : vector<8xf32>
    %92 = vector.multi_reduction <maximumf>, %91, %cst_39 [1] : vector<8x8xf32> to vector<8xf32>
    %93 = vector.shape_cast %92 : vector<8xf32> to vector<8x1xf32>
    %94 = vector.broadcast %93 : vector<8x1xf32> to vector<8x8xf32>
    %95 = arith.subf %91, %94 : vector<8x8xf32>
    %96 = math.exp %95 : vector<8x8xf32>
    %cst_40 = arith.constant dense<0.000000e+00> : vector<8xf32>
    %97 = vector.multi_reduction <add>, %96, %cst_40 [1] : vector<8x8xf32> to vector<8xf32>
    %98 = vector.shape_cast %97 : vector<8xf32> to vector<8x1xf32>
    %99 = tpu.reciprocal %98 {approx = true} : vector<8x1xf32> -> vector<8x1xf32>
    %100 = vector.broadcast %99 : vector<8x1xf32> to vector<8x8xf32>
    %101 = arith.mulf %96, %100 : vector<8x8xf32>
    %cst_41 = arith.constant dense<0.000000e+00> : vector<8x8xf32>
    %102 = tpu.matmul %101, %88, %cst_41 {dimension_numbers = #tpu.dot_dimension_numbers<[1], [0], [0], [1], [0, 0, 1, 1], [], []>} : vector<8x8xf32>, vector<8x8xf32>, vector<8x8xf32> -> vector<8x8xf32>
    %103 = arith.truncf %102 : vector<8x8xf32> to vector<8x8xbf16>
    %c24 = arith.constant 24 : index
    %c0_42 = arith.constant 0 : index
    %104 = vector.load %arg7[%c24, %c0_42] : memref<32x32xf32, #tpu.memory_space<vmem>>, vector<8x32xf32>
    %105 = arith.truncf %104 : vector<8x32xf32> to vector<8x32xbf16>
    %cst_43 = arith.constant dense<0.000000e+00> : vector<8x32xf32>
    %106 = tpu.matmul %103, %105, %cst_43 {dimension_numbers = #tpu.dot_dimension_numbers<[1], [0], [0], [1], [0, 0, 1, 1], [], []>} : vector<8x8xbf16>, vector<8x32xbf16>, vector<8x32xf32> -> vector<8x32xf32>
    %107 = arith.addf %85, %106 : vector<8x32xf32>
    %108 = arith.addf %1, %107 : vector<8x32xf32>
    %c0_44 = arith.constant 0 : index
    %c0_45 = arith.constant 0 : index
    %109 = vector.load %arg8[%c0_44, %c0_45] : memref<1x32xf32, #tpu.memory_space<vmem>>, vector<1x32xf32>
    %110 = vector.broadcast %109 : vector<1x32xf32> to vector<8x32xf32>
    %111 = arith.addf %108, %110 : vector<8x32xf32>
    %cst_46 = arith.constant dense<0.000000e+00> : vector<8xf32>
    %112 = vector.multi_reduction <add>, %111, %cst_46 [1] : vector<8x32xf32> to vector<8xf32>
    %113 = vector.shape_cast %112 : vector<8xf32> to vector<8x1xf32>
    %cst_47 = arith.constant 3.200000e+01 : f32
    %114 = vector.broadcast %cst_47 : f32 to vector<8x1xf32>
    %115 = arith.divf %113, %114 : vector<8x1xf32>
    %116 = vector.broadcast %115 : vector<8x1xf32> to vector<8x32xf32>
    %117 = arith.subf %111, %116 : vector<8x32xf32>
    %118 = arith.mulf %117, %117 : vector<8x32xf32>
    %cst_48 = arith.constant dense<0.000000e+00> : vector<8xf32>
    %119 = vector.multi_reduction <add>, %118, %cst_48 [1] : vector<8x32xf32> to vector<8xf32>
    %120 = vector.shape_cast %119 : vector<8xf32> to vector<8x1xf32>
    %cst_49 = arith.constant 3.200000e+01 : f32
    %121 = vector.broadcast %cst_49 : f32 to vector<8x1xf32>
    %122 = arith.divf %120, %121 : vector<8x1xf32>
    %123 = vector.broadcast %115 : vector<8x1xf32> to vector<8x32xf32>
    %124 = arith.subf %111, %123 : vector<8x32xf32>
    %cst_50 = arith.constant 9.99999974E-6 : f32
    %125 = vector.broadcast %cst_50 : f32 to vector<8x1xf32>
    %126 = arith.addf %122, %125 : vector<8x1xf32>
    %127 = math.rsqrt %126 : vector<8x1xf32>
    %128 = vector.broadcast %127 : vector<8x1xf32> to vector<8x32xf32>
    %129 = arith.mulf %124, %128 : vector<8x32xf32>
    %c0_51 = arith.constant 0 : index
    %c0_52 = arith.constant 0 : index
    %130 = vector.load %arg9[%c0_51, %c0_52] : memref<1x32xf32, #tpu.memory_space<vmem>>, vector<1x32xf32>
    %131 = vector.broadcast %130 : vector<1x32xf32> to vector<8x32xf32>
    %132 = arith.mulf %129, %131 : vector<8x32xf32>
    %c0_53 = arith.constant 0 : index
    %c0_54 = arith.constant 0 : index
    %133 = vector.load %arg10[%c0_53, %c0_54] : memref<1x32xf32, #tpu.memory_space<vmem>>, vector<1x32xf32>
    %134 = vector.broadcast %133 : vector<1x32xf32> to vector<8x32xf32>
    %135 = arith.addf %132, %134 : vector<8x32xf32>
    %c0_55 = arith.constant 0 : index
    %c0_56 = arith.constant 0 : index
    %c0_57 = arith.constant 0 : index
    %136 = vector.load %arg11[%c0_55, %c0_56, %c0_57] : memref<1x8x32xf32, #tpu.memory_space<vmem>>, vector<1x8x32xf32>
    %137 = vector.shape_cast %136 : vector<1x8x32xf32> to vector<8x32xf32>
    %138 = vector.shape_cast %135 : vector<8x32xf32> to vector<1x8x32xf32>
    tpu.vector_store %arg11[%c0_55, %c0_56, %c0_57], %138 {strides = array<i32>} : memref<1x8x32xf32, #tpu.memory_space<vmem>>, vector<1x8x32xf32>,
    return
  }
  func.func @transform_0(%arg0: i32) -> (i32, i32, i32) {
    %c0_i32 = arith.constant 0 : i32
    %c0_i32_0 = arith.constant 0 : i32
    %c0_i32_1 = arith.constant 0 : i32
    return %arg0, %c0_i32, %c0_i32_0 : i32, i32, i32
  }
  func.func @transform_1(%arg0: i32) -> (i32, i32, i32) {
    %c0_i32 = arith.constant 0 : i32
    %c0_i32_0 = arith.constant 0 : i32
    %c0_i32_1 = arith.constant 0 : i32
    return %arg0, %c0_i32, %c0_i32_0 : i32, i32, i32
  }
  func.func @transform_2(%arg0: i32) -> (i32, i32) {
    %c0_i32 = arith.constant 0 : i32
    %c0_i32_0 = arith.constant 0 : i32
    %c0_i32_1 = arith.constant 0 : i32
    return %c0_i32, %c0_i32_0 : i32, i32
  }
  func.func @transform_3(%arg0: i32) -> (i32, i32) {
    %c0_i32 = arith.constant 0 : i32
    %c0_i32_0 = arith.constant 0 : i32
    %c0_i32_1 = arith.constant 0 : i32
    return %c0_i32, %c0_i32_0 : i32, i32
  }
  func.func @transform_4(%arg0: i32) -> (i32, i32) {
    %c0_i32 = arith.constant 0 : i32
    %c0_i32_0 = arith.constant 0 : i32
    %c0_i32_1 = arith.constant 0 : i32
    return %c0_i32, %c0_i32_0 : i32, i32
  }
  func.func @transform_5(%arg0: i32) -> (i32, i32) {
    %c0_i32 = arith.constant 0 : i32
    %c0_i32_0 = arith.constant 0 : i32
    %c0_i32_1 = arith.constant 0 : i32
    return %c0_i32, %c0_i32_0 : i32, i32
  }
  func.func @transform_6(%arg0: i32) -> (i32, i32) {
    %c0_i32 = arith.constant 0 : i32
    %c0_i32_0 = arith.constant 0 : i32
    %c0_i32_1 = arith.constant 0 : i32
    return %c0_i32, %c0_i32_0 : i32, i32
  }
  func.func @transform_7(%arg0: i32) -> (i32, i32) {
    %c0_i32 = arith.constant 0 : i32
    %c0_i32_0 = arith.constant 0 : i32
    %c0_i32_1 = arith.constant 0 : i32
    return %c0_i32, %c0_i32_0 : i32, i32
  }
  func.func @transform_8(%arg0: i32) -> (i32, i32) {
    %c0_i32 = arith.constant 0 : i32
    %c0_i32_0 = arith.constant 0 : i32
    %c0_i32_1 = arith.constant 0 : i32
    return %c0_i32, %c0_i32_0 : i32, i32
  }
  func.func @transform_9(%arg0: i32) -> (i32, i32) {
    %c0_i32 = arith.constant 0 : i32
    %c0_i32_0 = arith.constant 0 : i32
    %c0_i32_1 = arith.constant 0 : i32
    return %c0_i32, %c0_i32_0 : i32, i32
  }
  func.func @transform_10(%arg0: i32) -> (i32, i32, i32) {
    %c0_i32 = arith.constant 0 : i32
    %c0_i32_0 = arith.constant 0 : i32
    %c0_i32_1 = arith.constant 0 : i32
    return %arg0, %c0_i32, %c0_i32_0 : i32, i32, i32
  }
}

module attributes {stable_mosaic.version = 11 : i64} {
  func.func @_value_proj_kernel(%arg0: i32, %arg1: memref<1x80x32xf32, #tpu.memory_space<vmem>>, %arg2: memref<32x32xf32, #tpu.memory_space<vmem>>, %arg3: memref<1x32xf32, #tpu.memory_space<vmem>>, %arg4: memref<1x80x32xf32, #tpu.memory_space<vmem>>) attributes {dimension_semantics = [#tpu.dimension_semantics<parallel>], iteration_bounds = array<i64: 2>, scalar_prefetch = 0 : i64, scratch_operands = 0 : i64, tpu.core_type = #tpu.core_type<tc>, window_params = [{transform_indices = @transform_0, window_bounds = array<i64: 1, 80, 32>}, {pipeline_mode = #tpu.pipeline_mode<synchronous>, transform_indices = @transform_1, window_bounds = array<i64: 32, 32>}, {pipeline_mode = #tpu.pipeline_mode<synchronous>, transform_indices = @transform_2, window_bounds = array<i64: 1, 32>}, {transform_indices = @transform_3, window_bounds = array<i64: 1, 80, 32>}]} {
    %c0 = arith.constant 0 : index
    %c0_0 = arith.constant 0 : index
    %c0_1 = arith.constant 0 : index
    %0 = vector.load %arg1[%c0, %c0_0, %c0_1] : memref<1x80x32xf32, #tpu.memory_space<vmem>>, vector<1x80x32xf32>
    %1 = vector.shape_cast %0 : vector<1x80x32xf32> to vector<80x32xf32>
    %2 = arith.truncf %1 : vector<80x32xf32> to vector<80x32xbf16>
    %c0_2 = arith.constant 0 : index
    %c0_3 = arith.constant 0 : index
    %3 = vector.load %arg2[%c0_2, %c0_3] : memref<32x32xf32, #tpu.memory_space<vmem>>, vector<32x32xf32>
    %4 = arith.truncf %3 : vector<32x32xf32> to vector<32x32xbf16>
    %cst = arith.constant dense<0.000000e+00> : vector<80x32xf32>
    %5 = tpu.matmul %2, %4, %cst {dimension_numbers = #tpu.dot_dimension_numbers<[1], [0], [0], [1], [0, 0, 1, 1], [], []>} : vector<80x32xbf16>, vector<32x32xbf16>, vector<80x32xf32> -> vector<80x32xf32>
    %c0_4 = arith.constant 0 : index
    %c0_5 = arith.constant 0 : index
    %6 = vector.load %arg3[%c0_4, %c0_5] : memref<1x32xf32, #tpu.memory_space<vmem>>, vector<1x32xf32>
    %7 = vector.broadcast %6 : vector<1x32xf32> to vector<80x32xf32>
    %8 = arith.addf %5, %7 : vector<80x32xf32>
    %c0_6 = arith.constant 0 : index
    %c0_7 = arith.constant 0 : index
    %c0_8 = arith.constant 0 : index
    %9 = vector.load %arg4[%c0_6, %c0_7, %c0_8] : memref<1x80x32xf32, #tpu.memory_space<vmem>>, vector<1x80x32xf32>
    %10 = vector.shape_cast %9 : vector<1x80x32xf32> to vector<80x32xf32>
    %11 = vector.shape_cast %8 : vector<80x32xf32> to vector<1x80x32xf32>
    tpu.vector_store %arg4[%c0_6, %c0_7, %c0_8], %11 {strides = array<i32>} : memref<1x80x32xf32, #tpu.memory_space<vmem>>, vector<1x80x32xf32>,
    return
  }
  func.func @transform_0(%arg0: i32) -> (i32, i32, i32) {
    %c0_i32 = arith.constant 0 : i32
    %c0_i32_0 = arith.constant 0 : i32
    %c0_i32_1 = arith.constant 0 : i32
    return %arg0, %c0_i32, %c0_i32_0 : i32, i32, i32
  }
  func.func @transform_1(%arg0: i32) -> (i32, i32) {
    %c0_i32 = arith.constant 0 : i32
    %c0_i32_0 = arith.constant 0 : i32
    %c0_i32_1 = arith.constant 0 : i32
    return %c0_i32, %c0_i32_0 : i32, i32
  }
  func.func @transform_2(%arg0: i32) -> (i32, i32) {
    %c0_i32 = arith.constant 0 : i32
    %c0_i32_0 = arith.constant 0 : i32
    %c0_i32_1 = arith.constant 0 : i32
    return %c0_i32, %c0_i32_0 : i32, i32
  }
  func.func @transform_3(%arg0: i32) -> (i32, i32, i32) {
    %c0_i32 = arith.constant 0 : i32
    %c0_i32_0 = arith.constant 0 : i32
    %c0_i32_1 = arith.constant 0 : i32
    return %arg0, %c0_i32, %c0_i32_0 : i32, i32, i32
  }
}

module attributes {stable_mosaic.version = 11 : i64} {
  func.func @_deform_agg_kernel(%arg0: i32, %arg1: memref<1x8x32x32xf32, #tpu.memory_space<vmem>>, %arg2: memref<1x8x32x32xf32, #tpu.memory_space<vmem>>, %arg3: memref<1x8x32xf32, #tpu.memory_space<vmem>>, %arg4: memref<32x32xf32, #tpu.memory_space<vmem>>, %arg5: memref<1x32xf32, #tpu.memory_space<vmem>>, %arg6: memref<1x32xf32, #tpu.memory_space<vmem>>, %arg7: memref<1x32xf32, #tpu.memory_space<vmem>>, %arg8: memref<1x8x32xf32, #tpu.memory_space<vmem>>) attributes {dimension_semantics = [#tpu.dimension_semantics<parallel>], iteration_bounds = array<i64: 2>, scalar_prefetch = 0 : i64, scratch_operands = 0 : i64, tpu.core_type = #tpu.core_type<tc>, window_params = [{transform_indices = @transform_0, window_bounds = array<i64: 1, 8, 32, 32>}, {transform_indices = @transform_1, window_bounds = array<i64: 1, 8, 32, 32>}, {transform_indices = @transform_2, window_bounds = array<i64: 1, 8, 32>}, {pipeline_mode = #tpu.pipeline_mode<synchronous>, transform_indices = @transform_3, window_bounds = array<i64: 32, 32>}, {pipeline_mode = #tpu.pipeline_mode<synchronous>, transform_indices = @transform_4, window_bounds = array<i64: 1, 32>}, {pipeline_mode = #tpu.pipeline_mode<synchronous>, transform_indices = @transform_5, window_bounds = array<i64: 1, 32>}, {pipeline_mode = #tpu.pipeline_mode<synchronous>, transform_indices = @transform_6, window_bounds = array<i64: 1, 32>}, {transform_indices = @transform_7, window_bounds = array<i64: 1, 8, 32>}]} {
    %c0 = arith.constant 0 : index
    %c0_0 = arith.constant 0 : index
    %c0_1 = arith.constant 0 : index
    %c0_2 = arith.constant 0 : index
    %0 = vector.load %arg1[%c0, %c0_0, %c0_1, %c0_2] : memref<1x8x32x32xf32, #tpu.memory_space<vmem>>, vector<1x8x32x32xf32>
    %1 = vector.shape_cast %0 : vector<1x8x32x32xf32> to vector<8x32x32xf32>
    %c0_3 = arith.constant 0 : index
    %c0_4 = arith.constant 0 : index
    %c0_5 = arith.constant 0 : index
    %c0_6 = arith.constant 0 : index
    %2 = vector.load %arg2[%c0_3, %c0_4, %c0_5, %c0_6] : memref<1x8x32x32xf32, #tpu.memory_space<vmem>>, vector<1x8x32x32xf32>
    %3 = vector.shape_cast %2 : vector<1x8x32x32xf32> to vector<8x32x32xf32>
    %4 = arith.mulf %1, %3 : vector<8x32x32xf32>
    %cst = arith.constant dense<0.000000e+00> : vector<8x32xf32>
    %5 = vector.multi_reduction <add>, %4, %cst [2] : vector<8x32x32xf32> to vector<8x32xf32>
    %6 = arith.truncf %5 : vector<8x32xf32> to vector<8x32xbf16>
    %c0_7 = arith.constant 0 : index
    %c0_8 = arith.constant 0 : index
    %7 = vector.load %arg4[%c0_7, %c0_8] : memref<32x32xf32, #tpu.memory_space<vmem>>, vector<32x32xf32>
    %8 = arith.truncf %7 : vector<32x32xf32> to vector<32x32xbf16>
    %cst_9 = arith.constant dense<0.000000e+00> : vector<8x32xf32>
    %9 = tpu.matmul %6, %8, %cst_9 {dimension_numbers = #tpu.dot_dimension_numbers<[1], [0], [0], [1], [0, 0, 1, 1], [], []>} : vector<8x32xbf16>, vector<32x32xbf16>, vector<8x32xf32> -> vector<8x32xf32>
    %c0_10 = arith.constant 0 : index
    %c0_11 = arith.constant 0 : index
    %10 = vector.load %arg5[%c0_10, %c0_11] : memref<1x32xf32, #tpu.memory_space<vmem>>, vector<1x32xf32>
    %11 = vector.broadcast %10 : vector<1x32xf32> to vector<8x32xf32>
    %12 = arith.addf %9, %11 : vector<8x32xf32>
    %c0_12 = arith.constant 0 : index
    %c0_13 = arith.constant 0 : index
    %c0_14 = arith.constant 0 : index
    %13 = vector.load %arg3[%c0_12, %c0_13, %c0_14] : memref<1x8x32xf32, #tpu.memory_space<vmem>>, vector<1x8x32xf32>
    %14 = vector.shape_cast %13 : vector<1x8x32xf32> to vector<8x32xf32>
    %15 = arith.addf %14, %12 : vector<8x32xf32>
    %cst_15 = arith.constant dense<0.000000e+00> : vector<8xf32>
    %16 = vector.multi_reduction <add>, %15, %cst_15 [1] : vector<8x32xf32> to vector<8xf32>
    %17 = vector.shape_cast %16 : vector<8xf32> to vector<8x1xf32>
    %cst_16 = arith.constant 3.200000e+01 : f32
    %18 = vector.broadcast %cst_16 : f32 to vector<8x1xf32>
    %19 = arith.divf %17, %18 : vector<8x1xf32>
    %20 = vector.broadcast %19 : vector<8x1xf32> to vector<8x32xf32>
    %21 = arith.subf %15, %20 : vector<8x32xf32>
    %22 = arith.mulf %21, %21 : vector<8x32xf32>
    %cst_17 = arith.constant dense<0.000000e+00> : vector<8xf32>
    %23 = vector.multi_reduction <add>, %22, %cst_17 [1] : vector<8x32xf32> to vector<8xf32>
    %24 = vector.shape_cast %23 : vector<8xf32> to vector<8x1xf32>
    %cst_18 = arith.constant 3.200000e+01 : f32
    %25 = vector.broadcast %cst_18 : f32 to vector<8x1xf32>
    %26 = arith.divf %24, %25 : vector<8x1xf32>
    %27 = vector.broadcast %19 : vector<8x1xf32> to vector<8x32xf32>
    %28 = arith.subf %15, %27 : vector<8x32xf32>
    %cst_19 = arith.constant 9.99999974E-6 : f32
    %29 = vector.broadcast %cst_19 : f32 to vector<8x1xf32>
    %30 = arith.addf %26, %29 : vector<8x1xf32>
    %31 = math.rsqrt %30 : vector<8x1xf32>
    %32 = vector.broadcast %31 : vector<8x1xf32> to vector<8x32xf32>
    %33 = arith.mulf %28, %32 : vector<8x32xf32>
    %c0_20 = arith.constant 0 : index
    %c0_21 = arith.constant 0 : index
    %34 = vector.load %arg6[%c0_20, %c0_21] : memref<1x32xf32, #tpu.memory_space<vmem>>, vector<1x32xf32>
    %35 = vector.broadcast %34 : vector<1x32xf32> to vector<8x32xf32>
    %36 = arith.mulf %33, %35 : vector<8x32xf32>
    %c0_22 = arith.constant 0 : index
    %c0_23 = arith.constant 0 : index
    %37 = vector.load %arg7[%c0_22, %c0_23] : memref<1x32xf32, #tpu.memory_space<vmem>>, vector<1x32xf32>
    %38 = vector.broadcast %37 : vector<1x32xf32> to vector<8x32xf32>
    %39 = arith.addf %36, %38 : vector<8x32xf32>
    %c0_24 = arith.constant 0 : index
    %c0_25 = arith.constant 0 : index
    %c0_26 = arith.constant 0 : index
    %40 = vector.load %arg8[%c0_24, %c0_25, %c0_26] : memref<1x8x32xf32, #tpu.memory_space<vmem>>, vector<1x8x32xf32>
    %41 = vector.shape_cast %40 : vector<1x8x32xf32> to vector<8x32xf32>
    %42 = vector.shape_cast %39 : vector<8x32xf32> to vector<1x8x32xf32>
    tpu.vector_store %arg8[%c0_24, %c0_25, %c0_26], %42 {strides = array<i32>} : memref<1x8x32xf32, #tpu.memory_space<vmem>>, vector<1x8x32xf32>,
    return
  }
  func.func @transform_0(%arg0: i32) -> (i32, i32, i32, i32) {
    %c0_i32 = arith.constant 0 : i32
    %c0_i32_0 = arith.constant 0 : i32
    %c0_i32_1 = arith.constant 0 : i32
    %c0_i32_2 = arith.constant 0 : i32
    return %arg0, %c0_i32, %c0_i32_0, %c0_i32_1 : i32, i32, i32, i32
  }
  func.func @transform_1(%arg0: i32) -> (i32, i32, i32, i32) {
    %c0_i32 = arith.constant 0 : i32
    %c0_i32_0 = arith.constant 0 : i32
    %c0_i32_1 = arith.constant 0 : i32
    %c0_i32_2 = arith.constant 0 : i32
    return %arg0, %c0_i32, %c0_i32_0, %c0_i32_1 : i32, i32, i32, i32
  }
  func.func @transform_2(%arg0: i32) -> (i32, i32, i32) {
    %c0_i32 = arith.constant 0 : i32
    %c0_i32_0 = arith.constant 0 : i32
    %c0_i32_1 = arith.constant 0 : i32
    return %arg0, %c0_i32, %c0_i32_0 : i32, i32, i32
  }
  func.func @transform_3(%arg0: i32) -> (i32, i32) {
    %c0_i32 = arith.constant 0 : i32
    %c0_i32_0 = arith.constant 0 : i32
    %c0_i32_1 = arith.constant 0 : i32
    return %c0_i32, %c0_i32_0 : i32, i32
  }
  func.func @transform_4(%arg0: i32) -> (i32, i32) {
    %c0_i32 = arith.constant 0 : i32
    %c0_i32_0 = arith.constant 0 : i32
    %c0_i32_1 = arith.constant 0 : i32
    return %c0_i32, %c0_i32_0 : i32, i32
  }
  func.func @transform_5(%arg0: i32) -> (i32, i32) {
    %c0_i32 = arith.constant 0 : i32
    %c0_i32_0 = arith.constant 0 : i32
    %c0_i32_1 = arith.constant 0 : i32
    return %c0_i32, %c0_i32_0 : i32, i32
  }
  func.func @transform_6(%arg0: i32) -> (i32, i32) {
    %c0_i32 = arith.constant 0 : i32
    %c0_i32_0 = arith.constant 0 : i32
    %c0_i32_1 = arith.constant 0 : i32
    return %c0_i32, %c0_i32_0 : i32, i32
  }
  func.func @transform_7(%arg0: i32) -> (i32, i32, i32) {
    %c0_i32 = arith.constant 0 : i32
    %c0_i32_0 = arith.constant 0 : i32
    %c0_i32_1 = arith.constant 0 : i32
    return %arg0, %c0_i32, %c0_i32_0 : i32, i32, i32
  }
}

module attributes {stable_mosaic.version = 11 : i64} {
  func.func @_ffn_kernel(%arg0: i32, %arg1: memref<1x8x32xf32, #tpu.memory_space<vmem>>, %arg2: memref<32x64xf32, #tpu.memory_space<vmem>>, %arg3: memref<1x64xf32, #tpu.memory_space<vmem>>, %arg4: memref<64x32xf32, #tpu.memory_space<vmem>>, %arg5: memref<1x32xf32, #tpu.memory_space<vmem>>, %arg6: memref<1x32xf32, #tpu.memory_space<vmem>>, %arg7: memref<1x32xf32, #tpu.memory_space<vmem>>, %arg8: memref<1x8x32xf32, #tpu.memory_space<vmem>>) attributes {dimension_semantics = [#tpu.dimension_semantics<parallel>], iteration_bounds = array<i64: 2>, scalar_prefetch = 0 : i64, scratch_operands = 0 : i64, tpu.core_type = #tpu.core_type<tc>, window_params = [{transform_indices = @transform_0, window_bounds = array<i64: 1, 8, 32>}, {pipeline_mode = #tpu.pipeline_mode<synchronous>, transform_indices = @transform_1, window_bounds = array<i64: 32, 64>}, {pipeline_mode = #tpu.pipeline_mode<synchronous>, transform_indices = @transform_2, window_bounds = array<i64: 1, 64>}, {pipeline_mode = #tpu.pipeline_mode<synchronous>, transform_indices = @transform_3, window_bounds = array<i64: 64, 32>}, {pipeline_mode = #tpu.pipeline_mode<synchronous>, transform_indices = @transform_4, window_bounds = array<i64: 1, 32>}, {pipeline_mode = #tpu.pipeline_mode<synchronous>, transform_indices = @transform_5, window_bounds = array<i64: 1, 32>}, {pipeline_mode = #tpu.pipeline_mode<synchronous>, transform_indices = @transform_6, window_bounds = array<i64: 1, 32>}, {transform_indices = @transform_7, window_bounds = array<i64: 1, 8, 32>}]} {
    %c0 = arith.constant 0 : index
    %c0_0 = arith.constant 0 : index
    %c0_1 = arith.constant 0 : index
    %0 = vector.load %arg1[%c0, %c0_0, %c0_1] : memref<1x8x32xf32, #tpu.memory_space<vmem>>, vector<1x8x32xf32>
    %1 = vector.shape_cast %0 : vector<1x8x32xf32> to vector<8x32xf32>
    %2 = arith.truncf %1 : vector<8x32xf32> to vector<8x32xbf16>
    %c0_2 = arith.constant 0 : index
    %c0_3 = arith.constant 0 : index
    %3 = vector.load %arg2[%c0_2, %c0_3] : memref<32x64xf32, #tpu.memory_space<vmem>>, vector<32x64xf32>
    %4 = arith.truncf %3 : vector<32x64xf32> to vector<32x64xbf16>
    %cst = arith.constant dense<0.000000e+00> : vector<8x64xf32>
    %5 = tpu.matmul %2, %4, %cst {dimension_numbers = #tpu.dot_dimension_numbers<[1], [0], [0], [1], [0, 0, 1, 1], [], []>} : vector<8x32xbf16>, vector<32x64xbf16>, vector<8x64xf32> -> vector<8x64xf32>
    %c0_4 = arith.constant 0 : index
    %c0_5 = arith.constant 0 : index
    %6 = vector.load %arg3[%c0_4, %c0_5] : memref<1x64xf32, #tpu.memory_space<vmem>>, vector<1x64xf32>
    %7 = vector.broadcast %6 : vector<1x64xf32> to vector<8x64xf32>
    %8 = arith.addf %5, %7 : vector<8x64xf32>
    %cst_6 = arith.constant 0.000000e+00 : f32
    %9 = vector.broadcast %cst_6 : f32 to vector<8x64xf32>
    %10 = arith.maximumf %8, %9 : vector<8x64xf32>
    %11 = arith.truncf %10 : vector<8x64xf32> to vector<8x64xbf16>
    %c0_7 = arith.constant 0 : index
    %c0_8 = arith.constant 0 : index
    %12 = vector.load %arg4[%c0_7, %c0_8] : memref<64x32xf32, #tpu.memory_space<vmem>>, vector<64x32xf32>
    %13 = arith.truncf %12 : vector<64x32xf32> to vector<64x32xbf16>
    %cst_9 = arith.constant dense<0.000000e+00> : vector<8x32xf32>
    %14 = tpu.matmul %11, %13, %cst_9 {dimension_numbers = #tpu.dot_dimension_numbers<[1], [0], [0], [1], [0, 0, 1, 1], [], []>} : vector<8x64xbf16>, vector<64x32xbf16>, vector<8x32xf32> -> vector<8x32xf32>
    %c0_10 = arith.constant 0 : index
    %c0_11 = arith.constant 0 : index
    %15 = vector.load %arg5[%c0_10, %c0_11] : memref<1x32xf32, #tpu.memory_space<vmem>>, vector<1x32xf32>
    %16 = vector.broadcast %15 : vector<1x32xf32> to vector<8x32xf32>
    %17 = arith.addf %14, %16 : vector<8x32xf32>
    %18 = arith.addf %1, %17 : vector<8x32xf32>
    %cst_12 = arith.constant dense<0.000000e+00> : vector<8xf32>
    %19 = vector.multi_reduction <add>, %18, %cst_12 [1] : vector<8x32xf32> to vector<8xf32>
    %20 = vector.shape_cast %19 : vector<8xf32> to vector<8x1xf32>
    %cst_13 = arith.constant 3.200000e+01 : f32
    %21 = vector.broadcast %cst_13 : f32 to vector<8x1xf32>
    %22 = arith.divf %20, %21 : vector<8x1xf32>
    %23 = vector.broadcast %22 : vector<8x1xf32> to vector<8x32xf32>
    %24 = arith.subf %18, %23 : vector<8x32xf32>
    %25 = arith.mulf %24, %24 : vector<8x32xf32>
    %cst_14 = arith.constant dense<0.000000e+00> : vector<8xf32>
    %26 = vector.multi_reduction <add>, %25, %cst_14 [1] : vector<8x32xf32> to vector<8xf32>
    %27 = vector.shape_cast %26 : vector<8xf32> to vector<8x1xf32>
    %cst_15 = arith.constant 3.200000e+01 : f32
    %28 = vector.broadcast %cst_15 : f32 to vector<8x1xf32>
    %29 = arith.divf %27, %28 : vector<8x1xf32>
    %30 = vector.broadcast %22 : vector<8x1xf32> to vector<8x32xf32>
    %31 = arith.subf %18, %30 : vector<8x32xf32>
    %cst_16 = arith.constant 9.99999974E-6 : f32
    %32 = vector.broadcast %cst_16 : f32 to vector<8x1xf32>
    %33 = arith.addf %29, %32 : vector<8x1xf32>
    %34 = math.rsqrt %33 : vector<8x1xf32>
    %35 = vector.broadcast %34 : vector<8x1xf32> to vector<8x32xf32>
    %36 = arith.mulf %31, %35 : vector<8x32xf32>
    %c0_17 = arith.constant 0 : index
    %c0_18 = arith.constant 0 : index
    %37 = vector.load %arg6[%c0_17, %c0_18] : memref<1x32xf32, #tpu.memory_space<vmem>>, vector<1x32xf32>
    %38 = vector.broadcast %37 : vector<1x32xf32> to vector<8x32xf32>
    %39 = arith.mulf %36, %38 : vector<8x32xf32>
    %c0_19 = arith.constant 0 : index
    %c0_20 = arith.constant 0 : index
    %40 = vector.load %arg7[%c0_19, %c0_20] : memref<1x32xf32, #tpu.memory_space<vmem>>, vector<1x32xf32>
    %41 = vector.broadcast %40 : vector<1x32xf32> to vector<8x32xf32>
    %42 = arith.addf %39, %41 : vector<8x32xf32>
    %c0_21 = arith.constant 0 : index
    %c0_22 = arith.constant 0 : index
    %c0_23 = arith.constant 0 : index
    %43 = vector.load %arg8[%c0_21, %c0_22, %c0_23] : memref<1x8x32xf32, #tpu.memory_space<vmem>>, vector<1x8x32xf32>
    %44 = vector.shape_cast %43 : vector<1x8x32xf32> to vector<8x32xf32>
    %45 = vector.shape_cast %42 : vector<8x32xf32> to vector<1x8x32xf32>
    tpu.vector_store %arg8[%c0_21, %c0_22, %c0_23], %45 {strides = array<i32>} : memref<1x8x32xf32, #tpu.memory_space<vmem>>, vector<1x8x32xf32>,
    return
  }
  func.func @transform_0(%arg0: i32) -> (i32, i32, i32) {
    %c0_i32 = arith.constant 0 : i32
    %c0_i32_0 = arith.constant 0 : i32
    %c0_i32_1 = arith.constant 0 : i32
    return %arg0, %c0_i32, %c0_i32_0 : i32, i32, i32
  }
  func.func @transform_1(%arg0: i32) -> (i32, i32) {
    %c0_i32 = arith.constant 0 : i32
    %c0_i32_0 = arith.constant 0 : i32
    %c0_i32_1 = arith.constant 0 : i32
    return %c0_i32, %c0_i32_0 : i32, i32
  }
  func.func @transform_2(%arg0: i32) -> (i32, i32) {
    %c0_i32 = arith.constant 0 : i32
    %c0_i32_0 = arith.constant 0 : i32
    %c0_i32_1 = arith.constant 0 : i32
    return %c0_i32, %c0_i32_0 : i32, i32
  }
  func.func @transform_3(%arg0: i32) -> (i32, i32) {
    %c0_i32 = arith.constant 0 : i32
    %c0_i32_0 = arith.constant 0 : i32
    %c0_i32_1 = arith.constant 0 : i32
    return %c0_i32, %c0_i32_0 : i32, i32
  }
  func.func @transform_4(%arg0: i32) -> (i32, i32) {
    %c0_i32 = arith.constant 0 : i32
    %c0_i32_0 = arith.constant 0 : i32
    %c0_i32_1 = arith.constant 0 : i32
    return %c0_i32, %c0_i32_0 : i32, i32
  }
  func.func @transform_5(%arg0: i32) -> (i32, i32) {
    %c0_i32 = arith.constant 0 : i32
    %c0_i32_0 = arith.constant 0 : i32
    %c0_i32_1 = arith.constant 0 : i32
    return %c0_i32, %c0_i32_0 : i32, i32
  }
  func.func @transform_6(%arg0: i32) -> (i32, i32) {
    %c0_i32 = arith.constant 0 : i32
    %c0_i32_0 = arith.constant 0 : i32
    %c0_i32_1 = arith.constant 0 : i32
    return %c0_i32, %c0_i32_0 : i32, i32
  }
  func.func @transform_7(%arg0: i32) -> (i32, i32, i32) {
    %c0_i32 = arith.constant 0 : i32
    %c0_i32_0 = arith.constant 0 : i32
    %c0_i32_1 = arith.constant 0 : i32
    return %arg0, %c0_i32, %c0_i32_0 : i32, i32, i32
  }
}

module attributes {stable_mosaic.version = 11 : i64} {
  func.func @_self_attn_block_kernel(%arg0: i32, %arg1: memref<1x8x32xf32, #tpu.memory_space<vmem>>, %arg2: memref<1x8x32xf32, #tpu.memory_space<vmem>>, %arg3: memref<32x64xf32, #tpu.memory_space<vmem>>, %arg4: memref<1x64xf32, #tpu.memory_space<vmem>>, %arg5: memref<32x32xf32, #tpu.memory_space<vmem>>, %arg6: memref<1x32xf32, #tpu.memory_space<vmem>>, %arg7: memref<32x32xf32, #tpu.memory_space<vmem>>, %arg8: memref<1x32xf32, #tpu.memory_space<vmem>>, %arg9: memref<1x32xf32, #tpu.memory_space<vmem>>, %arg10: memref<1x32xf32, #tpu.memory_space<vmem>>, %arg11: memref<1x8x32xf32, #tpu.memory_space<vmem>>) attributes {dimension_semantics = [#tpu.dimension_semantics<parallel>], iteration_bounds = array<i64: 2>, scalar_prefetch = 0 : i64, scratch_operands = 0 : i64, tpu.core_type = #tpu.core_type<tc>, window_params = [{transform_indices = @transform_0, window_bounds = array<i64: 1, 8, 32>}, {transform_indices = @transform_1, window_bounds = array<i64: 1, 8, 32>}, {pipeline_mode = #tpu.pipeline_mode<synchronous>, transform_indices = @transform_2, window_bounds = array<i64: 32, 64>}, {pipeline_mode = #tpu.pipeline_mode<synchronous>, transform_indices = @transform_3, window_bounds = array<i64: 1, 64>}, {pipeline_mode = #tpu.pipeline_mode<synchronous>, transform_indices = @transform_4, window_bounds = array<i64: 32, 32>}, {pipeline_mode = #tpu.pipeline_mode<synchronous>, transform_indices = @transform_5, window_bounds = array<i64: 1, 32>}, {pipeline_mode = #tpu.pipeline_mode<synchronous>, transform_indices = @transform_6, window_bounds = array<i64: 32, 32>}, {pipeline_mode = #tpu.pipeline_mode<synchronous>, transform_indices = @transform_7, window_bounds = array<i64: 1, 32>}, {pipeline_mode = #tpu.pipeline_mode<synchronous>, transform_indices = @transform_8, window_bounds = array<i64: 1, 32>}, {pipeline_mode = #tpu.pipeline_mode<synchronous>, transform_indices = @transform_9, window_bounds = array<i64: 1, 32>}, {transform_indices = @transform_10, window_bounds = array<i64: 1, 8, 32>}]} {
    %c0 = arith.constant 0 : index
    %c0_0 = arith.constant 0 : index
    %c0_1 = arith.constant 0 : index
    %0 = vector.load %arg1[%c0, %c0_0, %c0_1] : memref<1x8x32xf32, #tpu.memory_space<vmem>>, vector<1x8x32xf32>
    %1 = vector.shape_cast %0 : vector<1x8x32xf32> to vector<8x32xf32>
    %c0_2 = arith.constant 0 : index
    %c0_3 = arith.constant 0 : index
    %c0_4 = arith.constant 0 : index
    %2 = vector.load %arg2[%c0_2, %c0_3, %c0_4] : memref<1x8x32xf32, #tpu.memory_space<vmem>>, vector<1x8x32xf32>
    %3 = vector.shape_cast %2 : vector<1x8x32xf32> to vector<8x32xf32>
    %4 = arith.addf %1, %3 : vector<8x32xf32>
    %5 = arith.truncf %4 : vector<8x32xf32> to vector<8x32xbf16>
    %c0_5 = arith.constant 0 : index
    %c0_6 = arith.constant 0 : index
    %6 = vector.load %arg3[%c0_5, %c0_6] : memref<32x64xf32, #tpu.memory_space<vmem>>, vector<32x64xf32>
    %7 = arith.truncf %6 : vector<32x64xf32> to vector<32x64xbf16>
    %cst = arith.constant dense<0.000000e+00> : vector<8x64xf32>
    %8 = tpu.matmul %5, %7, %cst {dimension_numbers = #tpu.dot_dimension_numbers<[1], [0], [0], [1], [0, 0, 1, 1], [], []>} : vector<8x32xbf16>, vector<32x64xbf16>, vector<8x64xf32> -> vector<8x64xf32>
    %c0_7 = arith.constant 0 : index
    %c0_8 = arith.constant 0 : index
    %9 = vector.load %arg4[%c0_7, %c0_8] : memref<1x64xf32, #tpu.memory_space<vmem>>, vector<1x64xf32>
    %10 = vector.broadcast %9 : vector<1x64xf32> to vector<8x64xf32>
    %11 = arith.addf %8, %10 : vector<8x64xf32>
    %12 = arith.truncf %1 : vector<8x32xf32> to vector<8x32xbf16>
    %c0_9 = arith.constant 0 : index
    %c0_10 = arith.constant 0 : index
    %13 = vector.load %arg5[%c0_9, %c0_10] : memref<32x32xf32, #tpu.memory_space<vmem>>, vector<32x32xf32>
    %14 = arith.truncf %13 : vector<32x32xf32> to vector<32x32xbf16>
    %cst_11 = arith.constant dense<0.000000e+00> : vector<8x32xf32>
    %15 = tpu.matmul %12, %14, %cst_11 {dimension_numbers = #tpu.dot_dimension_numbers<[1], [0], [0], [1], [0, 0, 1, 1], [], []>} : vector<8x32xbf16>, vector<32x32xbf16>, vector<8x32xf32> -> vector<8x32xf32>
    %c0_12 = arith.constant 0 : index
    %c0_13 = arith.constant 0 : index
    %16 = vector.load %arg6[%c0_12, %c0_13] : memref<1x32xf32, #tpu.memory_space<vmem>>, vector<1x32xf32>
    %17 = vector.broadcast %16 : vector<1x32xf32> to vector<8x32xf32>
    %18 = arith.addf %15, %17 : vector<8x32xf32>
    %cst_14 = arith.constant 0.000000e+00 : f32
    %19 = vector.broadcast %cst_14 : f32 to vector<8x32xf32>
    %20 = vector.extract_strided_slice %11 {offsets = [0, 0], sizes = [8, 8], strides = [1, 1]} : vector<8x64xf32> to vector<8x8xf32>
    %21 = vector.extract_strided_slice %11 {offsets = [0, 32], sizes = [8, 8], strides = [1, 1]} : vector<8x64xf32> to vector<8x8xf32>
    %22 = vector.extract_strided_slice %18 {offsets = [0, 0], sizes = [8, 8], strides = [1, 1]} : vector<8x32xf32> to vector<8x8xf32>
    %cst_15 = arith.constant dense<0.000000e+00> : vector<8x8xf32>
    %23 = tpu.matmul %20, %21, %cst_15 {dimension_numbers = #tpu.dot_dimension_numbers<[1], [1], [0], [0], [0, 0, 1, 0], [], []>} : vector<8x8xf32>, vector<8x8xf32>, vector<8x8xf32> -> vector<8x8xf32>
    %cst_16 = arith.constant 0.353553385 : f32
    %24 = vector.broadcast %cst_16 : f32 to vector<8x8xf32>
    %25 = arith.mulf %23, %24 : vector<8x8xf32>
    %cst_17 = arith.constant dense<0xFF800000> : vector<8xf32>
    %26 = vector.multi_reduction <maximumf>, %25, %cst_17 [1] : vector<8x8xf32> to vector<8xf32>
    %27 = vector.shape_cast %26 : vector<8xf32> to vector<8x1xf32>
    %28 = vector.broadcast %27 : vector<8x1xf32> to vector<8x8xf32>
    %29 = arith.subf %25, %28 : vector<8x8xf32>
    %30 = math.exp %29 : vector<8x8xf32>
    %cst_18 = arith.constant dense<0.000000e+00> : vector<8xf32>
    %31 = vector.multi_reduction <add>, %30, %cst_18 [1] : vector<8x8xf32> to vector<8xf32>
    %32 = vector.shape_cast %31 : vector<8xf32> to vector<8x1xf32>
    %33 = tpu.reciprocal %32 {approx = true} : vector<8x1xf32> -> vector<8x1xf32>
    %34 = vector.broadcast %33 : vector<8x1xf32> to vector<8x8xf32>
    %35 = arith.mulf %30, %34 : vector<8x8xf32>
    %cst_19 = arith.constant dense<0.000000e+00> : vector<8x8xf32>
    %36 = tpu.matmul %35, %22, %cst_19 {dimension_numbers = #tpu.dot_dimension_numbers<[1], [0], [0], [1], [0, 0, 1, 1], [], []>} : vector<8x8xf32>, vector<8x8xf32>, vector<8x8xf32> -> vector<8x8xf32>
    %37 = arith.truncf %36 : vector<8x8xf32> to vector<8x8xbf16>
    %c0_20 = arith.constant 0 : index
    %c0_21 = arith.constant 0 : index
    %38 = vector.load %arg7[%c0_20, %c0_21] : memref<32x32xf32, #tpu.memory_space<vmem>>, vector<8x32xf32>
    %39 = arith.truncf %38 : vector<8x32xf32> to vector<8x32xbf16>
    %cst_22 = arith.constant dense<0.000000e+00> : vector<8x32xf32>
    %40 = tpu.matmul %37, %39, %cst_22 {dimension_numbers = #tpu.dot_dimension_numbers<[1], [0], [0], [1], [0, 0, 1, 1], [], []>} : vector<8x8xbf16>, vector<8x32xbf16>, vector<8x32xf32> -> vector<8x32xf32>
    %41 = arith.addf %19, %40 : vector<8x32xf32>
    %42 = vector.extract_strided_slice %11 {offsets = [0, 8], sizes = [8, 8], strides = [1, 1]} : vector<8x64xf32> to vector<8x8xf32>
    %43 = vector.extract_strided_slice %11 {offsets = [0, 40], sizes = [8, 8], strides = [1, 1]} : vector<8x64xf32> to vector<8x8xf32>
    %44 = vector.extract_strided_slice %18 {offsets = [0, 8], sizes = [8, 8], strides = [1, 1]} : vector<8x32xf32> to vector<8x8xf32>
    %cst_23 = arith.constant dense<0.000000e+00> : vector<8x8xf32>
    %45 = tpu.matmul %42, %43, %cst_23 {dimension_numbers = #tpu.dot_dimension_numbers<[1], [1], [0], [0], [0, 0, 1, 0], [], []>} : vector<8x8xf32>, vector<8x8xf32>, vector<8x8xf32> -> vector<8x8xf32>
    %cst_24 = arith.constant 0.353553385 : f32
    %46 = vector.broadcast %cst_24 : f32 to vector<8x8xf32>
    %47 = arith.mulf %45, %46 : vector<8x8xf32>
    %cst_25 = arith.constant dense<0xFF800000> : vector<8xf32>
    %48 = vector.multi_reduction <maximumf>, %47, %cst_25 [1] : vector<8x8xf32> to vector<8xf32>
    %49 = vector.shape_cast %48 : vector<8xf32> to vector<8x1xf32>
    %50 = vector.broadcast %49 : vector<8x1xf32> to vector<8x8xf32>
    %51 = arith.subf %47, %50 : vector<8x8xf32>
    %52 = math.exp %51 : vector<8x8xf32>
    %cst_26 = arith.constant dense<0.000000e+00> : vector<8xf32>
    %53 = vector.multi_reduction <add>, %52, %cst_26 [1] : vector<8x8xf32> to vector<8xf32>
    %54 = vector.shape_cast %53 : vector<8xf32> to vector<8x1xf32>
    %55 = tpu.reciprocal %54 {approx = true} : vector<8x1xf32> -> vector<8x1xf32>
    %56 = vector.broadcast %55 : vector<8x1xf32> to vector<8x8xf32>
    %57 = arith.mulf %52, %56 : vector<8x8xf32>
    %cst_27 = arith.constant dense<0.000000e+00> : vector<8x8xf32>
    %58 = tpu.matmul %57, %44, %cst_27 {dimension_numbers = #tpu.dot_dimension_numbers<[1], [0], [0], [1], [0, 0, 1, 1], [], []>} : vector<8x8xf32>, vector<8x8xf32>, vector<8x8xf32> -> vector<8x8xf32>
    %59 = arith.truncf %58 : vector<8x8xf32> to vector<8x8xbf16>
    %c8 = arith.constant 8 : index
    %c0_28 = arith.constant 0 : index
    %60 = vector.load %arg7[%c8, %c0_28] : memref<32x32xf32, #tpu.memory_space<vmem>>, vector<8x32xf32>
    %61 = arith.truncf %60 : vector<8x32xf32> to vector<8x32xbf16>
    %cst_29 = arith.constant dense<0.000000e+00> : vector<8x32xf32>
    %62 = tpu.matmul %59, %61, %cst_29 {dimension_numbers = #tpu.dot_dimension_numbers<[1], [0], [0], [1], [0, 0, 1, 1], [], []>} : vector<8x8xbf16>, vector<8x32xbf16>, vector<8x32xf32> -> vector<8x32xf32>
    %63 = arith.addf %41, %62 : vector<8x32xf32>
    %64 = vector.extract_strided_slice %11 {offsets = [0, 16], sizes = [8, 8], strides = [1, 1]} : vector<8x64xf32> to vector<8x8xf32>
    %65 = vector.extract_strided_slice %11 {offsets = [0, 48], sizes = [8, 8], strides = [1, 1]} : vector<8x64xf32> to vector<8x8xf32>
    %66 = vector.extract_strided_slice %18 {offsets = [0, 16], sizes = [8, 8], strides = [1, 1]} : vector<8x32xf32> to vector<8x8xf32>
    %cst_30 = arith.constant dense<0.000000e+00> : vector<8x8xf32>
    %67 = tpu.matmul %64, %65, %cst_30 {dimension_numbers = #tpu.dot_dimension_numbers<[1], [1], [0], [0], [0, 0, 1, 0], [], []>} : vector<8x8xf32>, vector<8x8xf32>, vector<8x8xf32> -> vector<8x8xf32>
    %cst_31 = arith.constant 0.353553385 : f32
    %68 = vector.broadcast %cst_31 : f32 to vector<8x8xf32>
    %69 = arith.mulf %67, %68 : vector<8x8xf32>
    %cst_32 = arith.constant dense<0xFF800000> : vector<8xf32>
    %70 = vector.multi_reduction <maximumf>, %69, %cst_32 [1] : vector<8x8xf32> to vector<8xf32>
    %71 = vector.shape_cast %70 : vector<8xf32> to vector<8x1xf32>
    %72 = vector.broadcast %71 : vector<8x1xf32> to vector<8x8xf32>
    %73 = arith.subf %69, %72 : vector<8x8xf32>
    %74 = math.exp %73 : vector<8x8xf32>
    %cst_33 = arith.constant dense<0.000000e+00> : vector<8xf32>
    %75 = vector.multi_reduction <add>, %74, %cst_33 [1] : vector<8x8xf32> to vector<8xf32>
    %76 = vector.shape_cast %75 : vector<8xf32> to vector<8x1xf32>
    %77 = tpu.reciprocal %76 {approx = true} : vector<8x1xf32> -> vector<8x1xf32>
    %78 = vector.broadcast %77 : vector<8x1xf32> to vector<8x8xf32>
    %79 = arith.mulf %74, %78 : vector<8x8xf32>
    %cst_34 = arith.constant dense<0.000000e+00> : vector<8x8xf32>
    %80 = tpu.matmul %79, %66, %cst_34 {dimension_numbers = #tpu.dot_dimension_numbers<[1], [0], [0], [1], [0, 0, 1, 1], [], []>} : vector<8x8xf32>, vector<8x8xf32>, vector<8x8xf32> -> vector<8x8xf32>
    %81 = arith.truncf %80 : vector<8x8xf32> to vector<8x8xbf16>
    %c16 = arith.constant 16 : index
    %c0_35 = arith.constant 0 : index
    %82 = vector.load %arg7[%c16, %c0_35] : memref<32x32xf32, #tpu.memory_space<vmem>>, vector<8x32xf32>
    %83 = arith.truncf %82 : vector<8x32xf32> to vector<8x32xbf16>
    %cst_36 = arith.constant dense<0.000000e+00> : vector<8x32xf32>
    %84 = tpu.matmul %81, %83, %cst_36 {dimension_numbers = #tpu.dot_dimension_numbers<[1], [0], [0], [1], [0, 0, 1, 1], [], []>} : vector<8x8xbf16>, vector<8x32xbf16>, vector<8x32xf32> -> vector<8x32xf32>
    %85 = arith.addf %63, %84 : vector<8x32xf32>
    %86 = vector.extract_strided_slice %11 {offsets = [0, 24], sizes = [8, 8], strides = [1, 1]} : vector<8x64xf32> to vector<8x8xf32>
    %87 = vector.extract_strided_slice %11 {offsets = [0, 56], sizes = [8, 8], strides = [1, 1]} : vector<8x64xf32> to vector<8x8xf32>
    %88 = vector.extract_strided_slice %18 {offsets = [0, 24], sizes = [8, 8], strides = [1, 1]} : vector<8x32xf32> to vector<8x8xf32>
    %cst_37 = arith.constant dense<0.000000e+00> : vector<8x8xf32>
    %89 = tpu.matmul %86, %87, %cst_37 {dimension_numbers = #tpu.dot_dimension_numbers<[1], [1], [0], [0], [0, 0, 1, 0], [], []>} : vector<8x8xf32>, vector<8x8xf32>, vector<8x8xf32> -> vector<8x8xf32>
    %cst_38 = arith.constant 0.353553385 : f32
    %90 = vector.broadcast %cst_38 : f32 to vector<8x8xf32>
    %91 = arith.mulf %89, %90 : vector<8x8xf32>
    %cst_39 = arith.constant dense<0xFF800000> : vector<8xf32>
    %92 = vector.multi_reduction <maximumf>, %91, %cst_39 [1] : vector<8x8xf32> to vector<8xf32>
    %93 = vector.shape_cast %92 : vector<8xf32> to vector<8x1xf32>
    %94 = vector.broadcast %93 : vector<8x1xf32> to vector<8x8xf32>
    %95 = arith.subf %91, %94 : vector<8x8xf32>
    %96 = math.exp %95 : vector<8x8xf32>
    %cst_40 = arith.constant dense<0.000000e+00> : vector<8xf32>
    %97 = vector.multi_reduction <add>, %96, %cst_40 [1] : vector<8x8xf32> to vector<8xf32>
    %98 = vector.shape_cast %97 : vector<8xf32> to vector<8x1xf32>
    %99 = tpu.reciprocal %98 {approx = true} : vector<8x1xf32> -> vector<8x1xf32>
    %100 = vector.broadcast %99 : vector<8x1xf32> to vector<8x8xf32>
    %101 = arith.mulf %96, %100 : vector<8x8xf32>
    %cst_41 = arith.constant dense<0.000000e+00> : vector<8x8xf32>
    %102 = tpu.matmul %101, %88, %cst_41 {dimension_numbers = #tpu.dot_dimension_numbers<[1], [0], [0], [1], [0, 0, 1, 1], [], []>} : vector<8x8xf32>, vector<8x8xf32>, vector<8x8xf32> -> vector<8x8xf32>
    %103 = arith.truncf %102 : vector<8x8xf32> to vector<8x8xbf16>
    %c24 = arith.constant 24 : index
    %c0_42 = arith.constant 0 : index
    %104 = vector.load %arg7[%c24, %c0_42] : memref<32x32xf32, #tpu.memory_space<vmem>>, vector<8x32xf32>
    %105 = arith.truncf %104 : vector<8x32xf32> to vector<8x32xbf16>
    %cst_43 = arith.constant dense<0.000000e+00> : vector<8x32xf32>
    %106 = tpu.matmul %103, %105, %cst_43 {dimension_numbers = #tpu.dot_dimension_numbers<[1], [0], [0], [1], [0, 0, 1, 1], [], []>} : vector<8x8xbf16>, vector<8x32xbf16>, vector<8x32xf32> -> vector<8x32xf32>
    %107 = arith.addf %85, %106 : vector<8x32xf32>
    %108 = arith.addf %1, %107 : vector<8x32xf32>
    %c0_44 = arith.constant 0 : index
    %c0_45 = arith.constant 0 : index
    %109 = vector.load %arg8[%c0_44, %c0_45] : memref<1x32xf32, #tpu.memory_space<vmem>>, vector<1x32xf32>
    %110 = vector.broadcast %109 : vector<1x32xf32> to vector<8x32xf32>
    %111 = arith.addf %108, %110 : vector<8x32xf32>
    %cst_46 = arith.constant dense<0.000000e+00> : vector<8xf32>
    %112 = vector.multi_reduction <add>, %111, %cst_46 [1] : vector<8x32xf32> to vector<8xf32>
    %113 = vector.shape_cast %112 : vector<8xf32> to vector<8x1xf32>
    %cst_47 = arith.constant 3.200000e+01 : f32
    %114 = vector.broadcast %cst_47 : f32 to vector<8x1xf32>
    %115 = arith.divf %113, %114 : vector<8x1xf32>
    %116 = vector.broadcast %115 : vector<8x1xf32> to vector<8x32xf32>
    %117 = arith.subf %111, %116 : vector<8x32xf32>
    %118 = arith.mulf %117, %117 : vector<8x32xf32>
    %cst_48 = arith.constant dense<0.000000e+00> : vector<8xf32>
    %119 = vector.multi_reduction <add>, %118, %cst_48 [1] : vector<8x32xf32> to vector<8xf32>
    %120 = vector.shape_cast %119 : vector<8xf32> to vector<8x1xf32>
    %cst_49 = arith.constant 3.200000e+01 : f32
    %121 = vector.broadcast %cst_49 : f32 to vector<8x1xf32>
    %122 = arith.divf %120, %121 : vector<8x1xf32>
    %123 = vector.broadcast %115 : vector<8x1xf32> to vector<8x32xf32>
    %124 = arith.subf %111, %123 : vector<8x32xf32>
    %cst_50 = arith.constant 9.99999974E-6 : f32
    %125 = vector.broadcast %cst_50 : f32 to vector<8x1xf32>
    %126 = arith.addf %122, %125 : vector<8x1xf32>
    %127 = math.rsqrt %126 : vector<8x1xf32>
    %128 = vector.broadcast %127 : vector<8x1xf32> to vector<8x32xf32>
    %129 = arith.mulf %124, %128 : vector<8x32xf32>
    %c0_51 = arith.constant 0 : index
    %c0_52 = arith.constant 0 : index
    %130 = vector.load %arg9[%c0_51, %c0_52] : memref<1x32xf32, #tpu.memory_space<vmem>>, vector<1x32xf32>
    %131 = vector.broadcast %130 : vector<1x32xf32> to vector<8x32xf32>
    %132 = arith.mulf %129, %131 : vector<8x32xf32>
    %c0_53 = arith.constant 0 : index
    %c0_54 = arith.constant 0 : index
    %133 = vector.load %arg10[%c0_53, %c0_54] : memref<1x32xf32, #tpu.memory_space<vmem>>, vector<1x32xf32>
    %134 = vector.broadcast %133 : vector<1x32xf32> to vector<8x32xf32>
    %135 = arith.addf %132, %134 : vector<8x32xf32>
    %c0_55 = arith.constant 0 : index
    %c0_56 = arith.constant 0 : index
    %c0_57 = arith.constant 0 : index
    %136 = vector.load %arg11[%c0_55, %c0_56, %c0_57] : memref<1x8x32xf32, #tpu.memory_space<vmem>>, vector<1x8x32xf32>
    %137 = vector.shape_cast %136 : vector<1x8x32xf32> to vector<8x32xf32>
    %138 = vector.shape_cast %135 : vector<8x32xf32> to vector<1x8x32xf32>
    tpu.vector_store %arg11[%c0_55, %c0_56, %c0_57], %138 {strides = array<i32>} : memref<1x8x32xf32, #tpu.memory_space<vmem>>, vector<1x8x32xf32>,
    return
  }
  func.func @transform_0(%arg0: i32) -> (i32, i32, i32) {
    %c0_i32 = arith.constant 0 : i32
    %c0_i32_0 = arith.constant 0 : i32
    %c0_i32_1 = arith.constant 0 : i32
    return %arg0, %c0_i32, %c0_i32_0 : i32, i32, i32
  }
  func.func @transform_1(%arg0: i32) -> (i32, i32, i32) {
    %c0_i32 = arith.constant 0 : i32
    %c0_i32_0 = arith.constant 0 : i32
    %c0_i32_1 = arith.constant 0 : i32
    return %arg0, %c0_i32, %c0_i32_0 : i32, i32, i32
  }
  func.func @transform_2(%arg0: i32) -> (i32, i32) {
    %c0_i32 = arith.constant 0 : i32
    %c0_i32_0 = arith.constant 0 : i32
    %c0_i32_1 = arith.constant 0 : i32
    return %c0_i32, %c0_i32_0 : i32, i32
  }
  func.func @transform_3(%arg0: i32) -> (i32, i32) {
    %c0_i32 = arith.constant 0 : i32
    %c0_i32_0 = arith.constant 0 : i32
    %c0_i32_1 = arith.constant 0 : i32
    return %c0_i32, %c0_i32_0 : i32, i32
  }
  func.func @transform_4(%arg0: i32) -> (i32, i32) {
    %c0_i32 = arith.constant 0 : i32
    %c0_i32_0 = arith.constant 0 : i32
    %c0_i32_1 = arith.constant 0 : i32
    return %c0_i32, %c0_i32_0 : i32, i32
  }
  func.func @transform_5(%arg0: i32) -> (i32, i32) {
    %c0_i32 = arith.constant 0 : i32
    %c0_i32_0 = arith.constant 0 : i32
    %c0_i32_1 = arith.constant 0 : i32
    return %c0_i32, %c0_i32_0 : i32, i32
  }
  func.func @transform_6(%arg0: i32) -> (i32, i32) {
    %c0_i32 = arith.constant 0 : i32
    %c0_i32_0 = arith.constant 0 : i32
    %c0_i32_1 = arith.constant 0 : i32
    return %c0_i32, %c0_i32_0 : i32, i32
  }
  func.func @transform_7(%arg0: i32) -> (i32, i32) {
    %c0_i32 = arith.constant 0 : i32
    %c0_i32_0 = arith.constant 0 : i32
    %c0_i32_1 = arith.constant 0 : i32
    return %c0_i32, %c0_i32_0 : i32, i32
  }
  func.func @transform_8(%arg0: i32) -> (i32, i32) {
    %c0_i32 = arith.constant 0 : i32
    %c0_i32_0 = arith.constant 0 : i32
    %c0_i32_1 = arith.constant 0 : i32
    return %c0_i32, %c0_i32_0 : i32, i32
  }
  func.func @transform_9(%arg0: i32) -> (i32, i32) {
    %c0_i32 = arith.constant 0 : i32
    %c0_i32_0 = arith.constant 0 : i32
    %c0_i32_1 = arith.constant 0 : i32
    return %c0_i32, %c0_i32_0 : i32, i32
  }
  func.func @transform_10(%arg0: i32) -> (i32, i32, i32) {
    %c0_i32 = arith.constant 0 : i32
    %c0_i32_0 = arith.constant 0 : i32
    %c0_i32_1 = arith.constant 0 : i32
    return %arg0, %c0_i32, %c0_i32_0 : i32, i32, i32
  }
}

module attributes {stable_mosaic.version = 11 : i64} {
  func.func @_ffn_kernel(%arg0: i32, %arg1: memref<1x8x32xf32, #tpu.memory_space<vmem>>, %arg2: memref<32x64xf32, #tpu.memory_space<vmem>>, %arg3: memref<1x64xf32, #tpu.memory_space<vmem>>, %arg4: memref<64x32xf32, #tpu.memory_space<vmem>>, %arg5: memref<1x32xf32, #tpu.memory_space<vmem>>, %arg6: memref<1x32xf32, #tpu.memory_space<vmem>>, %arg7: memref<1x32xf32, #tpu.memory_space<vmem>>, %arg8: memref<1x8x32xf32, #tpu.memory_space<vmem>>) attributes {dimension_semantics = [#tpu.dimension_semantics<parallel>], iteration_bounds = array<i64: 2>, scalar_prefetch = 0 : i64, scratch_operands = 0 : i64, tpu.core_type = #tpu.core_type<tc>, window_params = [{transform_indices = @transform_0, window_bounds = array<i64: 1, 8, 32>}, {pipeline_mode = #tpu.pipeline_mode<synchronous>, transform_indices = @transform_1, window_bounds = array<i64: 32, 64>}, {pipeline_mode = #tpu.pipeline_mode<synchronous>, transform_indices = @transform_2, window_bounds = array<i64: 1, 64>}, {pipeline_mode = #tpu.pipeline_mode<synchronous>, transform_indices = @transform_3, window_bounds = array<i64: 64, 32>}, {pipeline_mode = #tpu.pipeline_mode<synchronous>, transform_indices = @transform_4, window_bounds = array<i64: 1, 32>}, {pipeline_mode = #tpu.pipeline_mode<synchronous>, transform_indices = @transform_5, window_bounds = array<i64: 1, 32>}, {pipeline_mode = #tpu.pipeline_mode<synchronous>, transform_indices = @transform_6, window_bounds = array<i64: 1, 32>}, {transform_indices = @transform_7, window_bounds = array<i64: 1, 8, 32>}]} {
    %c0 = arith.constant 0 : index
    %c0_0 = arith.constant 0 : index
    %c0_1 = arith.constant 0 : index
    %0 = vector.load %arg1[%c0, %c0_0, %c0_1] : memref<1x8x32xf32, #tpu.memory_space<vmem>>, vector<1x8x32xf32>
    %1 = vector.shape_cast %0 : vector<1x8x32xf32> to vector<8x32xf32>
    %2 = arith.truncf %1 : vector<8x32xf32> to vector<8x32xbf16>
    %c0_2 = arith.constant 0 : index
    %c0_3 = arith.constant 0 : index
    %3 = vector.load %arg2[%c0_2, %c0_3] : memref<32x64xf32, #tpu.memory_space<vmem>>, vector<32x64xf32>
    %4 = arith.truncf %3 : vector<32x64xf32> to vector<32x64xbf16>
    %cst = arith.constant dense<0.000000e+00> : vector<8x64xf32>
    %5 = tpu.matmul %2, %4, %cst {dimension_numbers = #tpu.dot_dimension_numbers<[1], [0], [0], [1], [0, 0, 1, 1], [], []>} : vector<8x32xbf16>, vector<32x64xbf16>, vector<8x64xf32> -> vector<8x64xf32>
    %c0_4 = arith.constant 0 : index
    %c0_5 = arith.constant 0 : index
    %6 = vector.load %arg3[%c0_4, %c0_5] : memref<1x64xf32, #tpu.memory_space<vmem>>, vector<1x64xf32>
    %7 = vector.broadcast %6 : vector<1x64xf32> to vector<8x64xf32>
    %8 = arith.addf %5, %7 : vector<8x64xf32>
    %cst_6 = arith.constant 0.000000e+00 : f32
    %9 = vector.broadcast %cst_6 : f32 to vector<8x64xf32>
    %10 = arith.maximumf %8, %9 : vector<8x64xf32>
    %11 = arith.truncf %10 : vector<8x64xf32> to vector<8x64xbf16>
    %c0_7 = arith.constant 0 : index
    %c0_8 = arith.constant 0 : index
    %12 = vector.load %arg4[%c0_7, %c0_8] : memref<64x32xf32, #tpu.memory_space<vmem>>, vector<64x32xf32>
    %13 = arith.truncf %12 : vector<64x32xf32> to vector<64x32xbf16>
    %cst_9 = arith.constant dense<0.000000e+00> : vector<8x32xf32>
    %14 = tpu.matmul %11, %13, %cst_9 {dimension_numbers = #tpu.dot_dimension_numbers<[1], [0], [0], [1], [0, 0, 1, 1], [], []>} : vector<8x64xbf16>, vector<64x32xbf16>, vector<8x32xf32> -> vector<8x32xf32>
    %c0_10 = arith.constant 0 : index
    %c0_11 = arith.constant 0 : index
    %15 = vector.load %arg5[%c0_10, %c0_11] : memref<1x32xf32, #tpu.memory_space<vmem>>, vector<1x32xf32>
    %16 = vector.broadcast %15 : vector<1x32xf32> to vector<8x32xf32>
    %17 = arith.addf %14, %16 : vector<8x32xf32>
    %18 = arith.addf %1, %17 : vector<8x32xf32>
    %cst_12 = arith.constant dense<0.000000e+00> : vector<8xf32>
    %19 = vector.multi_reduction <add>, %18, %cst_12 [1] : vector<8x32xf32> to vector<8xf32>
    %20 = vector.shape_cast %19 : vector<8xf32> to vector<8x1xf32>
    %cst_13 = arith.constant 3.200000e+01 : f32
    %21 = vector.broadcast %cst_13 : f32 to vector<8x1xf32>
    %22 = arith.divf %20, %21 : vector<8x1xf32>
    %23 = vector.broadcast %22 : vector<8x1xf32> to vector<8x32xf32>
    %24 = arith.subf %18, %23 : vector<8x32xf32>
    %25 = arith.mulf %24, %24 : vector<8x32xf32>
    %cst_14 = arith.constant dense<0.000000e+00> : vector<8xf32>
    %26 = vector.multi_reduction <add>, %25, %cst_14 [1] : vector<8x32xf32> to vector<8xf32>
    %27 = vector.shape_cast %26 : vector<8xf32> to vector<8x1xf32>
    %cst_15 = arith.constant 3.200000e+01 : f32
    %28 = vector.broadcast %cst_15 : f32 to vector<8x1xf32>
    %29 = arith.divf %27, %28 : vector<8x1xf32>
    %30 = vector.broadcast %22 : vector<8x1xf32> to vector<8x32xf32>
    %31 = arith.subf %18, %30 : vector<8x32xf32>
    %cst_16 = arith.constant 9.99999974E-6 : f32
    %32 = vector.broadcast %cst_16 : f32 to vector<8x1xf32>
    %33 = arith.addf %29, %32 : vector<8x1xf32>
    %34 = math.rsqrt %33 : vector<8x1xf32>
    %35 = vector.broadcast %34 : vector<8x1xf32> to vector<8x32xf32>
    %36 = arith.mulf %31, %35 : vector<8x32xf32>
    %c0_17 = arith.constant 0 : index
    %c0_18 = arith.constant 0 : index
    %37 = vector.load %arg6[%c0_17, %c0_18] : memref<1x32xf32, #tpu.memory_space<vmem>>, vector<1x32xf32>
    %38 = vector.broadcast %37 : vector<1x32xf32> to vector<8x32xf32>
    %39 = arith.mulf %36, %38 : vector<8x32xf32>
    %c0_19 = arith.constant 0 : index
    %c0_20 = arith.constant 0 : index
    %40 = vector.load %arg7[%c0_19, %c0_20] : memref<1x32xf32, #tpu.memory_space<vmem>>, vector<1x32xf32>
    %41 = vector.broadcast %40 : vector<1x32xf32> to vector<8x32xf32>
    %42 = arith.addf %39, %41 : vector<8x32xf32>
    %c0_21 = arith.constant 0 : index
    %c0_22 = arith.constant 0 : index
    %c0_23 = arith.constant 0 : index
    %43 = vector.load %arg8[%c0_21, %c0_22, %c0_23] : memref<1x8x32xf32, #tpu.memory_space<vmem>>, vector<1x8x32xf32>
    %44 = vector.shape_cast %43 : vector<1x8x32xf32> to vector<8x32xf32>
    %45 = vector.shape_cast %42 : vector<8x32xf32> to vector<1x8x32xf32>
    tpu.vector_store %arg8[%c0_21, %c0_22, %c0_23], %45 {strides = array<i32>} : memref<1x8x32xf32, #tpu.memory_space<vmem>>, vector<1x8x32xf32>,
    return
  }
  func.func @transform_0(%arg0: i32) -> (i32, i32, i32) {
    %c0_i32 = arith.constant 0 : i32
    %c0_i32_0 = arith.constant 0 : i32
    %c0_i32_1 = arith.constant 0 : i32
    return %arg0, %c0_i32, %c0_i32_0 : i32, i32, i32
  }
  func.func @transform_1(%arg0: i32) -> (i32, i32) {
    %c0_i32 = arith.constant 0 : i32
    %c0_i32_0 = arith.constant 0 : i32
    %c0_i32_1 = arith.constant 0 : i32
    return %c0_i32, %c0_i32_0 : i32, i32
  }
  func.func @transform_2(%arg0: i32) -> (i32, i32) {
    %c0_i32 = arith.constant 0 : i32
    %c0_i32_0 = arith.constant 0 : i32
    %c0_i32_1 = arith.constant 0 : i32
    return %c0_i32, %c0_i32_0 : i32, i32
  }
  func.func @transform_3(%arg0: i32) -> (i32, i32) {
    %c0_i32 = arith.constant 0 : i32
    %c0_i32_0 = arith.constant 0 : i32
    %c0_i32_1 = arith.constant 0 : i32
    return %c0_i32, %c0_i32_0 : i32, i32
  }
  func.func @transform_4(%arg0: i32) -> (i32, i32) {
    %c0_i32 = arith.constant 0 : i32
    %c0_i32_0 = arith.constant 0 : i32
    %c0_i32_1 = arith.constant 0 : i32
    return %c0_i32, %c0_i32_0 : i32, i32
  }
  func.func @transform_5(%arg0: i32) -> (i32, i32) {
    %c0_i32 = arith.constant 0 : i32
    %c0_i32_0 = arith.constant 0 : i32
    %c0_i32_1 = arith.constant 0 : i32
    return %c0_i32, %c0_i32_0 : i32, i32
  }
  func.func @transform_6(%arg0: i32) -> (i32, i32) {
    %c0_i32 = arith.constant 0 : i32
    %c0_i32_0 = arith.constant 0 : i32
    %c0_i32_1 = arith.constant 0 : i32
    return %c0_i32, %c0_i32_0 : i32, i32
  }
  func.func @transform_7(%arg0: i32) -> (i32, i32, i32) {
    %c0_i32 = arith.constant 0 : i32
    %c0_i32_0 = arith.constant 0 : i32
    %c0_i32_1 = arith.constant 0 : i32
    return %arg0, %c0_i32, %c0_i32_0 : i32, i32, i32
  }
}

</mosaic_0001>

<llo_original>
// kernel: deformable_transformer_decoder_forward.11
$region0: #{deformable_transformer_decoder_forward.11}
  #allocation0 [shape = 'u32[]', space=smem, size = 0x4, offset = 0x4, fixed_abs, tag = 'smem constant byte address 0x4 - core index']
  #allocation1 [shape = 'u32[144,128]{1,0:T(1,128)}', space=vmem, size = 0x12000, scoped, tag = 'internal scratch']
  %s0 = inlined_call_operand.vmem [shape: f32[2,8,32], index: 0, kind: input, shape index: {}]
  %s1 = inlined_call_operand.vmem [shape: f32[2,8,32], index: 1, kind: input, shape index: {}]
  %s2 = inlined_call_operand.vmem [shape: f32[32,96], index: 2, kind: input, shape index: {}]
  %s3 = inlined_call_operand.vmem [shape: f32[1,96], index: 3, kind: input, shape index: {}]
  %s4 = inlined_call_operand.vmem [shape: f32[2,8,64], index: 4, kind: output, shape index: {0}]
  %s5 = inlined_call_operand.vmem [shape: f32[2,8,32], index: 5, kind: output, shape index: {1}]
  %6 = xla_tuple %s4, %s5
  %s7 = sld [smem:[#allocation0]]
  $region57: #{deformable_transformer_decoder_forward.11} parent=0
    _
  %s9 = ssub.s32 1, %s7
  %s10 = scalar_select 0, %s9, %s7
  loop: start=0, step=1, limit=4
  $region2: #{deformable_transformer_decoder_forward.11} parent=0 // loop_pre_header
    _
  $region3: #{deformable_transformer_decoder_forward.11} parent=0 // loop_header
    %s12 = sphi 0, %s16
    %p13 = scmp.ge.s32.totalorder %s12, 4
    %s22 = sphi 0, %s24
    %s25 = sphi 0, %s22
    %s26 = sphi 0, %s25
    %s42 = sphi 0, %s26
    %s48 = sphi 0, %s50
    %s51 = sphi 0, %s48
    %s52 = sphi 0, %s51
    %s68 = sphi 0, %s52
    %s72 = sphi 0, %s72
    %s74 = sphi 0, %s72
    %s75 = sphi 0, %s74
    %s89 = sphi 0, %s75
    %s93 = sphi 0, %s93
    %s95 = sphi 0, %s93
    %s96 = sphi 0, %s95
    %s110 = sphi 0, %s96
    %s116 = sphi 0, %s118
    %s119 = sphi 0, %s116
    %s120 = sphi 0, %s119
    %s136 = sphi 0, %s120
    %s142 = sphi 0, %s144
    %s145 = sphi 0, %s142
    %s146 = sphi 0, %s145
    %s162 = sphi 0, %s146
  $region4: #{deformable_transformer_decoder_forward.11} parent=0 // loop_header_branch
    %15 = sbr.rel (%p13) target = $region8
  $region5: #{deformable_transformer_decoder_forward.11} parent=0 // loop_body
    %s17 = ssub.s32 %s12, 1
    %s18 = ssub.s32 %s12, 2
    %s19 = sadd.s32 %s12, 1
    %s20 = ssub.s32 %s12, %s19
    %p21 = scmp.eq.s32.totalorder %s20, 0
    %s23 = sadd.s32 %s22, 1
    %s24 = scalar_select %p21, %s22, %s23
    %p27 = pneg %p21
    %p28 = scmp.eq.s32.totalorder %s12, 1
    %p29 = por %p27, %p28
    %p30 = scmp.ne.s32.totalorder %s22, %s25
    %p31 = scmp.eq.s32.totalorder %s12, 0
    %p32 = por %p30, %p31
    %p33 = scmp.ne.s32.totalorder %s22, %s25
    %p34 = scmp.eq.s32.totalorder %s17, 1
    %p35 = por %p33, %p34
    %p36 = scmp.ne.s32.totalorder %s25, %s26
    %p37 = scmp.eq.s32.totalorder %s17, 0
    %p38 = por %p36, %p37
    %p39 = scmp.ne.s32.totalorder %s25, %s26
    %p40 = scmp.eq.s32.totalorder %s18, 1
    %p41 = por %p39, %p40
    %p43 = scmp.ne.s32.totalorder %s26, %s42
    %p44 = scmp.eq.s32.totalorder %s18, 0
    %p45 = por %p43, %p44
    %s46 = ssub.s32 %s12, %s19
    %p47 = scmp.eq.s32.totalorder %s46, 0
    %s49 = sadd.s32 %s48, 1
    %s50 = scalar_select %p47, %s48, %s49
    %p53 = pneg %p47
    %p54 = scmp.eq.s32.totalorder %s12, 1
    %p55 = por %p53, %p54
    %p56 = scmp.ne.s32.totalorder %s48, %s51
    %p57 = scmp.eq.s32.totalorder %s12, 0
    %p58 = por %p56, %p57
    %p59 = scmp.ne.s32.totalorder %s48, %s51
    %p60 = scmp.eq.s32.totalorder %s17, 1
    %p61 = por %p59, %p60
    %p62 = scmp.ne.s32.totalorder %s51, %s52
    %p63 = scmp.eq.s32.totalorder %s17, 0
    %p64 = por %p62, %p63
    %p65 = scmp.ne.s32.totalorder %s51, %s52
    %p66 = scmp.eq.s32.totalorder %s18, 1
    %p67 = por %p65, %p66
    %p69 = scmp.ne.s32.totalorder %s52, %s68
    %p70 = scmp.eq.s32.totalorder %s18, 0
    %p71 = por %p69, %p70
    %s73 = sadd.s32 %s72, 1
    %p76 = scmp.eq.s32.totalorder %s12, 1
    %p77 = scmp.ne.s32.totalorder %s72, %s74
    %p78 = scmp.eq.s32.totalorder %s12, 0
    %p79 = por %p77, %p78
    %p80 = scmp.ne.s32.totalorder %s72, %s74
    %p81 = scmp.eq.s32.totalorder %s17, 1
    %p82 = por %p80, %p81
    %p83 = scmp.ne.s32.totalorder %s74, %s75
    %p84 = scmp.eq.s32.totalorder %s17, 0
    %p85 = por %p83, %p84
    %p86 = scmp.ne.s32.totalorder %s74, %s75
    %p87 = scmp.eq.s32.totalorder %s18, 1
    %p88 = por %p86, %p87
    %p90 = scmp.ne.s32.totalorder %s75, %s89
    %p91 = scmp.eq.s32.totalorder %s18, 0
    %p92 = por %p90, %p91
    %s94 = sadd.s32 %s93, 1
    %p97 = scmp.eq.s32.totalorder %s12, 1
    %p98 = scmp.ne.s32.totalorder %s93, %s95
    %p99 = scmp.eq.s32.totalorder %s12, 0
    %p100 = por %p98, %p99
    %p101 = scmp.ne.s32.totalorder %s93, %s95
    %p102 = scmp.eq.s32.totalorder %s17, 1
    %p103 = por %p101, %p102
    %p104 = scmp.ne.s32.totalorder %s95, %s96
    %p105 = scmp.eq.s32.totalorder %s17, 0
    %p106 = por %p104, %p105
    %p107 = scmp.ne.s32.totalorder %s95, %s96
    %p108 = scmp.eq.s32.totalorder %s18, 1
    %p109 = por %p107, %p108
    %p111 = scmp.ne.s32.totalorder %s96, %s110
    %p112 = scmp.eq.s32.totalorder %s18, 0
    %p113 = por %p111, %p112
    %s114 = ssub.s32 %s12, %s19
    %p115 = scmp.eq.s32.totalorder %s114, 0
    %s117 = sadd.s32 %s116, 1
    %s118 = scalar_select %p115, %s116, %s117
    %p121 = pneg %p115
    %p122 = scmp.eq.s32.totalorder %s12, 1
    %p123 = por %p121, %p122
    %p124 = scmp.ne.s32.totalorder %s116, %s119
    %p125 = scmp.eq.s32.totalorder %s12, 0
    %p126 = por %p124, %p125
    %p127 = scmp.ne.s32.totalorder %s116, %s119
    %p128 = scmp.eq.s32.totalorder %s17, 1
    %p129 = por %p127, %p128
    %p130 = scmp.ne.s32.totalorder %s119, %s120
    %p131 = scmp.eq.s32.totalorder %s17, 0
    %p132 = por %p130, %p131
    %p133 = scmp.ne.s32.totalorder %s119, %s120
    %p134 = scmp.eq.s32.totalorder %s18, 1
    %p135 = por %p133, %p134
    %p137 = scmp.ne.s32.totalorder %s120, %s136
    %p138 = scmp.eq.s32.totalorder %s18, 0
    %p139 = por %p137, %p138
    %s140 = ssub.s32 %s12, %s19
    %p141 = scmp.eq.s32.totalorder %s140, 0
    %s143 = sadd.s32 %s142, 1
    %s144 = scalar_select %p141, %s142, %s143
    %p147 = pneg %p141
    %p148 = scmp.eq.s32.totalorder %s12, 1
    %p149 = por %p147, %p148
    %p150 = scmp.ne.s32.totalorder %s142, %s145
    %p151 = scmp.eq.s32.totalorder %s12, 0
    %p152 = por %p150, %p151
    %p153 = scmp.ne.s32.totalorder %s142, %s145
    %p154 = scmp.eq.s32.totalorder %s17, 1
    %p155 = por %p153, %p154
    %p156 = scmp.ne.s32.totalorder %s145, %s146
    %p157 = scmp.eq.s32.totalorder %s17, 0
    %p158 = por %p156, %p157
    %p159 = scmp.ne.s32.totalorder %s145, %s146
    %p160 = scmp.eq.s32.totalorder %s18, 1
    %p161 = por %p159, %p160
    %p163 = scmp.ne.s32.totalorder %s146, %s162
    %p164 = scmp.eq.s32.totalorder %s18, 0
    %p165 = por %p163, %p164
    %p166 = scmp.le.s32.totalorder 1, %s12
    %p167 = scmp.lt.s32.totalorder %s12, 3
    %p168 = pnand %p166, %p167
    %p169 = pneg %p168
    // Predicated region
    $region9: #{deformable_transformer_decoder_forward.11} parent=5 // pred_check
      _
    $region10: #{deformable_transformer_decoder_forward.11} parent=5 // pred_check_branch
      %171 = sbr.rel (%p168) target = $region12
    $region11: #{deformable_transformer_decoder_forward.11} parent=5 // pred_region
      %s172 = ssub.s32 %s12, 1
      // Predicated region
      $region13: #{deformable_transformer_decoder_forward.11} parent=11 // pred_check
        %p173 = pneg %p85
      $region14: #{deformable_transformer_decoder_forward.11} parent=11 // pred_check_branch
        %175 = sbr.rel (%p173) target = $region16
      $region15: #{deformable_transformer_decoder_forward.11} parent=11 // pred_region
        _
      $region16: #{deformable_transformer_decoder_forward.11} parent=11 // pred_fallthru
        _
      // Predicated region
      $region17: #{deformable_transformer_decoder_forward.11} parent=11 // pred_check
        %p176 = pneg %p106
      $region18: #{deformable_transformer_decoder_forward.11} parent=11 // pred_check_branch
        %178 = sbr.rel (%p176) target = $region20
      $region19: #{deformable_transformer_decoder_forward.11} parent=11 // pred_region
        _
      $region20: #{deformable_transformer_decoder_forward.11} parent=11 // pred_fallthru
        _
    $region12: #{deformable_transformer_decoder_forward.11} parent=5 // pred_fallthru
      _
    %p179 = scmp.lt.s32.totalorder %s12, 2
    // Predicated region
    $region21: #{deformable_transformer_decoder_forward.11} parent=5 // pred_check
      %p180 = pneg %p179
    $region22: #{deformable_transformer_decoder_forward.11} parent=5 // pred_check_branch
      %182 = sbr.rel (%p180) target = $region24
    $region23: #{deformable_transformer_decoder_forward.11} parent=5 // pred_region
      // Predicated region
      $region25: #{deformable_transformer_decoder_forward.11} parent=23 // pred_check
        %p183 = pneg %p32
      $region26: #{deformable_transformer_decoder_forward.11} parent=23 // pred_check_branch
        %185 = sbr.rel (%p183) target = $region28
      $region27: #{deformable_transformer_decoder_forward.11} parent=23 // pred_region
        %p186 = scmp.lt.s32.totalorder %s12, 1
        %s187 = scalar_select %p186, %s12, 1
        %s188 = smul.addr %s187, 8
        %s189 = scalar_lea.vmem %s0, %s188
      $region28: #{deformable_transformer_decoder_forward.11} parent=23 // pred_fallthru
        _
      // Predicated region
      $region29: #{deformable_transformer_decoder_forward.11} parent=23 // pred_check
        %p190 = pneg %p58
      $region30: #{deformable_transformer_decoder_forward.11} parent=23 // pred_check_branch
        %192 = sbr.rel (%p190) target = $region32
      $region31: #{deformable_transformer_decoder_forward.11} parent=23 // pred_region
        %p193 = scmp.lt.s32.totalorder %s12, 1
        %s194 = scalar_select %p193, %s12, 1
        %s195 = smul.addr %s194, 8
        %s196 = scalar_lea.vmem %s1, %s195
      $region32: #{deformable_transformer_decoder_forward.11} parent=23 // pred_fallthru
        _
    $region24: #{deformable_transformer_decoder_forward.11} parent=5 // pred_fallthru
      _
    %p197 = scmp.le.s32.totalorder 1, %s12
    %p198 = scmp.lt.s32.totalorder %s12, 3
    %p199 = pnand %p197, %p198
    %p200 = pneg %p199
    // Predicated region
    $region33: #{deformable_transformer_decoder_forward.11} parent=5 // pred_check
      _
    $region34: #{deformable_transformer_decoder_forward.11} parent=5 // pred_check_branch
      %202 = sbr.rel (%p199) target = $region36
    $region35: #{deformable_transformer_decoder_forward.11} parent=5 // pred_region
      %s203 = ssub.s32 %s12, 1
      %p204 = scmp.lt.s32.totalorder %s17, 1
      %s205 = scalar_select %p204, %s17, 1
      %s206 = smul.addr %s205, 8
      %s207 = scalar_lea.vmem %s0, %s206
      %p208 = pneg %p38
      %p209 = pneg %p35
      %p210 = scmp.lt.s32.totalorder %s17, 1
      %s211 = scalar_select %p210, %s17, 1
      %s212 = smul.addr %s211, 8
      %s213 = scalar_lea.vmem %s1, %s212
      %p214 = pneg %p64
      %p215 = pneg %p61
      %p216 = pneg %p85
      %p217 = pneg %p82
      %p218 = pneg %p106
      %p219 = pneg %p103
      %p220 = pneg %p132
      %p221 = pneg %p129
      %p222 = scmp.lt.s32.totalorder %s17, 1
      %s223 = scalar_select %p222, %s17, 1
      %s224 = smul.addr %s223, 8
      %s225 = scalar_lea.vmem %s4, %s224
      %p226 = pneg %p158
      %p227 = pneg %p155
      %p228 = scmp.lt.s32.totalorder %s17, 1
      %s229 = scalar_select %p228, %s17, 1
      %s230 = smul.addr %s229, 8
      %s231 = scalar_lea.vmem %s5, %s230
      %p232 = scmp.lt.s32.totalorder %s17, 1
      %s233 = scalar_select %p232, %s17, 1
      %s234 = smul.addr %s233, 8
      %s235 = scalar_lea.vmem %s0, %s234
      %p236 = scmp.lt.s32.totalorder %s17, 1
      %s237 = scalar_select %p236, %s17, 1
      %s238 = smul.addr %s237, 8
      %s239 = scalar_lea.vmem %s1, %s238
      %p240 = scmp.lt.s32.totalorder %s17, 1
      %s241 = scalar_select %p240, %s17, 1
      %s242 = smul.addr %s241, 8
      %s243 = scalar_lea.vmem %s4, %s242
      %p244 = scmp.lt.s32.totalorder %s17, 1
      %s245 = scalar_select %p244, %s17, 1
      %s246 = smul.addr %s245, 8
      %s247 = scalar_lea.vmem %s5, %s246
      %v249 = vld [vmem:[%s235] sm:$0xff]
      %v250 = vld [vmem:[%s239] sm:$0xff]
      %v251 = vadd.f32 %v249, %v250
      %v252 = vpack.c.bf16 %v251, %v251
      %v253 = vld [vmem:[%s2] sm:$0xff]
      %v254 = vld [vmem:[%s2 + $0x8] sm:$0xff]
      %v255 = vld [vmem:[%s2 + $0x10] sm:$0xff]
      %v256 = vld [vmem:[%s2 + $0x18] sm:$0xff]
      %v257 = vpack.c.bf16 %v254, %v253
      %v258 = vpack.c.bf16 %v256, %v255
      %v259 = vld [vmem:[%s3] sm:$0x1]
      %v261 = vlaneseq
      %v262 = vshrl.u32 %v261, 7
      %v263 = vsub.s32 0, %v262
      %v264 = vrot.slane %v259, %v263
      %vm266 = vcmask 261120
      %v268 = vsel %vm266, %v252, 0
      %270 = vmatprep.subr.bf16.mxu0 0
      %271 = vmatpush1.bf16.msra.mxu0 0
      %272 = vmatprep.subr.bf16.mxu0 0
      %273 = vmatpush1.bf16.msra.mxu0 0
      %274 = vmatprep.subr.bf16.mxu0 0
      %275 = vmatpush1.bf16.msra.mxu0 0
      %276 = vmatprep.subr.bf16.mxu0 0
      %277 = vmatpush1.bf16.msra.mxu0 0
      %278 = vmatprep.subr.bf16.mxu0 0
      %279 = vmatpush1.bf16.msra.mxu0 0
      %280 = vmatprep.subr.bf16.mxu0 0
      %281 = vmatpush1.bf16.msra.mxu0 0
      %282 = vmatprep.subr.bf16.mxu0 0
      %283 = vmatpush1.bf16.msra.mxu0 %v258
      %284 = vmatprep.subr.bf16.mxu0 0
      %285 = vmatpush1.bf16.msra.mxu0 %v257
      %286 = vmatprep.subr.bf16.mxu0 0
      %287 = vmatpush2.bf16.msra.mxu0 0
      %288 = vmatprep.subr.bf16.mxu0 0
      %289 = vmatpush2.bf16.msra.mxu0 0
      %290 = vmatprep.subr.bf16.mxu0 0
      %291 = vmatpush2.bf16.msra.mxu0 0
      %292 = vmatprep.subr.bf16.mxu0 0
      %293 = vmatpush2.bf16.msra.mxu0 0
      %294 = vmatprep.subr.bf16.mxu0 0
      %295 = vmatpush2.bf16.msra.mxu0 0
      %296 = vmatprep.subr.bf16.mxu0 0
      %297 = vmatpush2.bf16.msra.mxu0 0
      %298 = vmatprep.subr.bf16.mxu0 0
      %299 = vmatpush2.bf16.msra.mxu0 0
      %300 = vmatprep.subr.bf16.mxu0 0
      %301 = vmatpush2.bf16.msra.mxu0 0
      %302 = vmatprep.mubr.bf16.mxu0 0
      %303 = vmatmul.mubr.bf16.gmra.mxu0 %v268
      %v304 = vpop.f32.mrf.mxu0
      %v305 = vadd.f32 %v264, %v304
      %v306 = vpop.f32.mrf.mxu0
      %v307 = vpop.f32.mrf.mxu0
      %v308 = vpop.f32.mrf.mxu0
      %309 = vdwg.mxu0
      %vm310 = vcmask 523264
      %311 = vst.msk [vmem:[%s243] sm:$0xff] %vm310, %v305
      %vm312 = vcmask 589312
      %v313 = vsel %vm312, %v305, -inf
      %314 = vmax.xlane.f32.xlu0 %v313
      %v315 = vpop.xlane.xlu0 %314
      %v316 = vsub.f32 %v305, %v315
      %v317 = vmul.f32 %v316, 1.442695
      %v318 = vpow.pop %v317
      %320 = vrot.lane.b32.xlu0 %v318, 64
      %v321 = vpop.permute.xlu0 %320
      %vm323 = vcmask 64512
      %v324 = vsel %vm323, %v321, 0.0
      %325 = vadd.xlane.f32.xlu0 %v324
      %v326 = vpop.xlane.xlu0 %325
      %v327 = vrcp.pop %v326
      %v328 = vmul.f32 %v318, %v327
      %vm329 = vcmask 654912
      %v330 = vsel %vm329, %v305, -inf
      %331 = vmax.xlane.f32.xlu0 %v330
      %v332 = vpop.xlane.xlu0 %331
      %v333 = vsub.f32 %v305, %v332
      %v334 = vmul.f32 %v333, 1.442695
      %v335 = vpow.pop %v334
      %337 = vrot.lane.b32.xlu0 %v335, 56
      %v338 = vpop.permute.xlu0 %337
      %v340 = vsel %vm323, %v338, 0.0
      %341 = vadd.xlane.f32.xlu0 %v340
      %v342 = vpop.xlane.xlu0 %341
      %v343 = vrcp.pop %v342
      %v344 = vmul.f32 %v335, %v343
      %vm345 = vcmask 720512
      %v346 = vsel %vm345, %v305, -inf
      %347 = vmax.xlane.f32.xlu0 %v346
      %v348 = vpop.xlane.xlu0 %347
      %v349 = vsub.f32 %v305, %v348
      %v350 = vmul.f32 %v349, 1.442695
      %v351 = vpow.pop %v350
      %353 = vrot.lane.b32.xlu0 %v351, 48
      %v354 = vpop.permute.xlu0 %353
      %v356 = vsel %vm323, %v354, 0.0
      %357 = vadd.xlane.f32.xlu0 %v356
      %v358 = vpop.xlane.xlu0 %357
      %v359 = vrcp.pop %v358
      %v360 = vmul.f32 %v351, %v359
      %vm361 = vcmask 786112
      %v362 = vsel %vm361, %v305, -inf
      %363 = vmax.xlane.f32.xlu0 %v362
      %v364 = vpop.xlane.xlu0 %363
      %v365 = vsub.f32 %v305, %v364
      %v366 = vmul.f32 %v365, 1.442695
      %v367 = vpow.pop %v366
      %369 = vrot.lane.b32.xlu0 %v367, 40
      %v370 = vpop.permute.xlu0 %369
      %v372 = vsel %vm323, %v370, 0.0
      %373 = vadd.xlane.f32.xlu0 %v372
      %v374 = vpop.xlane.xlu0 %373
      %v375 = vrcp.pop %v374
      %v376 = vmul.f32 %v367, %v375
      %378 = vrot.lane.b32.xlu0 %v328, 64
      %v379 = vpop.permute.xlu0 %378
      %382 = vrot.lane.b32.xlu0 %v344, 64
      %v383 = vpop.permute.xlu0 %382
      %386 = vrot.lane.b32.xlu0 %v360, 64
      %v387 = vpop.permute.xlu0 %386
      %390 = vrot.lane.b32.xlu0 %v376, 64
      %v391 = vpop.permute.xlu0 %390
      %v393 = vsel %vm323, %v379, %v383
      %vm394 = vcmask 130048
      %v395 = vsel %vm394, %v393, %v387
      %vm396 = vcmask 195584
      %v397 = vsel %vm396, %v395, %v391
      %398 = vst.msk [vmem:[%s247] sm:$0xff] %vm266, %v397
      %p399 = scmp.lt.s32.totalorder %s17, 1
      %s400 = scalar_select %p399, %s17, 1
      %s401 = smul.addr %s400, 8
      %s402 = scalar_lea.vmem %s4, %s401
      %p403 = scmp.lt.s32.totalorder %s17, 1
      %s404 = scalar_select %p403, %s17, 1
      %s405 = smul.addr %s404, 8
      %s406 = scalar_lea.vmem %s5, %s405
      // Predicated region
      $region37: #{deformable_transformer_decoder_forward.11} parent=35 // pred_check
        %p407 = pneg %p129
      $region38: #{deformable_transformer_decoder_forward.11} parent=35 // pred_check_branch
        %409 = sbr.rel (%p407) target = $region40
      $region39: #{deformable_transformer_decoder_forward.11} parent=35 // pred_region
        _
      $region40: #{deformable_transformer_decoder_forward.11} parent=35 // pred_fallthru
        _
      // Predicated region
      $region41: #{deformable_transformer_decoder_forward.11} parent=35 // pred_check
        %p410 = pneg %p155
      $region42: #{deformable_transformer_decoder_forward.11} parent=35 // pred_check_branch
        %412 = sbr.rel (%p410) target = $region44
      $region43: #{deformable_transformer_decoder_forward.11} parent=35 // pred_region
        _
      $region44: #{deformable_transformer_decoder_forward.11} parent=35 // pred_fallthru
        _
    $region36: #{deformable_transformer_decoder_forward.11} parent=5 // pred_fallthru
      _
    %p413 = scmp.le.s32.totalorder 2, %s12
    // Predicated region
    $region45: #{deformable_transformer_decoder_forward.11} parent=5 // pred_check
      %p414 = pneg %p413
    $region46: #{deformable_transformer_decoder_forward.11} parent=5 // pred_check_branch
      %416 = sbr.rel (%p414) target = $region48
    $region47: #{deformable_transformer_decoder_forward.11} parent=5 // pred_region
      %s417 = ssub.s32 %s12, 2
      // Predicated region
      $region49: #{deformable_transformer_decoder_forward.11} parent=47 // pred_check
        %p418 = pneg %p135
      $region50: #{deformable_transformer_decoder_forward.11} parent=47 // pred_check_branch
        %420 = sbr.rel (%p418) target = $region52
      $region51: #{deformable_transformer_decoder_forward.11} parent=47 // pred_region
        %p421 = scmp.lt.s32.totalorder %s18, 1
        %s422 = scalar_select %p421, %s18, 1
        %s423 = smul.addr %s422, 8
        %s424 = scalar_lea.vmem %s4, %s423
      $region52: #{deformable_transformer_decoder_forward.11} parent=47 // pred_fallthru
        _
      // Predicated region
      $region53: #{deformable_transformer_decoder_forward.11} parent=47 // pred_check
        %p425 = pneg %p161
      $region54: #{deformable_transformer_decoder_forward.11} parent=47 // pred_check_branch
        %427 = sbr.rel (%p425) target = $region56
      $region55: #{deformable_transformer_decoder_forward.11} parent=47 // pred_region
        %p428 = scmp.lt.s32.totalorder %s18, 1
        %s429 = scalar_select %p428, %s18, 1
        %s430 = smul.addr %s429, 8
        %s431 = scalar_lea.vmem %s5, %s430
      $region56: #{deformable_transformer_decoder_forward.11} parent=47 // pred_fallthru
        _
    $region48: #{deformable_transformer_decoder_forward.11} parent=5 // pred_fallthru
      _
  $region6: #{deformable_transformer_decoder_forward.11} parent=0 // loop_footer
    %s16 = sadd.s32 1, %s12
  $region7: #{deformable_transformer_decoder_forward.11} parent=0 // loop_footer_branch
    %11 = sbr.rel target = $region3
  $region8: #{deformable_transformer_decoder_forward.11} parent=0 // loop_exit
    _

// kernel: deformable_transformer_decoder_forward.10
$region0: #{deformable_transformer_decoder_forward.10}
  #allocation0 [shape = 'u32[]', space=smem, size = 0x4, offset = 0x4, fixed_abs, tag = 'smem constant byte address 0x4 - core index']
  #allocation1 [shape = 'u32[144,128]{1,0:T(1,128)}', space=vmem, size = 0x12000, scoped, tag = 'internal scratch']
  %s0 = inlined_call_operand.hbm [shape: f32[2,8,32], index: 0, kind: input, shape index: {}]
  %s1 = inlined_call_operand.vmem [shape: f32[2,8,32], index: 1, kind: input, shape index: {}]
  %s2 = inlined_call_operand.vmem [shape: f32[32,64], index: 2, kind: input, shape index: {}]
  %s3 = inlined_call_operand.vmem [shape: f32[1,64], index: 3, kind: input, shape index: {}]
  %s4 = inlined_call_operand.hbm [shape: f32[32,32], index: 4, kind: input, shape index: {}]
  %s5 = inlined_call_operand.vmem [shape: f32[1,32], index: 5, kind: input, shape index: {}]
  %s6 = inlined_call_operand.vmem [shape: f32[32,32], index: 6, kind: input, shape index: {}]
  %s7 = inlined_call_operand.vmem [shape: f32[1,32], index: 7, kind: input, shape index: {}]
  %s8 = inlined_call_operand.vmem [shape: f32[1,32], index: 8, kind: input, shape index: {}]
  %s9 = inlined_call_operand.vmem [shape: f32[1,32], index: 9, kind: input, shape index: {}]
  %s10 = inlined_call_operand.vmem [shape: f32[2,8,32], index: 10, kind: output, shape index: {}]
  %s11 = sld [smem:[#allocation0]]
  $region81: #{deformable_transformer_decoder_forward.10} parent=0
    _
  %s13 = ssub.s32 1, %s11
  %s14 = scalar_select 0, %s13, %s11
  $region1: #{deformable_transformer_decoder_forward.10} parent=0
    #allocation2 [shape = 'u8[8192]{0}', space=vmem, size = 0x2000, scoped, tag = 'input window, operand 0']
    #allocation3 [shape = 's32[2]{0}', space=sflag, size = 0x8, scoped, tag = 'scoped memory for deformable_transformer_decoder_forward.10']
    #allocation4 [shape = 'u8[16384]{0}', space=vmem, size = 0x4000, scoped, tag = 'input window, operand 4, single buffered']
    #allocation5 [shape = 's32[1]{0}', space=sflag, size = 0x4, scoped, tag = 'scoped memory for deformable_transformer_decoder_forward.10']
    %15 = vsyncpa [#allocation3], 0
    %s16 = scalar_lea.sflag [#allocation3], 1
    %17 = vsyncpa %s16, 0
    %18 = vsyncpa [#allocation5], 0
    loop: start=0, step=1, limit=4
    $region2: #{deformable_transformer_decoder_forward.10} parent=1 // loop_pre_header
      _
    $region3: #{deformable_transformer_decoder_forward.10} parent=1 // loop_header
      %s20 = sphi 0, %s24
      %p21 = scmp.ge.s32.totalorder %s20, 4
      %s30 = sphi 0, %s32
      %s33 = sphi 0, %s30
      %s34 = sphi 0, %s33
      %s50 = sphi 0, %s34
      %s56 = sphi 0, %s58
      %s59 = sphi 0, %s56
      %s60 = sphi 0, %s59
      %s76 = sphi 0, %s60
      %s80 = sphi 0, %s80
      %s82 = sphi 0, %s80
      %s83 = sphi 0, %s82
      %s97 = sphi 0, %s83
      %s101 = sphi 0, %s101
      %s103 = sphi 0, %s101
      %s104 = sphi 0, %s103
      %s118 = sphi 0, %s104
      %s122 = sphi 0, %s122
      %s124 = sphi 0, %s122
      %s125 = sphi 0, %s124
      %s139 = sphi 0, %s125
      %s143 = sphi 0, %s143
      %s145 = sphi 0, %s143
      %s146 = sphi 0, %s145
      %s160 = sphi 0, %s146
      %s164 = sphi 0, %s164
      %s166 = sphi 0, %s164
      %s167 = sphi 0, %s166
      %s181 = sphi 0, %s167
      %s185 = sphi 0, %s185
      %s187 = sphi 0, %s185
      %s188 = sphi 0, %s187
      %s202 = sphi 0, %s188
      %s206 = sphi 0, %s206
      %s208 = sphi 0, %s206
      %s209 = sphi 0, %s208
      %s223 = sphi 0, %s209
      %s227 = sphi 0, %s227
      %s229 = sphi 0, %s227
      %s230 = sphi 0, %s229
      %s244 = sphi 0, %s230
      %s250 = sphi 0, %s252
      %s253 = sphi 0, %s250
      %s254 = sphi 0, %s253
      %s270 = sphi 0, %s254
    $region4: #{deformable_transformer_decoder_forward.10} parent=1 // loop_header_branch
      %23 = sbr.rel (%p21) target = $region8
    $region5: #{deformable_transformer_decoder_forward.10} parent=1 // loop_body
      %s25 = ssub.s32 %s20, 1
      %s26 = ssub.s32 %s20, 2
      %s27 = sadd.s32 %s20, 1
      %s28 = ssub.s32 %s20, %s27
      %p29 = scmp.eq.s32.totalorder %s28, 0
      %s31 = sadd.s32 %s30, 1
      %s32 = scalar_select %p29, %s30, %s31
      %p35 = pneg %p29
      %p36 = scmp.eq.s32.totalorder %s20, 1
      %p37 = por %p35, %p36
      %p38 = scmp.ne.s32.totalorder %s30, %s33
      %p39 = scmp.eq.s32.totalorder %s20, 0
      %p40 = por %p38, %p39
      %p41 = scmp.ne.s32.totalorder %s30, %s33
      %p42 = scmp.eq.s32.totalorder %s25, 1
      %p43 = por %p41, %p42
      %p44 = scmp.ne.s32.totalorder %s33, %s34
      %p45 = scmp.eq.s32.totalorder %s25, 0
      %p46 = por %p44, %p45
      %p47 = scmp.ne.s32.totalorder %s33, %s34
      %p48 = scmp.eq.s32.totalorder %s26, 1
      %p49 = por %p47, %p48
      %p51 = scmp.ne.s32.totalorder %s34, %s50
      %p52 = scmp.eq.s32.totalorder %s26, 0
      %p53 = por %p51, %p52
      %s54 = ssub.s32 %s20, %s27
      %p55 = scmp.eq.s32.totalorder %s54, 0
      %s57 = sadd.s32 %s56, 1
      %s58 = scalar_select %p55, %s56, %s57
      %p61 = pneg %p55
      %p62 = scmp.eq.s32.totalorder %s20, 1
      %p63 = por %p61, %p62
      %p64 = scmp.ne.s32.totalorder %s56, %s59
      %p65 = scmp.eq.s32.totalorder %s20, 0
      %p66 = por %p64, %p65
      %p67 = scmp.ne.s32.totalorder %s56, %s59
      %p68 = scmp.eq.s32.totalorder %s25, 1
      %p69 = por %p67, %p68
      %p70 = scmp.ne.s32.totalorder %s59, %s60
      %p71 = scmp.eq.s32.totalorder %s25, 0
      %p72 = por %p70, %p71
      %p73 = scmp.ne.s32.totalorder %s59, %s60
      %p74 = scmp.eq.s32.totalorder %s26, 1
      %p75 = por %p73, %p74
      %p77 = scmp.ne.s32.totalorder %s60, %s76
      %p78 = scmp.eq.s32.totalorder %s26, 0
      %p79 = por %p77, %p78
      %s81 = sadd.s32 %s80, 1
      %p84 = scmp.eq.s32.totalorder %s20, 1
      %p85 = scmp.ne.s32.totalorder %s80, %s82
      %p86 = scmp.eq.s32.totalorder %s20, 0
      %p87 = por %p85, %p86
      %p88 = scmp.ne.s32.totalorder %s80, %s82
      %p89 = scmp.eq.s32.totalorder %s25, 1
      %p90 = por %p88, %p89
      %p91 = scmp.ne.s32.totalorder %s82, %s83
      %p92 = scmp.eq.s32.totalorder %s25, 0
      %p93 = por %p91, %p92
      %p94 = scmp.ne.s32.totalorder %s82, %s83
      %p95 = scmp.eq.s32.totalorder %s26, 1
      %p96 = por %p94, %p95
      %p98 = scmp.ne.s32.totalorder %s83, %s97
      %p99 = scmp.eq.s32.totalorder %s26, 0
      %p100 = por %p98, %p99
      %s102 = sadd.s32 %s101, 1
      %p105 = scmp.eq.s32.totalorder %s20, 1
      %p106 = scmp.ne.s32.totalorder %s101, %s103
      %p107 = scmp.eq.s32.totalorder %s20, 0
      %p108 = por %p106, %p107
      %p109 = scmp.ne.s32.totalorder %s101, %s103
      %p110 = scmp.eq.s32.totalorder %s25, 1
      %p111 = por %p109, %p110
      %p112 = scmp.ne.s32.totalorder %s103, %s104
      %p113 = scmp.eq.s32.totalorder %s25, 0
      %p114 = por %p112, %p113
      %p115 = scmp.ne.s32.totalorder %s103, %s104
      %p116 = scmp.eq.s32.totalorder %s26, 1
      %p117 = por %p115, %p116
      %p119 = scmp.ne.s32.totalorder %s104, %s118
      %p120 = scmp.eq.s32.totalorder %s26, 0
      %p121 = por %p119, %p120
      %s123 = sadd.s32 %s122, 1
      %p126 = scmp.eq.s32.totalorder %s20, 1
      %p127 = scmp.ne.s32.totalorder %s122, %s124
      %p128 = scmp.eq.s32.totalorder %s20, 0
      %p129 = por %p127, %p128
      %p130 = scmp.ne.s32.totalorder %s122, %s124
      %p131 = scmp.eq.s32.totalorder %s25, 1
      %p132 = por %p130, %p131
      %p133 = scmp.ne.s32.totalorder %s124, %s125
      %p134 = scmp.eq.s32.totalorder %s25, 0
      %p135 = por %p133, %p134
      %p136 = scmp.ne.s32.totalorder %s124, %s125
      %p137 = scmp.eq.s32.totalorder %s26, 1
      %p138 = por %p136, %p137
      %p140 = scmp.ne.s32.totalorder %s125, %s139
      %p141 = scmp.eq.s32.totalorder %s26, 0
      %p142 = por %p140, %p141
      %s144 = sadd.s32 %s143, 1
      %p147 = scmp.eq.s32.totalorder %s20, 1
      %p148 = scmp.ne.s32.totalorder %s143, %s145
      %p149 = scmp.eq.s32.totalorder %s20, 0
      %p150 = por %p148, %p149
      %p151 = scmp.ne.s32.totalorder %s143, %s145
      %p152 = scmp.eq.s32.totalorder %s25, 1
      %p153 = por %p151, %p152
      %p154 = scmp.ne.s32.totalorder %s145, %s146
      %p155 = scmp.eq.s32.totalorder %s25, 0
      %p156 = por %p154, %p155
      %p157 = scmp.ne.s32.totalorder %s145, %s146
      %p158 = scmp.eq.s32.totalorder %s26, 1
      %p159 = por %p157, %p158
      %p161 = scmp.ne.s32.totalorder %s146, %s160
      %p162 = scmp.eq.s32.totalorder %s26, 0
      %p163 = por %p161, %p162
      %s165 = sadd.s32 %s164, 1
      %p168 = scmp.eq.s32.totalorder %s20, 1
      %p169 = scmp.ne.s32.totalorder %s164, %s166
      %p170 = scmp.eq.s32.totalorder %s20, 0
      %p171 = por %p169, %p170
      %p172 = scmp.ne.s32.totalorder %s164, %s166
      %p173 = scmp.eq.s32.totalorder %s25, 1
      %p174 = por %p172, %p173
      %p175 = scmp.ne.s32.totalorder %s166, %s167
      %p176 = scmp.eq.s32.totalorder %s25, 0
      %p177 = por %p175, %p176
      %p178 = scmp.ne.s32.totalorder %s166, %s167
      %p179 = scmp.eq.s32.totalorder %s26, 1
      %p180 = por %p178, %p179
      %p182 = scmp.ne.s32.totalorder %s167, %s181
      %p183 = scmp.eq.s32.totalorder %s26, 0
      %p184 = por %p182, %p183
      %s186 = sadd.s32 %s185, 1
      %p189 = scmp.eq.s32.totalorder %s20, 1
      %p190 = scmp.ne.s32.totalorder %s185, %s187
      %p191 = scmp.eq.s32.totalorder %s20, 0
      %p192 = por %p190, %p191
      %p193 = scmp.ne.s32.totalorder %s185, %s187
      %p194 = scmp.eq.s32.totalorder %s25, 1
      %p195 = por %p193, %p194
      %p196 = scmp.ne.s32.totalorder %s187, %s188
      %p197 = scmp.eq.s32.totalorder %s25, 0
      %p198 = por %p196, %p197
      %p199 = scmp.ne.s32.totalorder %s187, %s188
      %p200 = scmp.eq.s32.totalorder %s26, 1
      %p201 = por %p199, %p200
      %p203 = scmp.ne.s32.totalorder %s188, %s202
      %p204 = scmp.eq.s32.totalorder %s26, 0
      %p205 = por %p203, %p204
      %s207 = sadd.s32 %s206, 1
      %p210 = scmp.eq.s32.totalorder %s20, 1
      %p211 = scmp.ne.s32.totalorder %s206, %s208
      %p212 = scmp.eq.s32.totalorder %s20, 0
      %p213 = por %p211, %p212
      %p214 = scmp.ne.s32.totalorder %s206, %s208
      %p215 = scmp.eq.s32.totalorder %s25, 1
      %p216 = por %p214, %p215
      %p217 = scmp.ne.s32.totalorder %s208, %s209
      %p218 = scmp.eq.s32.totalorder %s25, 0
      %p219 = por %p217, %p218
      %p220 = scmp.ne.s32.totalorder %s208, %s209
      %p221 = scmp.eq.s32.totalorder %s26, 1
      %p222 = por %p220, %p221
      %p224 = scmp.ne.s32.totalorder %s209, %s223
      %p225 = scmp.eq.s32.totalorder %s26, 0
      %p226 = por %p224, %p225
      %s228 = sadd.s32 %s227, 1
      %p231 = scmp.eq.s32.totalorder %s20, 1
      %p232 = scmp.ne.s32.totalorder %s227, %s229
      %p233 = scmp.eq.s32.totalorder %s20, 0
      %p234 = por %p232, %p233
      %p235 = scmp.ne.s32.totalorder %s227, %s229
      %p236 = scmp.eq.s32.totalorder %s25, 1
      %p237 = por %p235, %p236
      %p238 = scmp.ne.s32.totalorder %s229, %s230
      %p239 = scmp.eq.s32.totalorder %s25, 0
      %p240 = por %p238, %p239
      %p241 = scmp.ne.s32.totalorder %s229, %s230
      %p242 = scmp.eq.s32.totalorder %s26, 1
      %p243 = por %p241, %p242
      %p245 = scmp.ne.s32.totalorder %s230, %s244
      %p246 = scmp.eq.s32.totalorder %s26, 0
      %p247 = por %p245, %p246
      %s248 = ssub.s32 %s20, %s27
      %p249 = scmp.eq.s32.totalorder %s248, 0
      %s251 = sadd.s32 %s250, 1
      %s252 = scalar_select %p249, %s250, %s251
      %p255 = pneg %p249
      %p256 = scmp.eq.s32.totalorder %s20, 1
      %p257 = por %p255, %p256
      %p258 = scmp.ne.s32.totalorder %s250, %s253
      %p259 = scmp.eq.s32.totalorder %s20, 0
      %p260 = por %p258, %p259
      %p261 = scmp.ne.s32.totalorder %s250, %s253
      %p262 = scmp.eq.s32.totalorder %s25, 1
      %p263 = por %p261, %p262
      %p264 = scmp.ne.s32.totalorder %s253, %s254
      %p265 = scmp.eq.s32.totalorder %s25, 0
      %p266 = por %p264, %p265
      %p267 = scmp.ne.s32.totalorder %s253, %s254
      %p268 = scmp.eq.s32.totalorder %s26, 1
      %p269 = por %p267, %p268
      %p271 = scmp.ne.s32.totalorder %s254, %s270
      %p272 = scmp.eq.s32.totalorder %s26, 0
      %p273 = por %p271, %p272
      %p274 = scmp.le.s32.totalorder 1, %s20
      %p275 = scmp.lt.s32.totalorder %s20, 3
      %p276 = pnand %p274, %p275
      %p277 = pneg %p276
      // Predicated region
      $region9: #{deformable_transformer_decoder_forward.10} parent=5 // pred_check
        _
      $region10: #{deformable_transformer_decoder_forward.10} parent=5 // pred_check_branch
        %279 = sbr.rel (%p276) target = $region12
      $region11: #{deformable_transformer_decoder_forward.10} parent=5 // pred_region
        %s280 = ssub.s32 %s20, 1
        // Predicated region
        $region13: #{deformable_transformer_decoder_forward.10} parent=11 // pred_check
          %p281 = pneg %p93
        $region14: #{deformable_transformer_decoder_forward.10} parent=11 // pred_check_branch
          %283 = sbr.rel (%p281) target = $region16
        $region15: #{deformable_transformer_decoder_forward.10} parent=11 // pred_region
          _
        $region16: #{deformable_transformer_decoder_forward.10} parent=11 // pred_fallthru
          _
        // Predicated region
        $region17: #{deformable_transformer_decoder_forward.10} parent=11 // pred_check
          %p284 = pneg %p114
        $region18: #{deformable_transformer_decoder_forward.10} parent=11 // pred_check_branch
          %286 = sbr.rel (%p284) target = $region20
        $region19: #{deformable_transformer_decoder_forward.10} parent=11 // pred_region
          _
        $region20: #{deformable_transformer_decoder_forward.10} parent=11 // pred_fallthru
          _
        // Predicated region
        $region21: #{deformable_transformer_decoder_forward.10} parent=11 // pred_check
          %p287 = pneg %p135
        $region22: #{deformable_transformer_decoder_forward.10} parent=11 // pred_check_branch
          %289 = sbr.rel (%p287) target = $region24
        $region23: #{deformable_transformer_decoder_forward.10} parent=11 // pred_region
          %s291 = ssub.s32 512, 512
          %292 = vsyncadd [#allocation5], %s291
          %s293 = sshll.u32 [#allocation4], 4
          %s294 = int_to_ptr.vmem [resolvable:$true] %s293
          %299 = dma.hbm_to_vmem [thread:$0]  %s4, 512, %s294, [#allocation5], 128, 128, 8
        $region24: #{deformable_transformer_decoder_forward.10} parent=11 // pred_fallthru
          _
        // Predicated region
        $region25: #{deformable_transformer_decoder_forward.10} parent=11 // pred_check
          %p300 = pneg %p156
        $region26: #{deformable_transformer_decoder_forward.10} parent=11 // pred_check_branch
          %302 = sbr.rel (%p300) target = $region28
        $region27: #{deformable_transformer_decoder_forward.10} parent=11 // pred_region
          _
        $region28: #{deformable_transformer_decoder_forward.10} parent=11 // pred_fallthru
          _
        // Predicated region
        $region29: #{deformable_transformer_decoder_forward.10} parent=11 // pred_check
          %p303 = pneg %p177
        $region30: #{deformable_transformer_decoder_forward.10} parent=11 // pred_check_branch
          %305 = sbr.rel (%p303) target = $region32
        $region31: #{deformable_transformer_decoder_forward.10} parent=11 // pred_region
          _
        $region32: #{deformable_transformer_decoder_forward.10} parent=11 // pred_fallthru
          _
        // Predicated region
        $region33: #{deformable_transformer_decoder_forward.10} parent=11 // pred_check
          %p306 = pneg %p198
        $region34: #{deformable_transformer_decoder_forward.10} parent=11 // pred_check_branch
          %308 = sbr.rel (%p306) target = $region36
        $region35: #{deformable_transformer_decoder_forward.10} parent=11 // pred_region
          _
        $region36: #{deformable_transformer_decoder_forward.10} parent=11 // pred_fallthru
          _
        // Predicated region
        $region37: #{deformable_transformer_decoder_forward.10} parent=11 // pred_check
          %p309 = pneg %p219
        $region38: #{deformable_transformer_decoder_forward.10} parent=11 // pred_check_branch
          %311 = sbr.rel (%p309) target = $region40
        $region39: #{deformable_transformer_decoder_forward.10} parent=11 // pred_region
          _
        $region40: #{deformable_transformer_decoder_forward.10} parent=11 // pred_fallthru
          _
        // Predicated region
        $region41: #{deformable_transformer_decoder_forward.10} parent=11 // pred_check
          %p312 = pneg %p240
        $region42: #{deformable_transformer_decoder_forward.10} parent=11 // pred_check_branch
          %314 = sbr.rel (%p312) target = $region44
        $region43: #{deformable_transformer_decoder_forward.10} parent=11 // pred_region
          _
        $region44: #{deformable_transformer_decoder_forward.10} parent=11 // pred_fallthru
          _
      $region12: #{deformable_transformer_decoder_forward.10} parent=5 // pred_fallthru
        _
      %p315 = scmp.lt.s32.totalorder %s20, 2
      // Predicated region
      $region45: #{deformable_transformer_decoder_forward.10} parent=5 // pred_check
        %p316 = pneg %p315
      $region46: #{deformable_transformer_decoder_forward.10} parent=5 // pred_check_branch
        %318 = sbr.rel (%p316) target = $region48
      $region47: #{deformable_transformer_decoder_forward.10} parent=5 // pred_region
        // Predicated region
        $region49: #{deformable_transformer_decoder_forward.10} parent=47 // pred_check
          %p319 = pneg %p40
        $region50: #{deformable_transformer_decoder_forward.10} parent=47 // pred_check_branch
          %321 = sbr.rel (%p319) target = $region52
        $region51: #{deformable_transformer_decoder_forward.10} parent=47 // pred_region
          %s322 = sand.u32 %s30, 1
          %s323 = scalar_lea.sflag [#allocation3], %s322
          %s324 = sand.u32 %s30, 1
          %s325 = smul.addr %s324, 8
          %s326 = scalar_lea.vmem [#allocation2], %s325
          %s328 = ssub.s32 128, 128
          %329 = vsyncadd %s323, %s328
          %s330 = smul.addr %s20, 128
          %s331 = scalar_lea.hbm %s0, %s330
          %s333 = sshll.u32 %s326, 4
          %s334 = int_to_ptr.vmem [resolvable:$true] %s333
          %336 = dma.hbm_to_vmem [thread:$0]  %s331, 128, %s334, %s323
        $region52: #{deformable_transformer_decoder_forward.10} parent=47 // pred_fallthru
          _
        // Predicated region
        $region53: #{deformable_transformer_decoder_forward.10} parent=47 // pred_check
          %p337 = pneg %p66
        $region54: #{deformable_transformer_decoder_forward.10} parent=47 // pred_check_branch
          %339 = sbr.rel (%p337) target = $region56
        $region55: #{deformable_transformer_decoder_forward.10} parent=47 // pred_region
          %p340 = scmp.lt.s32.totalorder %s20, 1
          %s341 = scalar_select %p340, %s20, 1
          %s342 = smul.addr %s341, 8
          %s343 = scalar_lea.vmem %s1, %s342
        $region56: #{deformable_transformer_decoder_forward.10} parent=47 // pred_fallthru
          _
      $region48: #{deformable_transformer_decoder_forward.10} parent=5 // pred_fallthru
        _
      %p344 = scmp.le.s32.totalorder 1, %s20
      %p345 = scmp.lt.s32.totalorder %s20, 3
      %p346 = pnand %p344, %p345
      %p347 = pneg %p346
      // Predicated region
      $region57: #{deformable_transformer_decoder_forward.10} parent=5 // pred_check
        _
      $region58: #{deformable_transformer_decoder_forward.10} parent=5 // pred_check_branch
        %349 = sbr.rel (%p346) target = $region60
      $region59: #{deformable_transformer_decoder_forward.10} parent=5 // pred_region
        %s350 = ssub.s32 %s20, 1
        %s351 = sand.u32 %s33, 1
        %s352 = scalar_lea.sflag [#allocation3], %s351
        %s353 = sand.u32 %s33, 1
        %s354 = smul.addr %s353, 8
        %s355 = scalar_lea.vmem [#allocation2], %s354
        // Predicated region
        $region61: #{deformable_transformer_decoder_forward.10} parent=59 // pred_check
          %p356 = pneg %p46
        $region62: #{deformable_transformer_decoder_forward.10} parent=59 // pred_check_branch
          %358 = sbr.rel (%p356) target = $region64
        $region63: #{deformable_transformer_decoder_forward.10} parent=59 // pred_region
          %359 = dma.done %s352, 128
        $region64: #{deformable_transformer_decoder_forward.10} parent=59 // pred_fallthru
          _
        // Predicated region
        $region65: #{deformable_transformer_decoder_forward.10} parent=59 // pred_check
          %p360 = pneg %p135
        $region66: #{deformable_transformer_decoder_forward.10} parent=59 // pred_check_branch
          %362 = sbr.rel (%p360) target = $region68
        $region67: #{deformable_transformer_decoder_forward.10} parent=59 // pred_region
          %363 = dma.done [#allocation5], 512
        $region68: #{deformable_transformer_decoder_forward.10} parent=59 // pred_fallthru
          _
        %s364 = sand.u32 %s33, 1
        %s365 = scalar_lea.sflag [#allocation3], %s364
        %s366 = sand.u32 %s33, 1
        %s367 = smul.addr %s366, 8
        %s368 = scalar_lea.vmem [#allocation2], %s367
        %p369 = pneg %p46
        %p370 = pneg %p43
        %p371 = scmp.lt.s32.totalorder %s25, 1
        %s372 = scalar_select %p371, %s25, 1
        %s373 = smul.addr %s372, 8
        %s374 = scalar_lea.vmem %s1, %s373
        %p375 = pneg %p72
        %p376 = pneg %p69
        %p377 = pneg %p93
        %p378 = pneg %p90
        %p379 = pneg %p114
        %p380 = pneg %p111
        %p381 = pneg %p135
        %p382 = pneg %p132
        %p383 = pneg %p156
        %p384 = pneg %p153
        %p385 = pneg %p177
        %p386 = pneg %p174
        %p387 = pneg %p198
        %p388 = pneg %p195
        %p389 = pneg %p219
        %p390 = pneg %p216
        %p391 = pneg %p240
        %p392 = pneg %p237
        %p393 = pneg %p266
        %p394 = pneg %p263
        %p395 = scmp.lt.s32.totalorder %s25, 1
        %s396 = scalar_select %p395, %s25, 1
        %s397 = smul.addr %s396, 8
        %s398 = scalar_lea.vmem %s10, %s397
        %p399 = scmp.lt.s32.totalorder %s25, 1
        %s400 = scalar_select %p399, %s25, 1
        %s401 = smul.addr %s400, 8
        %s402 = scalar_lea.vmem %s1, %s401
        %p403 = scmp.lt.s32.totalorder %s25, 1
        %s404 = scalar_select %p403, %s25, 1
        %s405 = smul.addr %s404, 8
        %s406 = scalar_lea.vmem %s10, %s405
        %v408 = vld [vmem:[%s355] sm:$0xff]
        %v409 = vld [vmem:[%s402] sm:$0xff]
        %v410 = vadd.f32 %v408, %v409
        %v411 = vpack.c.bf16 %v410, %v410
        %v412 = vld [vmem:[%s2] sm:$0xff]
        %v413 = vld [vmem:[%s2 + $0x8] sm:$0xff]
        %v414 = vld [vmem:[%s2 + $0x10] sm:$0xff]
        %v415 = vld [vmem:[%s2 + $0x18] sm:$0xff]
        %v416 = vpack.c.bf16 %v413, %v412
        %v417 = vpack.c.bf16 %v415, %v414
        %v418 = vld [vmem:[%s3] sm:$0x1]
        %v420 = vlaneseq
        %v421 = vshrl.u32 %v420, 7
        %v422 = vsub.s32 0, %v421
        %v423 = vrot.slane %v418, %v422
        %vm425 = vcmask 261120
        %v427 = vsel %vm425, %v411, 0
        %429 = vmatprep.subr.bf16.mxu0 0
        %430 = vmatpush1.bf16.msra.mxu0 0
        %431 = vmatprep.subr.bf16.mxu0 0
        %432 = vmatpush1.bf16.msra.mxu0 0
        %433 = vmatprep.subr.bf16.mxu0 0
        %434 = vmatpush1.bf16.msra.mxu0 0
        %435 = vmatprep.subr.bf16.mxu0 0
        %436 = vmatpush1.bf16.msra.mxu0 0
        %437 = vmatprep.subr.bf16.mxu0 0
        %438 = vmatpush1.bf16.msra.mxu0 0
        %439 = vmatprep.subr.bf16.mxu0 0
        %440 = vmatpush1.bf16.msra.mxu0 0
        %441 = vmatprep.subr.bf16.mxu0 0
        %442 = vmatpush1.bf16.msra.mxu0 %v417
        %443 = vmatprep.subr.bf16.mxu0 0
        %444 = vmatpush1.bf16.msra.mxu0 %v416
        %445 = vmatprep.subr.bf16.mxu0 0
        %446 = vmatpush2.bf16.msra.mxu0 0
        %447 = vmatprep.subr.bf16.mxu0 0
        %448 = vmatpush2.bf16.msra.mxu0 0
        %449 = vmatprep.subr.bf16.mxu0 0
        %450 = vmatpush2.bf16.msra.mxu0 0
        %451 = vmatprep.subr.bf16.mxu0 0
        %452 = vmatpush2.bf16.msra.mxu0 0
        %453 = vmatprep.subr.bf16.mxu0 0
        %454 = vmatpush2.bf16.msra.mxu0 0
        %455 = vmatprep.subr.bf16.mxu0 0
        %456 = vmatpush2.bf16.msra.mxu0 0
        %457 = vmatprep.subr.bf16.mxu0 0
        %458 = vmatpush2.bf16.msra.mxu0 0
        %459 = vmatprep.subr.bf16.mxu0 0
        %460 = vmatpush2.bf16.msra.mxu0 0
        %461 = vmatprep.mubr.bf16.mxu0 0
        %462 = vmatmul.mubr.bf16.gmra.mxu0 %v427
        %v463 = vpop.f32.mrf.mxu0
        %v464 = vadd.f32 %v423, %v463
        %v465 = vpop.f32.mrf.mxu0
        %v466 = vpop.f32.mrf.mxu0
        %v467 = vpop.f32.mrf.mxu0
        %468 = vdwg.mxu0
        %v469 = vpack.c.bf16 %v408, %v408
        %v470 = vld [vmem:[#allocation4] sm:$0xff]
        %v471 = vld [vmem:[#allocation4 + $0x8] sm:$0xff]
        %v472 = vld [vmem:[#allocation4 + $0x10] sm:$0xff]
        %v473 = vld [vmem:[#allocation4 + $0x18] sm:$0xff]
        %v474 = vpack.c.bf16 %v471, %v470
        %v475 = vpack.c.bf16 %v473, %v472
        %v476 = vld [vmem:[%s5] sm:$0x1]
        %v478 = vlaneseq
        %v479 = vshrl.u32 %v478, 7
        %v480 = vsub.s32 0, %v479
        %v481 = vrot.slane %v476, %v480
        %v484 = vsel %vm425, %v469, 0
        %486 = vmatprep.subr.bf16.mxu0 0
        %487 = vmatpush1.bf16.msra.mxu0 0
        %488 = vmatprep.subr.bf16.mxu0 0
        %489 = vmatpush1.bf16.msra.mxu0 0
        %490 = vmatprep.subr.bf16.mxu0 0
        %491 = vmatpush1.bf16.msra.mxu0 0
        %492 = vmatprep.subr.bf16.mxu0 0
        %493 = vmatpush1.bf16.msra.mxu0 0
        %494 = vmatprep.subr.bf16.mxu0 0
        %495 = vmatpush1.bf16.msra.mxu0 0
        %496 = vmatprep.subr.bf16.mxu0 0
        %497 = vmatpush1.bf16.msra.mxu0 0
        %498 = vmatprep.subr.bf16.mxu0 0
        %499 = vmatpush1.bf16.msra.mxu0 %v475
        %500 = vmatprep.subr.bf16.mxu0 0
        %501 = vmatpush1.bf16.msra.mxu0 %v474
        %502 = vmatprep.subr.bf16.mxu0 0
        %503 = vmatpush2.bf16.msra.mxu0 0
        %504 = vmatprep.subr.bf16.mxu0 0
        %505 = vmatpush2.bf16.msra.mxu0 0
        %506 = vmatprep.subr.bf16.mxu0 0
        %507 = vmatpush2.bf16.msra.mxu0 0
        %508 = vmatprep.subr.bf16.mxu0 0
        %509 = vmatpush2.bf16.msra.mxu0 0
        %510 = vmatprep.subr.bf16.mxu0 0
        %511 = vmatpush2.bf16.msra.mxu0 0
        %512 = vmatprep.subr.bf16.mxu0 0
        %513 = vmatpush2.bf16.msra.mxu0 0
        %514 = vmatprep.subr.bf16.mxu0 0
        %515 = vmatpush2.bf16.msra.mxu0 0
        %516 = vmatprep.subr.bf16.mxu0 0
        %517 = vmatpush2.bf16.msra.mxu0 0
        %518 = vmatprep.mubr.bf16.mxu0 0
        %519 = vmatmul.mubr.bf16.gmra.mxu0 %v484
        %v520 = vpop.f32.mrf.mxu0
        %v521 = vadd.f32 %v481, %v520
        %v522 = vpop.f32.mrf.mxu0
        %v523 = vpop.f32.mrf.mxu0
        %v524 = vpop.f32.mrf.mxu0
        %525 = vdwg.mxu0
        %527 = vrot.lane.b32.xlu0 %v464, 96
        %v528 = vpop.permute.xlu0 %527
        %vm529 = vcmask 64512
        %v530 = vsel %vm529, %v464, 0
        %v532 = vsel %vm529, %v528, 0
        %534 = vmatprep.subr.mxu0 0.0
        %535 = vmatpush1.xpose.msra.mxu0 0.0
        %536 = vmatprep.subr.mxu0 0.0
        %537 = vmatpush1.xpose.msra.mxu0 0.0
        %538 = vmatprep.subr.mxu0 0.0
        %539 = vmatpush1.xpose.msra.mxu0 0.0
        %540 = vmatprep.subr.mxu0 0.0
        %541 = vmatpush1.xpose.msra.mxu0 0.0
        %542 = vmatprep.subr.mxu0 0.0
        %543 = vmatpush1.xpose.msra.mxu0 0.0
        %544 = vmatprep.subr.mxu0 0.0
        %545 = vmatpush1.xpose.msra.mxu0 0.0
        %546 = vmatprep.subr.mxu0 0.0
        %547 = vmatpush1.xpose.msra.mxu0 0.0
        %548 = vmatprep.subr.mxu0 0.0
        %549 = vmatpush1.xpose.msra.mxu0 0.0
        %550 = vmatprep.subr.mxu0 0.0
        %551 = vmatpush1.xpose.msra.mxu0 0.0
        %552 = vmatprep.subr.mxu0 0.0
        %553 = vmatpush1.xpose.msra.mxu0 0.0
        %554 = vmatprep.subr.mxu0 0.0
        %555 = vmatpush1.xpose.msra.mxu0 0.0
        %556 = vmatprep.subr.mxu0 0.0
        %557 = vmatpush1.xpose.msra.mxu0 0.0
        %558 = vmatprep.subr.mxu0 0.0
        %559 = vmatpush1.xpose.msra.mxu0 0.0
        %560 = vmatprep.subr.mxu0 0.0
        %561 = vmatpush1.xpose.msra.mxu0 0.0
        %562 = vmatprep.subr.mxu0 0.0
        %563 = vmatpush1.xpose.msra.mxu0 0.0
        %564 = vmatprep.subr.mxu0 0.0
        %565 = vmatpush1.xpose.msra.mxu0 %v532
        %566 = vmatprep.subr.mxu0 0.0
        %567 = vmatpush2.xpose.msra.mxu0 0.0
        %568 = vmatprep.subr.mxu0 0.0
        %569 = vmatpush2.xpose.msra.mxu0 0.0
        %570 = vmatprep.subr.mxu0 0.0
        %571 = vmatpush2.xpose.msra.mxu0 0.0
        %572 = vmatprep.subr.mxu0 0.0
        %573 = vmatpush2.xpose.msra.mxu0 0.0
        %574 = vmatprep.subr.mxu0 0.0
        %575 = vmatpush2.xpose.msra.mxu0 0.0
        %576 = vmatprep.subr.mxu0 0.0
        %577 = vmatpush2.xpose.msra.mxu0 0.0
        %578 = vmatprep.subr.mxu0 0.0
        %579 = vmatpush2.xpose.msra.mxu0 0.0
        %580 = vmatprep.subr.mxu0 0.0
        %581 = vmatpush2.xpose.msra.mxu0 0.0
        %582 = vmatprep.subr.mxu0 0.0
        %583 = vmatpush2.xpose.msra.mxu0 0.0
        %584 = vmatprep.subr.mxu0 0.0
        %585 = vmatpush2.xpose.msra.mxu0 0.0
        %586 = vmatprep.subr.mxu0 0.0
        %587 = vmatpush2.xpose.msra.mxu0 0.0
        %588 = vmatprep.subr.mxu0 0.0
        %589 = vmatpush2.xpose.msra.mxu0 0.0
        %590 = vmatprep.subr.mxu0 0.0
        %591 = vmatpush2.xpose.msra.mxu0 0.0
        %592 = vmatprep.subr.mxu0 0.0
        %593 = vmatpush2.xpose.msra.mxu0 0.0
        %594 = vmatprep.subr.mxu0 0.0
        %595 = vmatpush2.xpose.msra.mxu0 0.0
        %596 = vmatprep.subr.mxu0 0.0
        %597 = vmatpush2.xpose.msra.mxu0 0.0
        %598 = vmatprep.mubr.f32.mxu0 0.0
        %599 = vmatmul.mubr.f32.gmra.mxu0 %v530
        %v600 = vpop.f32.mrf.mxu0
        %v601 = vadd.f32 0.0, %v600
        %v602 = vpop.f32.mrf.mxu0
        %603 = vdwg.mxu0
        %v604 = vmul.f32 %v601, 0.35355338
        %v605 = vsel %vm529, %v604, -inf
        %606 = vmax.xlane.f32.xlu0 %v605
        %v607 = vpop.xlane.xlu0 %606
        %v608 = vsub.f32 %v604, %v607
        %v609 = vmul.f32 %v608, 1.442695
        %v610 = vpow.pop %v609
        %v611 = vsel %vm529, %v610, 0.0
        %612 = vadd.xlane.f32.xlu0 %v611
        %v613 = vpop.xlane.xlu0 %612
        %v614 = vrcp.pop %v613
        %v615 = vmul.f32 %v610, %v614
        %v617 = vsel %vm529, %v615, 0
        %619 = vmatprep.subr.mxu0 0.0
        %620 = vmatpush1.msra.mxu0 0.0
        %621 = vmatprep.subr.mxu0 0.0
        %622 = vmatpush1.msra.mxu0 0.0
        %623 = vmatprep.subr.mxu0 0.0
        %624 = vmatpush1.msra.mxu0 0.0
        %625 = vmatprep.subr.mxu0 0.0
        %626 = vmatpush1.msra.mxu0 0.0
        %627 = vmatprep.subr.mxu0 0.0
        %628 = vmatpush1.msra.mxu0 0.0
        %629 = vmatprep.subr.mxu0 0.0
        %630 = vmatpush1.msra.mxu0 0.0
        %631 = vmatprep.subr.mxu0 0.0
        %632 = vmatpush1.msra.mxu0 0.0
        %633 = vmatprep.subr.mxu0 0.0
        %634 = vmatpush1.msra.mxu0 0.0
        %635 = vmatprep.subr.mxu0 0.0
        %636 = vmatpush1.msra.mxu0 0.0
        %637 = vmatprep.subr.mxu0 0.0
        %638 = vmatpush1.msra.mxu0 0.0
        %639 = vmatprep.subr.mxu0 0.0
        %640 = vmatpush1.msra.mxu0 0.0
        %641 = vmatprep.subr.mxu0 0.0
        %642 = vmatpush1.msra.mxu0 0.0
        %643 = vmatprep.subr.mxu0 0.0
        %644 = vmatpush1.msra.mxu0 0.0
        %645 = vmatprep.subr.mxu0 0.0
        %646 = vmatpush1.msra.mxu0 0.0
        %647 = vmatprep.subr.mxu0 0.0
        %648 = vmatpush1.msra.mxu0 0.0
        %649 = vmatprep.subr.mxu0 0.0
        %650 = vmatpush1.msra.mxu0 %v521
        %651 = vmatprep.subr.mxu0 0.0
        %652 = vmatpush2.msra.mxu0 0.0
        %653 = vmatprep.subr.mxu0 0.0
        %654 = vmatpush2.msra.mxu0 0.0
        %655 = vmatprep.subr.mxu0 0.0
        %656 = vmatpush2.msra.mxu0 0.0
        %657 = vmatprep.subr.mxu0 0.0
        %658 = vmatpush2.msra.mxu0 0.0
        %659 = vmatprep.subr.mxu0 0.0
        %660 = vmatpush2.msra.mxu0 0.0
        %661 = vmatprep.subr.mxu0 0.0
        %662 = vmatpush2.msra.mxu0 0.0
        %663 = vmatprep.subr.mxu0 0.0
        %664 = vmatpush2.msra.mxu0 0.0
        %665 = vmatprep.subr.mxu0 0.0
        %666 = vmatpush2.msra.mxu0 0.0
        %667 = vmatprep.subr.mxu0 0.0
        %668 = vmatpush2.msra.mxu0 0.0
        %669 = vmatprep.subr.mxu0 0.0
        %670 = vmatpush2.msra.mxu0 0.0
        %671 = vmatprep.subr.mxu0 0.0
        %672 = vmatpush2.msra.mxu0 0.0
        %673 = vmatprep.subr.mxu0 0.0
        %674 = vmatpush2.msra.mxu0 0.0
        %675 = vmatprep.subr.mxu0 0.0
        %676 = vmatpush2.msra.mxu0 0.0
        %677 = vmatprep.subr.mxu0 0.0
        %678 = vmatpush2.msra.mxu0 0.0
        %679 = vmatprep.subr.mxu0 0.0
        %680 = vmatpush2.msra.mxu0 0.0
        %681 = vmatprep.subr.mxu0 0.0
        %682 = vmatpush2.msra.mxu0 0.0
        %683 = vmatprep.mubr.f32.mxu0 0.0
        %684 = vmatmul.mubr.f32.gmra.mxu0 %v617
        %v685 = vpop.f32.mrf.mxu0
        %v686 = vadd.f32 0.0, %v685
        %v687 = vpop.f32.mrf.mxu0
        %688 = vdwg.mxu0
        %v689 = vpack.c.bf16 %v686, %v686
        %v690 = vld [vmem:[%s6] sm:$0xff]
        %v691 = vpack.c.bf16 %v690, %v690
        %692 = vrot.lane.b32.xlu0 %v464, 120
        %v693 = vpop.permute.xlu0 %692
        %694 = vrot.lane.b32.xlu0 %v464, 88
        %v695 = vpop.permute.xlu0 %694
        %v696 = vsel %vm529, %v693, 0
        %v698 = vsel %vm529, %v695, 0
        %700 = vmatprep.subr.mxu0 0.0
        %701 = vmatpush1.xpose.msra.mxu0 0.0
        %702 = vmatprep.subr.mxu0 0.0
        %703 = vmatpush1.xpose.msra.mxu0 0.0
        %704 = vmatprep.subr.mxu0 0.0
        %705 = vmatpush1.xpose.msra.mxu0 0.0
        %706 = vmatprep.subr.mxu0 0.0
        %707 = vmatpush1.xpose.msra.mxu0 0.0
        %708 = vmatprep.subr.mxu0 0.0
        %709 = vmatpush1.xpose.msra.mxu0 0.0
        %710 = vmatprep.subr.mxu0 0.0
        %711 = vmatpush1.xpose.msra.mxu0 0.0
        %712 = vmatprep.subr.mxu0 0.0
        %713 = vmatpush1.xpose.msra.mxu0 0.0
        %714 = vmatprep.subr.mxu0 0.0
        %715 = vmatpush1.xpose.msra.mxu0 0.0
        %716 = vmatprep.subr.mxu0 0.0
        %717 = vmatpush1.xpose.msra.mxu0 0.0
        %718 = vmatprep.subr.mxu0 0.0
        %719 = vmatpush1.xpose.msra.mxu0 0.0
        %720 = vmatprep.subr.mxu0 0.0
        %721 = vmatpush1.xpose.msra.mxu0 0.0
        %722 = vmatprep.subr.mxu0 0.0
        %723 = vmatpush1.xpose.msra.mxu0 0.0
        %724 = vmatprep.subr.mxu0 0.0
        %725 = vmatpush1.xpose.msra.mxu0 0.0
        %726 = vmatprep.subr.mxu0 0.0
        %727 = vmatpush1.xpose.msra.mxu0 0.0
        %728 = vmatprep.subr.mxu0 0.0
        %729 = vmatpush1.xpose.msra.mxu0 0.0
        %730 = vmatprep.subr.mxu0 0.0
        %731 = vmatpush1.xpose.msra.mxu0 %v698
        %732 = vmatprep.subr.mxu0 0.0
        %733 = vmatpush2.xpose.msra.mxu0 0.0
        %734 = vmatprep.subr.mxu0 0.0
        %735 = vmatpush2.xpose.msra.mxu0 0.0
        %736 = vmatprep.subr.mxu0 0.0
        %737 = vmatpush2.xpose.msra.mxu0 0.0
        %738 = vmatprep.subr.mxu0 0.0
        %739 = vmatpush2.xpose.msra.mxu0 0.0
        %740 = vmatprep.subr.mxu0 0.0
        %741 = vmatpush2.xpose.msra.mxu0 0.0
        %742 = vmatprep.subr.mxu0 0.0
        %743 = vmatpush2.xpose.msra.mxu0 0.0
        %744 = vmatprep.subr.mxu0 0.0
        %745 = vmatpush2.xpose.msra.mxu0 0.0
        %746 = vmatprep.subr.mxu0 0.0
        %747 = vmatpush2.xpose.msra.mxu0 0.0
        %748 = vmatprep.subr.mxu0 0.0
        %749 = vmatpush2.xpose.msra.mxu0 0.0
        %750 = vmatprep.subr.mxu0 0.0
        %751 = vmatpush2.xpose.msra.mxu0 0.0
        %752 = vmatprep.subr.mxu0 0.0
        %753 = vmatpush2.xpose.msra.mxu0 0.0
        %754 = vmatprep.subr.mxu0 0.0
        %755 = vmatpush2.xpose.msra.mxu0 0.0
        %756 = vmatprep.subr.mxu0 0.0
        %757 = vmatpush2.xpose.msra.mxu0 0.0
        %758 = vmatprep.subr.mxu0 0.0
        %759 = vmatpush2.xpose.msra.mxu0 0.0
        %760 = vmatprep.subr.mxu0 0.0
        %761 = vmatpush2.xpose.msra.mxu0 0.0
        %762 = vmatprep.subr.mxu0 0.0
        %763 = vmatpush2.xpose.msra.mxu0 0.0
        %764 = vmatprep.mubr.f32.mxu0 0.0
        %765 = vmatmul.mubr.f32.gmra.mxu0 %v696
        %v766 = vpop.f32.mrf.mxu0
        %v767 = vadd.f32 0.0, %v766
        %v768 = vpop.f32.mrf.mxu0
        %769 = vdwg.mxu0
        %v770 = vmul.f32 %v767, 0.35355338
        %v771 = vsel %vm529, %v770, -inf
        %772 = vmax.xlane.f32.xlu0 %v771
        %v773 = vpop.xlane.xlu0 %772
        %v774 = vsub.f32 %v770, %v773
        %v775 = vmul.f32 %v774, 1.442695
        %v776 = vpow.pop %v775
        %v777 = vsel %vm529, %v776, 0.0
        %778 = vadd.xlane.f32.xlu0 %v777
        %v779 = vpop.xlane.xlu0 %778
        %v780 = vrcp.pop %v779
        %v781 = vmul.f32 %v776, %v780
        %783 = vrot.lane.b32.xlu0 %v521, 120
        %v784 = vpop.permute.xlu0 %783
        %v787 = vsel %vm529, %v781, 0
        %789 = vmatprep.subr.mxu0 0.0
        %790 = vmatpush1.msra.mxu0 0.0
        %791 = vmatprep.subr.mxu0 0.0
        %792 = vmatpush1.msra.mxu0 0.0
        %793 = vmatprep.subr.mxu0 0.0
        %794 = vmatpush1.msra.mxu0 0.0
        %795 = vmatprep.subr.mxu0 0.0
        %796 = vmatpush1.msra.mxu0 0.0
        %797 = vmatprep.subr.mxu0 0.0
        %798 = vmatpush1.msra.mxu0 0.0
        %799 = vmatprep.subr.mxu0 0.0
        %800 = vmatpush1.msra.mxu0 0.0
        %801 = vmatprep.subr.mxu0 0.0
        %802 = vmatpush1.msra.mxu0 0.0
        %803 = vmatprep.subr.mxu0 0.0
        %804 = vmatpush1.msra.mxu0 0.0
        %805 = vmatprep.subr.mxu0 0.0
        %806 = vmatpush1.msra.mxu0 0.0
        %807 = vmatprep.subr.mxu0 0.0
        %808 = vmatpush1.msra.mxu0 0.0
        %809 = vmatprep.subr.mxu0 0.0
        %810 = vmatpush1.msra.mxu0 0.0
        %811 = vmatprep.subr.mxu0 0.0
        %812 = vmatpush1.msra.mxu0 0.0
        %813 = vmatprep.subr.mxu0 0.0
        %814 = vmatpush1.msra.mxu0 0.0
        %815 = vmatprep.subr.mxu0 0.0
        %816 = vmatpush1.msra.mxu0 0.0
        %817 = vmatprep.subr.mxu0 0.0
        %818 = vmatpush1.msra.mxu0 0.0
        %819 = vmatprep.subr.mxu0 0.0
        %820 = vmatpush1.msra.mxu0 %v784
        %821 = vmatprep.subr.mxu0 0.0
        %822 = vmatpush2.msra.mxu0 0.0
        %823 = vmatprep.subr.mxu0 0.0
        %824 = vmatpush2.msra.mxu0 0.0
        %825 = vmatprep.subr.mxu0 0.0
        %826 = vmatpush2.msra.mxu0 0.0
        %827 = vmatprep.subr.mxu0 0.0
        %828 = vmatpush2.msra.mxu0 0.0
        %829 = vmatprep.subr.mxu0 0.0
        %830 = vmatpush2.msra.mxu0 0.0
        %831 = vmatprep.subr.mxu0 0.0
        %832 = vmatpush2.msra.mxu0 0.0
        %833 = vmatprep.subr.mxu0 0.0
        %834 = vmatpush2.msra.mxu0 0.0
        %835 = vmatprep.subr.mxu0 0.0
        %836 = vmatpush2.msra.mxu0 0.0
        %837 = vmatprep.subr.mxu0 0.0
        %838 = vmatpush2.msra.mxu0 0.0
        %839 = vmatprep.subr.mxu0 0.0
        %840 = vmatpush2.msra.mxu0 0.0
        %841 = vmatprep.subr.mxu0 0.0
        %842 = vmatpush2.msra.mxu0 0.0
        %843 = vmatprep.subr.mxu0 0.0
        %844 = vmatpush2.msra.mxu0 0.0
        %845 = vmatprep.subr.mxu0 0.0
        %846 = vmatpush2.msra.mxu0 0.0
        %847 = vmatprep.subr.mxu0 0.0
        %848 = vmatpush2.msra.mxu0 0.0
        %849 = vmatprep.subr.mxu0 0.0
        %850 = vmatpush2.msra.mxu0 0.0
        %851 = vmatprep.subr.mxu0 0.0
        %852 = vmatpush2.msra.mxu0 0.0
        %853 = vmatprep.mubr.f32.mxu0 0.0
        %854 = vmatmul.mubr.f32.gmra.mxu0 %v787
        %v855 = vpop.f32.mrf.mxu0
        %v856 = vadd.f32 0.0, %v855
        %v857 = vpop.f32.mrf.mxu0
        %858 = vdwg.mxu0
        %v859 = vpack.c.bf16 %v856, %v856
        %v860 = vld [vmem:[%s6 + $0x8] sm:$0xff]
        %v861 = vpack.c.bf16 %v860, %v860
        %v863 = vsel %vm529, %v859, 0
        %vm865 = vcmask 1043456
        %v867 = vsel %vm865, %v861, 0
        %869 = vmatprep.subr.bf16.mxu0 0
        %870 = vmatpush1.bf16.msra.mxu0 0
        %871 = vmatprep.subr.bf16.mxu0 0
        %872 = vmatpush1.bf16.msra.mxu0 0
        %873 = vmatprep.subr.bf16.mxu0 0
        %874 = vmatpush1.bf16.msra.mxu0 0
        %875 = vmatprep.subr.bf16.mxu0 0
        %876 = vmatpush1.bf16.msra.mxu0 0
        %877 = vmatprep.subr.bf16.mxu0 0
        %878 = vmatpush1.bf16.msra.mxu0 0
        %879 = vmatprep.subr.bf16.mxu0 0
        %880 = vmatpush1.bf16.msra.mxu0 0
        %881 = vmatprep.subr.bf16.mxu0 0
        %882 = vmatpush1.bf16.msra.mxu0 0
        %883 = vmatprep.subr.bf16.mxu0 0
        %884 = vmatpush1.bf16.msra.mxu0 %v867
        %885 = vmatprep.subr.bf16.mxu0 0
        %886 = vmatpush2.bf16.msra.mxu0 0
        %887 = vmatprep.subr.bf16.mxu0 0
        %888 = vmatpush2.bf16.msra.mxu0 0
        %889 = vmatprep.subr.bf16.mxu0 0
        %890 = vmatpush2.bf16.msra.mxu0 0
        %891 = vmatprep.subr.bf16.mxu0 0
        %892 = vmatpush2.bf16.msra.mxu0 0
        %893 = vmatprep.subr.bf16.mxu0 0
        %894 = vmatpush2.bf16.msra.mxu0 0
        %895 = vmatprep.subr.bf16.mxu0 0
        %896 = vmatpush2.bf16.msra.mxu0 0
        %897 = vmatprep.subr.bf16.mxu0 0
        %898 = vmatpush2.bf16.msra.mxu0 0
        %899 = vmatprep.subr.bf16.mxu0 0
        %900 = vmatpush2.bf16.msra.mxu0 0
        %901 = vmatprep.mubr.bf16.mxu0 0
        %902 = vmatmul.mubr.bf16.gmra.mxu0 %v863
        %v903 = vpop.f32.mrf.mxu0
        %v904 = vadd.f32 0.0, %v903
        %v905 = vpop.f32.mrf.mxu0
        %v906 = vpop.f32.mrf.mxu0
        %v907 = vpop.f32.mrf.mxu0
        %908 = vdwg.mxu0
        %v910 = vsel %vm529, %v689, 0
        %v913 = vsel %vm865, %v691, 0
        %915 = vmatprep.subr.bf16.mxu0 0
        %916 = vmatpush1.bf16.msra.mxu0 0
        %917 = vmatprep.subr.bf16.mxu0 0
        %918 = vmatpush1.bf16.msra.mxu0 0
        %919 = vmatprep.subr.bf16.mxu0 0
        %920 = vmatpush1.bf16.msra.mxu0 0
        %921 = vmatprep.subr.bf16.mxu0 0
        %922 = vmatpush1.bf16.msra.mxu0 0
        %923 = vmatprep.subr.bf16.mxu0 0
        %924 = vmatpush1.bf16.msra.mxu0 0
        %925 = vmatprep.subr.bf16.mxu0 0
        %926 = vmatpush1.bf16.msra.mxu0 0
        %927 = vmatprep.subr.bf16.mxu0 0
        %928 = vmatpush1.bf16.msra.mxu0 0
        %929 = vmatprep.subr.bf16.mxu0 0
        %930 = vmatpush1.bf16.msra.mxu0 %v913
        %931 = vmatprep.subr.bf16.mxu0 0
        %932 = vmatpush2.bf16.msra.mxu0 0
        %933 = vmatprep.subr.bf16.mxu0 0
        %934 = vmatpush2.bf16.msra.mxu0 0
        %935 = vmatprep.subr.bf16.mxu0 0
        %936 = vmatpush2.bf16.msra.mxu0 0
        %937 = vmatprep.subr.bf16.mxu0 0
        %938 = vmatpush2.bf16.msra.mxu0 0
        %939 = vmatprep.subr.bf16.mxu0 0
        %940 = vmatpush2.bf16.msra.mxu0 0
        %941 = vmatprep.subr.bf16.mxu0 0
        %942 = vmatpush2.bf16.msra.mxu0 0
        %943 = vmatprep.subr.bf16.mxu0 0
        %944 = vmatpush2.bf16.msra.mxu0 0
        %945 = vmatprep.subr.bf16.mxu0 0
        %946 = vmatpush2.bf16.msra.mxu0 0
        %947 = vmatprep.mubr.bf16.mxu0 0
        %948 = vmatmul.mubr.bf16.gmra.mxu0 %v910
        %v949 = vpop.f32.mrf.mxu0
        %v950 = vadd.f32 %v904, %v949
        %v951 = vpop.f32.mrf.mxu0
        %v952 = vpop.f32.mrf.mxu0
        %v953 = vpop.f32.mrf.mxu0
        %954 = vdwg.mxu0
        %955 = vrot.lane.b32.xlu0 %v464, 112
        %v956 = vpop.permute.xlu0 %955
        %957 = vrot.lane.b32.xlu0 %v464, 80
        %v958 = vpop.permute.xlu0 %957
        %v959 = vsel %vm529, %v956, 0
        %v961 = vsel %vm529, %v958, 0
        %963 = vmatprep.subr.mxu0 0.0
        %964 = vmatpush1.xpose.msra.mxu0 0.0
        %965 = vmatprep.subr.mxu0 0.0
        %966 = vmatpush1.xpose.msra.mxu0 0.0
        %967 = vmatprep.subr.mxu0 0.0
        %968 = vmatpush1.xpose.msra.mxu0 0.0
        %969 = vmatprep.subr.mxu0 0.0
        %970 = vmatpush1.xpose.msra.mxu0 0.0
        %971 = vmatprep.subr.mxu0 0.0
        %972 = vmatpush1.xpose.msra.mxu0 0.0
        %973 = vmatprep.subr.mxu0 0.0
        %974 = vmatpush1.xpose.msra.mxu0 0.0
        %975 = vmatprep.subr.mxu0 0.0
        %976 = vmatpush1.xpose.msra.mxu0 0.0
        %977 = vmatprep.subr.mxu0 0.0
        %978 = vmatpush1.xpose.msra.mxu0 0.0
        %979 = vmatprep.subr.mxu0 0.0
        %980 = vmatpush1.xpose.msra.mxu0 0.0
        %981 = vmatprep.subr.mxu0 0.0
        %982 = vmatpush1.xpose.msra.mxu0 0.0
        %983 = vmatprep.subr.mxu0 0.0
        %984 = vmatpush1.xpose.msra.mxu0 0.0
        %985 = vmatprep.subr.mxu0 0.0
        %986 = vmatpush1.xpose.msra.mxu0 0.0
        %987 = vmatprep.subr.mxu0 0.0
        %988 = vmatpush1.xpose.msra.mxu0 0.0
        %989 = vmatprep.subr.mxu0 0.0
        %990 = vmatpush1.xpose.msra.mxu0 0.0
        %991 = vmatprep.subr.mxu0 0.0
        %992 = vmatpush1.xpose.msra.mxu0 0.0
        %993 = vmatprep.subr.mxu0 0.0
        %994 = vmatpush1.xpose.msra.mxu0 %v961
        %995 = vmatprep.subr.mxu0 0.0
        %996 = vmatpush2.xpose.msra.mxu0 0.0
        %997 = vmatprep.subr.mxu0 0.0
        %998 = vmatpush2.xpose.msra.mxu0 0.0
        %999 = vmatprep.subr.mxu0 0.0
        %1000 = vmatpush2.xpose.msra.mxu0 0.0
        %1001 = vmatprep.subr.mxu0 0.0
        %1002 = vmatpush2.xpose.msra.mxu0 0.0
        %1003 = vmatprep.subr.mxu0 0.0
        %1004 = vmatpush2.xpose.msra.mxu0 0.0
        %1005 = vmatprep.subr.mxu0 0.0
        %1006 = vmatpush2.xpose.msra.mxu0 0.0
        %1007 = vmatprep.subr.mxu0 0.0
        %1008 = vmatpush2.xpose.msra.mxu0 0.0
        %1009 = vmatprep.subr.mxu0 0.0
        %1010 = vmatpush2.xpose.msra.mxu0 0.0
        %1011 = vmatprep.subr.mxu0 0.0
        %1012 = vmatpush2.xpose.msra.mxu0 0.0
        %1013 = vmatprep.subr.mxu0 0.0
        %1014 = vmatpush2.xpose.msra.mxu0 0.0
        %1015 = vmatprep.subr.mxu0 0.0
        %1016 = vmatpush2.xpose.msra.mxu0 0.0
        %1017 = vmatprep.subr.mxu0 0.0
        %1018 = vmatpush2.xpose.msra.mxu0 0.0
        %1019 = vmatprep.subr.mxu0 0.0
        %1020 = vmatpush2.xpose.msra.mxu0 0.0
        %1021 = vmatprep.subr.mxu0 0.0
        %1022 = vmatpush2.xpose.msra.mxu0 0.0
        %1023 = vmatprep.subr.mxu0 0.0
        %1024 = vmatpush2.xpose.msra.mxu0 0.0
        %1025 = vmatprep.subr.mxu0 0.0
        %1026 = vmatpush2.xpose.msra.mxu0 0.0
        %1027 = vmatprep.mubr.f32.mxu0 0.0
        %1028 = vmatmul.mubr.f32.gmra.mxu0 %v959
        %v1029 = vpop.f32.mrf.mxu0
        %v1030 = vadd.f32 0.0, %v1029
        %v1031 = vpop.f32.mrf.mxu0
        %1032 = vdwg.mxu0
        %v1033 = vmul.f32 %v1030, 0.35355338
        %v1034 = vsel %vm529, %v1033, -inf
        %1035 = vmax.xlane.f32.xlu0 %v1034
        %v1036 = vpop.xlane.xlu0 %1035
        %v1037 = vsub.f32 %v1033, %v1036
        %v1038 = vmul.f32 %v1037, 1.442695
        %v1039 = vpow.pop %v1038
        %v1040 = vsel %vm529, %v1039, 0.0
        %1041 = vadd.xlane.f32.xlu0 %v1040
        %v1042 = vpop.xlane.xlu0 %1041
        %v1043 = vrcp.pop %v1042
        %v1044 = vmul.f32 %v1039, %v1043
        %1045 = vrot.lane.b32.xlu0 %v521, 112
        %v1046 = vpop.permute.xlu0 %1045
        %v1049 = vsel %vm529, %v1044, 0
        %1051 = vmatprep.subr.mxu0 0.0
        %1052 = vmatpush1.msra.mxu0 0.0
        %1053 = vmatprep.subr.mxu0 0.0
        %1054 = vmatpush1.msra.mxu0 0.0
        %1055 = vmatprep.subr.mxu0 0.0
        %1056 = vmatpush1.msra.mxu0 0.0
        %1057 = vmatprep.subr.mxu0 0.0
        %1058 = vmatpush1.msra.mxu0 0.0
        %1059 = vmatprep.subr.mxu0 0.0
        %1060 = vmatpush1.msra.mxu0 0.0
        %1061 = vmatprep.subr.mxu0 0.0
        %1062 = vmatpush1.msra.mxu0 0.0
        %1063 = vmatprep.subr.mxu0 0.0
        %1064 = vmatpush1.msra.mxu0 0.0
        %1065 = vmatprep.subr.mxu0 0.0
        %1066 = vmatpush1.msra.mxu0 0.0
        %1067 = vmatprep.subr.mxu0 0.0
        %1068 = vmatpush1.msra.mxu0 0.0
        %1069 = vmatprep.subr.mxu0 0.0
        %1070 = vmatpush1.msra.mxu0 0.0
        %1071 = vmatprep.subr.mxu0 0.0
        %1072 = vmatpush1.msra.mxu0 0.0
        %1073 = vmatprep.subr.mxu0 0.0
        %1074 = vmatpush1.msra.mxu0 0.0
        %1075 = vmatprep.subr.mxu0 0.0
        %1076 = vmatpush1.msra.mxu0 0.0
        %1077 = vmatprep.subr.mxu0 0.0
        %1078 = vmatpush1.msra.mxu0 0.0
        %1079 = vmatprep.subr.mxu0 0.0
        %1080 = vmatpush1.msra.mxu0 0.0
        %1081 = vmatprep.subr.mxu0 0.0
        %1082 = vmatpush1.msra.mxu0 %v1046
        %1083 = vmatprep.subr.mxu0 0.0
        %1084 = vmatpush2.msra.mxu0 0.0
        %1085 = vmatprep.subr.mxu0 0.0
        %1086 = vmatpush2.msra.mxu0 0.0
        %1087 = vmatprep.subr.mxu0 0.0
        %1088 = vmatpush2.msra.mxu0 0.0
        %1089 = vmatprep.subr.mxu0 0.0
        %1090 = vmatpush2.msra.mxu0 0.0
        %1091 = vmatprep.subr.mxu0 0.0
        %1092 = vmatpush2.msra.mxu0 0.0
        %1093 = vmatprep.subr.mxu0 0.0
        %1094 = vmatpush2.msra.mxu0 0.0
        %1095 = vmatprep.subr.mxu0 0.0
        %1096 = vmatpush2.msra.mxu0 0.0
        %1097 = vmatprep.subr.mxu0 0.0
        %1098 = vmatpush2.msra.mxu0 0.0
        %1099 = vmatprep.subr.mxu0 0.0
        %1100 = vmatpush2.msra.mxu0 0.0
        %1101 = vmatprep.subr.mxu0 0.0
        %1102 = vmatpush2.msra.mxu0 0.0
        %1103 = vmatprep.subr.mxu0 0.0
        %1104 = vmatpush2.msra.mxu0 0.0
        %1105 = vmatprep.subr.mxu0 0.0
        %1106 = vmatpush2.msra.mxu0 0.0
        %1107 = vmatprep.subr.mxu0 0.0
        %1108 = vmatpush2.msra.mxu0 0.0
        %1109 = vmatprep.subr.mxu0 0.0
        %1110 = vmatpush2.msra.mxu0 0.0
        %1111 = vmatprep.subr.mxu0 0.0
        %1112 = vmatpush2.msra.mxu0 0.0
        %1113 = vmatprep.subr.mxu0 0.0
        %1114 = vmatpush2.msra.mxu0 0.0
        %1115 = vmatprep.mubr.f32.mxu0 0.0
        %1116 = vmatmul.mubr.f32.gmra.mxu0 %v1049
        %v1117 = vpop.f32.mrf.mxu0
        %v1118 = vadd.f32 0.0, %v1117
        %v1119 = vpop.f32.mrf.mxu0
        %1120 = vdwg.mxu0
        %v1121 = vpack.c.bf16 %v1118, %v1118
        %v1122 = vld [vmem:[%s6 + $0x10] sm:$0xff]
        %v1123 = vpack.c.bf16 %v1122, %v1122
        %v1125 = vsel %vm529, %v1121, 0
        %v1128 = vsel %vm865, %v1123, 0
        %1130 = vmatprep.subr.bf16.mxu0 0
        %1131 = vmatpush1.bf16.msra.mxu0 0
        %1132 = vmatprep.subr.bf16.mxu0 0
        %1133 = vmatpush1.bf16.msra.mxu0 0
        %1134 = vmatprep.subr.bf16.mxu0 0
        %1135 = vmatpush1.bf16.msra.mxu0 0
        %1136 = vmatprep.subr.bf16.mxu0 0
        %1137 = vmatpush1.bf16.msra.mxu0 0
        %1138 = vmatprep.subr.bf16.mxu0 0
        %1139 = vmatpush1.bf16.msra.mxu0 0
        %1140 = vmatprep.subr.bf16.mxu0 0
        %1141 = vmatpush1.bf16.msra.mxu0 0
        %1142 = vmatprep.subr.bf16.mxu0 0
        %1143 = vmatpush1.bf16.msra.mxu0 0
        %1144 = vmatprep.subr.bf16.mxu0 0
        %1145 = vmatpush1.bf16.msra.mxu0 %v1128
        %1146 = vmatprep.subr.bf16.mxu0 0
        %1147 = vmatpush2.bf16.msra.mxu0 0
        %1148 = vmatprep.subr.bf16.mxu0 0
        %1149 = vmatpush2.bf16.msra.mxu0 0
        %1150 = vmatprep.subr.bf16.mxu0 0
        %1151 = vmatpush2.bf16.msra.mxu0 0
        %1152 = vmatprep.subr.bf16.mxu0 0
        %1153 = vmatpush2.bf16.msra.mxu0 0
        %1154 = vmatprep.subr.bf16.mxu0 0
        %1155 = vmatpush2.bf16.msra.mxu0 0
        %1156 = vmatprep.subr.bf16.mxu0 0
        %1157 = vmatpush2.bf16.msra.mxu0 0
        %1158 = vmatprep.subr.bf16.mxu0 0
        %1159 = vmatpush2.bf16.msra.mxu0 0
        %1160 = vmatprep.subr.bf16.mxu0 0
        %1161 = vmatpush2.bf16.msra.mxu0 0
        %1162 = vmatprep.mubr.bf16.mxu0 0
        %1163 = vmatmul.mubr.bf16.gmra.mxu0 %v1125
        %v1164 = vpop.f32.mrf.mxu0
        %v1165 = vadd.f32 0.0, %v1164
        %v1166 = vpop.f32.mrf.mxu0
        %v1167 = vpop.f32.mrf.mxu0
        %v1168 = vpop.f32.mrf.mxu0
        %1169 = vdwg.mxu0
        %v1170 = vadd.f32 %v950, %v1165
        %1171 = vrot.lane.b32.xlu0 %v464, 104
        %v1172 = vpop.permute.xlu0 %1171
        %1173 = vrot.lane.b32.xlu0 %v464, 72
        %v1174 = vpop.permute.xlu0 %1173
        %v1175 = vsel %vm529, %v1172, 0
        %v1177 = vsel %vm529, %v1174, 0
        %1179 = vmatprep.subr.mxu0 0.0
        %1180 = vmatpush1.xpose.msra.mxu0 0.0
        %1181 = vmatprep.subr.mxu0 0.0
        %1182 = vmatpush1.xpose.msra.mxu0 0.0
        %1183 = vmatprep.subr.mxu0 0.0
        %1184 = vmatpush1.xpose.msra.mxu0 0.0
        %1185 = vmatprep.subr.mxu0 0.0
        %1186 = vmatpush1.xpose.msra.mxu0 0.0
        %1187 = vmatprep.subr.mxu0 0.0
        %1188 = vmatpush1.xpose.msra.mxu0 0.0
        %1189 = vmatprep.subr.mxu0 0.0
        %1190 = vmatpush1.xpose.msra.mxu0 0.0
        %1191 = vmatprep.subr.mxu0 0.0
        %1192 = vmatpush1.xpose.msra.mxu0 0.0
        %1193 = vmatprep.subr.mxu0 0.0
        %1194 = vmatpush1.xpose.msra.mxu0 0.0
        %1195 = vmatprep.subr.mxu0 0.0
        %1196 = vmatpush1.xpose.msra.mxu0 0.0
        %1197 = vmatprep.subr.mxu0 0.0
        %1198 = vmatpush1.xpose.msra.mxu0 0.0
        %1199 = vmatprep.subr.mxu0 0.0
        %1200 = vmatpush1.xpose.msra.mxu0 0.0
        %1201 = vmatprep.subr.mxu0 0.0
        %1202 = vmatpush1.xpose.msra.mxu0 0.0
        %1203 = vmatprep.subr.mxu0 0.0
        %1204 = vmatpush1.xpose.msra.mxu0 0.0
        %1205 = vmatprep.subr.mxu0 0.0
        %1206 = vmatpush1.xpose.msra.mxu0 0.0
        %1207 = vmatprep.subr.mxu0 0.0
        %1208 = vmatpush1.xpose.msra.mxu0 0.0
        %1209 = vmatprep.subr.mxu0 0.0
        %1210 = vmatpush1.xpose.msra.mxu0 %v1177
        %1211 = vmatprep.subr.mxu0 0.0
        %1212 = vmatpush2.xpose.msra.mxu0 0.0
        %1213 = vmatprep.subr.mxu0 0.0
        %1214 = vmatpush2.xpose.msra.mxu0 0.0
        %1215 = vmatprep.subr.mxu0 0.0
        %1216 = vmatpush2.xpose.msra.mxu0 0.0
        %1217 = vmatprep.subr.mxu0 0.0
        %1218 = vmatpush2.xpose.msra.mxu0 0.0
        %1219 = vmatprep.subr.mxu0 0.0
        %1220 = vmatpush2.xpose.msra.mxu0 0.0
        %1221 = vmatprep.subr.mxu0 0.0
        %1222 = vmatpush2.xpose.msra.mxu0 0.0
        %1223 = vmatprep.subr.mxu0 0.0
        %1224 = vmatpush2.xpose.msra.mxu0 0.0
        %1225 = vmatprep.subr.mxu0 0.0
        %1226 = vmatpush2.xpose.msra.mxu0 0.0
        %1227 = vmatprep.subr.mxu0 0.0
        %1228 = vmatpush2.xpose.msra.mxu0 0.0
        %1229 = vmatprep.subr.mxu0 0.0
        %1230 = vmatpush2.xpose.msra.mxu0 0.0
        %1231 = vmatprep.subr.mxu0 0.0
        %1232 = vmatpush2.xpose.msra.mxu0 0.0
        %1233 = vmatprep.subr.mxu0 0.0
        %1234 = vmatpush2.xpose.msra.mxu0 0.0
        %1235 = vmatprep.subr.mxu0 0.0
        %1236 = vmatpush2.xpose.msra.mxu0 0.0
        %1237 = vmatprep.subr.mxu0 0.0
        %1238 = vmatpush2.xpose.msra.mxu0 0.0
        %1239 = vmatprep.subr.mxu0 0.0
        %1240 = vmatpush2.xpose.msra.mxu0 0.0
        %1241 = vmatprep.subr.mxu0 0.0
        %1242 = vmatpush2.xpose.msra.mxu0 0.0
        %1243 = vmatprep.mubr.f32.mxu0 0.0
        %1244 = vmatmul.mubr.f32.gmra.mxu0 %v1175
        %v1245 = vpop.f32.mrf.mxu0
        %v1246 = vadd.f32 0.0, %v1245
        %v1247 = vpop.f32.mrf.mxu0
        %1248 = vdwg.mxu0
        %v1249 = vmul.f32 %v1246, 0.35355338
        %v1250 = vsel %vm529, %v1249, -inf
        %1251 = vmax.xlane.f32.xlu0 %v1250
        %v1252 = vpop.xlane.xlu0 %1251
        %v1253 = vsub.f32 %v1249, %v1252
        %v1254 = vmul.f32 %v1253, 1.442695
        %v1255 = vpow.pop %v1254
        %v1256 = vsel %vm529, %v1255, 0.0
        %1257 = vadd.xlane.f32.xlu0 %v1256
        %v1258 = vpop.xlane.xlu0 %1257
        %v1259 = vrcp.pop %v1258
        %v1260 = vmul.f32 %v1255, %v1259
        %1261 = vrot.lane.b32.xlu0 %v521, 104
        %v1262 = vpop.permute.xlu0 %1261
        %v1265 = vsel %vm529, %v1260, 0
        %1267 = vmatprep.subr.mxu0 0.0
        %1268 = vmatpush1.msra.mxu0 0.0
        %1269 = vmatprep.subr.mxu0 0.0
        %1270 = vmatpush1.msra.mxu0 0.0
        %1271 = vmatprep.subr.mxu0 0.0
        %1272 = vmatpush1.msra.mxu0 0.0
        %1273 = vmatprep.subr.mxu0 0.0
        %1274 = vmatpush1.msra.mxu0 0.0
        %1275 = vmatprep.subr.mxu0 0.0
        %1276 = vmatpush1.msra.mxu0 0.0
        %1277 = vmatprep.subr.mxu0 0.0
        %1278 = vmatpush1.msra.mxu0 0.0
        %1279 = vmatprep.subr.mxu0 0.0
        %1280 = vmatpush1.msra.mxu0 0.0
        %1281 = vmatprep.subr.mxu0 0.0
        %1282 = vmatpush1.msra.mxu0 0.0
        %1283 = vmatprep.subr.mxu0 0.0
        %1284 = vmatpush1.msra.mxu0 0.0
        %1285 = vmatprep.subr.mxu0 0.0
        %1286 = vmatpush1.msra.mxu0 0.0
        %1287 = vmatprep.subr.mxu0 0.0
        %1288 = vmatpush1.msra.mxu0 0.0
        %1289 = vmatprep.subr.mxu0 0.0
        %1290 = vmatpush1.msra.mxu0 0.0
        %1291 = vmatprep.subr.mxu0 0.0
        %1292 = vmatpush1.msra.mxu0 0.0
        %1293 = vmatprep.subr.mxu0 0.0
        %1294 = vmatpush1.msra.mxu0 0.0
        %1295 = vmatprep.subr.mxu0 0.0
        %1296 = vmatpush1.msra.mxu0 0.0
        %1297 = vmatprep.subr.mxu0 0.0
        %1298 = vmatpush1.msra.mxu0 %v1262
        %1299 = vmatprep.subr.mxu0 0.0
        %1300 = vmatpush2.msra.mxu0 0.0
        %1301 = vmatprep.subr.mxu0 0.0
        %1302 = vmatpush2.msra.mxu0 0.0
        %1303 = vmatprep.subr.mxu0 0.0
        %1304 = vmatpush2.msra.mxu0 0.0
        %1305 = vmatprep.subr.mxu0 0.0
        %1306 = vmatpush2.msra.mxu0 0.0
        %1307 = vmatprep.subr.mxu0 0.0
        %1308 = vmatpush2.msra.mxu0 0.0
        %1309 = vmatprep.subr.mxu0 0.0
        %1310 = vmatpush2.msra.mxu0 0.0
        %1311 = vmatprep.subr.mxu0 0.0
        %1312 = vmatpush2.msra.mxu0 0.0
        %1313 = vmatprep.subr.mxu0 0.0
        %1314 = vmatpush2.msra.mxu0 0.0
        %1315 = vmatprep.subr.mxu0 0.0
        %1316 = vmatpush2.msra.mxu0 0.0
        %1317 = vmatprep.subr.mxu0 0.0
        %1318 = vmatpush2.msra.mxu0 0.0
        %1319 = vmatprep.subr.mxu0 0.0
        %1320 = vmatpush2.msra.mxu0 0.0
        %1321 = vmatprep.subr.mxu0 0.0
        %1322 = vmatpush2.msra.mxu0 0.0
        %1323 = vmatprep.subr.mxu0 0.0
        %1324 = vmatpush2.msra.mxu0 0.0
        %1325 = vmatprep.subr.mxu0 0.0
        %1326 = vmatpush2.msra.mxu0 0.0
        %1327 = vmatprep.subr.mxu0 0.0
        %1328 = vmatpush2.msra.mxu0 0.0
        %1329 = vmatprep.subr.mxu0 0.0
        %1330 = vmatpush2.msra.mxu0 0.0
        %1331 = vmatprep.mubr.f32.mxu0 0.0
        %1332 = vmatmul.mubr.f32.gmra.mxu0 %v1265
        %v1333 = vpop.f32.mrf.mxu0
        %v1334 = vadd.f32 0.0, %v1333
        %v1335 = vpop.f32.mrf.mxu0
        %1336 = vdwg.mxu0
        %v1337 = vpack.c.bf16 %v1334, %v1334
        %v1338 = vld [vmem:[%s6 + $0x18] sm:$0xff]
        %v1339 = vpack.c.bf16 %v1338, %v1338
        %v1341 = vsel %vm529, %v1337, 0
        %v1344 = vsel %vm865, %v1339, 0
        %1346 = vmatprep.subr.bf16.mxu0 0
        %1347 = vmatpush1.bf16.msra.mxu0 0
        %1348 = vmatprep.subr.bf16.mxu0 0
        %1349 = vmatpush1.bf16.msra.mxu0 0
        %1350 = vmatprep.subr.bf16.mxu0 0
        %1351 = vmatpush1.bf16.msra.mxu0 0
        %1352 = vmatprep.subr.bf16.mxu0 0
        %1353 = vmatpush1.bf16.msra.mxu0 0
        %1354 = vmatprep.subr.bf16.mxu0 0
        %1355 = vmatpush1.bf16.msra.mxu0 0
        %1356 = vmatprep.subr.bf16.mxu0 0
        %1357 = vmatpush1.bf16.msra.mxu0 0
        %1358 = vmatprep.subr.bf16.mxu0 0
        %1359 = vmatpush1.bf16.msra.mxu0 0
        %1360 = vmatprep.subr.bf16.mxu0 0
        %1361 = vmatpush1.bf16.msra.mxu0 %v1344
        %1362 = vmatprep.subr.bf16.mxu0 0
        %1363 = vmatpush2.bf16.msra.mxu0 0
        %1364 = vmatprep.subr.bf16.mxu0 0
        %1365 = vmatpush2.bf16.msra.mxu0 0
        %1366 = vmatprep.subr.bf16.mxu0 0
        %1367 = vmatpush2.bf16.msra.mxu0 0
        %1368 = vmatprep.subr.bf16.mxu0 0
        %1369 = vmatpush2.bf16.msra.mxu0 0
        %1370 = vmatprep.subr.bf16.mxu0 0
        %1371 = vmatpush2.bf16.msra.mxu0 0
        %1372 = vmatprep.subr.bf16.mxu0 0
        %1373 = vmatpush2.bf16.msra.mxu0 0
        %1374 = vmatprep.subr.bf16.mxu0 0
        %1375 = vmatpush2.bf16.msra.mxu0 0
        %1376 = vmatprep.subr.bf16.mxu0 0
        %1377 = vmatpush2.bf16.msra.mxu0 0
        %1378 = vmatprep.mubr.bf16.mxu0 0
        %1379 = vmatmul.mubr.bf16.gmra.mxu0 %v1341
        %v1380 = vpop.f32.mrf.mxu0
        %v1381 = vadd.f32 0.0, %v1380
        %v1382 = vpop.f32.mrf.mxu0
        %v1383 = vpop.f32.mrf.mxu0
        %v1384 = vpop.f32.mrf.mxu0
        %1385 = vdwg.mxu0
        %v1386 = vadd.f32 %v1170, %v1381
        %v1387 = vadd.f32 %v408, %v1386
        %v1388 = vld [vmem:[%s7] sm:$0x1]
        %v1390 = vlaneseq
        %v1391 = vshrl.u32 %v1390, 7
        %v1392 = vsub.s32 0, %v1391
        %v1393 = vrot.slane %v1388, %v1392
        %v1395 = vadd.f32 %v1387, %v1393
        %v1396 = vsel %vm425, %v1395, 0.0
        %1397 = vadd.xlane.f32.xlu0 %v1396
        %v1398 = vpop.xlane.xlu0 %1397
        %v1399 = vrcp.pop 32.0
        %v1400 = vmul.f32 %v1398, %v1399
        %v1401 = vsub.f32 %v1395, %v1400
        %v1402 = vmul.f32 %v1401, %v1401
        %v1403 = vsel %vm425, %v1402, 0.0
        %1404 = vadd.xlane.f32.xlu0 %v1403
        %v1405 = vpop.xlane.xlu0 %1404
        %v1406 = vmul.f32 %v1405, %v1399
        %v1407 = vadd.f32 %v1406, 1e-05
        %v1408 = vrsqrt.pop %v1407
        %v1409 = vmul.f32 %v1401, %v1408
        %v1410 = vld [vmem:[%s8] sm:$0x1]
        %v1412 = vlaneseq
        %v1413 = vshrl.u32 %v1412, 7
        %v1414 = vsub.s32 0, %v1413
        %v1415 = vrot.slane %v1410, %v1414
        %v1417 = vmul.f32 %v1409, %v1415
        %v1418 = vld [vmem:[%s9] sm:$0x1]
        %v1420 = vlaneseq
        %v1421 = vshrl.u32 %v1420, 7
        %v1422 = vsub.s32 0, %v1421
        %v1423 = vrot.slane %v1418, %v1422
        %v1425 = vadd.f32 %v1417, %v1423
        %1426 = vst.msk [vmem:[%s406] sm:$0xff] %vm425, %v1425
        %p1427 = scmp.lt.s32.totalorder %s25, 1
        %s1428 = scalar_select %p1427, %s25, 1
        %s1429 = smul.addr %s1428, 8
        %s1430 = scalar_lea.vmem %s10, %s1429
        // Predicated region
        $region69: #{deformable_transformer_decoder_forward.10} parent=59 // pred_check
          %p1431 = pneg %p263
        $region70: #{deformable_transformer_decoder_forward.10} parent=59 // pred_check_branch
          %1433 = sbr.rel (%p1431) target = $region72
        $region71: #{deformable_transformer_decoder_forward.10} parent=59 // pred_region
          _
        $region72: #{deformable_transformer_decoder_forward.10} parent=59 // pred_fallthru
          _
      $region60: #{deformable_transformer_decoder_forward.10} parent=5 // pred_fallthru
        _
      %p1434 = scmp.le.s32.totalorder 2, %s20
      // Predicated region
      $region73: #{deformable_transformer_decoder_forward.10} parent=5 // pred_check
        %p1435 = pneg %p1434
      $region74: #{deformable_transformer_decoder_forward.10} parent=5 // pred_check_branch
        %1437 = sbr.rel (%p1435) target = $region76
      $region75: #{deformable_transformer_decoder_forward.10} parent=5 // pred_region
        %s1438 = ssub.s32 %s20, 2
        // Predicated region
        $region77: #{deformable_transformer_decoder_forward.10} parent=75 // pred_check
          %p1439 = pneg %p269
        $region78: #{deformable_transformer_decoder_forward.10} parent=75 // pred_check_branch
          %1441 = sbr.rel (%p1439) target = $region80
        $region79: #{deformable_transformer_decoder_forward.10} parent=75 // pred_region
          %p1442 = scmp.lt.s32.totalorder %s26, 1
          %s1443 = scalar_select %p1442, %s26, 1
          %s1444 = smul.addr %s1443, 8
          %s1445 = scalar_lea.vmem %s10, %s1444
        $region80: #{deformable_transformer_decoder_forward.10} parent=75 // pred_fallthru
          _
      $region76: #{deformable_transformer_decoder_forward.10} parent=5 // pred_fallthru
        _
    $region6: #{deformable_transformer_decoder_forward.10} parent=1 // loop_footer
      %s24 = sadd.s32 1, %s20
    $region7: #{deformable_transformer_decoder_forward.10} parent=1 // loop_footer_branch
      %19 = sbr.rel target = $region3
    $region8: #{deformable_transformer_decoder_forward.10} parent=1 // loop_exit
      _
    %1446 = vsyncpa [#allocation3], 1
    %s1447 = scalar_lea.sflag [#allocation3], 1
    %1448 = vsyncpa %s1447, 1
    %1449 = vsyncpa [#allocation5], 1

// kernel: deformable_transformer_decoder_forward.12
$region0: #{deformable_transformer_decoder_forward.12}
  #allocation0 [shape = 'u32[]', space=smem, size = 0x4, offset = 0x4, fixed_abs, tag = 'smem constant byte address 0x4 - core index']
  #allocation1 [shape = 'u32[144,128]{1,0:T(1,128)}', space=vmem, size = 0x12000, scoped, tag = 'internal scratch']
  %s0 = inlined_call_operand.vmem [shape: f32[2,80,32], index: 0, kind: input, shape index: {}]
  %s1 = inlined_call_operand.vmem [shape: f32[32,32], index: 1, kind: input, shape index: {}]
  %s2 = inlined_call_operand.vmem [shape: f32[1,32], index: 2, kind: input, shape index: {}]
  %s3 = inlined_call_operand.vmem [shape: f32[2,80,32], index: 3, kind: output, shape index: {}]
  %s4 = sld [smem:[#allocation0]]
  $region45: #{deformable_transformer_decoder_forward.12} parent=0
    _
  %s6 = ssub.s32 1, %s4
  %s7 = scalar_select 0, %s6, %s4
  loop: start=0, step=1, limit=4
  $region2: #{deformable_transformer_decoder_forward.12} parent=0 // loop_pre_header
    _
  $region3: #{deformable_transformer_decoder_forward.12} parent=0 // loop_header
    %s9 = sphi 0, %s13
    %p10 = scmp.ge.s32.totalorder %s9, 4
    %s19 = sphi 0, %s21
    %s22 = sphi 0, %s19
    %s23 = sphi 0, %s22
    %s39 = sphi 0, %s23
    %s43 = sphi 0, %s43
    %s45 = sphi 0, %s43
    %s46 = sphi 0, %s45
    %s60 = sphi 0, %s46
    %s64 = sphi 0, %s64
    %s66 = sphi 0, %s64
    %s67 = sphi 0, %s66
    %s81 = sphi 0, %s67
    %s87 = sphi 0, %s89
    %s90 = sphi 0, %s87
    %s91 = sphi 0, %s90
    %s107 = sphi 0, %s91
  $region4: #{deformable_transformer_decoder_forward.12} parent=0 // loop_header_branch
    %12 = sbr.rel (%p10) target = $region8
  $region5: #{deformable_transformer_decoder_forward.12} parent=0 // loop_body
    %s14 = ssub.s32 %s9, 1
    %s15 = ssub.s32 %s9, 2
    %s16 = sadd.s32 %s9, 1
    %s17 = ssub.s32 %s9, %s16
    %p18 = scmp.eq.s32.totalorder %s17, 0
    %s20 = sadd.s32 %s19, 1
    %s21 = scalar_select %p18, %s19, %s20
    %p24 = pneg %p18
    %p25 = scmp.eq.s32.totalorder %s9, 1
    %p26 = por %p24, %p25
    %p27 = scmp.ne.s32.totalorder %s19, %s22
    %p28 = scmp.eq.s32.totalorder %s9, 0
    %p29 = por %p27, %p28
    %p30 = scmp.ne.s32.totalorder %s19, %s22
    %p31 = scmp.eq.s32.totalorder %s14, 1
    %p32 = por %p30, %p31
    %p33 = scmp.ne.s32.totalorder %s22, %s23
    %p34 = scmp.eq.s32.totalorder %s14, 0
    %p35 = por %p33, %p34
    %p36 = scmp.ne.s32.totalorder %s22, %s23
    %p37 = scmp.eq.s32.totalorder %s15, 1
    %p38 = por %p36, %p37
    %p40 = scmp.ne.s32.totalorder %s23, %s39
    %p41 = scmp.eq.s32.totalorder %s15, 0
    %p42 = por %p40, %p41
    %s44 = sadd.s32 %s43, 1
    %p47 = scmp.eq.s32.totalorder %s9, 1
    %p48 = scmp.ne.s32.totalorder %s43, %s45
    %p49 = scmp.eq.s32.totalorder %s9, 0
    %p50 = por %p48, %p49
    %p51 = scmp.ne.s32.totalorder %s43, %s45
    %p52 = scmp.eq.s32.totalorder %s14, 1
    %p53 = por %p51, %p52
    %p54 = scmp.ne.s32.totalorder %s45, %s46
    %p55 = scmp.eq.s32.totalorder %s14, 0
    %p56 = por %p54, %p55
    %p57 = scmp.ne.s32.totalorder %s45, %s46
    %p58 = scmp.eq.s32.totalorder %s15, 1
    %p59 = por %p57, %p58
    %p61 = scmp.ne.s32.totalorder %s46, %s60
    %p62 = scmp.eq.s32.totalorder %s15, 0
    %p63 = por %p61, %p62
    %s65 = sadd.s32 %s64, 1
    %p68 = scmp.eq.s32.totalorder %s9, 1
    %p69 = scmp.ne.s32.totalorder %s64, %s66
    %p70 = scmp.eq.s32.totalorder %s9, 0
    %p71 = por %p69, %p70
    %p72 = scmp.ne.s32.totalorder %s64, %s66
    %p73 = scmp.eq.s32.totalorder %s14, 1
    %p74 = por %p72, %p73
    %p75 = scmp.ne.s32.totalorder %s66, %s67
    %p76 = scmp.eq.s32.totalorder %s14, 0
    %p77 = por %p75, %p76
    %p78 = scmp.ne.s32.totalorder %s66, %s67
    %p79 = scmp.eq.s32.totalorder %s15, 1
    %p80 = por %p78, %p79
    %p82 = scmp.ne.s32.totalorder %s67, %s81
    %p83 = scmp.eq.s32.totalorder %s15, 0
    %p84 = por %p82, %p83
    %s85 = ssub.s32 %s9, %s16
    %p86 = scmp.eq.s32.totalorder %s85, 0
    %s88 = sadd.s32 %s87, 1
    %s89 = scalar_select %p86, %s87, %s88
    %p92 = pneg %p86
    %p93 = scmp.eq.s32.totalorder %s9, 1
    %p94 = por %p92, %p93
    %p95 = scmp.ne.s32.totalorder %s87, %s90
    %p96 = scmp.eq.s32.totalorder %s9, 0
    %p97 = por %p95, %p96
    %p98 = scmp.ne.s32.totalorder %s87, %s90
    %p99 = scmp.eq.s32.totalorder %s14, 1
    %p100 = por %p98, %p99
    %p101 = scmp.ne.s32.totalorder %s90, %s91
    %p102 = scmp.eq.s32.totalorder %s14, 0
    %p103 = por %p101, %p102
    %p104 = scmp.ne.s32.totalorder %s90, %s91
    %p105 = scmp.eq.s32.totalorder %s15, 1
    %p106 = por %p104, %p105
    %p108 = scmp.ne.s32.totalorder %s91, %s107
    %p109 = scmp.eq.s32.totalorder %s15, 0
    %p110 = por %p108, %p109
    %p111 = scmp.le.s32.totalorder 1, %s9
    %p112 = scmp.lt.s32.totalorder %s9, 3
    %p113 = pnand %p111, %p112
    %p114 = pneg %p113
    // Predicated region
    $region9: #{deformable_transformer_decoder_forward.12} parent=5 // pred_check
      _
    $region10: #{deformable_transformer_decoder_forward.12} parent=5 // pred_check_branch
      %116 = sbr.rel (%p113) target = $region12
    $region11: #{deformable_transformer_decoder_forward.12} parent=5 // pred_region
      %s117 = ssub.s32 %s9, 1
      // Predicated region
      $region13: #{deformable_transformer_decoder_forward.12} parent=11 // pred_check
        %p118 = pneg %p56
      $region14: #{deformable_transformer_decoder_forward.12} parent=11 // pred_check_branch
        %120 = sbr.rel (%p118) target = $region16
      $region15: #{deformable_transformer_decoder_forward.12} parent=11 // pred_region
        _
      $region16: #{deformable_transformer_decoder_forward.12} parent=11 // pred_fallthru
        _
      // Predicated region
      $region17: #{deformable_transformer_decoder_forward.12} parent=11 // pred_check
        %p121 = pneg %p77
      $region18: #{deformable_transformer_decoder_forward.12} parent=11 // pred_check_branch
        %123 = sbr.rel (%p121) target = $region20
      $region19: #{deformable_transformer_decoder_forward.12} parent=11 // pred_region
        _
      $region20: #{deformable_transformer_decoder_forward.12} parent=11 // pred_fallthru
        _
    $region12: #{deformable_transformer_decoder_forward.12} parent=5 // pred_fallthru
      _
    %p124 = scmp.lt.s32.totalorder %s9, 2
    // Predicated region
    $region21: #{deformable_transformer_decoder_forward.12} parent=5 // pred_check
      %p125 = pneg %p124
    $region22: #{deformable_transformer_decoder_forward.12} parent=5 // pred_check_branch
      %127 = sbr.rel (%p125) target = $region24
    $region23: #{deformable_transformer_decoder_forward.12} parent=5 // pred_region
      // Predicated region
      $region25: #{deformable_transformer_decoder_forward.12} parent=23 // pred_check
        %p128 = pneg %p29
      $region26: #{deformable_transformer_decoder_forward.12} parent=23 // pred_check_branch
        %130 = sbr.rel (%p128) target = $region28
      $region27: #{deformable_transformer_decoder_forward.12} parent=23 // pred_region
        %p131 = scmp.lt.s32.totalorder %s9, 1
        %s132 = scalar_select %p131, %s9, 1
        %s133 = smul.addr %s132, 10
        %s134 = smul.addr %s133, 8
        %s135 = scalar_lea.vmem %s0, %s134
      $region28: #{deformable_transformer_decoder_forward.12} parent=23 // pred_fallthru
        _
    $region24: #{deformable_transformer_decoder_forward.12} parent=5 // pred_fallthru
      _
    %p136 = scmp.le.s32.totalorder 1, %s9
    %p137 = scmp.lt.s32.totalorder %s9, 3
    %p138 = pnand %p136, %p137
    %p139 = pneg %p138
    // Predicated region
    $region29: #{deformable_transformer_decoder_forward.12} parent=5 // pred_check
      _
    $region30: #{deformable_transformer_decoder_forward.12} parent=5 // pred_check_branch
      %141 = sbr.rel (%p138) target = $region32
    $region31: #{deformable_transformer_decoder_forward.12} parent=5 // pred_region
      %s142 = ssub.s32 %s9, 1
      %p143 = scmp.lt.s32.totalorder %s14, 1
      %s144 = scalar_select %p143, %s14, 1
      %s145 = smul.addr %s144, 10
      %s146 = smul.addr %s145, 8
      %s147 = scalar_lea.vmem %s0, %s146
      %p148 = pneg %p35
      %p149 = pneg %p32
      %p150 = pneg %p56
      %p151 = pneg %p53
      %p152 = pneg %p77
      %p153 = pneg %p74
      %p154 = pneg %p103
      %p155 = pneg %p100
      %p156 = scmp.lt.s32.totalorder %s14, 1
      %s157 = scalar_select %p156, %s14, 1
      %s158 = smul.addr %s157, 10
      %s159 = smul.addr %s158, 8
      %s160 = scalar_lea.vmem %s3, %s159
      %p161 = scmp.lt.s32.totalorder %s14, 1
      %s162 = scalar_select %p161, %s14, 1
      %s163 = smul.addr %s162, 10
      %s164 = smul.addr %s163, 8
      %s165 = scalar_lea.vmem %s0, %s164
      %p166 = scmp.lt.s32.totalorder %s14, 1
      %s167 = scalar_select %p166, %s14, 1
      %s168 = smul.addr %s167, 10
      %s169 = smul.addr %s168, 8
      %s170 = scalar_lea.vmem %s3, %s169
      %v172 = vld [vmem:[%s165] sm:$0xff]
      %v173 = vld [vmem:[%s165 + $0x8] sm:$0xff]
      %v174 = vld [vmem:[%s165 + $0x10] sm:$0xff]
      %v175 = vld [vmem:[%s165 + $0x18] sm:$0xff]
      %v176 = vld [vmem:[%s165 + $0x20] sm:$0xff]
      %v177 = vld [vmem:[%s165 + $0x28] sm:$0xff]
      %v178 = vld [vmem:[%s165 + $0x30] sm:$0xff]
      %v179 = vld [vmem:[%s165 + $0x38] sm:$0xff]
      %v180 = vld [vmem:[%s165 + $0x40] sm:$0xff]
      %v181 = vld [vmem:[%s165 + $0x48] sm:$0xff]
      %v182 = vpack.c.bf16 %v173, %v172
      %v183 = vpack.c.bf16 %v175, %v174
      %v184 = vpack.c.bf16 %v177, %v176
      %v185 = vpack.c.bf16 %v179, %v178
      %v186 = vpack.c.bf16 %v181, %v180
      %v187 = vld [vmem:[%s1] sm:$0xff]
      %v188 = vld [vmem:[%s1 + $0x8] sm:$0xff]
      %v189 = vld [vmem:[%s1 + $0x10] sm:$0xff]
      %v190 = vld [vmem:[%s1 + $0x18] sm:$0xff]
      %v191 = vpack.c.bf16 %v188, %v187
      %v192 = vpack.c.bf16 %v190, %v189
      %v193 = vld [vmem:[%s2] sm:$0x1]
      %v195 = vlaneseq
      %v196 = vshrl.u32 %v195, 7
      %v197 = vsub.s32 0, %v196
      %v198 = vrot.slane %v193, %v197
      %vm200 = vcmask 261120
      %v202 = vsel %vm200, %v182, 0
      %v205 = vsel %vm200, %v183, 0
      %v208 = vsel %vm200, %v184, 0
      %v211 = vsel %vm200, %v185, 0
      %v214 = vsel %vm200, %v186, 0
      %216 = vmatprep.subr.bf16.mxu0 0
      %217 = vmatpush1.bf16.msra.mxu0 0
      %218 = vmatprep.subr.bf16.mxu0 0
      %219 = vmatpush1.bf16.msra.mxu0 0
      %220 = vmatprep.subr.bf16.mxu0 0
      %221 = vmatpush1.bf16.msra.mxu0 0
      %222 = vmatprep.subr.bf16.mxu0 0
      %223 = vmatpush1.bf16.msra.mxu0 0
      %224 = vmatprep.subr.bf16.mxu0 0
      %225 = vmatpush1.bf16.msra.mxu0 0
      %226 = vmatprep.subr.bf16.mxu0 0
      %227 = vmatpush1.bf16.msra.mxu0 0
      %228 = vmatprep.subr.bf16.mxu0 0
      %229 = vmatpush1.bf16.msra.mxu0 %v192
      %230 = vmatprep.subr.bf16.mxu0 0
      %231 = vmatpush1.bf16.msra.mxu0 %v191
      %232 = vmatprep.subr.bf16.mxu0 0
      %233 = vmatpush2.bf16.msra.mxu0 0
      %234 = vmatprep.subr.bf16.mxu0 0
      %235 = vmatpush2.bf16.msra.mxu0 0
      %236 = vmatprep.subr.bf16.mxu0 0
      %237 = vmatpush2.bf16.msra.mxu0 0
      %238 = vmatprep.subr.bf16.mxu0 0
      %239 = vmatpush2.bf16.msra.mxu0 0
      %240 = vmatprep.subr.bf16.mxu0 0
      %241 = vmatpush2.bf16.msra.mxu0 0
      %242 = vmatprep.subr.bf16.mxu0 0
      %243 = vmatpush2.bf16.msra.mxu0 0
      %244 = vmatprep.subr.bf16.mxu0 0
      %245 = vmatpush2.bf16.msra.mxu0 0
      %246 = vmatprep.subr.bf16.mxu0 0
      %247 = vmatpush2.bf16.msra.mxu0 0
      %248 = vmatprep.mubr.bf16.mxu0 0
      %249 = vmatmul.mubr.bf16.gmra.mxu0 %v202
      %v250 = vpop.f32.mrf.mxu0
      %v251 = vadd.f32 %v198, %v250
      %v252 = vpop.f32.mrf.mxu0
      %v253 = vpop.f32.mrf.mxu0
      %v254 = vadd.f32 %v198, %v253
      %v255 = vpop.f32.mrf.mxu0
      %256 = vmatprep.mubr.bf16.mxu0 0
      %257 = vmatmul.mubr.bf16.gmra.mxu0 %v205
      %v258 = vpop.f32.mrf.mxu0
      %v259 = vadd.f32 %v198, %v258
      %v260 = vpop.f32.mrf.mxu0
      %v261 = vpop.f32.mrf.mxu0
      %v262 = vadd.f32 %v198, %v261
      %v263 = vpop.f32.mrf.mxu0
      %264 = vmatprep.mubr.bf16.mxu0 0
      %265 = vmatmul.mubr.bf16.gmra.mxu0 %v208
      %v266 = vpop.f32.mrf.mxu0
      %v267 = vadd.f32 %v198, %v266
      %v268 = vpop.f32.mrf.mxu0
      %v269 = vpop.f32.mrf.mxu0
      %v270 = vadd.f32 %v198, %v269
      %v271 = vpop.f32.mrf.mxu0
      %272 = vmatprep.mubr.bf16.mxu0 0
      %273 = vmatmul.mubr.bf16.gmra.mxu0 %v211
      %v274 = vpop.f32.mrf.mxu0
      %v275 = vadd.f32 %v198, %v274
      %v276 = vpop.f32.mrf.mxu0
      %v277 = vpop.f32.mrf.mxu0
      %v278 = vadd.f32 %v198, %v277
      %v279 = vpop.f32.mrf.mxu0
      %280 = vmatprep.mubr.bf16.mxu0 0
      %281 = vmatmul.mubr.bf16.gmra.mxu0 %v214
      %v282 = vpop.f32.mrf.mxu0
      %v283 = vadd.f32 %v198, %v282
      %v284 = vpop.f32.mrf.mxu0
      %v285 = vpop.f32.mrf.mxu0
      %v286 = vadd.f32 %v198, %v285
      %v287 = vpop.f32.mrf.mxu0
      %288 = vdwg.mxu0
      %289 = vst.msk [vmem:[%s170] sm:$0xff] %vm200, %v251
      %290 = vst.msk [vmem:[%s170 + $0x8] sm:$0xff] %vm200, %v254
      %291 = vst.msk [vmem:[%s170 + $0x10] sm:$0xff] %vm200, %v259
      %292 = vst.msk [vmem:[%s170 + $0x18] sm:$0xff] %vm200, %v262
      %293 = vst.msk [vmem:[%s170 + $0x20] sm:$0xff] %vm200, %v267
      %294 = vst.msk [vmem:[%s170 + $0x28] sm:$0xff] %vm200, %v270
      %295 = vst.msk [vmem:[%s170 + $0x30] sm:$0xff] %vm200, %v275
      %296 = vst.msk [vmem:[%s170 + $0x38] sm:$0xff] %vm200, %v278
      %297 = vst.msk [vmem:[%s170 + $0x40] sm:$0xff] %vm200, %v283
      %298 = vst.msk [vmem:[%s170 + $0x48] sm:$0xff] %vm200, %v286
      %p299 = scmp.lt.s32.totalorder %s14, 1
      %s300 = scalar_select %p299, %s14, 1
      %s301 = smul.addr %s300, 10
      %s302 = smul.addr %s301, 8
      %s303 = scalar_lea.vmem %s3, %s302
      // Predicated region
      $region33: #{deformable_transformer_decoder_forward.12} parent=31 // pred_check
        %p304 = pneg %p100
      $region34: #{deformable_transformer_decoder_forward.12} parent=31 // pred_check_branch
        %306 = sbr.rel (%p304) target = $region36
      $region35: #{deformable_transformer_decoder_forward.12} parent=31 // pred_region
        _
      $region36: #{deformable_transformer_decoder_forward.12} parent=31 // pred_fallthru
        _
    $region32: #{deformable_transformer_decoder_forward.12} parent=5 // pred_fallthru
      _
    %p307 = scmp.le.s32.totalorder 2, %s9
    // Predicated region
    $region37: #{deformable_transformer_decoder_forward.12} parent=5 // pred_check
      %p308 = pneg %p307
    $region38: #{deformable_transformer_decoder_forward.12} parent=5 // pred_check_branch
      %310 = sbr.rel (%p308) target = $region40
    $region39: #{deformable_transformer_decoder_forward.12} parent=5 // pred_region
      %s311 = ssub.s32 %s9, 2
      // Predicated region
      $region41: #{deformable_transformer_decoder_forward.12} parent=39 // pred_check
        %p312 = pneg %p106
      $region42: #{deformable_transformer_decoder_forward.12} parent=39 // pred_check_branch
        %314 = sbr.rel (%p312) target = $region44
      $region43: #{deformable_transformer_decoder_forward.12} parent=39 // pred_region
        %p315 = scmp.lt.s32.totalorder %s15, 1
        %s316 = scalar_select %p315, %s15, 1
        %s317 = smul.addr %s316, 10
        %s318 = smul.addr %s317, 8
        %s319 = scalar_lea.vmem %s3, %s318
      $region44: #{deformable_transformer_decoder_forward.12} parent=39 // pred_fallthru
        _
    $region40: #{deformable_transformer_decoder_forward.12} parent=5 // pred_fallthru
      _
  $region6: #{deformable_transformer_decoder_forward.12} parent=0 // loop_footer
    %s13 = sadd.s32 1, %s9
  $region7: #{deformable_transformer_decoder_forward.12} parent=0 // loop_footer_branch
    %8 = sbr.rel target = $region3
  $region8: #{deformable_transformer_decoder_forward.12} parent=0 // loop_exit
    _

// kernel: deformable_transformer_decoder_forward.13
$region0: #{deformable_transformer_decoder_forward.13}
  #allocation0 [shape = 'u32[]', space=smem, size = 0x4, offset = 0x4, fixed_abs, tag = 'smem constant byte address 0x4 - core index']
  #allocation1 [shape = 'u32[144,128]{1,0:T(1,128)}', space=vmem, size = 0x12000, scoped, tag = 'internal scratch']
  %s0 = inlined_call_operand.vmem [shape: f32[2,8,32,32], index: 0, kind: input, shape index: {}]
  %s1 = inlined_call_operand.vmem [shape: f32[2,8,32,32], index: 1, kind: input, shape index: {}]
  %s2 = inlined_call_operand.vmem [shape: f32[2,8,32], index: 2, kind: input, shape index: {}]
  %s3 = inlined_call_operand.vmem [shape: f32[32,32], index: 3, kind: input, shape index: {}]
  %s4 = inlined_call_operand.vmem [shape: f32[1,32], index: 4, kind: input, shape index: {}]
  %s5 = inlined_call_operand.vmem [shape: f32[1,32], index: 5, kind: input, shape index: {}]
  %s6 = inlined_call_operand.vmem [shape: f32[1,32], index: 6, kind: input, shape index: {}]
  %s7 = inlined_call_operand.vmem [shape: f32[2,8,32], index: 7, kind: output, shape index: {}]
  %s8 = sld [smem:[#allocation0]]
  $region61: #{deformable_transformer_decoder_forward.13} parent=0
    _
  %s10 = ssub.s32 1, %s8
  %s11 = scalar_select 0, %s10, %s8
  loop: start=0, step=1, limit=4
  $region2: #{deformable_transformer_decoder_forward.13} parent=0 // loop_pre_header
    _
  $region3: #{deformable_transformer_decoder_forward.13} parent=0 // loop_header
    %s13 = sphi 0, %s17
    %p14 = scmp.ge.s32.totalorder %s13, 4
    %s23 = sphi 0, %s25
    %s26 = sphi 0, %s23
    %s27 = sphi 0, %s26
    %s43 = sphi 0, %s27
    %s49 = sphi 0, %s51
    %s52 = sphi 0, %s49
    %s53 = sphi 0, %s52
    %s69 = sphi 0, %s53
    %s75 = sphi 0, %s77
    %s78 = sphi 0, %s75
    %s79 = sphi 0, %s78
    %s95 = sphi 0, %s79
    %s99 = sphi 0, %s99
    %s101 = sphi 0, %s99
    %s102 = sphi 0, %s101
    %s116 = sphi 0, %s102
    %s120 = sphi 0, %s120
    %s122 = sphi 0, %s120
    %s123 = sphi 0, %s122
    %s137 = sphi 0, %s123
    %s141 = sphi 0, %s141
    %s143 = sphi 0, %s141
    %s144 = sphi 0, %s143
    %s158 = sphi 0, %s144
    %s162 = sphi 0, %s162
    %s164 = sphi 0, %s162
    %s165 = sphi 0, %s164
    %s179 = sphi 0, %s165
    %s185 = sphi 0, %s187
    %s188 = sphi 0, %s185
    %s189 = sphi 0, %s188
    %s205 = sphi 0, %s189
  $region4: #{deformable_transformer_decoder_forward.13} parent=0 // loop_header_branch
    %16 = sbr.rel (%p14) target = $region8
  $region5: #{deformable_transformer_decoder_forward.13} parent=0 // loop_body
    %s18 = ssub.s32 %s13, 1
    %s19 = ssub.s32 %s13, 2
    %s20 = sadd.s32 %s13, 1
    %s21 = ssub.s32 %s13, %s20
    %p22 = scmp.eq.s32.totalorder %s21, 0
    %s24 = sadd.s32 %s23, 1
    %s25 = scalar_select %p22, %s23, %s24
    %p28 = pneg %p22
    %p29 = scmp.eq.s32.totalorder %s13, 1
    %p30 = por %p28, %p29
    %p31 = scmp.ne.s32.totalorder %s23, %s26
    %p32 = scmp.eq.s32.totalorder %s13, 0
    %p33 = por %p31, %p32
    %p34 = scmp.ne.s32.totalorder %s23, %s26
    %p35 = scmp.eq.s32.totalorder %s18, 1
    %p36 = por %p34, %p35
    %p37 = scmp.ne.s32.totalorder %s26, %s27
    %p38 = scmp.eq.s32.totalorder %s18, 0
    %p39 = por %p37, %p38
    %p40 = scmp.ne.s32.totalorder %s26, %s27
    %p41 = scmp.eq.s32.totalorder %s19, 1
    %p42 = por %p40, %p41
    %p44 = scmp.ne.s32.totalorder %s27, %s43
    %p45 = scmp.eq.s32.totalorder %s19, 0
    %p46 = por %p44, %p45
    %s47 = ssub.s32 %s13, %s20
    %p48 = scmp.eq.s32.totalorder %s47, 0
    %s50 = sadd.s32 %s49, 1
    %s51 = scalar_select %p48, %s49, %s50
    %p54 = pneg %p48
    %p55 = scmp.eq.s32.totalorder %s13, 1
    %p56 = por %p54, %p55
    %p57 = scmp.ne.s32.totalorder %s49, %s52
    %p58 = scmp.eq.s32.totalorder %s13, 0
    %p59 = por %p57, %p58
    %p60 = scmp.ne.s32.totalorder %s49, %s52
    %p61 = scmp.eq.s32.totalorder %s18, 1
    %p62 = por %p60, %p61
    %p63 = scmp.ne.s32.totalorder %s52, %s53
    %p64 = scmp.eq.s32.totalorder %s18, 0
    %p65 = por %p63, %p64
    %p66 = scmp.ne.s32.totalorder %s52, %s53
    %p67 = scmp.eq.s32.totalorder %s19, 1
    %p68 = por %p66, %p67
    %p70 = scmp.ne.s32.totalorder %s53, %s69
    %p71 = scmp.eq.s32.totalorder %s19, 0
    %p72 = por %p70, %p71
    %s73 = ssub.s32 %s13, %s20
    %p74 = scmp.eq.s32.totalorder %s73, 0
    %s76 = sadd.s32 %s75, 1
    %s77 = scalar_select %p74, %s75, %s76
    %p80 = pneg %p74
    %p81 = scmp.eq.s32.totalorder %s13, 1
    %p82 = por %p80, %p81
    %p83 = scmp.ne.s32.totalorder %s75, %s78
    %p84 = scmp.eq.s32.totalorder %s13, 0
    %p85 = por %p83, %p84
    %p86 = scmp.ne.s32.totalorder %s75, %s78
    %p87 = scmp.eq.s32.totalorder %s18, 1
    %p88 = por %p86, %p87
    %p89 = scmp.ne.s32.totalorder %s78, %s79
    %p90 = scmp.eq.s32.totalorder %s18, 0
    %p91 = por %p89, %p90
    %p92 = scmp.ne.s32.totalorder %s78, %s79
    %p93 = scmp.eq.s32.totalorder %s19, 1
    %p94 = por %p92, %p93
    %p96 = scmp.ne.s32.totalorder %s79, %s95
    %p97 = scmp.eq.s32.totalorder %s19, 0
    %p98 = por %p96, %p97
    %s100 = sadd.s32 %s99, 1
    %p103 = scmp.eq.s32.totalorder %s13, 1
    %p104 = scmp.ne.s32.totalorder %s99, %s101
    %p105 = scmp.eq.s32.totalorder %s13, 0
    %p106 = por %p104, %p105
    %p107 = scmp.ne.s32.totalorder %s99, %s101
    %p108 = scmp.eq.s32.totalorder %s18, 1
    %p109 = por %p107, %p108
    %p110 = scmp.ne.s32.totalorder %s101, %s102
    %p111 = scmp.eq.s32.totalorder %s18, 0
    %p112 = por %p110, %p111
    %p113 = scmp.ne.s32.totalorder %s101, %s102
    %p114 = scmp.eq.s32.totalorder %s19, 1
    %p115 = por %p113, %p114
    %p117 = scmp.ne.s32.totalorder %s102, %s116
    %p118 = scmp.eq.s32.totalorder %s19, 0
    %p119 = por %p117, %p118
    %s121 = sadd.s32 %s120, 1
    %p124 = scmp.eq.s32.totalorder %s13, 1
    %p125 = scmp.ne.s32.totalorder %s120, %s122
    %p126 = scmp.eq.s32.totalorder %s13, 0
    %p127 = por %p125, %p126
    %p128 = scmp.ne.s32.totalorder %s120, %s122
    %p129 = scmp.eq.s32.totalorder %s18, 1
    %p130 = por %p128, %p129
    %p131 = scmp.ne.s32.totalorder %s122, %s123
    %p132 = scmp.eq.s32.totalorder %s18, 0
    %p133 = por %p131, %p132
    %p134 = scmp.ne.s32.totalorder %s122, %s123
    %p135 = scmp.eq.s32.totalorder %s19, 1
    %p136 = por %p134, %p135
    %p138 = scmp.ne.s32.totalorder %s123, %s137
    %p139 = scmp.eq.s32.totalorder %s19, 0
    %p140 = por %p138, %p139
    %s142 = sadd.s32 %s141, 1
    %p145 = scmp.eq.s32.totalorder %s13, 1
    %p146 = scmp.ne.s32.totalorder %s141, %s143
    %p147 = scmp.eq.s32.totalorder %s13, 0
    %p148 = por %p146, %p147
    %p149 = scmp.ne.s32.totalorder %s141, %s143
    %p150 = scmp.eq.s32.totalorder %s18, 1
    %p151 = por %p149, %p150
    %p152 = scmp.ne.s32.totalorder %s143, %s144
    %p153 = scmp.eq.s32.totalorder %s18, 0
    %p154 = por %p152, %p153
    %p155 = scmp.ne.s32.totalorder %s143, %s144
    %p156 = scmp.eq.s32.totalorder %s19, 1
    %p157 = por %p155, %p156
    %p159 = scmp.ne.s32.totalorder %s144, %s158
    %p160 = scmp.eq.s32.totalorder %s19, 0
    %p161 = por %p159, %p160
    %s163 = sadd.s32 %s162, 1
    %p166 = scmp.eq.s32.totalorder %s13, 1
    %p167 = scmp.ne.s32.totalorder %s162, %s164
    %p168 = scmp.eq.s32.totalorder %s13, 0
    %p169 = por %p167, %p168
    %p170 = scmp.ne.s32.totalorder %s162, %s164
    %p171 = scmp.eq.s32.totalorder %s18, 1
    %p172 = por %p170, %p171
    %p173 = scmp.ne.s32.totalorder %s164, %s165
    %p174 = scmp.eq.s32.totalorder %s18, 0
    %p175 = por %p173, %p174
    %p176 = scmp.ne.s32.totalorder %s164, %s165
    %p177 = scmp.eq.s32.totalorder %s19, 1
    %p178 = por %p176, %p177
    %p180 = scmp.ne.s32.totalorder %s165, %s179
    %p181 = scmp.eq.s32.totalorder %s19, 0
    %p182 = por %p180, %p181
    %s183 = ssub.s32 %s13, %s20
    %p184 = scmp.eq.s32.totalorder %s183, 0
    %s186 = sadd.s32 %s185, 1
    %s187 = scalar_select %p184, %s185, %s186
    %p190 = pneg %p184
    %p191 = scmp.eq.s32.totalorder %s13, 1
    %p192 = por %p190, %p191
    %p193 = scmp.ne.s32.totalorder %s185, %s188
    %p194 = scmp.eq.s32.totalorder %s13, 0
    %p195 = por %p193, %p194
    %p196 = scmp.ne.s32.totalorder %s185, %s188
    %p197 = scmp.eq.s32.totalorder %s18, 1
    %p198 = por %p196, %p197
    %p199 = scmp.ne.s32.totalorder %s188, %s189
    %p200 = scmp.eq.s32.totalorder %s18, 0
    %p201 = por %p199, %p200
    %p202 = scmp.ne.s32.totalorder %s188, %s189
    %p203 = scmp.eq.s32.totalorder %s19, 1
    %p204 = por %p202, %p203
    %p206 = scmp.ne.s32.totalorder %s189, %s205
    %p207 = scmp.eq.s32.totalorder %s19, 0
    %p208 = por %p206, %p207
    %p209 = scmp.le.s32.totalorder 1, %s13
    %p210 = scmp.lt.s32.totalorder %s13, 3
    %p211 = pnand %p209, %p210
    %p212 = pneg %p211
    // Predicated region
    $region9: #{deformable_transformer_decoder_forward.13} parent=5 // pred_check
      _
    $region10: #{deformable_transformer_decoder_forward.13} parent=5 // pred_check_branch
      %214 = sbr.rel (%p211) target = $region12
    $region11: #{deformable_transformer_decoder_forward.13} parent=5 // pred_region
      %s215 = ssub.s32 %s13, 1
      // Predicated region
      $region13: #{deformable_transformer_decoder_forward.13} parent=11 // pred_check
        %p216 = pneg %p112
      $region14: #{deformable_transformer_decoder_forward.13} parent=11 // pred_check_branch
        %218 = sbr.rel (%p216) target = $region16
      $region15: #{deformable_transformer_decoder_forward.13} parent=11 // pred_region
        _
      $region16: #{deformable_transformer_decoder_forward.13} parent=11 // pred_fallthru
        _
      // Predicated region
      $region17: #{deformable_transformer_decoder_forward.13} parent=11 // pred_check
        %p219 = pneg %p133
      $region18: #{deformable_transformer_decoder_forward.13} parent=11 // pred_check_branch
        %221 = sbr.rel (%p219) target = $region20
      $region19: #{deformable_transformer_decoder_forward.13} parent=11 // pred_region
        _
      $region20: #{deformable_transformer_decoder_forward.13} parent=11 // pred_fallthru
        _
      // Predicated region
      $region21: #{deformable_transformer_decoder_forward.13} parent=11 // pred_check
        %p222 = pneg %p154
      $region22: #{deformable_transformer_decoder_forward.13} parent=11 // pred_check_branch
        %224 = sbr.rel (%p222) target = $region24
      $region23: #{deformable_transformer_decoder_forward.13} parent=11 // pred_region
        _
      $region24: #{deformable_transformer_decoder_forward.13} parent=11 // pred_fallthru
        _
      // Predicated region
      $region25: #{deformable_transformer_decoder_forward.13} parent=11 // pred_check
        %p225 = pneg %p175
      $region26: #{deformable_transformer_decoder_forward.13} parent=11 // pred_check_branch
        %227 = sbr.rel (%p225) target = $region28
      $region27: #{deformable_transformer_decoder_forward.13} parent=11 // pred_region
        _
      $region28: #{deformable_transformer_decoder_forward.13} parent=11 // pred_fallthru
        _
    $region12: #{deformable_transformer_decoder_forward.13} parent=5 // pred_fallthru
      _
    %p228 = scmp.lt.s32.totalorder %s13, 2
    // Predicated region
    $region29: #{deformable_transformer_decoder_forward.13} parent=5 // pred_check
      %p229 = pneg %p228
    $region30: #{deformable_transformer_decoder_forward.13} parent=5 // pred_check_branch
      %231 = sbr.rel (%p229) target = $region32
    $region31: #{deformable_transformer_decoder_forward.13} parent=5 // pred_region
      // Predicated region
      $region33: #{deformable_transformer_decoder_forward.13} parent=31 // pred_check
        %p232 = pneg %p33
      $region34: #{deformable_transformer_decoder_forward.13} parent=31 // pred_check_branch
        %234 = sbr.rel (%p232) target = $region36
      $region35: #{deformable_transformer_decoder_forward.13} parent=31 // pred_region
        %p235 = scmp.lt.s32.totalorder %s13, 1
        %s236 = scalar_select %p235, %s13, 1
        %s237 = smul.addr %s236, 32
        %s238 = smul.addr %s237, 8
        %s239 = scalar_lea.vmem %s0, %s238
      $region36: #{deformable_transformer_decoder_forward.13} parent=31 // pred_fallthru
        _
      // Predicated region
      $region37: #{deformable_transformer_decoder_forward.13} parent=31 // pred_check
        %p240 = pneg %p59
      $region38: #{deformable_transformer_decoder_forward.13} parent=31 // pred_check_branch
        %242 = sbr.rel (%p240) target = $region40
      $region39: #{deformable_transformer_decoder_forward.13} parent=31 // pred_region
        %p243 = scmp.lt.s32.totalorder %s13, 1
        %s244 = scalar_select %p243, %s13, 1
        %s245 = smul.addr %s244, 32
        %s246 = smul.addr %s245, 8
        %s247 = scalar_lea.vmem %s1, %s246
      $region40: #{deformable_transformer_decoder_forward.13} parent=31 // pred_fallthru
        _
      // Predicated region
      $region41: #{deformable_transformer_decoder_forward.13} parent=31 // pred_check
        %p248 = pneg %p85
      $region42: #{deformable_transformer_decoder_forward.13} parent=31 // pred_check_branch
        %250 = sbr.rel (%p248) target = $region44
      $region43: #{deformable_transformer_decoder_forward.13} parent=31 // pred_region
        %p251 = scmp.lt.s32.totalorder %s13, 1
        %s252 = scalar_select %p251, %s13, 1
        %s253 = smul.addr %s252, 8
        %s254 = scalar_lea.vmem %s2, %s253
      $region44: #{deformable_transformer_decoder_forward.13} parent=31 // pred_fallthru
        _
    $region32: #{deformable_transformer_decoder_forward.13} parent=5 // pred_fallthru
      _
    %p255 = scmp.le.s32.totalorder 1, %s13
    %p256 = scmp.lt.s32.totalorder %s13, 3
    %p257 = pnand %p255, %p256
    %p258 = pneg %p257
    // Predicated region
    $region45: #{deformable_transformer_decoder_forward.13} parent=5 // pred_check
      _
    $region46: #{deformable_transformer_decoder_forward.13} parent=5 // pred_check_branch
      %260 = sbr.rel (%p257) target = $region48
    $region47: #{deformable_transformer_decoder_forward.13} parent=5 // pred_region
      %s261 = ssub.s32 %s13, 1
      %p262 = scmp.lt.s32.totalorder %s18, 1
      %s263 = scalar_select %p262, %s18, 1
      %s264 = smul.addr %s263, 32
      %s265 = smul.addr %s264, 8
      %s266 = scalar_lea.vmem %s0, %s265
      %p267 = pneg %p39
      %p268 = pneg %p36
      %p269 = scmp.lt.s32.totalorder %s18, 1
      %s270 = scalar_select %p269, %s18, 1
      %s271 = smul.addr %s270, 32
      %s272 = smul.addr %s271, 8
      %s273 = scalar_lea.vmem %s1, %s272
      %p274 = pneg %p65
      %p275 = pneg %p62
      %p276 = scmp.lt.s32.totalorder %s18, 1
      %s277 = scalar_select %p276, %s18, 1
      %s278 = smul.addr %s277, 8
      %s279 = scalar_lea.vmem %s2, %s278
      %p280 = pneg %p91
      %p281 = pneg %p88
      %p282 = pneg %p112
      %p283 = pneg %p109
      %p284 = pneg %p133
      %p285 = pneg %p130
      %p286 = pneg %p154
      %p287 = pneg %p151
      %p288 = pneg %p175
      %p289 = pneg %p172
      %p290 = pneg %p201
      %p291 = pneg %p198
      %p292 = scmp.lt.s32.totalorder %s18, 1
      %s293 = scalar_select %p292, %s18, 1
      %s294 = smul.addr %s293, 8
      %s295 = scalar_lea.vmem %s7, %s294
      %p296 = scmp.lt.s32.totalorder %s18, 1
      %s297 = scalar_select %p296, %s18, 1
      %s298 = smul.addr %s297, 32
      %s299 = smul.addr %s298, 8
      %s300 = scalar_lea.vmem %s0, %s299
      %p301 = scmp.lt.s32.totalorder %s18, 1
      %s302 = scalar_select %p301, %s18, 1
      %s303 = smul.addr %s302, 32
      %s304 = smul.addr %s303, 8
      %s305 = scalar_lea.vmem %s1, %s304
      %p306 = scmp.lt.s32.totalorder %s18, 1
      %s307 = scalar_select %p306, %s18, 1
      %s308 = smul.addr %s307, 8
      %s309 = scalar_lea.vmem %s2, %s308
      %p310 = scmp.lt.s32.totalorder %s18, 1
      %s311 = scalar_select %p310, %s18, 1
      %s312 = smul.addr %s311, 8
      %s313 = scalar_lea.vmem %s7, %s312
      %v315 = vld [vmem:[%s300] sm:$0xff]
      %v316 = vld [vmem:[%s300 + $0x8] sm:$0xff]
      %v317 = vld [vmem:[%s300 + $0x10] sm:$0xff]
      %v318 = vld [vmem:[%s300 + $0x18] sm:$0xff]
      %v319 = vld [vmem:[%s300 + $0x20] sm:$0xff]
      %v320 = vld [vmem:[%s300 + $0x28] sm:$0xff]
      %v321 = vld [vmem:[%s300 + $0x30] sm:$0xff]
      %v322 = vld [vmem:[%s300 + $0x38] sm:$0xff]
      %v323 = vld [vmem:[%s300 + $0x40] sm:$0xff]
      %v324 = vld [vmem:[%s300 + $0x48] sm:$0xff]
      %v325 = vld [vmem:[%s300 + $0x50] sm:$0xff]
      %v326 = vld [vmem:[%s300 + $0x58] sm:$0xff]
      %v327 = vld [vmem:[%s300 + $0x60] sm:$0xff]
      %v328 = vld [vmem:[%s300 + $0x68] sm:$0xff]
      %v329 = vld [vmem:[%s300 + $0x70] sm:$0xff]
      %v330 = vld [vmem:[%s300 + $0x78] sm:$0xff]
      %v331 = vld [vmem:[%s300 + $0x80] sm:$0xff]
      %v332 = vld [vmem:[%s300 + $0x88] sm:$0xff]
      %v333 = vld [vmem:[%s300 + $0x90] sm:$0xff]
      %v334 = vld [vmem:[%s300 + $0x98] sm:$0xff]
      %v335 = vld [vmem:[%s300 + $0xa0] sm:$0xff]
      %v336 = vld [vmem:[%s300 + $0xa8] sm:$0xff]
      %v337 = vld [vmem:[%s300 + $0xb0] sm:$0xff]
      %v338 = vld [vmem:[%s300 + $0xb8] sm:$0xff]
      %v339 = vld [vmem:[%s300 + $0xc0] sm:$0xff]
      %v340 = vld [vmem:[%s300 + $0xc8] sm:$0xff]
      %v341 = vld [vmem:[%s300 + $0xd0] sm:$0xff]
      %v342 = vld [vmem:[%s300 + $0xd8] sm:$0xff]
      %v343 = vld [vmem:[%s300 + $0xe0] sm:$0xff]
      %v344 = vld [vmem:[%s300 + $0xe8] sm:$0xff]
      %v345 = vld [vmem:[%s300 + $0xf0] sm:$0xff]
      %v346 = vld [vmem:[%s300 + $0xf8] sm:$0xff]
      %v347 = vld [vmem:[%s305] sm:$0xff]
      %v348 = vld [vmem:[%s305 + $0x8] sm:$0xff]
      %v349 = vld [vmem:[%s305 + $0x10] sm:$0xff]
      %v350 = vld [vmem:[%s305 + $0x18] sm:$0xff]
      %v351 = vld [vmem:[%s305 + $0x20] sm:$0xff]
      %v352 = vld [vmem:[%s305 + $0x28] sm:$0xff]
      %v353 = vld [vmem:[%s305 + $0x30] sm:$0xff]
      %v354 = vld [vmem:[%s305 + $0x38] sm:$0xff]
      %v355 = vld [vmem:[%s305 + $0x40] sm:$0xff]
      %v356 = vld [vmem:[%s305 + $0x48] sm:$0xff]
      %v357 = vld [vmem:[%s305 + $0x50] sm:$0xff]
      %v358 = vld [vmem:[%s305 + $0x58] sm:$0xff]
      %v359 = vld [vmem:[%s305 + $0x60] sm:$0xff]
      %v360 = vld [vmem:[%s305 + $0x68] sm:$0xff]
      %v361 = vld [vmem:[%s305 + $0x70] sm:$0xff]
      %v362 = vld [vmem:[%s305 + $0x78] sm:$0xff]
      %v363 = vld [vmem:[%s305 + $0x80] sm:$0xff]
      %v364 = vld [vmem:[%s305 + $0x88] sm:$0xff]
      %v365 = vld [vmem:[%s305 + $0x90] sm:$0xff]
      %v366 = vld [vmem:[%s305 + $0x98] sm:$0xff]
      %v367 = vld [vmem:[%s305 + $0xa0] sm:$0xff]
      %v368 = vld [vmem:[%s305 + $0xa8] sm:$0xff]
      %v369 = vld [vmem:[%s305 + $0xb0] sm:$0xff]
      %v370 = vld [vmem:[%s305 + $0xb8] sm:$0xff]
      %v371 = vld [vmem:[%s305 + $0xc0] sm:$0xff]
      %v372 = vld [vmem:[%s305 + $0xc8] sm:$0xff]
      %v373 = vld [vmem:[%s305 + $0xd0] sm:$0xff]
      %v374 = vld [vmem:[%s305 + $0xd8] sm:$0xff]
      %v375 = vld [vmem:[%s305 + $0xe0] sm:$0xff]
      %v376 = vld [vmem:[%s305 + $0xe8] sm:$0xff]
      %v377 = vld [vmem:[%s305 + $0xf0] sm:$0xff]
      %v378 = vld [vmem:[%s305 + $0xf8] sm:$0xff]
      %v379 = vmul.f32 %v315, %v347
      %v380 = vmul.f32 %v316, %v348
      %v381 = vmul.f32 %v317, %v349
      %v382 = vmul.f32 %v318, %v350
      %v383 = vmul.f32 %v319, %v351
      %v384 = vmul.f32 %v320, %v352
      %v385 = vmul.f32 %v321, %v353
      %v386 = vmul.f32 %v322, %v354
      %v387 = vmul.f32 %v323, %v355
      %v388 = vmul.f32 %v324, %v356
      %v389 = vmul.f32 %v325, %v357
      %v390 = vmul.f32 %v326, %v358
      %v391 = vmul.f32 %v327, %v359
      %v392 = vmul.f32 %v328, %v360
      %v393 = vmul.f32 %v329, %v361
      %v394 = vmul.f32 %v330, %v362
      %v395 = vmul.f32 %v331, %v363
      %v396 = vmul.f32 %v332, %v364
      %v397 = vmul.f32 %v333, %v365
      %v398 = vmul.f32 %v334, %v366
      %v399 = vmul.f32 %v335, %v367
      %v400 = vmul.f32 %v336, %v368
      %v401 = vmul.f32 %v337, %v369
      %v402 = vmul.f32 %v338, %v370
      %v403 = vmul.f32 %v339, %v371
      %v404 = vmul.f32 %v340, %v372
      %v405 = vmul.f32 %v341, %v373
      %v406 = vmul.f32 %v342, %v374
      %v407 = vmul.f32 %v343, %v375
      %v408 = vmul.f32 %v344, %v376
      %v409 = vmul.f32 %v345, %v377
      %v410 = vmul.f32 %v346, %v378
      %vm411 = vcmask 261120
      %v412 = vsel %vm411, %v379, 0.0
      %413 = vadd.xlane.f32.xlu0 %v412
      %v414 = vpop.xlane.xlu0 %413
      %v415 = vsel %vm411, %v380, 0.0
      %416 = vadd.xlane.f32.xlu0 %v415
      %v417 = vpop.xlane.xlu0 %416
      %v418 = vsel %vm411, %v381, 0.0
      %419 = vadd.xlane.f32.xlu0 %v418
      %v420 = vpop.xlane.xlu0 %419
      %v421 = vsel %vm411, %v382, 0.0
      %422 = vadd.xlane.f32.xlu0 %v421
      %v423 = vpop.xlane.xlu0 %422
      %v424 = vsel %vm411, %v383, 0.0
      %425 = vadd.xlane.f32.xlu0 %v424
      %v426 = vpop.xlane.xlu0 %425
      %v427 = vsel %vm411, %v384, 0.0
      %428 = vadd.xlane.f32.xlu0 %v427
      %v429 = vpop.xlane.xlu0 %428
      %v430 = vsel %vm411, %v385, 0.0
      %431 = vadd.xlane.f32.xlu0 %v430
      %v432 = vpop.xlane.xlu0 %431
      %v433 = vsel %vm411, %v386, 0.0
      %434 = vadd.xlane.f32.xlu0 %v433
      %v435 = vpop.xlane.xlu0 %434
      %v436 = vsel %vm411, %v387, 0.0
      %437 = vadd.xlane.f32.xlu0 %v436
      %v438 = vpop.xlane.xlu0 %437
      %v439 = vsel %vm411, %v388, 0.0
      %440 = vadd.xlane.f32.xlu0 %v439
      %v441 = vpop.xlane.xlu0 %440
      %v442 = vsel %vm411, %v389, 0.0
      %443 = vadd.xlane.f32.xlu0 %v442
      %v444 = vpop.xlane.xlu0 %443
      %v445 = vsel %vm411, %v390, 0.0
      %446 = vadd.xlane.f32.xlu0 %v445
      %v447 = vpop.xlane.xlu0 %446
      %v448 = vsel %vm411, %v391, 0.0
      %449 = vadd.xlane.f32.xlu0 %v448
      %v450 = vpop.xlane.xlu0 %449
      %v451 = vsel %vm411, %v392, 0.0
      %452 = vadd.xlane.f32.xlu0 %v451
      %v453 = vpop.xlane.xlu0 %452
      %v454 = vsel %vm411, %v393, 0.0
      %455 = vadd.xlane.f32.xlu0 %v454
      %v456 = vpop.xlane.xlu0 %455
      %v457 = vsel %vm411, %v394, 0.0
      %458 = vadd.xlane.f32.xlu0 %v457
      %v459 = vpop.xlane.xlu0 %458
      %v460 = vsel %vm411, %v395, 0.0
      %461 = vadd.xlane.f32.xlu0 %v460
      %v462 = vpop.xlane.xlu0 %461
      %v463 = vsel %vm411, %v396, 0.0
      %464 = vadd.xlane.f32.xlu0 %v463
      %v465 = vpop.xlane.xlu0 %464
      %v466 = vsel %vm411, %v397, 0.0
      %467 = vadd.xlane.f32.xlu0 %v466
      %v468 = vpop.xlane.xlu0 %467
      %v469 = vsel %vm411, %v398, 0.0
      %470 = vadd.xlane.f32.xlu0 %v469
      %v471 = vpop.xlane.xlu0 %470
      %v472 = vsel %vm411, %v399, 0.0
      %473 = vadd.xlane.f32.xlu0 %v472
      %v474 = vpop.xlane.xlu0 %473
      %v475 = vsel %vm411, %v400, 0.0
      %476 = vadd.xlane.f32.xlu0 %v475
      %v477 = vpop.xlane.xlu0 %476
      %v478 = vsel %vm411, %v401, 0.0
      %479 = vadd.xlane.f32.xlu0 %v478
      %v480 = vpop.xlane.xlu0 %479
      %v481 = vsel %vm411, %v402, 0.0
      %482 = vadd.xlane.f32.xlu0 %v481
      %v483 = vpop.xlane.xlu0 %482
      %v484 = vsel %vm411, %v403, 0.0
      %485 = vadd.xlane.f32.xlu0 %v484
      %v486 = vpop.xlane.xlu0 %485
      %v487 = vsel %vm411, %v404, 0.0
      %488 = vadd.xlane.f32.xlu0 %v487
      %v489 = vpop.xlane.xlu0 %488
      %v490 = vsel %vm411, %v405, 0.0
      %491 = vadd.xlane.f32.xlu0 %v490
      %v492 = vpop.xlane.xlu0 %491
      %v493 = vsel %vm411, %v406, 0.0
      %494 = vadd.xlane.f32.xlu0 %v493
      %v495 = vpop.xlane.xlu0 %494
      %v496 = vsel %vm411, %v407, 0.0
      %497 = vadd.xlane.f32.xlu0 %v496
      %v498 = vpop.xlane.xlu0 %497
      %v499 = vsel %vm411, %v408, 0.0
      %500 = vadd.xlane.f32.xlu0 %v499
      %v501 = vpop.xlane.xlu0 %500
      %v502 = vsel %vm411, %v409, 0.0
      %503 = vadd.xlane.f32.xlu0 %v502
      %v504 = vpop.xlane.xlu0 %503
      %v505 = vsel %vm411, %v410, 0.0
      %506 = vadd.xlane.f32.xlu0 %v505
      %v507 = vpop.xlane.xlu0 %506
      %v508 = vpack.c.bf16 %v417, %v414
      %v509 = vpack.c.bf16 %v423, %v420
      %v510 = vpack.c.bf16 %v429, %v426
      %v511 = vpack.c.bf16 %v435, %v432
      %v512 = vpack.c.bf16 %v441, %v438
      %v513 = vpack.c.bf16 %v447, %v444
      %v514 = vpack.c.bf16 %v453, %v450
      %v515 = vpack.c.bf16 %v459, %v456
      %v516 = vpack.c.bf16 %v465, %v462
      %v517 = vpack.c.bf16 %v471, %v468
      %v518 = vpack.c.bf16 %v477, %v474
      %v519 = vpack.c.bf16 %v483, %v480
      %v520 = vpack.c.bf16 %v489, %v486
      %v521 = vpack.c.bf16 %v495, %v492
      %v522 = vpack.c.bf16 %v501, %v498
      %v523 = vpack.c.bf16 %v507, %v504
      %v524 = vld [vmem:[%s3] sm:$0xff]
      %v525 = vld [vmem:[%s3 + $0x8] sm:$0xff]
      %v526 = vld [vmem:[%s3 + $0x10] sm:$0xff]
      %v527 = vld [vmem:[%s3 + $0x18] sm:$0xff]
      %v528 = vpack.c.bf16 %v525, %v524
      %v529 = vpack.c.bf16 %v527, %v526
      %v530 = vld [vmem:[%s4] sm:$0x1]
      %v532 = vlaneseq
      %v533 = vshrl.u32 %v532, 7
      %v534 = vsub.s32 0, %v533
      %v535 = vrot.slane %v530, %v534
      %v553 = vunpack.c.l.b16 %v508
      %v554 = vunpack.c.h.b16 %v508
      %v555 = vunpack.c.l.b16 %v509
      %v556 = vunpack.c.h.b16 %v509
      %v557 = vunpack.c.l.b16 %v510
      %v558 = vunpack.c.h.b16 %v510
      %v559 = vunpack.c.l.b16 %v511
      %v560 = vunpack.c.h.b16 %v511
      %v561 = vunpack.c.l.b16 %v512
      %v562 = vunpack.c.h.b16 %v512
      %v563 = vunpack.c.l.b16 %v513
      %v564 = vunpack.c.h.b16 %v513
      %v565 = vunpack.c.l.b16 %v514
      %v566 = vunpack.c.h.b16 %v514
      %v567 = vunpack.c.l.b16 %v515
      %v568 = vunpack.c.h.b16 %v515
      %v569 = vunpack.c.l.b16 %v516
      %v570 = vunpack.c.h.b16 %v516
      %v571 = vunpack.c.l.b16 %v517
      %v572 = vunpack.c.h.b16 %v517
      %v573 = vunpack.c.l.b16 %v518
      %v574 = vunpack.c.h.b16 %v518
      %v575 = vunpack.c.l.b16 %v519
      %v576 = vunpack.c.h.b16 %v519
      %v577 = vunpack.c.l.b16 %v520
      %v578 = vunpack.c.h.b16 %v520
      %v579 = vunpack.c.l.b16 %v521
      %v580 = vunpack.c.h.b16 %v521
      %v581 = vunpack.c.l.b16 %v522
      %v582 = vunpack.c.h.b16 %v522
      %v583 = vunpack.c.l.b16 %v523
      %v584 = vunpack.c.h.b16 %v523
      %v585 = vlaneseq
      %v586 = vand.u32 %v585, 127
      %v587 = vlaneseq
      %v588 = vshrl.u32 %v587, 7
      %v589 = vsub.s32 %v586, %v588
      %v590 = vrot.slane %v553, %v589
      %v591 = vadd.s32 %v586, 4294967288
      %v592 = vlaneseq
      %v593 = vshrl.u32 %v592, 7
      %v594 = vsub.s32 %v591, %v593
      %v595 = vrot.slane %v554, %v594
      %vm596 = vcmask 130112
      %v597 = vsel %vm596, %v595, %v590
      %v598 = vadd.s32 %v586, 4294967280
      %v599 = vlaneseq
      %v600 = vshrl.u32 %v599, 7
      %v601 = vsub.s32 %v598, %v600
      %v602 = vrot.slane %v555, %v601
      %vm603 = vcmask 195712
      %v604 = vsel %vm603, %v602, %v597
      %v605 = vadd.s32 %v586, 4294967272
      %v606 = vlaneseq
      %v607 = vshrl.u32 %v606, 7
      %v608 = vsub.s32 %v605, %v607
      %v609 = vrot.slane %v556, %v608
      %vm610 = vcmask 261312
      %v611 = vsel %vm610, %v609, %v604
      %v612 = vlaneseq
      %v613 = vshrl.u32 %v612, 7
      %v614 = vsub.s32 %v586, %v613
      %v615 = vrot.slane %v557, %v614
      %v616 = vlaneseq
      %v617 = vshrl.u32 %v616, 7
      %v618 = vsub.s32 %v591, %v617
      %v619 = vrot.slane %v558, %v618
      %v620 = vsel %vm596, %v619, %v615
      %v621 = vlaneseq
      %v622 = vshrl.u32 %v621, 7
      %v623 = vsub.s32 %v598, %v622
      %v624 = vrot.slane %v559, %v623
      %v625 = vsel %vm603, %v624, %v620
      %v626 = vlaneseq
      %v627 = vshrl.u32 %v626, 7
      %v628 = vsub.s32 %v605, %v627
      %v629 = vrot.slane %v560, %v628
      %v630 = vsel %vm610, %v629, %v625
      %v631 = vlaneseq
      %v632 = vshrl.u32 %v631, 7
      %v633 = vsub.s32 %v586, %v632
      %v634 = vrot.slane %v561, %v633
      %v635 = vlaneseq
      %v636 = vshrl.u32 %v635, 7
      %v637 = vsub.s32 %v591, %v636
      %v638 = vrot.slane %v562, %v637
      %v639 = vsel %vm596, %v638, %v634
      %v640 = vlaneseq
      %v641 = vshrl.u32 %v640, 7
      %v642 = vsub.s32 %v598, %v641
      %v643 = vrot.slane %v563, %v642
      %v644 = vsel %vm603, %v643, %v639
      %v645 = vlaneseq
      %v646 = vshrl.u32 %v645, 7
      %v647 = vsub.s32 %v605, %v646
      %v648 = vrot.slane %v564, %v647
      %v649 = vsel %vm610, %v648, %v644
      %v650 = vlaneseq
      %v651 = vshrl.u32 %v650, 7
      %v652 = vsub.s32 %v586, %v651
      %v653 = vrot.slane %v565, %v652
      %v654 = vlaneseq
      %v655 = vshrl.u32 %v654, 7
      %v656 = vsub.s32 %v591, %v655
      %v657 = vrot.slane %v566, %v656
      %v658 = vsel %vm596, %v657, %v653
      %v659 = vlaneseq
      %v660 = vshrl.u32 %v659, 7
      %v661 = vsub.s32 %v598, %v660
      %v662 = vrot.slane %v567, %v661
      %v663 = vsel %vm603, %v662, %v658
      %v664 = vlaneseq
      %v665 = vshrl.u32 %v664, 7
      %v666 = vsub.s32 %v605, %v665
      %v667 = vrot.slane %v568, %v666
      %v668 = vsel %vm610, %v667, %v663
      %v669 = vlaneseq
      %v670 = vshrl.u32 %v669, 7
      %v671 = vsub.s32 %v586, %v670
      %v672 = vrot.slane %v569, %v671
      %v673 = vlaneseq
      %v674 = vshrl.u32 %v673, 7
      %v675 = vsub.s32 %v591, %v674
      %v676 = vrot.slane %v570, %v675
      %v677 = vsel %vm596, %v676, %v672
      %v678 = vlaneseq
      %v679 = vshrl.u32 %v678, 7
      %v680 = vsub.s32 %v598, %v679
      %v681 = vrot.slane %v571, %v680
      %v682 = vsel %vm603, %v681, %v677
      %v683 = vlaneseq
      %v684 = vshrl.u32 %v683, 7
      %v685 = vsub.s32 %v605, %v684
      %v686 = vrot.slane %v572, %v685
      %v687 = vsel %vm610, %v686, %v682
      %v688 = vlaneseq
      %v689 = vshrl.u32 %v688, 7
      %v690 = vsub.s32 %v586, %v689
      %v691 = vrot.slane %v573, %v690
      %v692 = vlaneseq
      %v693 = vshrl.u32 %v692, 7
      %v694 = vsub.s32 %v591, %v693
      %v695 = vrot.slane %v574, %v694
      %v696 = vsel %vm596, %v695, %v691
      %v697 = vlaneseq
      %v698 = vshrl.u32 %v697, 7
      %v699 = vsub.s32 %v598, %v698
      %v700 = vrot.slane %v575, %v699
      %v701 = vsel %vm603, %v700, %v696
      %v702 = vlaneseq
      %v703 = vshrl.u32 %v702, 7
      %v704 = vsub.s32 %v605, %v703
      %v705 = vrot.slane %v576, %v704
      %v706 = vsel %vm610, %v705, %v701
      %v707 = vlaneseq
      %v708 = vshrl.u32 %v707, 7
      %v709 = vsub.s32 %v586, %v708
      %v710 = vrot.slane %v577, %v709
      %v711 = vlaneseq
      %v712 = vshrl.u32 %v711, 7
      %v713 = vsub.s32 %v591, %v712
      %v714 = vrot.slane %v578, %v713
      %v715 = vsel %vm596, %v714, %v710
      %v716 = vlaneseq
      %v717 = vshrl.u32 %v716, 7
      %v718 = vsub.s32 %v598, %v717
      %v719 = vrot.slane %v579, %v718
      %v720 = vsel %vm603, %v719, %v715
      %v721 = vlaneseq
      %v722 = vshrl.u32 %v721, 7
      %v723 = vsub.s32 %v605, %v722
      %v724 = vrot.slane %v580, %v723
      %v725 = vsel %vm610, %v724, %v720
      %v726 = vlaneseq
      %v727 = vshrl.u32 %v726, 7
      %v728 = vsub.s32 %v586, %v727
      %v729 = vrot.slane %v581, %v728
      %v730 = vlaneseq
      %v731 = vshrl.u32 %v730, 7
      %v732 = vsub.s32 %v591, %v731
      %v733 = vrot.slane %v582, %v732
      %v734 = vsel %vm596, %v733, %v729
      %v735 = vlaneseq
      %v736 = vshrl.u32 %v735, 7
      %v737 = vsub.s32 %v598, %v736
      %v738 = vrot.slane %v583, %v737
      %v739 = vsel %vm603, %v738, %v734
      %v740 = vlaneseq
      %v741 = vshrl.u32 %v740, 7
      %v742 = vsub.s32 %v605, %v741
      %v743 = vrot.slane %v584, %v742
      %v744 = vsel %vm610, %v743, %v739
      %vm745 = vcmask 1041409
      %v746 = vsel %vm745, %v630, %v611
      %vm747 = vcmask 1042434
      %v748 = vsel %vm747, %v649, %v746
      %vm749 = vcmask 1043459
      %v750 = vsel %vm749, %v668, %v748
      %vm751 = vcmask 1044484
      %v752 = vsel %vm751, %v687, %v750
      %vm753 = vcmask 1045509
      %v754 = vsel %vm753, %v706, %v752
      %vm755 = vcmask 1046534
      %v756 = vsel %vm755, %v725, %v754
      %vm757 = vcmask 1047559
      %v758 = vsel %vm757, %v744, %v756
      %v759 = vpack.c.b16 %v758, %v758
      %v761 = vsel %vm411, %v759, 0
      %763 = vmatprep.subr.bf16.mxu0 0
      %764 = vmatpush1.bf16.msra.mxu0 0
      %765 = vmatprep.subr.bf16.mxu0 0
      %766 = vmatpush1.bf16.msra.mxu0 0
      %767 = vmatprep.subr.bf16.mxu0 0
      %768 = vmatpush1.bf16.msra.mxu0 0
      %769 = vmatprep.subr.bf16.mxu0 0
      %770 = vmatpush1.bf16.msra.mxu0 0
      %771 = vmatprep.subr.bf16.mxu0 0
      %772 = vmatpush1.bf16.msra.mxu0 0
      %773 = vmatprep.subr.bf16.mxu0 0
      %774 = vmatpush1.bf16.msra.mxu0 0
      %775 = vmatprep.subr.bf16.mxu0 0
      %776 = vmatpush1.bf16.msra.mxu0 %v529
      %777 = vmatprep.subr.bf16.mxu0 0
      %778 = vmatpush1.bf16.msra.mxu0 %v528
      %779 = vmatprep.subr.bf16.mxu0 0
      %780 = vmatpush2.bf16.msra.mxu0 0
      %781 = vmatprep.subr.bf16.mxu0 0
      %782 = vmatpush2.bf16.msra.mxu0 0
      %783 = vmatprep.subr.bf16.mxu0 0
      %784 = vmatpush2.bf16.msra.mxu0 0
      %785 = vmatprep.subr.bf16.mxu0 0
      %786 = vmatpush2.bf16.msra.mxu0 0
      %787 = vmatprep.subr.bf16.mxu0 0
      %788 = vmatpush2.bf16.msra.mxu0 0
      %789 = vmatprep.subr.bf16.mxu0 0
      %790 = vmatpush2.bf16.msra.mxu0 0
      %791 = vmatprep.subr.bf16.mxu0 0
      %792 = vmatpush2.bf16.msra.mxu0 0
      %793 = vmatprep.subr.bf16.mxu0 0
      %794 = vmatpush2.bf16.msra.mxu0 0
      %795 = vmatprep.mubr.bf16.mxu0 0
      %796 = vmatmul.mubr.bf16.gmra.mxu0 %v761
      %v797 = vpop.f32.mrf.mxu0
      %v798 = vadd.f32 %v535, %v797
      %v799 = vpop.f32.mrf.mxu0
      %v800 = vpop.f32.mrf.mxu0
      %v801 = vpop.f32.mrf.mxu0
      %802 = vdwg.mxu0
      %v803 = vld [vmem:[%s309] sm:$0xff]
      %v804 = vadd.f32 %v803, %v798
      %v805 = vsel %vm411, %v804, 0.0
      %806 = vadd.xlane.f32.xlu0 %v805
      %v807 = vpop.xlane.xlu0 %806
      %v808 = vrcp.pop 32.0
      %v809 = vmul.f32 %v807, %v808
      %v810 = vsub.f32 %v804, %v809
      %v811 = vmul.f32 %v810, %v810
      %v812 = vsel %vm411, %v811, 0.0
      %813 = vadd.xlane.f32.xlu0 %v812
      %v814 = vpop.xlane.xlu0 %813
      %v815 = vmul.f32 %v814, %v808
      %v816 = vadd.f32 %v815, 1e-05
      %v817 = vrsqrt.pop %v816
      %v818 = vmul.f32 %v810, %v817
      %v819 = vld [vmem:[%s5] sm:$0x1]
      %v821 = vlaneseq
      %v822 = vshrl.u32 %v821, 7
      %v823 = vsub.s32 0, %v822
      %v824 = vrot.slane %v819, %v823
      %v826 = vmul.f32 %v818, %v824
      %v827 = vld [vmem:[%s6] sm:$0x1]
      %v829 = vlaneseq
      %v830 = vshrl.u32 %v829, 7
      %v831 = vsub.s32 0, %v830
      %v832 = vrot.slane %v827, %v831
      %v834 = vadd.f32 %v826, %v832
      %835 = vst.msk [vmem:[%s313] sm:$0xff] %vm411, %v834
      %p836 = scmp.lt.s32.totalorder %s18, 1
      %s837 = scalar_select %p836, %s18, 1
      %s838 = smul.addr %s837, 8
      %s839 = scalar_lea.vmem %s7, %s838
      // Predicated region
      $region49: #{deformable_transformer_decoder_forward.13} parent=47 // pred_check
        %p840 = pneg %p198
      $region50: #{deformable_transformer_decoder_forward.13} parent=47 // pred_check_branch
        %842 = sbr.rel (%p840) target = $region52
      $region51: #{deformable_transformer_decoder_forward.13} parent=47 // pred_region
        _
      $region52: #{deformable_transformer_decoder_forward.13} parent=47 // pred_fallthru
        _
    $region48: #{deformable_transformer_decoder_forward.13} parent=5 // pred_fallthru
      _
    %p843 = scmp.le.s32.totalorder 2, %s13
    // Predicated region
    $region53: #{deformable_transformer_decoder_forward.13} parent=5 // pred_check
      %p844 = pneg %p843
    $region54: #{deformable_transformer_decoder_forward.13} parent=5 // pred_check_branch
      %846 = sbr.rel (%p844) target = $region56
    $region55: #{deformable_transformer_decoder_forward.13} parent=5 // pred_region
      %s847 = ssub.s32 %s13, 2
      // Predicated region
      $region57: #{deformable_transformer_decoder_forward.13} parent=55 // pred_check
        %p848 = pneg %p204
      $region58: #{deformable_transformer_decoder_forward.13} parent=55 // pred_check_branch
        %850 = sbr.rel (%p848) target = $region60
      $region59: #{deformable_transformer_decoder_forward.13} parent=55 // pred_region
        %p851 = scmp.lt.s32.totalorder %s19, 1
        %s852 = scalar_select %p851, %s19, 1
        %s853 = smul.addr %s852, 8
        %s854 = scalar_lea.vmem %s7, %s853
      $region60: #{deformable_transformer_decoder_forward.13} parent=55 // pred_fallthru
        _
    $region56: #{deformable_transformer_decoder_forward.13} parent=5 // pred_fallthru
      _
  $region6: #{deformable_transformer_decoder_forward.13} parent=0 // loop_footer
    %s17 = sadd.s32 1, %s13
  $region7: #{deformable_transformer_decoder_forward.13} parent=0 // loop_footer_branch
    %12 = sbr.rel target = $region3
  $region8: #{deformable_transformer_decoder_forward.13} parent=0 // loop_exit
    _

// kernel: deformable_transformer_decoder_forward.14
$region0: #{deformable_transformer_decoder_forward.14}
  #allocation0 [shape = 'u32[]', space=smem, size = 0x4, offset = 0x4, fixed_abs, tag = 'smem constant byte address 0x4 - core index']
  #allocation1 [shape = 'u32[144,128]{1,0:T(1,128)}', space=vmem, size = 0x12000, scoped, tag = 'internal scratch']
  %s0 = inlined_call_operand.vmem [shape: f32[2,8,32], index: 0, kind: input, shape index: {}]
  %s1 = inlined_call_operand.vmem [shape: f32[32,64], index: 1, kind: input, shape index: {}]
  %s2 = inlined_call_operand.vmem [shape: f32[1,64], index: 2, kind: input, shape index: {}]
  %s3 = inlined_call_operand.vmem [shape: f32[64,32], index: 3, kind: input, shape index: {}]
  %s4 = inlined_call_operand.vmem [shape: f32[1,32], index: 4, kind: input, shape index: {}]
  %s5 = inlined_call_operand.vmem [shape: f32[1,32], index: 5, kind: input, shape index: {}]
  %s6 = inlined_call_operand.vmem [shape: f32[1,32], index: 6, kind: input, shape index: {}]
  %s7 = inlined_call_operand.vmem [shape: f32[2,8,32], index: 7, kind: output, shape index: {}]
  %s8 = sld [smem:[#allocation0]]
  $region61: #{deformable_transformer_decoder_forward.14} parent=0
    _
  %s10 = ssub.s32 1, %s8
  %s11 = scalar_select 0, %s10, %s8
  loop: start=0, step=1, limit=4
  $region2: #{deformable_transformer_decoder_forward.14} parent=0 // loop_pre_header
    _
  $region3: #{deformable_transformer_decoder_forward.14} parent=0 // loop_header
    %s13 = sphi 0, %s17
    %p14 = scmp.ge.s32.totalorder %s13, 4
    %s23 = sphi 0, %s25
    %s26 = sphi 0, %s23
    %s27 = sphi 0, %s26
    %s43 = sphi 0, %s27
    %s47 = sphi 0, %s47
    %s49 = sphi 0, %s47
    %s50 = sphi 0, %s49
    %s64 = sphi 0, %s50
    %s68 = sphi 0, %s68
    %s70 = sphi 0, %s68
    %s71 = sphi 0, %s70
    %s85 = sphi 0, %s71
    %s89 = sphi 0, %s89
    %s91 = sphi 0, %s89
    %s92 = sphi 0, %s91
    %s106 = sphi 0, %s92
    %s110 = sphi 0, %s110
    %s112 = sphi 0, %s110
    %s113 = sphi 0, %s112
    %s127 = sphi 0, %s113
    %s131 = sphi 0, %s131
    %s133 = sphi 0, %s131
    %s134 = sphi 0, %s133
    %s148 = sphi 0, %s134
    %s152 = sphi 0, %s152
    %s154 = sphi 0, %s152
    %s155 = sphi 0, %s154
    %s169 = sphi 0, %s155
    %s175 = sphi 0, %s177
    %s178 = sphi 0, %s175
    %s179 = sphi 0, %s178
    %s195 = sphi 0, %s179
  $region4: #{deformable_transformer_decoder_forward.14} parent=0 // loop_header_branch
    %16 = sbr.rel (%p14) target = $region8
  $region5: #{deformable_transformer_decoder_forward.14} parent=0 // loop_body
    %s18 = ssub.s32 %s13, 1
    %s19 = ssub.s32 %s13, 2
    %s20 = sadd.s32 %s13, 1
    %s21 = ssub.s32 %s13, %s20
    %p22 = scmp.eq.s32.totalorder %s21, 0
    %s24 = sadd.s32 %s23, 1
    %s25 = scalar_select %p22, %s23, %s24
    %p28 = pneg %p22
    %p29 = scmp.eq.s32.totalorder %s13, 1
    %p30 = por %p28, %p29
    %p31 = scmp.ne.s32.totalorder %s23, %s26
    %p32 = scmp.eq.s32.totalorder %s13, 0
    %p33 = por %p31, %p32
    %p34 = scmp.ne.s32.totalorder %s23, %s26
    %p35 = scmp.eq.s32.totalorder %s18, 1
    %p36 = por %p34, %p35
    %p37 = scmp.ne.s32.totalorder %s26, %s27
    %p38 = scmp.eq.s32.totalorder %s18, 0
    %p39 = por %p37, %p38
    %p40 = scmp.ne.s32.totalorder %s26, %s27
    %p41 = scmp.eq.s32.totalorder %s19, 1
    %p42 = por %p40, %p41
    %p44 = scmp.ne.s32.totalorder %s27, %s43
    %p45 = scmp.eq.s32.totalorder %s19, 0
    %p46 = por %p44, %p45
    %s48 = sadd.s32 %s47, 1
    %p51 = scmp.eq.s32.totalorder %s13, 1
    %p52 = scmp.ne.s32.totalorder %s47, %s49
    %p53 = scmp.eq.s32.totalorder %s13, 0
    %p54 = por %p52, %p53
    %p55 = scmp.ne.s32.totalorder %s47, %s49
    %p56 = scmp.eq.s32.totalorder %s18, 1
    %p57 = por %p55, %p56
    %p58 = scmp.ne.s32.totalorder %s49, %s50
    %p59 = scmp.eq.s32.totalorder %s18, 0
    %p60 = por %p58, %p59
    %p61 = scmp.ne.s32.totalorder %s49, %s50
    %p62 = scmp.eq.s32.totalorder %s19, 1
    %p63 = por %p61, %p62
    %p65 = scmp.ne.s32.totalorder %s50, %s64
    %p66 = scmp.eq.s32.totalorder %s19, 0
    %p67 = por %p65, %p66
    %s69 = sadd.s32 %s68, 1
    %p72 = scmp.eq.s32.totalorder %s13, 1
    %p73 = scmp.ne.s32.totalorder %s68, %s70
    %p74 = scmp.eq.s32.totalorder %s13, 0
    %p75 = por %p73, %p74
    %p76 = scmp.ne.s32.totalorder %s68, %s70
    %p77 = scmp.eq.s32.totalorder %s18, 1
    %p78 = por %p76, %p77
    %p79 = scmp.ne.s32.totalorder %s70, %s71
    %p80 = scmp.eq.s32.totalorder %s18, 0
    %p81 = por %p79, %p80
    %p82 = scmp.ne.s32.totalorder %s70, %s71
    %p83 = scmp.eq.s32.totalorder %s19, 1
    %p84 = por %p82, %p83
    %p86 = scmp.ne.s32.totalorder %s71, %s85
    %p87 = scmp.eq.s32.totalorder %s19, 0
    %p88 = por %p86, %p87
    %s90 = sadd.s32 %s89, 1
    %p93 = scmp.eq.s32.totalorder %s13, 1
    %p94 = scmp.ne.s32.totalorder %s89, %s91
    %p95 = scmp.eq.s32.totalorder %s13, 0
    %p96 = por %p94, %p95
    %p97 = scmp.ne.s32.totalorder %s89, %s91
    %p98 = scmp.eq.s32.totalorder %s18, 1
    %p99 = por %p97, %p98
    %p100 = scmp.ne.s32.totalorder %s91, %s92
    %p101 = scmp.eq.s32.totalorder %s18, 0
    %p102 = por %p100, %p101
    %p103 = scmp.ne.s32.totalorder %s91, %s92
    %p104 = scmp.eq.s32.totalorder %s19, 1
    %p105 = por %p103, %p104
    %p107 = scmp.ne.s32.totalorder %s92, %s106
    %p108 = scmp.eq.s32.totalorder %s19, 0
    %p109 = por %p107, %p108
    %s111 = sadd.s32 %s110, 1
    %p114 = scmp.eq.s32.totalorder %s13, 1
    %p115 = scmp.ne.s32.totalorder %s110, %s112
    %p116 = scmp.eq.s32.totalorder %s13, 0
    %p117 = por %p115, %p116
    %p118 = scmp.ne.s32.totalorder %s110, %s112
    %p119 = scmp.eq.s32.totalorder %s18, 1
    %p120 = por %p118, %p119
    %p121 = scmp.ne.s32.totalorder %s112, %s113
    %p122 = scmp.eq.s32.totalorder %s18, 0
    %p123 = por %p121, %p122
    %p124 = scmp.ne.s32.totalorder %s112, %s113
    %p125 = scmp.eq.s32.totalorder %s19, 1
    %p126 = por %p124, %p125
    %p128 = scmp.ne.s32.totalorder %s113, %s127
    %p129 = scmp.eq.s32.totalorder %s19, 0
    %p130 = por %p128, %p129
    %s132 = sadd.s32 %s131, 1
    %p135 = scmp.eq.s32.totalorder %s13, 1
    %p136 = scmp.ne.s32.totalorder %s131, %s133
    %p137 = scmp.eq.s32.totalorder %s13, 0
    %p138 = por %p136, %p137
    %p139 = scmp.ne.s32.totalorder %s131, %s133
    %p140 = scmp.eq.s32.totalorder %s18, 1
    %p141 = por %p139, %p140
    %p142 = scmp.ne.s32.totalorder %s133, %s134
    %p143 = scmp.eq.s32.totalorder %s18, 0
    %p144 = por %p142, %p143
    %p145 = scmp.ne.s32.totalorder %s133, %s134
    %p146 = scmp.eq.s32.totalorder %s19, 1
    %p147 = por %p145, %p146
    %p149 = scmp.ne.s32.totalorder %s134, %s148
    %p150 = scmp.eq.s32.totalorder %s19, 0
    %p151 = por %p149, %p150
    %s153 = sadd.s32 %s152, 1
    %p156 = scmp.eq.s32.totalorder %s13, 1
    %p157 = scmp.ne.s32.totalorder %s152, %s154
    %p158 = scmp.eq.s32.totalorder %s13, 0
    %p159 = por %p157, %p158
    %p160 = scmp.ne.s32.totalorder %s152, %s154
    %p161 = scmp.eq.s32.totalorder %s18, 1
    %p162 = por %p160, %p161
    %p163 = scmp.ne.s32.totalorder %s154, %s155
    %p164 = scmp.eq.s32.totalorder %s18, 0
    %p165 = por %p163, %p164
    %p166 = scmp.ne.s32.totalorder %s154, %s155
    %p167 = scmp.eq.s32.totalorder %s19, 1
    %p168 = por %p166, %p167
    %p170 = scmp.ne.s32.totalorder %s155, %s169
    %p171 = scmp.eq.s32.totalorder %s19, 0
    %p172 = por %p170, %p171
    %s173 = ssub.s32 %s13, %s20
    %p174 = scmp.eq.s32.totalorder %s173, 0
    %s176 = sadd.s32 %s175, 1
    %s177 = scalar_select %p174, %s175, %s176
    %p180 = pneg %p174
    %p181 = scmp.eq.s32.totalorder %s13, 1
    %p182 = por %p180, %p181
    %p183 = scmp.ne.s32.totalorder %s175, %s178
    %p184 = scmp.eq.s32.totalorder %s13, 0
    %p185 = por %p183, %p184
    %p186 = scmp.ne.s32.totalorder %s175, %s178
    %p187 = scmp.eq.s32.totalorder %s18, 1
    %p188 = por %p186, %p187
    %p189 = scmp.ne.s32.totalorder %s178, %s179
    %p190 = scmp.eq.s32.totalorder %s18, 0
    %p191 = por %p189, %p190
    %p192 = scmp.ne.s32.totalorder %s178, %s179
    %p193 = scmp.eq.s32.totalorder %s19, 1
    %p194 = por %p192, %p193
    %p196 = scmp.ne.s32.totalorder %s179, %s195
    %p197 = scmp.eq.s32.totalorder %s19, 0
    %p198 = por %p196, %p197
    %p199 = scmp.le.s32.totalorder 1, %s13
    %p200 = scmp.lt.s32.totalorder %s13, 3
    %p201 = pnand %p199, %p200
    %p202 = pneg %p201
    // Predicated region
    $region9: #{deformable_transformer_decoder_forward.14} parent=5 // pred_check
      _
    $region10: #{deformable_transformer_decoder_forward.14} parent=5 // pred_check_branch
      %204 = sbr.rel (%p201) target = $region12
    $region11: #{deformable_transformer_decoder_forward.14} parent=5 // pred_region
      %s205 = ssub.s32 %s13, 1
      // Predicated region
      $region13: #{deformable_transformer_decoder_forward.14} parent=11 // pred_check
        %p206 = pneg %p60
      $region14: #{deformable_transformer_decoder_forward.14} parent=11 // pred_check_branch
        %208 = sbr.rel (%p206) target = $region16
      $region15: #{deformable_transformer_decoder_forward.14} parent=11 // pred_region
        _
      $region16: #{deformable_transformer_decoder_forward.14} parent=11 // pred_fallthru
        _
      // Predicated region
      $region17: #{deformable_transformer_decoder_forward.14} parent=11 // pred_check
        %p209 = pneg %p81
      $region18: #{deformable_transformer_decoder_forward.14} parent=11 // pred_check_branch
        %211 = sbr.rel (%p209) target = $region20
      $region19: #{deformable_transformer_decoder_forward.14} parent=11 // pred_region
        _
      $region20: #{deformable_transformer_decoder_forward.14} parent=11 // pred_fallthru
        _
      // Predicated region
      $region21: #{deformable_transformer_decoder_forward.14} parent=11 // pred_check
        %p212 = pneg %p102
      $region22: #{deformable_transformer_decoder_forward.14} parent=11 // pred_check_branch
        %214 = sbr.rel (%p212) target = $region24
      $region23: #{deformable_transformer_decoder_forward.14} parent=11 // pred_region
        _
      $region24: #{deformable_transformer_decoder_forward.14} parent=11 // pred_fallthru
        _
      // Predicated region
      $region25: #{deformable_transformer_decoder_forward.14} parent=11 // pred_check
        %p215 = pneg %p123
      $region26: #{deformable_transformer_decoder_forward.14} parent=11 // pred_check_branch
        %217 = sbr.rel (%p215) target = $region28
      $region27: #{deformable_transformer_decoder_forward.14} parent=11 // pred_region
        _
      $region28: #{deformable_transformer_decoder_forward.14} parent=11 // pred_fallthru
        _
      // Predicated region
      $region29: #{deformable_transformer_decoder_forward.14} parent=11 // pred_check
        %p218 = pneg %p144
      $region30: #{deformable_transformer_decoder_forward.14} parent=11 // pred_check_branch
        %220 = sbr.rel (%p218) target = $region32
      $region31: #{deformable_transformer_decoder_forward.14} parent=11 // pred_region
        _
      $region32: #{deformable_transformer_decoder_forward.14} parent=11 // pred_fallthru
        _
      // Predicated region
      $region33: #{deformable_transformer_decoder_forward.14} parent=11 // pred_check
        %p221 = pneg %p165
      $region34: #{deformable_transformer_decoder_forward.14} parent=11 // pred_check_branch
        %223 = sbr.rel (%p221) target = $region36
      $region35: #{deformable_transformer_decoder_forward.14} parent=11 // pred_region
        _
      $region36: #{deformable_transformer_decoder_forward.14} parent=11 // pred_fallthru
        _
    $region12: #{deformable_transformer_decoder_forward.14} parent=5 // pred_fallthru
      _
    %p224 = scmp.lt.s32.totalorder %s13, 2
    // Predicated region
    $region37: #{deformable_transformer_decoder_forward.14} parent=5 // pred_check
      %p225 = pneg %p224
    $region38: #{deformable_transformer_decoder_forward.14} parent=5 // pred_check_branch
      %227 = sbr.rel (%p225) target = $region40
    $region39: #{deformable_transformer_decoder_forward.14} parent=5 // pred_region
      // Predicated region
      $region41: #{deformable_transformer_decoder_forward.14} parent=39 // pred_check
        %p228 = pneg %p33
      $region42: #{deformable_transformer_decoder_forward.14} parent=39 // pred_check_branch
        %230 = sbr.rel (%p228) target = $region44
      $region43: #{deformable_transformer_decoder_forward.14} parent=39 // pred_region
        %p231 = scmp.lt.s32.totalorder %s13, 1
        %s232 = scalar_select %p231, %s13, 1
        %s233 = smul.addr %s232, 8
        %s234 = scalar_lea.vmem %s0, %s233
      $region44: #{deformable_transformer_decoder_forward.14} parent=39 // pred_fallthru
        _
    $region40: #{deformable_transformer_decoder_forward.14} parent=5 // pred_fallthru
      _
    %p235 = scmp.le.s32.totalorder 1, %s13
    %p236 = scmp.lt.s32.totalorder %s13, 3
    %p237 = pnand %p235, %p236
    %p238 = pneg %p237
    // Predicated region
    $region45: #{deformable_transformer_decoder_forward.14} parent=5 // pred_check
      _
    $region46: #{deformable_transformer_decoder_forward.14} parent=5 // pred_check_branch
      %240 = sbr.rel (%p237) target = $region48
    $region47: #{deformable_transformer_decoder_forward.14} parent=5 // pred_region
      %s241 = ssub.s32 %s13, 1
      %p242 = scmp.lt.s32.totalorder %s18, 1
      %s243 = scalar_select %p242, %s18, 1
      %s244 = smul.addr %s243, 8
      %s245 = scalar_lea.vmem %s0, %s244
      %p246 = pneg %p39
      %p247 = pneg %p36
      %p248 = pneg %p60
      %p249 = pneg %p57
      %p250 = pneg %p81
      %p251 = pneg %p78
      %p252 = pneg %p102
      %p253 = pneg %p99
      %p254 = pneg %p123
      %p255 = pneg %p120
      %p256 = pneg %p144
      %p257 = pneg %p141
      %p258 = pneg %p165
      %p259 = pneg %p162
      %p260 = pneg %p191
      %p261 = pneg %p188
      %p262 = scmp.lt.s32.totalorder %s18, 1
      %s263 = scalar_select %p262, %s18, 1
      %s264 = smul.addr %s263, 8
      %s265 = scalar_lea.vmem %s7, %s264
      %p266 = scmp.lt.s32.totalorder %s18, 1
      %s267 = scalar_select %p266, %s18, 1
      %s268 = smul.addr %s267, 8
      %s269 = scalar_lea.vmem %s0, %s268
      %p270 = scmp.lt.s32.totalorder %s18, 1
      %s271 = scalar_select %p270, %s18, 1
      %s272 = smul.addr %s271, 8
      %s273 = scalar_lea.vmem %s7, %s272
      %v275 = vld [vmem:[%s269] sm:$0xff]
      %v276 = vpack.c.bf16 %v275, %v275
      %v277 = vld [vmem:[%s1] sm:$0xff]
      %v278 = vld [vmem:[%s1 + $0x8] sm:$0xff]
      %v279 = vld [vmem:[%s1 + $0x10] sm:$0xff]
      %v280 = vld [vmem:[%s1 + $0x18] sm:$0xff]
      %v281 = vpack.c.bf16 %v278, %v277
      %v282 = vpack.c.bf16 %v280, %v279
      %v283 = vld [vmem:[%s2] sm:$0x1]
      %v285 = vlaneseq
      %v286 = vshrl.u32 %v285, 7
      %v287 = vsub.s32 0, %v286
      %v288 = vrot.slane %v283, %v287
      %vm290 = vcmask 261120
      %v292 = vsel %vm290, %v276, 0
      %294 = vmatprep.subr.bf16.mxu0 0
      %295 = vmatpush1.bf16.msra.mxu0 0
      %296 = vmatprep.subr.bf16.mxu0 0
      %297 = vmatpush1.bf16.msra.mxu0 0
      %298 = vmatprep.subr.bf16.mxu0 0
      %299 = vmatpush1.bf16.msra.mxu0 0
      %300 = vmatprep.subr.bf16.mxu0 0
      %301 = vmatpush1.bf16.msra.mxu0 0
      %302 = vmatprep.subr.bf16.mxu0 0
      %303 = vmatpush1.bf16.msra.mxu0 0
      %304 = vmatprep.subr.bf16.mxu0 0
      %305 = vmatpush1.bf16.msra.mxu0 0
      %306 = vmatprep.subr.bf16.mxu0 0
      %307 = vmatpush1.bf16.msra.mxu0 %v282
      %308 = vmatprep.subr.bf16.mxu0 0
      %309 = vmatpush1.bf16.msra.mxu0 %v281
      %310 = vmatprep.subr.bf16.mxu0 0
      %311 = vmatpush2.bf16.msra.mxu0 0
      %312 = vmatprep.subr.bf16.mxu0 0
      %313 = vmatpush2.bf16.msra.mxu0 0
      %314 = vmatprep.subr.bf16.mxu0 0
      %315 = vmatpush2.bf16.msra.mxu0 0
      %316 = vmatprep.subr.bf16.mxu0 0
      %317 = vmatpush2.bf16.msra.mxu0 0
      %318 = vmatprep.subr.bf16.mxu0 0
      %319 = vmatpush2.bf16.msra.mxu0 0
      %320 = vmatprep.subr.bf16.mxu0 0
      %321 = vmatpush2.bf16.msra.mxu0 0
      %322 = vmatprep.subr.bf16.mxu0 0
      %323 = vmatpush2.bf16.msra.mxu0 0
      %324 = vmatprep.subr.bf16.mxu0 0
      %325 = vmatpush2.bf16.msra.mxu0 0
      %326 = vmatprep.mubr.bf16.mxu0 0
      %327 = vmatmul.mubr.bf16.gmra.mxu0 %v292
      %v328 = vpop.f32.mrf.mxu0
      %v329 = vadd.f32 %v288, %v328
      %v330 = vpop.f32.mrf.mxu0
      %v331 = vpop.f32.mrf.mxu0
      %v332 = vpop.f32.mrf.mxu0
      %333 = vdwg.mxu0
      %v334 = vmax.f32 %v329, 0.0
      %v335 = vpack.c.bf16 %v334, %v334
      %v336 = vld [vmem:[%s3] sm:$0xff]
      %v337 = vld [vmem:[%s3 + $0x8] sm:$0xff]
      %v338 = vld [vmem:[%s3 + $0x10] sm:$0xff]
      %v339 = vld [vmem:[%s3 + $0x18] sm:$0xff]
      %v340 = vld [vmem:[%s3 + $0x20] sm:$0xff]
      %v341 = vld [vmem:[%s3 + $0x28] sm:$0xff]
      %v342 = vld [vmem:[%s3 + $0x30] sm:$0xff]
      %v343 = vld [vmem:[%s3 + $0x38] sm:$0xff]
      %v344 = vpack.c.bf16 %v337, %v336
      %v345 = vpack.c.bf16 %v339, %v338
      %v346 = vpack.c.bf16 %v341, %v340
      %v347 = vpack.c.bf16 %v343, %v342
      %v348 = vld [vmem:[%s4] sm:$0x1]
      %v350 = vlaneseq
      %v351 = vshrl.u32 %v350, 7
      %v352 = vsub.s32 0, %v351
      %v353 = vrot.slane %v348, %v352
      %vm355 = vcmask 523264
      %v357 = vsel %vm355, %v335, 0
      %359 = vmatprep.subr.bf16.mxu0 0
      %360 = vmatpush1.bf16.msra.mxu0 0
      %361 = vmatprep.subr.bf16.mxu0 0
      %362 = vmatpush1.bf16.msra.mxu0 0
      %363 = vmatprep.subr.bf16.mxu0 0
      %364 = vmatpush1.bf16.msra.mxu0 0
      %365 = vmatprep.subr.bf16.mxu0 0
      %366 = vmatpush1.bf16.msra.mxu0 0
      %367 = vmatprep.subr.bf16.mxu0 0
      %368 = vmatpush1.bf16.msra.mxu0 %v347
      %369 = vmatprep.subr.bf16.mxu0 0
      %370 = vmatpush1.bf16.msra.mxu0 %v346
      %371 = vmatprep.subr.bf16.mxu0 0
      %372 = vmatpush1.bf16.msra.mxu0 %v345
      %373 = vmatprep.subr.bf16.mxu0 0
      %374 = vmatpush1.bf16.msra.mxu0 %v344
      %375 = vmatprep.subr.bf16.mxu0 0
      %376 = vmatpush2.bf16.msra.mxu0 0
      %377 = vmatprep.subr.bf16.mxu0 0
      %378 = vmatpush2.bf16.msra.mxu0 0
      %379 = vmatprep.subr.bf16.mxu0 0
      %380 = vmatpush2.bf16.msra.mxu0 0
      %381 = vmatprep.subr.bf16.mxu0 0
      %382 = vmatpush2.bf16.msra.mxu0 0
      %383 = vmatprep.subr.bf16.mxu0 0
      %384 = vmatpush2.bf16.msra.mxu0 0
      %385 = vmatprep.subr.bf16.mxu0 0
      %386 = vmatpush2.bf16.msra.mxu0 0
      %387 = vmatprep.subr.bf16.mxu0 0
      %388 = vmatpush2.bf16.msra.mxu0 0
      %389 = vmatprep.subr.bf16.mxu0 0
      %390 = vmatpush2.bf16.msra.mxu0 0
      %391 = vmatprep.mubr.bf16.mxu0 0
      %392 = vmatmul.mubr.bf16.gmra.mxu0 %v357
      %v393 = vpop.f32.mrf.mxu0
      %v394 = vadd.f32 %v353, %v393
      %v395 = vpop.f32.mrf.mxu0
      %v396 = vpop.f32.mrf.mxu0
      %v397 = vpop.f32.mrf.mxu0
      %398 = vdwg.mxu0
      %v399 = vadd.f32 %v275, %v394
      %v400 = vsel %vm290, %v399, 0.0
      %401 = vadd.xlane.f32.xlu0 %v400
      %v402 = vpop.xlane.xlu0 %401
      %v403 = vrcp.pop 32.0
      %v404 = vmul.f32 %v402, %v403
      %v405 = vsub.f32 %v399, %v404
      %v406 = vmul.f32 %v405, %v405
      %v407 = vsel %vm290, %v406, 0.0
      %408 = vadd.xlane.f32.xlu0 %v407
      %v409 = vpop.xlane.xlu0 %408
      %v410 = vmul.f32 %v409, %v403
      %v411 = vadd.f32 %v410, 1e-05
      %v412 = vrsqrt.pop %v411
      %v413 = vmul.f32 %v405, %v412
      %v414 = vld [vmem:[%s5] sm:$0x1]
      %v416 = vlaneseq
      %v417 = vshrl.u32 %v416, 7
      %v418 = vsub.s32 0, %v417
      %v419 = vrot.slane %v414, %v418
      %v421 = vmul.f32 %v413, %v419
      %v422 = vld [vmem:[%s6] sm:$0x1]
      %v424 = vlaneseq
      %v425 = vshrl.u32 %v424, 7
      %v426 = vsub.s32 0, %v425
      %v427 = vrot.slane %v422, %v426
      %v429 = vadd.f32 %v421, %v427
      %430 = vst.msk [vmem:[%s273] sm:$0xff] %vm290, %v429
      %p431 = scmp.lt.s32.totalorder %s18, 1
      %s432 = scalar_select %p431, %s18, 1
      %s433 = smul.addr %s432, 8
      %s434 = scalar_lea.vmem %s7, %s433
      // Predicated region
      $region49: #{deformable_transformer_decoder_forward.14} parent=47 // pred_check
        %p435 = pneg %p188
      $region50: #{deformable_transformer_decoder_forward.14} parent=47 // pred_check_branch
        %437 = sbr.rel (%p435) target = $region52
      $region51: #{deformable_transformer_decoder_forward.14} parent=47 // pred_region
        _
      $region52: #{deformable_transformer_decoder_forward.14} parent=47 // pred_fallthru
        _
    $region48: #{deformable_transformer_decoder_forward.14} parent=5 // pred_fallthru
      _
    %p438 = scmp.le.s32.totalorder 2, %s13
    // Predicated region
    $region53: #{deformable_transformer_decoder_forward.14} parent=5 // pred_check
      %p439 = pneg %p438
    $region54: #{deformable_transformer_decoder_forward.14} parent=5 // pred_check_branch
      %441 = sbr.rel (%p439) target = $region56
    $region55: #{deformable_transformer_decoder_forward.14} parent=5 // pred_region
      %s442 = ssub.s32 %s13, 2
      // Predicated region
      $region57: #{deformable_transformer_decoder_forward.14} parent=55 // pred_check
        %p443 = pneg %p194
      $region58: #{deformable_transformer_decoder_forward.14} parent=55 // pred_check_branch
        %445 = sbr.rel (%p443) target = $region60
      $region59: #{deformable_transformer_decoder_forward.14} parent=55 // pred_region
        %p446 = scmp.lt.s32.totalorder %s19, 1
        %s447 = scalar_select %p446, %s19, 1
        %s448 = smul.addr %s447, 8
        %s449 = scalar_lea.vmem %s7, %s448
      $region60: #{deformable_transformer_decoder_forward.14} parent=55 // pred_fallthru
        _
    $region56: #{deformable_transformer_decoder_forward.14} parent=5 // pred_fallthru
      _
  $region6: #{deformable_transformer_decoder_forward.14} parent=0 // loop_footer
    %s17 = sadd.s32 1, %s13
  $region7: #{deformable_transformer_decoder_forward.14} parent=0 // loop_footer_branch
    %12 = sbr.rel target = $region3
  $region8: #{deformable_transformer_decoder_forward.14} parent=0 // loop_exit
    _

// kernel: deformable_transformer_decoder_forward.15
$region0: #{deformable_transformer_decoder_forward.15}
  #allocation0 [shape = 'u32[]', space=smem, size = 0x4, offset = 0x4, fixed_abs, tag = 'smem constant byte address 0x4 - core index']
  #allocation1 [shape = 'u32[144,128]{1,0:T(1,128)}', space=vmem, size = 0x12000, scoped, tag = 'internal scratch']
  %s0 = inlined_call_operand.vmem [shape: f32[2,8,32], index: 0, kind: input, shape index: {}]
  %s1 = inlined_call_operand.vmem [shape: f32[2,8,32], index: 1, kind: input, shape index: {}]
  %s2 = inlined_call_operand.vmem [shape: f32[32,64], index: 2, kind: input, shape index: {}]
  %s3 = inlined_call_operand.vmem [shape: f32[1,64], index: 3, kind: input, shape index: {}]
  %s4 = inlined_call_operand.vmem [shape: f32[32,32], index: 4, kind: input, shape index: {}]
  %s5 = inlined_call_operand.vmem [shape: f32[1,32], index: 5, kind: input, shape index: {}]
  %s6 = inlined_call_operand.vmem [shape: f32[32,32], index: 6, kind: input, shape index: {}]
  %s7 = inlined_call_operand.vmem [shape: f32[1,32], index: 7, kind: input, shape index: {}]
  %s8 = inlined_call_operand.vmem [shape: f32[1,32], index: 8, kind: input, shape index: {}]
  %s9 = inlined_call_operand.vmem [shape: f32[1,32], index: 9, kind: input, shape index: {}]
  %s10 = inlined_call_operand.vmem [shape: f32[2,8,32], index: 10, kind: output, shape index: {}]
  %s11 = sld [smem:[#allocation0]]
  $region73: #{deformable_transformer_decoder_forward.15} parent=0
    _
  %s13 = ssub.s32 1, %s11
  %s14 = scalar_select 0, %s13, %s11
  loop: start=0, step=1, limit=4
  $region2: #{deformable_transformer_decoder_forward.15} parent=0 // loop_pre_header
    _
  $region3: #{deformable_transformer_decoder_forward.15} parent=0 // loop_header
    %s16 = sphi 0, %s20
    %p17 = scmp.ge.s32.totalorder %s16, 4
    %s26 = sphi 0, %s28
    %s29 = sphi 0, %s26
    %s30 = sphi 0, %s29
    %s46 = sphi 0, %s30
    %s52 = sphi 0, %s54
    %s55 = sphi 0, %s52
    %s56 = sphi 0, %s55
    %s72 = sphi 0, %s56
    %s76 = sphi 0, %s76
    %s78 = sphi 0, %s76
    %s79 = sphi 0, %s78
    %s93 = sphi 0, %s79
    %s97 = sphi 0, %s97
    %s99 = sphi 0, %s97
    %s100 = sphi 0, %s99
    %s114 = sphi 0, %s100
    %s118 = sphi 0, %s118
    %s120 = sphi 0, %s118
    %s121 = sphi 0, %s120
    %s135 = sphi 0, %s121
    %s139 = sphi 0, %s139
    %s141 = sphi 0, %s139
    %s142 = sphi 0, %s141
    %s156 = sphi 0, %s142
    %s160 = sphi 0, %s160
    %s162 = sphi 0, %s160
    %s163 = sphi 0, %s162
    %s177 = sphi 0, %s163
    %s181 = sphi 0, %s181
    %s183 = sphi 0, %s181
    %s184 = sphi 0, %s183
    %s198 = sphi 0, %s184
    %s202 = sphi 0, %s202
    %s204 = sphi 0, %s202
    %s205 = sphi 0, %s204
    %s219 = sphi 0, %s205
    %s223 = sphi 0, %s223
    %s225 = sphi 0, %s223
    %s226 = sphi 0, %s225
    %s240 = sphi 0, %s226
    %s246 = sphi 0, %s248
    %s249 = sphi 0, %s246
    %s250 = sphi 0, %s249
    %s266 = sphi 0, %s250
  $region4: #{deformable_transformer_decoder_forward.15} parent=0 // loop_header_branch
    %19 = sbr.rel (%p17) target = $region8
  $region5: #{deformable_transformer_decoder_forward.15} parent=0 // loop_body
    %s21 = ssub.s32 %s16, 1
    %s22 = ssub.s32 %s16, 2
    %s23 = sadd.s32 %s16, 1
    %s24 = ssub.s32 %s16, %s23
    %p25 = scmp.eq.s32.totalorder %s24, 0
    %s27 = sadd.s32 %s26, 1
    %s28 = scalar_select %p25, %s26, %s27
    %p31 = pneg %p25
    %p32 = scmp.eq.s32.totalorder %s16, 1
    %p33 = por %p31, %p32
    %p34 = scmp.ne.s32.totalorder %s26, %s29
    %p35 = scmp.eq.s32.totalorder %s16, 0
    %p36 = por %p34, %p35
    %p37 = scmp.ne.s32.totalorder %s26, %s29
    %p38 = scmp.eq.s32.totalorder %s21, 1
    %p39 = por %p37, %p38
    %p40 = scmp.ne.s32.totalorder %s29, %s30
    %p41 = scmp.eq.s32.totalorder %s21, 0
    %p42 = por %p40, %p41
    %p43 = scmp.ne.s32.totalorder %s29, %s30
    %p44 = scmp.eq.s32.totalorder %s22, 1
    %p45 = por %p43, %p44
    %p47 = scmp.ne.s32.totalorder %s30, %s46
    %p48 = scmp.eq.s32.totalorder %s22, 0
    %p49 = por %p47, %p48
    %s50 = ssub.s32 %s16, %s23
    %p51 = scmp.eq.s32.totalorder %s50, 0
    %s53 = sadd.s32 %s52, 1
    %s54 = scalar_select %p51, %s52, %s53
    %p57 = pneg %p51
    %p58 = scmp.eq.s32.totalorder %s16, 1
    %p59 = por %p57, %p58
    %p60 = scmp.ne.s32.totalorder %s52, %s55
    %p61 = scmp.eq.s32.totalorder %s16, 0
    %p62 = por %p60, %p61
    %p63 = scmp.ne.s32.totalorder %s52, %s55
    %p64 = scmp.eq.s32.totalorder %s21, 1
    %p65 = por %p63, %p64
    %p66 = scmp.ne.s32.totalorder %s55, %s56
    %p67 = scmp.eq.s32.totalorder %s21, 0
    %p68 = por %p66, %p67
    %p69 = scmp.ne.s32.totalorder %s55, %s56
    %p70 = scmp.eq.s32.totalorder %s22, 1
    %p71 = por %p69, %p70
    %p73 = scmp.ne.s32.totalorder %s56, %s72
    %p74 = scmp.eq.s32.totalorder %s22, 0
    %p75 = por %p73, %p74
    %s77 = sadd.s32 %s76, 1
    %p80 = scmp.eq.s32.totalorder %s16, 1
    %p81 = scmp.ne.s32.totalorder %s76, %s78
    %p82 = scmp.eq.s32.totalorder %s16, 0
    %p83 = por %p81, %p82
    %p84 = scmp.ne.s32.totalorder %s76, %s78
    %p85 = scmp.eq.s32.totalorder %s21, 1
    %p86 = por %p84, %p85
    %p87 = scmp.ne.s32.totalorder %s78, %s79
    %p88 = scmp.eq.s32.totalorder %s21, 0
    %p89 = por %p87, %p88
    %p90 = scmp.ne.s32.totalorder %s78, %s79
    %p91 = scmp.eq.s32.totalorder %s22, 1
    %p92 = por %p90, %p91
    %p94 = scmp.ne.s32.totalorder %s79, %s93
    %p95 = scmp.eq.s32.totalorder %s22, 0
    %p96 = por %p94, %p95
    %s98 = sadd.s32 %s97, 1
    %p101 = scmp.eq.s32.totalorder %s16, 1
    %p102 = scmp.ne.s32.totalorder %s97, %s99
    %p103 = scmp.eq.s32.totalorder %s16, 0
    %p104 = por %p102, %p103
    %p105 = scmp.ne.s32.totalorder %s97, %s99
    %p106 = scmp.eq.s32.totalorder %s21, 1
    %p107 = por %p105, %p106
    %p108 = scmp.ne.s32.totalorder %s99, %s100
    %p109 = scmp.eq.s32.totalorder %s21, 0
    %p110 = por %p108, %p109
    %p111 = scmp.ne.s32.totalorder %s99, %s100
    %p112 = scmp.eq.s32.totalorder %s22, 1
    %p113 = por %p111, %p112
    %p115 = scmp.ne.s32.totalorder %s100, %s114
    %p116 = scmp.eq.s32.totalorder %s22, 0
    %p117 = por %p115, %p116
    %s119 = sadd.s32 %s118, 1
    %p122 = scmp.eq.s32.totalorder %s16, 1
    %p123 = scmp.ne.s32.totalorder %s118, %s120
    %p124 = scmp.eq.s32.totalorder %s16, 0
    %p125 = por %p123, %p124
    %p126 = scmp.ne.s32.totalorder %s118, %s120
    %p127 = scmp.eq.s32.totalorder %s21, 1
    %p128 = por %p126, %p127
    %p129 = scmp.ne.s32.totalorder %s120, %s121
    %p130 = scmp.eq.s32.totalorder %s21, 0
    %p131 = por %p129, %p130
    %p132 = scmp.ne.s32.totalorder %s120, %s121
    %p133 = scmp.eq.s32.totalorder %s22, 1
    %p134 = por %p132, %p133
    %p136 = scmp.ne.s32.totalorder %s121, %s135
    %p137 = scmp.eq.s32.totalorder %s22, 0
    %p138 = por %p136, %p137
    %s140 = sadd.s32 %s139, 1
    %p143 = scmp.eq.s32.totalorder %s16, 1
    %p144 = scmp.ne.s32.totalorder %s139, %s141
    %p145 = scmp.eq.s32.totalorder %s16, 0
    %p146 = por %p144, %p145
    %p147 = scmp.ne.s32.totalorder %s139, %s141
    %p148 = scmp.eq.s32.totalorder %s21, 1
    %p149 = por %p147, %p148
    %p150 = scmp.ne.s32.totalorder %s141, %s142
    %p151 = scmp.eq.s32.totalorder %s21, 0
    %p152 = por %p150, %p151
    %p153 = scmp.ne.s32.totalorder %s141, %s142
    %p154 = scmp.eq.s32.totalorder %s22, 1
    %p155 = por %p153, %p154
    %p157 = scmp.ne.s32.totalorder %s142, %s156
    %p158 = scmp.eq.s32.totalorder %s22, 0
    %p159 = por %p157, %p158
    %s161 = sadd.s32 %s160, 1
    %p164 = scmp.eq.s32.totalorder %s16, 1
    %p165 = scmp.ne.s32.totalorder %s160, %s162
    %p166 = scmp.eq.s32.totalorder %s16, 0
    %p167 = por %p165, %p166
    %p168 = scmp.ne.s32.totalorder %s160, %s162
    %p169 = scmp.eq.s32.totalorder %s21, 1
    %p170 = por %p168, %p169
    %p171 = scmp.ne.s32.totalorder %s162, %s163
    %p172 = scmp.eq.s32.totalorder %s21, 0
    %p173 = por %p171, %p172
    %p174 = scmp.ne.s32.totalorder %s162, %s163
    %p175 = scmp.eq.s32.totalorder %s22, 1
    %p176 = por %p174, %p175
    %p178 = scmp.ne.s32.totalorder %s163, %s177
    %p179 = scmp.eq.s32.totalorder %s22, 0
    %p180 = por %p178, %p179
    %s182 = sadd.s32 %s181, 1
    %p185 = scmp.eq.s32.totalorder %s16, 1
    %p186 = scmp.ne.s32.totalorder %s181, %s183
    %p187 = scmp.eq.s32.totalorder %s16, 0
    %p188 = por %p186, %p187
    %p189 = scmp.ne.s32.totalorder %s181, %s183
    %p190 = scmp.eq.s32.totalorder %s21, 1
    %p191 = por %p189, %p190
    %p192 = scmp.ne.s32.totalorder %s183, %s184
    %p193 = scmp.eq.s32.totalorder %s21, 0
    %p194 = por %p192, %p193
    %p195 = scmp.ne.s32.totalorder %s183, %s184
    %p196 = scmp.eq.s32.totalorder %s22, 1
    %p197 = por %p195, %p196
    %p199 = scmp.ne.s32.totalorder %s184, %s198
    %p200 = scmp.eq.s32.totalorder %s22, 0
    %p201 = por %p199, %p200
    %s203 = sadd.s32 %s202, 1
    %p206 = scmp.eq.s32.totalorder %s16, 1
    %p207 = scmp.ne.s32.totalorder %s202, %s204
    %p208 = scmp.eq.s32.totalorder %s16, 0
    %p209 = por %p207, %p208
    %p210 = scmp.ne.s32.totalorder %s202, %s204
    %p211 = scmp.eq.s32.totalorder %s21, 1
    %p212 = por %p210, %p211
    %p213 = scmp.ne.s32.totalorder %s204, %s205
    %p214 = scmp.eq.s32.totalorder %s21, 0
    %p215 = por %p213, %p214
    %p216 = scmp.ne.s32.totalorder %s204, %s205
    %p217 = scmp.eq.s32.totalorder %s22, 1
    %p218 = por %p216, %p217
    %p220 = scmp.ne.s32.totalorder %s205, %s219
    %p221 = scmp.eq.s32.totalorder %s22, 0
    %p222 = por %p220, %p221
    %s224 = sadd.s32 %s223, 1
    %p227 = scmp.eq.s32.totalorder %s16, 1
    %p228 = scmp.ne.s32.totalorder %s223, %s225
    %p229 = scmp.eq.s32.totalorder %s16, 0
    %p230 = por %p228, %p229
    %p231 = scmp.ne.s32.totalorder %s223, %s225
    %p232 = scmp.eq.s32.totalorder %s21, 1
    %p233 = por %p231, %p232
    %p234 = scmp.ne.s32.totalorder %s225, %s226
    %p235 = scmp.eq.s32.totalorder %s21, 0
    %p236 = por %p234, %p235
    %p237 = scmp.ne.s32.totalorder %s225, %s226
    %p238 = scmp.eq.s32.totalorder %s22, 1
    %p239 = por %p237, %p238
    %p241 = scmp.ne.s32.totalorder %s226, %s240
    %p242 = scmp.eq.s32.totalorder %s22, 0
    %p243 = por %p241, %p242
    %s244 = ssub.s32 %s16, %s23
    %p245 = scmp.eq.s32.totalorder %s244, 0
    %s247 = sadd.s32 %s246, 1
    %s248 = scalar_select %p245, %s246, %s247
    %p251 = pneg %p245
    %p252 = scmp.eq.s32.totalorder %s16, 1
    %p253 = por %p251, %p252
    %p254 = scmp.ne.s32.totalorder %s246, %s249
    %p255 = scmp.eq.s32.totalorder %s16, 0
    %p256 = por %p254, %p255
    %p257 = scmp.ne.s32.totalorder %s246, %s249
    %p258 = scmp.eq.s32.totalorder %s21, 1
    %p259 = por %p257, %p258
    %p260 = scmp.ne.s32.totalorder %s249, %s250
    %p261 = scmp.eq.s32.totalorder %s21, 0
    %p262 = por %p260, %p261
    %p263 = scmp.ne.s32.totalorder %s249, %s250
    %p264 = scmp.eq.s32.totalorder %s22, 1
    %p265 = por %p263, %p264
    %p267 = scmp.ne.s32.totalorder %s250, %s266
    %p268 = scmp.eq.s32.totalorder %s22, 0
    %p269 = por %p267, %p268
    %p270 = scmp.le.s32.totalorder 1, %s16
    %p271 = scmp.lt.s32.totalorder %s16, 3
    %p272 = pnand %p270, %p271
    %p273 = pneg %p272
    // Predicated region
    $region9: #{deformable_transformer_decoder_forward.15} parent=5 // pred_check
      _
    $region10: #{deformable_transformer_decoder_forward.15} parent=5 // pred_check_branch
      %275 = sbr.rel (%p272) target = $region12
    $region11: #{deformable_transformer_decoder_forward.15} parent=5 // pred_region
      %s276 = ssub.s32 %s16, 1
      // Predicated region
      $region13: #{deformable_transformer_decoder_forward.15} parent=11 // pred_check
        %p277 = pneg %p89
      $region14: #{deformable_transformer_decoder_forward.15} parent=11 // pred_check_branch
        %279 = sbr.rel (%p277) target = $region16
      $region15: #{deformable_transformer_decoder_forward.15} parent=11 // pred_region
        _
      $region16: #{deformable_transformer_decoder_forward.15} parent=11 // pred_fallthru
        _
      // Predicated region
      $region17: #{deformable_transformer_decoder_forward.15} parent=11 // pred_check
        %p280 = pneg %p110
      $region18: #{deformable_transformer_decoder_forward.15} parent=11 // pred_check_branch
        %282 = sbr.rel (%p280) target = $region20
      $region19: #{deformable_transformer_decoder_forward.15} parent=11 // pred_region
        _
      $region20: #{deformable_transformer_decoder_forward.15} parent=11 // pred_fallthru
        _
      // Predicated region
      $region21: #{deformable_transformer_decoder_forward.15} parent=11 // pred_check
        %p283 = pneg %p131
      $region22: #{deformable_transformer_decoder_forward.15} parent=11 // pred_check_branch
        %285 = sbr.rel (%p283) target = $region24
      $region23: #{deformable_transformer_decoder_forward.15} parent=11 // pred_region
        _
      $region24: #{deformable_transformer_decoder_forward.15} parent=11 // pred_fallthru
        _
      // Predicated region
      $region25: #{deformable_transformer_decoder_forward.15} parent=11 // pred_check
        %p286 = pneg %p152
      $region26: #{deformable_transformer_decoder_forward.15} parent=11 // pred_check_branch
        %288 = sbr.rel (%p286) target = $region28
      $region27: #{deformable_transformer_decoder_forward.15} parent=11 // pred_region
        _
      $region28: #{deformable_transformer_decoder_forward.15} parent=11 // pred_fallthru
        _
      // Predicated region
      $region29: #{deformable_transformer_decoder_forward.15} parent=11 // pred_check
        %p289 = pneg %p173
      $region30: #{deformable_transformer_decoder_forward.15} parent=11 // pred_check_branch
        %291 = sbr.rel (%p289) target = $region32
      $region31: #{deformable_transformer_decoder_forward.15} parent=11 // pred_region
        _
      $region32: #{deformable_transformer_decoder_forward.15} parent=11 // pred_fallthru
        _
      // Predicated region
      $region33: #{deformable_transformer_decoder_forward.15} parent=11 // pred_check
        %p292 = pneg %p194
      $region34: #{deformable_transformer_decoder_forward.15} parent=11 // pred_check_branch
        %294 = sbr.rel (%p292) target = $region36
      $region35: #{deformable_transformer_decoder_forward.15} parent=11 // pred_region
        _
      $region36: #{deformable_transformer_decoder_forward.15} parent=11 // pred_fallthru
        _
      // Predicated region
      $region37: #{deformable_transformer_decoder_forward.15} parent=11 // pred_check
        %p295 = pneg %p215
      $region38: #{deformable_transformer_decoder_forward.15} parent=11 // pred_check_branch
        %297 = sbr.rel (%p295) target = $region40
      $region39: #{deformable_transformer_decoder_forward.15} parent=11 // pred_region
        _
      $region40: #{deformable_transformer_decoder_forward.15} parent=11 // pred_fallthru
        _
      // Predicated region
      $region41: #{deformable_transformer_decoder_forward.15} parent=11 // pred_check
        %p298 = pneg %p236
      $region42: #{deformable_transformer_decoder_forward.15} parent=11 // pred_check_branch
        %300 = sbr.rel (%p298) target = $region44
      $region43: #{deformable_transformer_decoder_forward.15} parent=11 // pred_region
        _
      $region44: #{deformable_transformer_decoder_forward.15} parent=11 // pred_fallthru
        _
    $region12: #{deformable_transformer_decoder_forward.15} parent=5 // pred_fallthru
      _
    %p301 = scmp.lt.s32.totalorder %s16, 2
    // Predicated region
    $region45: #{deformable_transformer_decoder_forward.15} parent=5 // pred_check
      %p302 = pneg %p301
    $region46: #{deformable_transformer_decoder_forward.15} parent=5 // pred_check_branch
      %304 = sbr.rel (%p302) target = $region48
    $region47: #{deformable_transformer_decoder_forward.15} parent=5 // pred_region
      // Predicated region
      $region49: #{deformable_transformer_decoder_forward.15} parent=47 // pred_check
        %p305 = pneg %p36
      $region50: #{deformable_transformer_decoder_forward.15} parent=47 // pred_check_branch
        %307 = sbr.rel (%p305) target = $region52
      $region51: #{deformable_transformer_decoder_forward.15} parent=47 // pred_region
        %p308 = scmp.lt.s32.totalorder %s16, 1
        %s309 = scalar_select %p308, %s16, 1
        %s310 = smul.addr %s309, 8
        %s311 = scalar_lea.vmem %s0, %s310
      $region52: #{deformable_transformer_decoder_forward.15} parent=47 // pred_fallthru
        _
      // Predicated region
      $region53: #{deformable_transformer_decoder_forward.15} parent=47 // pred_check
        %p312 = pneg %p62
      $region54: #{deformable_transformer_decoder_forward.15} parent=47 // pred_check_branch
        %314 = sbr.rel (%p312) target = $region56
      $region55: #{deformable_transformer_decoder_forward.15} parent=47 // pred_region
        %p315 = scmp.lt.s32.totalorder %s16, 1
        %s316 = scalar_select %p315, %s16, 1
        %s317 = smul.addr %s316, 8
        %s318 = scalar_lea.vmem %s1, %s317
      $region56: #{deformable_transformer_decoder_forward.15} parent=47 // pred_fallthru
        _
    $region48: #{deformable_transformer_decoder_forward.15} parent=5 // pred_fallthru
      _
    %p319 = scmp.le.s32.totalorder 1, %s16
    %p320 = scmp.lt.s32.totalorder %s16, 3
    %p321 = pnand %p319, %p320
    %p322 = pneg %p321
    // Predicated region
    $region57: #{deformable_transformer_decoder_forward.15} parent=5 // pred_check
      _
    $region58: #{deformable_transformer_decoder_forward.15} parent=5 // pred_check_branch
      %324 = sbr.rel (%p321) target = $region60
    $region59: #{deformable_transformer_decoder_forward.15} parent=5 // pred_region
      %s325 = ssub.s32 %s16, 1
      %p326 = scmp.lt.s32.totalorder %s21, 1
      %s327 = scalar_select %p326, %s21, 1
      %s328 = smul.addr %s327, 8
      %s329 = scalar_lea.vmem %s0, %s328
      %p330 = pneg %p42
      %p331 = pneg %p39
      %p332 = scmp.lt.s32.totalorder %s21, 1
      %s333 = scalar_select %p332, %s21, 1
      %s334 = smul.addr %s333, 8
      %s335 = scalar_lea.vmem %s1, %s334
      %p336 = pneg %p68
      %p337 = pneg %p65
      %p338 = pneg %p89
      %p339 = pneg %p86
      %p340 = pneg %p110
      %p341 = pneg %p107
      %p342 = pneg %p131
      %p343 = pneg %p128
      %p344 = pneg %p152
      %p345 = pneg %p149
      %p346 = pneg %p173
      %p347 = pneg %p170
      %p348 = pneg %p194
      %p349 = pneg %p191
      %p350 = pneg %p215
      %p351 = pneg %p212
      %p352 = pneg %p236
      %p353 = pneg %p233
      %p354 = pneg %p262
      %p355 = pneg %p259
      %p356 = scmp.lt.s32.totalorder %s21, 1
      %s357 = scalar_select %p356, %s21, 1
      %s358 = smul.addr %s357, 8
      %s359 = scalar_lea.vmem %s10, %s358
      %p360 = scmp.lt.s32.totalorder %s21, 1
      %s361 = scalar_select %p360, %s21, 1
      %s362 = smul.addr %s361, 8
      %s363 = scalar_lea.vmem %s0, %s362
      %p364 = scmp.lt.s32.totalorder %s21, 1
      %s365 = scalar_select %p364, %s21, 1
      %s366 = smul.addr %s365, 8
      %s367 = scalar_lea.vmem %s1, %s366
      %p368 = scmp.lt.s32.totalorder %s21, 1
      %s369 = scalar_select %p368, %s21, 1
      %s370 = smul.addr %s369, 8
      %s371 = scalar_lea.vmem %s10, %s370
      %v373 = vld [vmem:[%s363] sm:$0xff]
      %v374 = vld [vmem:[%s367] sm:$0xff]
      %v375 = vadd.f32 %v373, %v374
      %v376 = vpack.c.bf16 %v375, %v375
      %v377 = vld [vmem:[%s2] sm:$0xff]
      %v378 = vld [vmem:[%s2 + $0x8] sm:$0xff]
      %v379 = vld [vmem:[%s2 + $0x10] sm:$0xff]
      %v380 = vld [vmem:[%s2 + $0x18] sm:$0xff]
      %v381 = vpack.c.bf16 %v378, %v377
      %v382 = vpack.c.bf16 %v380, %v379
      %v383 = vld [vmem:[%s3] sm:$0x1]
      %v385 = vlaneseq
      %v386 = vshrl.u32 %v385, 7
      %v387 = vsub.s32 0, %v386
      %v388 = vrot.slane %v383, %v387
      %vm390 = vcmask 261120
      %v392 = vsel %vm390, %v376, 0
      %394 = vmatprep.subr.bf16.mxu0 0
      %395 = vmatpush1.bf16.msra.mxu0 0
      %396 = vmatprep.subr.bf16.mxu0 0
      %397 = vmatpush1.bf16.msra.mxu0 0
      %398 = vmatprep.subr.bf16.mxu0 0
      %399 = vmatpush1.bf16.msra.mxu0 0
      %400 = vmatprep.subr.bf16.mxu0 0
      %401 = vmatpush1.bf16.msra.mxu0 0
      %402 = vmatprep.subr.bf16.mxu0 0
      %403 = vmatpush1.bf16.msra.mxu0 0
      %404 = vmatprep.subr.bf16.mxu0 0
      %405 = vmatpush1.bf16.msra.mxu0 0
      %406 = vmatprep.subr.bf16.mxu0 0
      %407 = vmatpush1.bf16.msra.mxu0 %v382
      %408 = vmatprep.subr.bf16.mxu0 0
      %409 = vmatpush1.bf16.msra.mxu0 %v381
      %410 = vmatprep.subr.bf16.mxu0 0
      %411 = vmatpush2.bf16.msra.mxu0 0
      %412 = vmatprep.subr.bf16.mxu0 0
      %413 = vmatpush2.bf16.msra.mxu0 0
      %414 = vmatprep.subr.bf16.mxu0 0
      %415 = vmatpush2.bf16.msra.mxu0 0
      %416 = vmatprep.subr.bf16.mxu0 0
      %417 = vmatpush2.bf16.msra.mxu0 0
      %418 = vmatprep.subr.bf16.mxu0 0
      %419 = vmatpush2.bf16.msra.mxu0 0
      %420 = vmatprep.subr.bf16.mxu0 0
      %421 = vmatpush2.bf16.msra.mxu0 0
      %422 = vmatprep.subr.bf16.mxu0 0
      %423 = vmatpush2.bf16.msra.mxu0 0
      %424 = vmatprep.subr.bf16.mxu0 0
      %425 = vmatpush2.bf16.msra.mxu0 0
      %426 = vmatprep.mubr.bf16.mxu0 0
      %427 = vmatmul.mubr.bf16.gmra.mxu0 %v392
      %v428 = vpop.f32.mrf.mxu0
      %v429 = vadd.f32 %v388, %v428
      %v430 = vpop.f32.mrf.mxu0
      %v431 = vpop.f32.mrf.mxu0
      %v432 = vpop.f32.mrf.mxu0
      %433 = vdwg.mxu0
      %v434 = vpack.c.bf16 %v373, %v373
      %v435 = vld [vmem:[%s4] sm:$0xff]
      %v436 = vld [vmem:[%s4 + $0x8] sm:$0xff]
      %v437 = vld [vmem:[%s4 + $0x10] sm:$0xff]
      %v438 = vld [vmem:[%s4 + $0x18] sm:$0xff]
      %v439 = vpack.c.bf16 %v436, %v435
      %v440 = vpack.c.bf16 %v438, %v437
      %v441 = vld [vmem:[%s5] sm:$0x1]
      %v443 = vlaneseq
      %v444 = vshrl.u32 %v443, 7
      %v445 = vsub.s32 0, %v444
      %v446 = vrot.slane %v441, %v445
      %v449 = vsel %vm390, %v434, 0
      %451 = vmatprep.subr.bf16.mxu0 0
      %452 = vmatpush1.bf16.msra.mxu0 0
      %453 = vmatprep.subr.bf16.mxu0 0
      %454 = vmatpush1.bf16.msra.mxu0 0
      %455 = vmatprep.subr.bf16.mxu0 0
      %456 = vmatpush1.bf16.msra.mxu0 0
      %457 = vmatprep.subr.bf16.mxu0 0
      %458 = vmatpush1.bf16.msra.mxu0 0
      %459 = vmatprep.subr.bf16.mxu0 0
      %460 = vmatpush1.bf16.msra.mxu0 0
      %461 = vmatprep.subr.bf16.mxu0 0
      %462 = vmatpush1.bf16.msra.mxu0 0
      %463 = vmatprep.subr.bf16.mxu0 0
      %464 = vmatpush1.bf16.msra.mxu0 %v440
      %465 = vmatprep.subr.bf16.mxu0 0
      %466 = vmatpush1.bf16.msra.mxu0 %v439
      %467 = vmatprep.subr.bf16.mxu0 0
      %468 = vmatpush2.bf16.msra.mxu0 0
      %469 = vmatprep.subr.bf16.mxu0 0
      %470 = vmatpush2.bf16.msra.mxu0 0
      %471 = vmatprep.subr.bf16.mxu0 0
      %472 = vmatpush2.bf16.msra.mxu0 0
      %473 = vmatprep.subr.bf16.mxu0 0
      %474 = vmatpush2.bf16.msra.mxu0 0
      %475 = vmatprep.subr.bf16.mxu0 0
      %476 = vmatpush2.bf16.msra.mxu0 0
      %477 = vmatprep.subr.bf16.mxu0 0
      %478 = vmatpush2.bf16.msra.mxu0 0
      %479 = vmatprep.subr.bf16.mxu0 0
      %480 = vmatpush2.bf16.msra.mxu0 0
      %481 = vmatprep.subr.bf16.mxu0 0
      %482 = vmatpush2.bf16.msra.mxu0 0
      %483 = vmatprep.mubr.bf16.mxu0 0
      %484 = vmatmul.mubr.bf16.gmra.mxu0 %v449
      %v485 = vpop.f32.mrf.mxu0
      %v486 = vadd.f32 %v446, %v485
      %v487 = vpop.f32.mrf.mxu0
      %v488 = vpop.f32.mrf.mxu0
      %v489 = vpop.f32.mrf.mxu0
      %490 = vdwg.mxu0
      %492 = vrot.lane.b32.xlu0 %v429, 96
      %v493 = vpop.permute.xlu0 %492
      %vm494 = vcmask 64512
      %v495 = vsel %vm494, %v429, 0
      %v497 = vsel %vm494, %v493, 0
      %499 = vmatprep.subr.mxu0 0.0
      %500 = vmatpush1.xpose.msra.mxu0 0.0
      %501 = vmatprep.subr.mxu0 0.0
      %502 = vmatpush1.xpose.msra.mxu0 0.0
      %503 = vmatprep.subr.mxu0 0.0
      %504 = vmatpush1.xpose.msra.mxu0 0.0
      %505 = vmatprep.subr.mxu0 0.0
      %506 = vmatpush1.xpose.msra.mxu0 0.0
      %507 = vmatprep.subr.mxu0 0.0
      %508 = vmatpush1.xpose.msra.mxu0 0.0
      %509 = vmatprep.subr.mxu0 0.0
      %510 = vmatpush1.xpose.msra.mxu0 0.0
      %511 = vmatprep.subr.mxu0 0.0
      %512 = vmatpush1.xpose.msra.mxu0 0.0
      %513 = vmatprep.subr.mxu0 0.0
      %514 = vmatpush1.xpose.msra.mxu0 0.0
      %515 = vmatprep.subr.mxu0 0.0
      %516 = vmatpush1.xpose.msra.mxu0 0.0
      %517 = vmatprep.subr.mxu0 0.0
      %518 = vmatpush1.xpose.msra.mxu0 0.0
      %519 = vmatprep.subr.mxu0 0.0
      %520 = vmatpush1.xpose.msra.mxu0 0.0
      %521 = vmatprep.subr.mxu0 0.0
      %522 = vmatpush1.xpose.msra.mxu0 0.0
      %523 = vmatprep.subr.mxu0 0.0
      %524 = vmatpush1.xpose.msra.mxu0 0.0
      %525 = vmatprep.subr.mxu0 0.0
      %526 = vmatpush1.xpose.msra.mxu0 0.0
      %527 = vmatprep.subr.mxu0 0.0
      %528 = vmatpush1.xpose.msra.mxu0 0.0
      %529 = vmatprep.subr.mxu0 0.0
      %530 = vmatpush1.xpose.msra.mxu0 %v497
      %531 = vmatprep.subr.mxu0 0.0
      %532 = vmatpush2.xpose.msra.mxu0 0.0
      %533 = vmatprep.subr.mxu0 0.0
      %534 = vmatpush2.xpose.msra.mxu0 0.0
      %535 = vmatprep.subr.mxu0 0.0
      %536 = vmatpush2.xpose.msra.mxu0 0.0
      %537 = vmatprep.subr.mxu0 0.0
      %538 = vmatpush2.xpose.msra.mxu0 0.0
      %539 = vmatprep.subr.mxu0 0.0
      %540 = vmatpush2.xpose.msra.mxu0 0.0
      %541 = vmatprep.subr.mxu0 0.0
      %542 = vmatpush2.xpose.msra.mxu0 0.0
      %543 = vmatprep.subr.mxu0 0.0
      %544 = vmatpush2.xpose.msra.mxu0 0.0
      %545 = vmatprep.subr.mxu0 0.0
      %546 = vmatpush2.xpose.msra.mxu0 0.0
      %547 = vmatprep.subr.mxu0 0.0
      %548 = vmatpush2.xpose.msra.mxu0 0.0
      %549 = vmatprep.subr.mxu0 0.0
      %550 = vmatpush2.xpose.msra.mxu0 0.0
      %551 = vmatprep.subr.mxu0 0.0
      %552 = vmatpush2.xpose.msra.mxu0 0.0
      %553 = vmatprep.subr.mxu0 0.0
      %554 = vmatpush2.xpose.msra.mxu0 0.0
      %555 = vmatprep.subr.mxu0 0.0
      %556 = vmatpush2.xpose.msra.mxu0 0.0
      %557 = vmatprep.subr.mxu0 0.0
      %558 = vmatpush2.xpose.msra.mxu0 0.0
      %559 = vmatprep.subr.mxu0 0.0
      %560 = vmatpush2.xpose.msra.mxu0 0.0
      %561 = vmatprep.subr.mxu0 0.0
      %562 = vmatpush2.xpose.msra.mxu0 0.0
      %563 = vmatprep.mubr.f32.mxu0 0.0
      %564 = vmatmul.mubr.f32.gmra.mxu0 %v495
      %v565 = vpop.f32.mrf.mxu0
      %v566 = vadd.f32 0.0, %v565
      %v567 = vpop.f32.mrf.mxu0
      %568 = vdwg.mxu0
      %v569 = vmul.f32 %v566, 0.35355338
      %v570 = vsel %vm494, %v569, -inf
      %571 = vmax.xlane.f32.xlu0 %v570
      %v572 = vpop.xlane.xlu0 %571
      %v573 = vsub.f32 %v569, %v572
      %v574 = vmul.f32 %v573, 1.442695
      %v575 = vpow.pop %v574
      %v576 = vsel %vm494, %v575, 0.0
      %577 = vadd.xlane.f32.xlu0 %v576
      %v578 = vpop.xlane.xlu0 %577
      %v579 = vrcp.pop %v578
      %v580 = vmul.f32 %v575, %v579
      %v582 = vsel %vm494, %v580, 0
      %584 = vmatprep.subr.mxu0 0.0
      %585 = vmatpush1.msra.mxu0 0.0
      %586 = vmatprep.subr.mxu0 0.0
      %587 = vmatpush1.msra.mxu0 0.0
      %588 = vmatprep.subr.mxu0 0.0
      %589 = vmatpush1.msra.mxu0 0.0
      %590 = vmatprep.subr.mxu0 0.0
      %591 = vmatpush1.msra.mxu0 0.0
      %592 = vmatprep.subr.mxu0 0.0
      %593 = vmatpush1.msra.mxu0 0.0
      %594 = vmatprep.subr.mxu0 0.0
      %595 = vmatpush1.msra.mxu0 0.0
      %596 = vmatprep.subr.mxu0 0.0
      %597 = vmatpush1.msra.mxu0 0.0
      %598 = vmatprep.subr.mxu0 0.0
      %599 = vmatpush1.msra.mxu0 0.0
      %600 = vmatprep.subr.mxu0 0.0
      %601 = vmatpush1.msra.mxu0 0.0
      %602 = vmatprep.subr.mxu0 0.0
      %603 = vmatpush1.msra.mxu0 0.0
      %604 = vmatprep.subr.mxu0 0.0
      %605 = vmatpush1.msra.mxu0 0.0
      %606 = vmatprep.subr.mxu0 0.0
      %607 = vmatpush1.msra.mxu0 0.0
      %608 = vmatprep.subr.mxu0 0.0
      %609 = vmatpush1.msra.mxu0 0.0
      %610 = vmatprep.subr.mxu0 0.0
      %611 = vmatpush1.msra.mxu0 0.0
      %612 = vmatprep.subr.mxu0 0.0
      %613 = vmatpush1.msra.mxu0 0.0
      %614 = vmatprep.subr.mxu0 0.0
      %615 = vmatpush1.msra.mxu0 %v486
      %616 = vmatprep.subr.mxu0 0.0
      %617 = vmatpush2.msra.mxu0 0.0
      %618 = vmatprep.subr.mxu0 0.0
      %619 = vmatpush2.msra.mxu0 0.0
      %620 = vmatprep.subr.mxu0 0.0
      %621 = vmatpush2.msra.mxu0 0.0
      %622 = vmatprep.subr.mxu0 0.0
      %623 = vmatpush2.msra.mxu0 0.0
      %624 = vmatprep.subr.mxu0 0.0
      %625 = vmatpush2.msra.mxu0 0.0
      %626 = vmatprep.subr.mxu0 0.0
      %627 = vmatpush2.msra.mxu0 0.0
      %628 = vmatprep.subr.mxu0 0.0
      %629 = vmatpush2.msra.mxu0 0.0
      %630 = vmatprep.subr.mxu0 0.0
      %631 = vmatpush2.msra.mxu0 0.0
      %632 = vmatprep.subr.mxu0 0.0
      %633 = vmatpush2.msra.mxu0 0.0
      %634 = vmatprep.subr.mxu0 0.0
      %635 = vmatpush2.msra.mxu0 0.0
      %636 = vmatprep.subr.mxu0 0.0
      %637 = vmatpush2.msra.mxu0 0.0
      %638 = vmatprep.subr.mxu0 0.0
      %639 = vmatpush2.msra.mxu0 0.0
      %640 = vmatprep.subr.mxu0 0.0
      %641 = vmatpush2.msra.mxu0 0.0
      %642 = vmatprep.subr.mxu0 0.0
      %643 = vmatpush2.msra.mxu0 0.0
      %644 = vmatprep.subr.mxu0 0.0
      %645 = vmatpush2.msra.mxu0 0.0
      %646 = vmatprep.subr.mxu0 0.0
      %647 = vmatpush2.msra.mxu0 0.0
      %648 = vmatprep.mubr.f32.mxu0 0.0
      %649 = vmatmul.mubr.f32.gmra.mxu0 %v582
      %v650 = vpop.f32.mrf.mxu0
      %v651 = vadd.f32 0.0, %v650
      %v652 = vpop.f32.mrf.mxu0
      %653 = vdwg.mxu0
      %v654 = vpack.c.bf16 %v651, %v651
      %v655 = vld [vmem:[%s6] sm:$0xff]
      %v656 = vpack.c.bf16 %v655, %v655
      %657 = vrot.lane.b32.xlu0 %v429, 120
      %v658 = vpop.permute.xlu0 %657
      %659 = vrot.lane.b32.xlu0 %v429, 88
      %v660 = vpop.permute.xlu0 %659
      %v661 = vsel %vm494, %v658, 0
      %v663 = vsel %vm494, %v660, 0
      %665 = vmatprep.subr.mxu0 0.0
      %666 = vmatpush1.xpose.msra.mxu0 0.0
      %667 = vmatprep.subr.mxu0 0.0
      %668 = vmatpush1.xpose.msra.mxu0 0.0
      %669 = vmatprep.subr.mxu0 0.0
      %670 = vmatpush1.xpose.msra.mxu0 0.0
      %671 = vmatprep.subr.mxu0 0.0
      %672 = vmatpush1.xpose.msra.mxu0 0.0
      %673 = vmatprep.subr.mxu0 0.0
      %674 = vmatpush1.xpose.msra.mxu0 0.0
      %675 = vmatprep.subr.mxu0 0.0
      %676 = vmatpush1.xpose.msra.mxu0 0.0
      %677 = vmatprep.subr.mxu0 0.0
      %678 = vmatpush1.xpose.msra.mxu0 0.0
      %679 = vmatprep.subr.mxu0 0.0
      %680 = vmatpush1.xpose.msra.mxu0 0.0
      %681 = vmatprep.subr.mxu0 0.0
      %682 = vmatpush1.xpose.msra.mxu0 0.0
      %683 = vmatprep.subr.mxu0 0.0
      %684 = vmatpush1.xpose.msra.mxu0 0.0
      %685 = vmatprep.subr.mxu0 0.0
      %686 = vmatpush1.xpose.msra.mxu0 0.0
      %687 = vmatprep.subr.mxu0 0.0
      %688 = vmatpush1.xpose.msra.mxu0 0.0
      %689 = vmatprep.subr.mxu0 0.0
      %690 = vmatpush1.xpose.msra.mxu0 0.0
      %691 = vmatprep.subr.mxu0 0.0
      %692 = vmatpush1.xpose.msra.mxu0 0.0
      %693 = vmatprep.subr.mxu0 0.0
      %694 = vmatpush1.xpose.msra.mxu0 0.0
      %695 = vmatprep.subr.mxu0 0.0
      %696 = vmatpush1.xpose.msra.mxu0 %v663
      %697 = vmatprep.subr.mxu0 0.0
      %698 = vmatpush2.xpose.msra.mxu0 0.0
      %699 = vmatprep.subr.mxu0 0.0
      %700 = vmatpush2.xpose.msra.mxu0 0.0
      %701 = vmatprep.subr.mxu0 0.0
      %702 = vmatpush2.xpose.msra.mxu0 0.0
      %703 = vmatprep.subr.mxu0 0.0
      %704 = vmatpush2.xpose.msra.mxu0 0.0
      %705 = vmatprep.subr.mxu0 0.0
      %706 = vmatpush2.xpose.msra.mxu0 0.0
      %707 = vmatprep.subr.mxu0 0.0
      %708 = vmatpush2.xpose.msra.mxu0 0.0
      %709 = vmatprep.subr.mxu0 0.0
      %710 = vmatpush2.xpose.msra.mxu0 0.0
      %711 = vmatprep.subr.mxu0 0.0
      %712 = vmatpush2.xpose.msra.mxu0 0.0
      %713 = vmatprep.subr.mxu0 0.0
      %714 = vmatpush2.xpose.msra.mxu0 0.0
      %715 = vmatprep.subr.mxu0 0.0
      %716 = vmatpush2.xpose.msra.mxu0 0.0
      %717 = vmatprep.subr.mxu0 0.0
      %718 = vmatpush2.xpose.msra.mxu0 0.0
      %719 = vmatprep.subr.mxu0 0.0
      %720 = vmatpush2.xpose.msra.mxu0 0.0
      %721 = vmatprep.subr.mxu0 0.0
      %722 = vmatpush2.xpose.msra.mxu0 0.0
      %723 = vmatprep.subr.mxu0 0.0
      %724 = vmatpush2.xpose.msra.mxu0 0.0
      %725 = vmatprep.subr.mxu0 0.0
      %726 = vmatpush2.xpose.msra.mxu0 0.0
      %727 = vmatprep.subr.mxu0 0.0
      %728 = vmatpush2.xpose.msra.mxu0 0.0
      %729 = vmatprep.mubr.f32.mxu0 0.0
      %730 = vmatmul.mubr.f32.gmra.mxu0 %v661
      %v731 = vpop.f32.mrf.mxu0
      %v732 = vadd.f32 0.0, %v731
      %v733 = vpop.f32.mrf.mxu0
      %734 = vdwg.mxu0
      %v735 = vmul.f32 %v732, 0.35355338
      %v736 = vsel %vm494, %v735, -inf
      %737 = vmax.xlane.f32.xlu0 %v736
      %v738 = vpop.xlane.xlu0 %737
      %v739 = vsub.f32 %v735, %v738
      %v740 = vmul.f32 %v739, 1.442695
      %v741 = vpow.pop %v740
      %v742 = vsel %vm494, %v741, 0.0
      %743 = vadd.xlane.f32.xlu0 %v742
      %v744 = vpop.xlane.xlu0 %743
      %v745 = vrcp.pop %v744
      %v746 = vmul.f32 %v741, %v745
      %748 = vrot.lane.b32.xlu0 %v486, 120
      %v749 = vpop.permute.xlu0 %748
      %v752 = vsel %vm494, %v746, 0
      %754 = vmatprep.subr.mxu0 0.0
      %755 = vmatpush1.msra.mxu0 0.0
      %756 = vmatprep.subr.mxu0 0.0
      %757 = vmatpush1.msra.mxu0 0.0
      %758 = vmatprep.subr.mxu0 0.0
      %759 = vmatpush1.msra.mxu0 0.0
      %760 = vmatprep.subr.mxu0 0.0
      %761 = vmatpush1.msra.mxu0 0.0
      %762 = vmatprep.subr.mxu0 0.0
      %763 = vmatpush1.msra.mxu0 0.0
      %764 = vmatprep.subr.mxu0 0.0
      %765 = vmatpush1.msra.mxu0 0.0
      %766 = vmatprep.subr.mxu0 0.0
      %767 = vmatpush1.msra.mxu0 0.0
      %768 = vmatprep.subr.mxu0 0.0
      %769 = vmatpush1.msra.mxu0 0.0
      %770 = vmatprep.subr.mxu0 0.0
      %771 = vmatpush1.msra.mxu0 0.0
      %772 = vmatprep.subr.mxu0 0.0
      %773 = vmatpush1.msra.mxu0 0.0
      %774 = vmatprep.subr.mxu0 0.0
      %775 = vmatpush1.msra.mxu0 0.0
      %776 = vmatprep.subr.mxu0 0.0
      %777 = vmatpush1.msra.mxu0 0.0
      %778 = vmatprep.subr.mxu0 0.0
      %779 = vmatpush1.msra.mxu0 0.0
      %780 = vmatprep.subr.mxu0 0.0
      %781 = vmatpush1.msra.mxu0 0.0
      %782 = vmatprep.subr.mxu0 0.0
      %783 = vmatpush1.msra.mxu0 0.0
      %784 = vmatprep.subr.mxu0 0.0
      %785 = vmatpush1.msra.mxu0 %v749
      %786 = vmatprep.subr.mxu0 0.0
      %787 = vmatpush2.msra.mxu0 0.0
      %788 = vmatprep.subr.mxu0 0.0
      %789 = vmatpush2.msra.mxu0 0.0
      %790 = vmatprep.subr.mxu0 0.0
      %791 = vmatpush2.msra.mxu0 0.0
      %792 = vmatprep.subr.mxu0 0.0
      %793 = vmatpush2.msra.mxu0 0.0
      %794 = vmatprep.subr.mxu0 0.0
      %795 = vmatpush2.msra.mxu0 0.0
      %796 = vmatprep.subr.mxu0 0.0
      %797 = vmatpush2.msra.mxu0 0.0
      %798 = vmatprep.subr.mxu0 0.0
      %799 = vmatpush2.msra.mxu0 0.0
      %800 = vmatprep.subr.mxu0 0.0
      %801 = vmatpush2.msra.mxu0 0.0
      %802 = vmatprep.subr.mxu0 0.0
      %803 = vmatpush2.msra.mxu0 0.0
      %804 = vmatprep.subr.mxu0 0.0
      %805 = vmatpush2.msra.mxu0 0.0
      %806 = vmatprep.subr.mxu0 0.0
      %807 = vmatpush2.msra.mxu0 0.0
      %808 = vmatprep.subr.mxu0 0.0
      %809 = vmatpush2.msra.mxu0 0.0
      %810 = vmatprep.subr.mxu0 0.0
      %811 = vmatpush2.msra.mxu0 0.0
      %812 = vmatprep.subr.mxu0 0.0
      %813 = vmatpush2.msra.mxu0 0.0
      %814 = vmatprep.subr.mxu0 0.0
      %815 = vmatpush2.msra.mxu0 0.0
      %816 = vmatprep.subr.mxu0 0.0
      %817 = vmatpush2.msra.mxu0 0.0
      %818 = vmatprep.mubr.f32.mxu0 0.0
      %819 = vmatmul.mubr.f32.gmra.mxu0 %v752
      %v820 = vpop.f32.mrf.mxu0
      %v821 = vadd.f32 0.0, %v820
      %v822 = vpop.f32.mrf.mxu0
      %823 = vdwg.mxu0
      %v824 = vpack.c.bf16 %v821, %v821
      %v825 = vld [vmem:[%s6 + $0x8] sm:$0xff]
      %v826 = vpack.c.bf16 %v825, %v825
      %v828 = vsel %vm494, %v824, 0
      %vm830 = vcmask 1043456
      %v832 = vsel %vm830, %v826, 0
      %834 = vmatprep.subr.bf16.mxu0 0
      %835 = vmatpush1.bf16.msra.mxu0 0
      %836 = vmatprep.subr.bf16.mxu0 0
      %837 = vmatpush1.bf16.msra.mxu0 0
      %838 = vmatprep.subr.bf16.mxu0 0
      %839 = vmatpush1.bf16.msra.mxu0 0
      %840 = vmatprep.subr.bf16.mxu0 0
      %841 = vmatpush1.bf16.msra.mxu0 0
      %842 = vmatprep.subr.bf16.mxu0 0
      %843 = vmatpush1.bf16.msra.mxu0 0
      %844 = vmatprep.subr.bf16.mxu0 0
      %845 = vmatpush1.bf16.msra.mxu0 0
      %846 = vmatprep.subr.bf16.mxu0 0
      %847 = vmatpush1.bf16.msra.mxu0 0
      %848 = vmatprep.subr.bf16.mxu0 0
      %849 = vmatpush1.bf16.msra.mxu0 %v832
      %850 = vmatprep.subr.bf16.mxu0 0
      %851 = vmatpush2.bf16.msra.mxu0 0
      %852 = vmatprep.subr.bf16.mxu0 0
      %853 = vmatpush2.bf16.msra.mxu0 0
      %854 = vmatprep.subr.bf16.mxu0 0
      %855 = vmatpush2.bf16.msra.mxu0 0
      %856 = vmatprep.subr.bf16.mxu0 0
      %857 = vmatpush2.bf16.msra.mxu0 0
      %858 = vmatprep.subr.bf16.mxu0 0
      %859 = vmatpush2.bf16.msra.mxu0 0
      %860 = vmatprep.subr.bf16.mxu0 0
      %861 = vmatpush2.bf16.msra.mxu0 0
      %862 = vmatprep.subr.bf16.mxu0 0
      %863 = vmatpush2.bf16.msra.mxu0 0
      %864 = vmatprep.subr.bf16.mxu0 0
      %865 = vmatpush2.bf16.msra.mxu0 0
      %866 = vmatprep.mubr.bf16.mxu0 0
      %867 = vmatmul.mubr.bf16.gmra.mxu0 %v828
      %v868 = vpop.f32.mrf.mxu0
      %v869 = vadd.f32 0.0, %v868
      %v870 = vpop.f32.mrf.mxu0
      %v871 = vpop.f32.mrf.mxu0
      %v872 = vpop.f32.mrf.mxu0
      %873 = vdwg.mxu0
      %v875 = vsel %vm494, %v654, 0
      %v878 = vsel %vm830, %v656, 0
      %880 = vmatprep.subr.bf16.mxu0 0
      %881 = vmatpush1.bf16.msra.mxu0 0
      %882 = vmatprep.subr.bf16.mxu0 0
      %883 = vmatpush1.bf16.msra.mxu0 0
      %884 = vmatprep.subr.bf16.mxu0 0
      %885 = vmatpush1.bf16.msra.mxu0 0
      %886 = vmatprep.subr.bf16.mxu0 0
      %887 = vmatpush1.bf16.msra.mxu0 0
      %888 = vmatprep.subr.bf16.mxu0 0
      %889 = vmatpush1.bf16.msra.mxu0 0
      %890 = vmatprep.subr.bf16.mxu0 0
      %891 = vmatpush1.bf16.msra.mxu0 0
      %892 = vmatprep.subr.bf16.mxu0 0
      %893 = vmatpush1.bf16.msra.mxu0 0
      %894 = vmatprep.subr.bf16.mxu0 0
      %895 = vmatpush1.bf16.msra.mxu0 %v878
      %896 = vmatprep.subr.bf16.mxu0 0
      %897 = vmatpush2.bf16.msra.mxu0 0
      %898 = vmatprep.subr.bf16.mxu0 0
      %899 = vmatpush2.bf16.msra.mxu0 0
      %900 = vmatprep.subr.bf16.mxu0 0
      %901 = vmatpush2.bf16.msra.mxu0 0
      %902 = vmatprep.subr.bf16.mxu0 0
      %903 = vmatpush2.bf16.msra.mxu0 0
      %904 = vmatprep.subr.bf16.mxu0 0
      %905 = vmatpush2.bf16.msra.mxu0 0
      %906 = vmatprep.subr.bf16.mxu0 0
      %907 = vmatpush2.bf16.msra.mxu0 0
      %908 = vmatprep.subr.bf16.mxu0 0
      %909 = vmatpush2.bf16.msra.mxu0 0
      %910 = vmatprep.subr.bf16.mxu0 0
      %911 = vmatpush2.bf16.msra.mxu0 0
      %912 = vmatprep.mubr.bf16.mxu0 0
      %913 = vmatmul.mubr.bf16.gmra.mxu0 %v875
      %v914 = vpop.f32.mrf.mxu0
      %v915 = vadd.f32 %v869, %v914
      %v916 = vpop.f32.mrf.mxu0
      %v917 = vpop.f32.mrf.mxu0
      %v918 = vpop.f32.mrf.mxu0
      %919 = vdwg.mxu0
      %920 = vrot.lane.b32.xlu0 %v429, 112
      %v921 = vpop.permute.xlu0 %920
      %922 = vrot.lane.b32.xlu0 %v429, 80
      %v923 = vpop.permute.xlu0 %922
      %v924 = vsel %vm494, %v921, 0
      %v926 = vsel %vm494, %v923, 0
      %928 = vmatprep.subr.mxu0 0.0
      %929 = vmatpush1.xpose.msra.mxu0 0.0
      %930 = vmatprep.subr.mxu0 0.0
      %931 = vmatpush1.xpose.msra.mxu0 0.0
      %932 = vmatprep.subr.mxu0 0.0
      %933 = vmatpush1.xpose.msra.mxu0 0.0
      %934 = vmatprep.subr.mxu0 0.0
      %935 = vmatpush1.xpose.msra.mxu0 0.0
      %936 = vmatprep.subr.mxu0 0.0
      %937 = vmatpush1.xpose.msra.mxu0 0.0
      %938 = vmatprep.subr.mxu0 0.0
      %939 = vmatpush1.xpose.msra.mxu0 0.0
      %940 = vmatprep.subr.mxu0 0.0
      %941 = vmatpush1.xpose.msra.mxu0 0.0
      %942 = vmatprep.subr.mxu0 0.0
      %943 = vmatpush1.xpose.msra.mxu0 0.0
      %944 = vmatprep.subr.mxu0 0.0
      %945 = vmatpush1.xpose.msra.mxu0 0.0
      %946 = vmatprep.subr.mxu0 0.0
      %947 = vmatpush1.xpose.msra.mxu0 0.0
      %948 = vmatprep.subr.mxu0 0.0
      %949 = vmatpush1.xpose.msra.mxu0 0.0
      %950 = vmatprep.subr.mxu0 0.0
      %951 = vmatpush1.xpose.msra.mxu0 0.0
      %952 = vmatprep.subr.mxu0 0.0
      %953 = vmatpush1.xpose.msra.mxu0 0.0
      %954 = vmatprep.subr.mxu0 0.0
      %955 = vmatpush1.xpose.msra.mxu0 0.0
      %956 = vmatprep.subr.mxu0 0.0
      %957 = vmatpush1.xpose.msra.mxu0 0.0
      %958 = vmatprep.subr.mxu0 0.0
      %959 = vmatpush1.xpose.msra.mxu0 %v926
      %960 = vmatprep.subr.mxu0 0.0
      %961 = vmatpush2.xpose.msra.mxu0 0.0
      %962 = vmatprep.subr.mxu0 0.0
      %963 = vmatpush2.xpose.msra.mxu0 0.0
      %964 = vmatprep.subr.mxu0 0.0
      %965 = vmatpush2.xpose.msra.mxu0 0.0
      %966 = vmatprep.subr.mxu0 0.0
      %967 = vmatpush2.xpose.msra.mxu0 0.0
      %968 = vmatprep.subr.mxu0 0.0
      %969 = vmatpush2.xpose.msra.mxu0 0.0
      %970 = vmatprep.subr.mxu0 0.0
      %971 = vmatpush2.xpose.msra.mxu0 0.0
      %972 = vmatprep.subr.mxu0 0.0
      %973 = vmatpush2.xpose.msra.mxu0 0.0
      %974 = vmatprep.subr.mxu0 0.0
      %975 = vmatpush2.xpose.msra.mxu0 0.0
      %976 = vmatprep.subr.mxu0 0.0
      %977 = vmatpush2.xpose.msra.mxu0 0.0
      %978 = vmatprep.subr.mxu0 0.0
      %979 = vmatpush2.xpose.msra.mxu0 0.0
      %980 = vmatprep.subr.mxu0 0.0
      %981 = vmatpush2.xpose.msra.mxu0 0.0
      %982 = vmatprep.subr.mxu0 0.0
      %983 = vmatpush2.xpose.msra.mxu0 0.0
      %984 = vmatprep.subr.mxu0 0.0
      %985 = vmatpush2.xpose.msra.mxu0 0.0
      %986 = vmatprep.subr.mxu0 0.0
      %987 = vmatpush2.xpose.msra.mxu0 0.0
      %988 = vmatprep.subr.mxu0 0.0
      %989 = vmatpush2.xpose.msra.mxu0 0.0
      %990 = vmatprep.subr.mxu0 0.0
      %991 = vmatpush2.xpose.msra.mxu0 0.0
      %992 = vmatprep.mubr.f32.mxu0 0.0
      %993 = vmatmul.mubr.f32.gmra.mxu0 %v924
      %v994 = vpop.f32.mrf.mxu0
      %v995 = vadd.f32 0.0, %v994
      %v996 = vpop.f32.mrf.mxu0
      %997 = vdwg.mxu0
      %v998 = vmul.f32 %v995, 0.35355338
      %v999 = vsel %vm494, %v998, -inf
      %1000 = vmax.xlane.f32.xlu0 %v999
      %v1001 = vpop.xlane.xlu0 %1000
      %v1002 = vsub.f32 %v998, %v1001
      %v1003 = vmul.f32 %v1002, 1.442695
      %v1004 = vpow.pop %v1003
      %v1005 = vsel %vm494, %v1004, 0.0
      %1006 = vadd.xlane.f32.xlu0 %v1005
      %v1007 = vpop.xlane.xlu0 %1006
      %v1008 = vrcp.pop %v1007
      %v1009 = vmul.f32 %v1004, %v1008
      %1010 = vrot.lane.b32.xlu0 %v486, 112
      %v1011 = vpop.permute.xlu0 %1010
      %v1014 = vsel %vm494, %v1009, 0
      %1016 = vmatprep.subr.mxu0 0.0
      %1017 = vmatpush1.msra.mxu0 0.0
      %1018 = vmatprep.subr.mxu0 0.0
      %1019 = vmatpush1.msra.mxu0 0.0
      %1020 = vmatprep.subr.mxu0 0.0
      %1021 = vmatpush1.msra.mxu0 0.0
      %1022 = vmatprep.subr.mxu0 0.0
      %1023 = vmatpush1.msra.mxu0 0.0
      %1024 = vmatprep.subr.mxu0 0.0
      %1025 = vmatpush1.msra.mxu0 0.0
      %1026 = vmatprep.subr.mxu0 0.0
      %1027 = vmatpush1.msra.mxu0 0.0
      %1028 = vmatprep.subr.mxu0 0.0
      %1029 = vmatpush1.msra.mxu0 0.0
      %1030 = vmatprep.subr.mxu0 0.0
      %1031 = vmatpush1.msra.mxu0 0.0
      %1032 = vmatprep.subr.mxu0 0.0
      %1033 = vmatpush1.msra.mxu0 0.0
      %1034 = vmatprep.subr.mxu0 0.0
      %1035 = vmatpush1.msra.mxu0 0.0
      %1036 = vmatprep.subr.mxu0 0.0
      %1037 = vmatpush1.msra.mxu0 0.0
      %1038 = vmatprep.subr.mxu0 0.0
      %1039 = vmatpush1.msra.mxu0 0.0
      %1040 = vmatprep.subr.mxu0 0.0
      %1041 = vmatpush1.msra.mxu0 0.0
      %1042 = vmatprep.subr.mxu0 0.0
      %1043 = vmatpush1.msra.mxu0 0.0
      %1044 = vmatprep.subr.mxu0 0.0
      %1045 = vmatpush1.msra.mxu0 0.0
      %1046 = vmatprep.subr.mxu0 0.0
      %1047 = vmatpush1.msra.mxu0 %v1011
      %1048 = vmatprep.subr.mxu0 0.0
      %1049 = vmatpush2.msra.mxu0 0.0
      %1050 = vmatprep.subr.mxu0 0.0
      %1051 = vmatpush2.msra.mxu0 0.0
      %1052 = vmatprep.subr.mxu0 0.0
      %1053 = vmatpush2.msra.mxu0 0.0
      %1054 = vmatprep.subr.mxu0 0.0
      %1055 = vmatpush2.msra.mxu0 0.0
      %1056 = vmatprep.subr.mxu0 0.0
      %1057 = vmatpush2.msra.mxu0 0.0
      %1058 = vmatprep.subr.mxu0 0.0
      %1059 = vmatpush2.msra.mxu0 0.0
      %1060 = vmatprep.subr.mxu0 0.0
      %1061 = vmatpush2.msra.mxu0 0.0
      %1062 = vmatprep.subr.mxu0 0.0
      %1063 = vmatpush2.msra.mxu0 0.0
      %1064 = vmatprep.subr.mxu0 0.0
      %1065 = vmatpush2.msra.mxu0 0.0
      %1066 = vmatprep.subr.mxu0 0.0
      %1067 = vmatpush2.msra.mxu0 0.0
      %1068 = vmatprep.subr.mxu0 0.0
      %1069 = vmatpush2.msra.mxu0 0.0
      %1070 = vmatprep.subr.mxu0 0.0
      %1071 = vmatpush2.msra.mxu0 0.0
      %1072 = vmatprep.subr.mxu0 0.0
      %1073 = vmatpush2.msra.mxu0 0.0
      %1074 = vmatprep.subr.mxu0 0.0
      %1075 = vmatpush2.msra.mxu0 0.0
      %1076 = vmatprep.subr.mxu0 0.0
      %1077 = vmatpush2.msra.mxu0 0.0
      %1078 = vmatprep.subr.mxu0 0.0
      %1079 = vmatpush2.msra.mxu0 0.0
      %1080 = vmatprep.mubr.f32.mxu0 0.0
      %1081 = vmatmul.mubr.f32.gmra.mxu0 %v1014
      %v1082 = vpop.f32.mrf.mxu0
      %v1083 = vadd.f32 0.0, %v1082
      %v1084 = vpop.f32.mrf.mxu0
      %1085 = vdwg.mxu0
      %v1086 = vpack.c.bf16 %v1083, %v1083
      %v1087 = vld [vmem:[%s6 + $0x10] sm:$0xff]
      %v1088 = vpack.c.bf16 %v1087, %v1087
      %v1090 = vsel %vm494, %v1086, 0
      %v1093 = vsel %vm830, %v1088, 0
      %1095 = vmatprep.subr.bf16.mxu0 0
      %1096 = vmatpush1.bf16.msra.mxu0 0
      %1097 = vmatprep.subr.bf16.mxu0 0
      %1098 = vmatpush1.bf16.msra.mxu0 0
      %1099 = vmatprep.subr.bf16.mxu0 0
      %1100 = vmatpush1.bf16.msra.mxu0 0
      %1101 = vmatprep.subr.bf16.mxu0 0
      %1102 = vmatpush1.bf16.msra.mxu0 0
      %1103 = vmatprep.subr.bf16.mxu0 0
      %1104 = vmatpush1.bf16.msra.mxu0 0
      %1105 = vmatprep.subr.bf16.mxu0 0
      %1106 = vmatpush1.bf16.msra.mxu0 0
      %1107 = vmatprep.subr.bf16.mxu0 0
      %1108 = vmatpush1.bf16.msra.mxu0 0
      %1109 = vmatprep.subr.bf16.mxu0 0
      %1110 = vmatpush1.bf16.msra.mxu0 %v1093
      %1111 = vmatprep.subr.bf16.mxu0 0
      %1112 = vmatpush2.bf16.msra.mxu0 0
      %1113 = vmatprep.subr.bf16.mxu0 0
      %1114 = vmatpush2.bf16.msra.mxu0 0
      %1115 = vmatprep.subr.bf16.mxu0 0
      %1116 = vmatpush2.bf16.msra.mxu0 0
      %1117 = vmatprep.subr.bf16.mxu0 0
      %1118 = vmatpush2.bf16.msra.mxu0 0
      %1119 = vmatprep.subr.bf16.mxu0 0
      %1120 = vmatpush2.bf16.msra.mxu0 0
      %1121 = vmatprep.subr.bf16.mxu0 0
      %1122 = vmatpush2.bf16.msra.mxu0 0
      %1123 = vmatprep.subr.bf16.mxu0 0
      %1124 = vmatpush2.bf16.msra.mxu0 0
      %1125 = vmatprep.subr.bf16.mxu0 0
      %1126 = vmatpush2.bf16.msra.mxu0 0
      %1127 = vmatprep.mubr.bf16.mxu0 0
      %1128 = vmatmul.mubr.bf16.gmra.mxu0 %v1090
      %v1129 = vpop.f32.mrf.mxu0
      %v1130 = vadd.f32 0.0, %v1129
      %v1131 = vpop.f32.mrf.mxu0
      %v1132 = vpop.f32.mrf.mxu0
      %v1133 = vpop.f32.mrf.mxu0
      %1134 = vdwg.mxu0
      %v1135 = vadd.f32 %v915, %v1130
      %1136 = vrot.lane.b32.xlu0 %v429, 104
      %v1137 = vpop.permute.xlu0 %1136
      %1138 = vrot.lane.b32.xlu0 %v429, 72
      %v1139 = vpop.permute.xlu0 %1138
      %v1140 = vsel %vm494, %v1137, 0
      %v1142 = vsel %vm494, %v1139, 0
      %1144 = vmatprep.subr.mxu0 0.0
      %1145 = vmatpush1.xpose.msra.mxu0 0.0
      %1146 = vmatprep.subr.mxu0 0.0
      %1147 = vmatpush1.xpose.msra.mxu0 0.0
      %1148 = vmatprep.subr.mxu0 0.0
      %1149 = vmatpush1.xpose.msra.mxu0 0.0
      %1150 = vmatprep.subr.mxu0 0.0
      %1151 = vmatpush1.xpose.msra.mxu0 0.0
      %1152 = vmatprep.subr.mxu0 0.0
      %1153 = vmatpush1.xpose.msra.mxu0 0.0
      %1154 = vmatprep.subr.mxu0 0.0
      %1155 = vmatpush1.xpose.msra.mxu0 0.0
      %1156 = vmatprep.subr.mxu0 0.0
      %1157 = vmatpush1.xpose.msra.mxu0 0.0
      %1158 = vmatprep.subr.mxu0 0.0
      %1159 = vmatpush1.xpose.msra.mxu0 0.0
      %1160 = vmatprep.subr.mxu0 0.0
      %1161 = vmatpush1.xpose.msra.mxu0 0.0
      %1162 = vmatprep.subr.mxu0 0.0
      %1163 = vmatpush1.xpose.msra.mxu0 0.0
      %1164 = vmatprep.subr.mxu0 0.0
      %1165 = vmatpush1.xpose.msra.mxu0 0.0
      %1166 = vmatprep.subr.mxu0 0.0
      %1167 = vmatpush1.xpose.msra.mxu0 0.0
      %1168 = vmatprep.subr.mxu0 0.0
      %1169 = vmatpush1.xpose.msra.mxu0 0.0
      %1170 = vmatprep.subr.mxu0 0.0
      %1171 = vmatpush1.xpose.msra.mxu0 0.0
      %1172 = vmatprep.subr.mxu0 0.0
      %1173 = vmatpush1.xpose.msra.mxu0 0.0
      %1174 = vmatprep.subr.mxu0 0.0
      %1175 = vmatpush1.xpose.msra.mxu0 %v1142
      %1176 = vmatprep.subr.mxu0 0.0
      %1177 = vmatpush2.xpose.msra.mxu0 0.0
      %1178 = vmatprep.subr.mxu0 0.0
      %1179 = vmatpush2.xpose.msra.mxu0 0.0
      %1180 = vmatprep.subr.mxu0 0.0
      %1181 = vmatpush2.xpose.msra.mxu0 0.0
      %1182 = vmatprep.subr.mxu0 0.0
      %1183 = vmatpush2.xpose.msra.mxu0 0.0
      %1184 = vmatprep.subr.mxu0 0.0
      %1185 = vmatpush2.xpose.msra.mxu0 0.0
      %1186 = vmatprep.subr.mxu0 0.0
      %1187 = vmatpush2.xpose.msra.mxu0 0.0
      %1188 = vmatprep.subr.mxu0 0.0
      %1189 = vmatpush2.xpose.msra.mxu0 0.0
      %1190 = vmatprep.subr.mxu0 0.0
      %1191 = vmatpush2.xpose.msra.mxu0 0.0
      %1192 = vmatprep.subr.mxu0 0.0
      %1193 = vmatpush2.xpose.msra.mxu0 0.0
      %1194 = vmatprep.subr.mxu0 0.0
      %1195 = vmatpush2.xpose.msra.mxu0 0.0
      %1196 = vmatprep.subr.mxu0 0.0
      %1197 = vmatpush2.xpose.msra.mxu0 0.0
      %1198 = vmatprep.subr.mxu0 0.0
      %1199 = vmatpush2.xpose.msra.mxu0 0.0
      %1200 = vmatprep.subr.mxu0 0.0
      %1201 = vmatpush2.xpose.msra.mxu0 0.0
      %1202 = vmatprep.subr.mxu0 0.0
      %1203 = vmatpush2.xpose.msra.mxu0 0.0
      %1204 = vmatprep.subr.mxu0 0.0
      %1205 = vmatpush2.xpose.msra.mxu0 0.0
      %1206 = vmatprep.subr.mxu0 0.0
      %1207 = vmatpush2.xpose.msra.mxu0 0.0
      %1208 = vmatprep.mubr.f32.mxu0 0.0
      %1209 = vmatmul.mubr.f32.gmra.mxu0 %v1140
      %v1210 = vpop.f32.mrf.mxu0
      %v1211 = vadd.f32 0.0, %v1210
      %v1212 = vpop.f32.mrf.mxu0
      %1213 = vdwg.mxu0
      %v1214 = vmul.f32 %v1211, 0.35355338
      %v1215 = vsel %vm494, %v1214, -inf
      %1216 = vmax.xlane.f32.xlu0 %v1215
      %v1217 = vpop.xlane.xlu0 %1216
      %v1218 = vsub.f32 %v1214, %v1217
      %v1219 = vmul.f32 %v1218, 1.442695
      %v1220 = vpow.pop %v1219
      %v1221 = vsel %vm494, %v1220, 0.0
      %1222 = vadd.xlane.f32.xlu0 %v1221
      %v1223 = vpop.xlane.xlu0 %1222
      %v1224 = vrcp.pop %v1223
      %v1225 = vmul.f32 %v1220, %v1224
      %1226 = vrot.lane.b32.xlu0 %v486, 104
      %v1227 = vpop.permute.xlu0 %1226
      %v1230 = vsel %vm494, %v1225, 0
      %1232 = vmatprep.subr.mxu0 0.0
      %1233 = vmatpush1.msra.mxu0 0.0
      %1234 = vmatprep.subr.mxu0 0.0
      %1235 = vmatpush1.msra.mxu0 0.0
      %1236 = vmatprep.subr.mxu0 0.0
      %1237 = vmatpush1.msra.mxu0 0.0
      %1238 = vmatprep.subr.mxu0 0.0
      %1239 = vmatpush1.msra.mxu0 0.0
      %1240 = vmatprep.subr.mxu0 0.0
      %1241 = vmatpush1.msra.mxu0 0.0
      %1242 = vmatprep.subr.mxu0 0.0
      %1243 = vmatpush1.msra.mxu0 0.0
      %1244 = vmatprep.subr.mxu0 0.0
      %1245 = vmatpush1.msra.mxu0 0.0
      %1246 = vmatprep.subr.mxu0 0.0
      %1247 = vmatpush1.msra.mxu0 0.0
      %1248 = vmatprep.subr.mxu0 0.0
      %1249 = vmatpush1.msra.mxu0 0.0
      %1250 = vmatprep.subr.mxu0 0.0
      %1251 = vmatpush1.msra.mxu0 0.0
      %1252 = vmatprep.subr.mxu0 0.0
      %1253 = vmatpush1.msra.mxu0 0.0
      %1254 = vmatprep.subr.mxu0 0.0
      %1255 = vmatpush1.msra.mxu0 0.0
      %1256 = vmatprep.subr.mxu0 0.0
      %1257 = vmatpush1.msra.mxu0 0.0
      %1258 = vmatprep.subr.mxu0 0.0
      %1259 = vmatpush1.msra.mxu0 0.0
      %1260 = vmatprep.subr.mxu0 0.0
      %1261 = vmatpush1.msra.mxu0 0.0
      %1262 = vmatprep.subr.mxu0 0.0
      %1263 = vmatpush1.msra.mxu0 %v1227
      %1264 = vmatprep.subr.mxu0 0.0
      %1265 = vmatpush2.msra.mxu0 0.0
      %1266 = vmatprep.subr.mxu0 0.0
      %1267 = vmatpush2.msra.mxu0 0.0
      %1268 = vmatprep.subr.mxu0 0.0
      %1269 = vmatpush2.msra.mxu0 0.0
      %1270 = vmatprep.subr.mxu0 0.0
      %1271 = vmatpush2.msra.mxu0 0.0
      %1272 = vmatprep.subr.mxu0 0.0
      %1273 = vmatpush2.msra.mxu0 0.0
      %1274 = vmatprep.subr.mxu0 0.0
      %1275 = vmatpush2.msra.mxu0 0.0
      %1276 = vmatprep.subr.mxu0 0.0
      %1277 = vmatpush2.msra.mxu0 0.0
      %1278 = vmatprep.subr.mxu0 0.0
      %1279 = vmatpush2.msra.mxu0 0.0
      %1280 = vmatprep.subr.mxu0 0.0
      %1281 = vmatpush2.msra.mxu0 0.0
      %1282 = vmatprep.subr.mxu0 0.0
      %1283 = vmatpush2.msra.mxu0 0.0
      %1284 = vmatprep.subr.mxu0 0.0
      %1285 = vmatpush2.msra.mxu0 0.0
      %1286 = vmatprep.subr.mxu0 0.0
      %1287 = vmatpush2.msra.mxu0 0.0
      %1288 = vmatprep.subr.mxu0 0.0
      %1289 = vmatpush2.msra.mxu0 0.0
      %1290 = vmatprep.subr.mxu0 0.0
      %1291 = vmatpush2.msra.mxu0 0.0
      %1292 = vmatprep.subr.mxu0 0.0
      %1293 = vmatpush2.msra.mxu0 0.0
      %1294 = vmatprep.subr.mxu0 0.0
      %1295 = vmatpush2.msra.mxu0 0.0
      %1296 = vmatprep.mubr.f32.mxu0 0.0
      %1297 = vmatmul.mubr.f32.gmra.mxu0 %v1230
      %v1298 = vpop.f32.mrf.mxu0
      %v1299 = vadd.f32 0.0, %v1298
      %v1300 = vpop.f32.mrf.mxu0
      %1301 = vdwg.mxu0
      %v1302 = vpack.c.bf16 %v1299, %v1299
      %v1303 = vld [vmem:[%s6 + $0x18] sm:$0xff]
      %v1304 = vpack.c.bf16 %v1303, %v1303
      %v1306 = vsel %vm494, %v1302, 0
      %v1309 = vsel %vm830, %v1304, 0
      %1311 = vmatprep.subr.bf16.mxu0 0
      %1312 = vmatpush1.bf16.msra.mxu0 0
      %1313 = vmatprep.subr.bf16.mxu0 0
      %1314 = vmatpush1.bf16.msra.mxu0 0
      %1315 = vmatprep.subr.bf16.mxu0 0
      %1316 = vmatpush1.bf16.msra.mxu0 0
      %1317 = vmatprep.subr.bf16.mxu0 0
      %1318 = vmatpush1.bf16.msra.mxu0 0
      %1319 = vmatprep.subr.bf16.mxu0 0
      %1320 = vmatpush1.bf16.msra.mxu0 0
      %1321 = vmatprep.subr.bf16.mxu0 0
      %1322 = vmatpush1.bf16.msra.mxu0 0
      %1323 = vmatprep.subr.bf16.mxu0 0
      %1324 = vmatpush1.bf16.msra.mxu0 0
      %1325 = vmatprep.subr.bf16.mxu0 0
      %1326 = vmatpush1.bf16.msra.mxu0 %v1309
      %1327 = vmatprep.subr.bf16.mxu0 0
      %1328 = vmatpush2.bf16.msra.mxu0 0
      %1329 = vmatprep.subr.bf16.mxu0 0
      %1330 = vmatpush2.bf16.msra.mxu0 0
      %1331 = vmatprep.subr.bf16.mxu0 0
      %1332 = vmatpush2.bf16.msra.mxu0 0
      %1333 = vmatprep.subr.bf16.mxu0 0
      %1334 = vmatpush2.bf16.msra.mxu0 0
      %1335 = vmatprep.subr.bf16.mxu0 0
      %1336 = vmatpush2.bf16.msra.mxu0 0
      %1337 = vmatprep.subr.bf16.mxu0 0
      %1338 = vmatpush2.bf16.msra.mxu0 0
      %1339 = vmatprep.subr.bf16.mxu0 0
      %1340 = vmatpush2.bf16.msra.mxu0 0
      %1341 = vmatprep.subr.bf16.mxu0 0
      %1342 = vmatpush2.bf16.msra.mxu0 0
      %1343 = vmatprep.mubr.bf16.mxu0 0
      %1344 = vmatmul.mubr.bf16.gmra.mxu0 %v1306
      %v1345 = vpop.f32.mrf.mxu0
      %v1346 = vadd.f32 0.0, %v1345
      %v1347 = vpop.f32.mrf.mxu0
      %v1348 = vpop.f32.mrf.mxu0
      %v1349 = vpop.f32.mrf.mxu0
      %1350 = vdwg.mxu0
      %v1351 = vadd.f32 %v1135, %v1346
      %v1352 = vadd.f32 %v373, %v1351
      %v1353 = vld [vmem:[%s7] sm:$0x1]
      %v1355 = vlaneseq
      %v1356 = vshrl.u32 %v1355, 7
      %v1357 = vsub.s32 0, %v1356
      %v1358 = vrot.slane %v1353, %v1357
      %v1360 = vadd.f32 %v1352, %v1358
      %v1361 = vsel %vm390, %v1360, 0.0
      %1362 = vadd.xlane.f32.xlu0 %v1361
      %v1363 = vpop.xlane.xlu0 %1362
      %v1364 = vrcp.pop 32.0
      %v1365 = vmul.f32 %v1363, %v1364
      %v1366 = vsub.f32 %v1360, %v1365
      %v1367 = vmul.f32 %v1366, %v1366
      %v1368 = vsel %vm390, %v1367, 0.0
      %1369 = vadd.xlane.f32.xlu0 %v1368
      %v1370 = vpop.xlane.xlu0 %1369
      %v1371 = vmul.f32 %v1370, %v1364
      %v1372 = vadd.f32 %v1371, 1e-05
      %v1373 = vrsqrt.pop %v1372
      %v1374 = vmul.f32 %v1366, %v1373
      %v1375 = vld [vmem:[%s8] sm:$0x1]
      %v1377 = vlaneseq
      %v1378 = vshrl.u32 %v1377, 7
      %v1379 = vsub.s32 0, %v1378
      %v1380 = vrot.slane %v1375, %v1379
      %v1382 = vmul.f32 %v1374, %v1380
      %v1383 = vld [vmem:[%s9] sm:$0x1]
      %v1385 = vlaneseq
      %v1386 = vshrl.u32 %v1385, 7
      %v1387 = vsub.s32 0, %v1386
      %v1388 = vrot.slane %v1383, %v1387
      %v1390 = vadd.f32 %v1382, %v1388
      %1391 = vst.msk [vmem:[%s371] sm:$0xff] %vm390, %v1390
      %p1392 = scmp.lt.s32.totalorder %s21, 1
      %s1393 = scalar_select %p1392, %s21, 1
      %s1394 = smul.addr %s1393, 8
      %s1395 = scalar_lea.vmem %s10, %s1394
      // Predicated region
      $region61: #{deformable_transformer_decoder_forward.15} parent=59 // pred_check
        %p1396 = pneg %p259
      $region62: #{deformable_transformer_decoder_forward.15} parent=59 // pred_check_branch
        %1398 = sbr.rel (%p1396) target = $region64
      $region63: #{deformable_transformer_decoder_forward.15} parent=59 // pred_region
        _
      $region64: #{deformable_transformer_decoder_forward.15} parent=59 // pred_fallthru
        _
    $region60: #{deformable_transformer_decoder_forward.15} parent=5 // pred_fallthru
      _
    %p1399 = scmp.le.s32.totalorder 2, %s16
    // Predicated region
    $region65: #{deformable_transformer_decoder_forward.15} parent=5 // pred_check
      %p1400 = pneg %p1399
    $region66: #{deformable_transformer_decoder_forward.15} parent=5 // pred_check_branch
      %1402 = sbr.rel (%p1400) target = $region68
    $region67: #{deformable_transformer_decoder_forward.15} parent=5 // pred_region
      %s1403 = ssub.s32 %s16, 2
      // Predicated region
      $region69: #{deformable_transformer_decoder_forward.15} parent=67 // pred_check
        %p1404 = pneg %p265
      $region70: #{deformable_transformer_decoder_forward.15} parent=67 // pred_check_branch
        %1406 = sbr.rel (%p1404) target = $region72
      $region71: #{deformable_transformer_decoder_forward.15} parent=67 // pred_region
        %p1407 = scmp.lt.s32.totalorder %s22, 1
        %s1408 = scalar_select %p1407, %s22, 1
        %s1409 = smul.addr %s1408, 8
        %s1410 = scalar_lea.vmem %s10, %s1409
      $region72: #{deformable_transformer_decoder_forward.15} parent=67 // pred_fallthru
        _
    $region68: #{deformable_transformer_decoder_forward.15} parent=5 // pred_fallthru
      _
  $region6: #{deformable_transformer_decoder_forward.15} parent=0 // loop_footer
    %s20 = sadd.s32 1, %s16
  $region7: #{deformable_transformer_decoder_forward.15} parent=0 // loop_footer_branch
    %15 = sbr.rel target = $region3
  $region8: #{deformable_transformer_decoder_forward.15} parent=0 // loop_exit
    _

// kernel: deformable_transformer_decoder_forward.19
$region0: #{deformable_transformer_decoder_forward.19}
  #allocation0 [shape = 'u32[]', space=smem, size = 0x4, offset = 0x4, fixed_abs, tag = 'smem constant byte address 0x4 - core index']
  #allocation1 [shape = 'u32[144,128]{1,0:T(1,128)}', space=vmem, size = 0x12000, scoped, tag = 'internal scratch']
  %s0 = inlined_call_operand.vmem [shape: f32[2,8,32], index: 0, kind: input, shape index: {}]
  %s1 = inlined_call_operand.vmem [shape: f32[32,64], index: 1, kind: input, shape index: {}]
  %s2 = inlined_call_operand.vmem [shape: f32[1,64], index: 2, kind: input, shape index: {}]
  %s3 = inlined_call_operand.vmem [shape: f32[64,32], index: 3, kind: input, shape index: {}]
  %s4 = inlined_call_operand.vmem [shape: f32[1,32], index: 4, kind: input, shape index: {}]
  %s5 = inlined_call_operand.vmem [shape: f32[1,32], index: 5, kind: input, shape index: {}]
  %s6 = inlined_call_operand.vmem [shape: f32[1,32], index: 6, kind: input, shape index: {}]
  %s7 = inlined_call_operand.hbm [shape: f32[2,8,32], index: 7, kind: output, shape index: {}]
  %s8 = sld [smem:[#allocation0]]
  $region61: #{deformable_transformer_decoder_forward.19} parent=0
    _
  %s10 = ssub.s32 1, %s8
  %s11 = scalar_select 0, %s10, %s8
  $region1: #{deformable_transformer_decoder_forward.19} parent=0
    #allocation2 [shape = 'u8[8192]{0}', space=vmem, size = 0x2000, scoped, tag = 'output window, operand 0']
    #allocation3 [shape = 's32[2]{0}', space=sflag, size = 0x8, scoped, tag = 'scoped memory for deformable_transformer_decoder_forward.19']
    %12 = vsyncpa [#allocation3], 0
    %s13 = scalar_lea.sflag [#allocation3], 1
    %14 = vsyncpa %s13, 0
    loop: start=0, step=1, limit=4
    $region2: #{deformable_transformer_decoder_forward.19} parent=1 // loop_pre_header
      _
    $region3: #{deformable_transformer_decoder_forward.19} parent=1 // loop_header
      %s16 = sphi 0, %s20
      %p17 = scmp.ge.s32.totalorder %s16, 4
      %s26 = sphi 0, %s28
      %s29 = sphi 0, %s26
      %s30 = sphi 0, %s29
      %s46 = sphi 0, %s30
      %s50 = sphi 0, %s50
      %s52 = sphi 0, %s50
      %s53 = sphi 0, %s52
      %s67 = sphi 0, %s53
      %s71 = sphi 0, %s71
      %s73 = sphi 0, %s71
      %s74 = sphi 0, %s73
      %s88 = sphi 0, %s74
      %s92 = sphi 0, %s92
      %s94 = sphi 0, %s92
      %s95 = sphi 0, %s94
      %s109 = sphi 0, %s95
      %s113 = sphi 0, %s113
      %s115 = sphi 0, %s113
      %s116 = sphi 0, %s115
      %s130 = sphi 0, %s116
      %s134 = sphi 0, %s134
      %s136 = sphi 0, %s134
      %s137 = sphi 0, %s136
      %s151 = sphi 0, %s137
      %s155 = sphi 0, %s155
      %s157 = sphi 0, %s155
      %s158 = sphi 0, %s157
      %s172 = sphi 0, %s158
      %s178 = sphi 0, %s180
      %s181 = sphi 0, %s178
      %s182 = sphi 0, %s181
      %s198 = sphi 0, %s182
    $region4: #{deformable_transformer_decoder_forward.19} parent=1 // loop_header_branch
      %19 = sbr.rel (%p17) target = $region8
    $region5: #{deformable_transformer_decoder_forward.19} parent=1 // loop_body
      %s21 = ssub.s32 %s16, 1
      %s22 = ssub.s32 %s16, 2
      %s23 = sadd.s32 %s16, 1
      %s24 = ssub.s32 %s16, %s23
      %p25 = scmp.eq.s32.totalorder %s24, 0
      %s27 = sadd.s32 %s26, 1
      %s28 = scalar_select %p25, %s26, %s27
      %p31 = pneg %p25
      %p32 = scmp.eq.s32.totalorder %s16, 1
      %p33 = por %p31, %p32
      %p34 = scmp.ne.s32.totalorder %s26, %s29
      %p35 = scmp.eq.s32.totalorder %s16, 0
      %p36 = por %p34, %p35
      %p37 = scmp.ne.s32.totalorder %s26, %s29
      %p38 = scmp.eq.s32.totalorder %s21, 1
      %p39 = por %p37, %p38
      %p40 = scmp.ne.s32.totalorder %s29, %s30
      %p41 = scmp.eq.s32.totalorder %s21, 0
      %p42 = por %p40, %p41
      %p43 = scmp.ne.s32.totalorder %s29, %s30
      %p44 = scmp.eq.s32.totalorder %s22, 1
      %p45 = por %p43, %p44
      %p47 = scmp.ne.s32.totalorder %s30, %s46
      %p48 = scmp.eq.s32.totalorder %s22, 0
      %p49 = por %p47, %p48
      %s51 = sadd.s32 %s50, 1
      %p54 = scmp.eq.s32.totalorder %s16, 1
      %p55 = scmp.ne.s32.totalorder %s50, %s52
      %p56 = scmp.eq.s32.totalorder %s16, 0
      %p57 = por %p55, %p56
      %p58 = scmp.ne.s32.totalorder %s50, %s52
      %p59 = scmp.eq.s32.totalorder %s21, 1
      %p60 = por %p58, %p59
      %p61 = scmp.ne.s32.totalorder %s52, %s53
      %p62 = scmp.eq.s32.totalorder %s21, 0
      %p63 = por %p61, %p62
      %p64 = scmp.ne.s32.totalorder %s52, %s53
      %p65 = scmp.eq.s32.totalorder %s22, 1
      %p66 = por %p64, %p65
      %p68 = scmp.ne.s32.totalorder %s53, %s67
      %p69 = scmp.eq.s32.totalorder %s22, 0
      %p70 = por %p68, %p69
      %s72 = sadd.s32 %s71, 1
      %p75 = scmp.eq.s32.totalorder %s16, 1
      %p76 = scmp.ne.s32.totalorder %s71, %s73
      %p77 = scmp.eq.s32.totalorder %s16, 0
      %p78 = por %p76, %p77
      %p79 = scmp.ne.s32.totalorder %s71, %s73
      %p80 = scmp.eq.s32.totalorder %s21, 1
      %p81 = por %p79, %p80
      %p82 = scmp.ne.s32.totalorder %s73, %s74
      %p83 = scmp.eq.s32.totalorder %s21, 0
      %p84 = por %p82, %p83
      %p85 = scmp.ne.s32.totalorder %s73, %s74
      %p86 = scmp.eq.s32.totalorder %s22, 1
      %p87 = por %p85, %p86
      %p89 = scmp.ne.s32.totalorder %s74, %s88
      %p90 = scmp.eq.s32.totalorder %s22, 0
      %p91 = por %p89, %p90
      %s93 = sadd.s32 %s92, 1
      %p96 = scmp.eq.s32.totalorder %s16, 1
      %p97 = scmp.ne.s32.totalorder %s92, %s94
      %p98 = scmp.eq.s32.totalorder %s16, 0
      %p99 = por %p97, %p98
      %p100 = scmp.ne.s32.totalorder %s92, %s94
      %p101 = scmp.eq.s32.totalorder %s21, 1
      %p102 = por %p100, %p101
      %p103 = scmp.ne.s32.totalorder %s94, %s95
      %p104 = scmp.eq.s32.totalorder %s21, 0
      %p105 = por %p103, %p104
      %p106 = scmp.ne.s32.totalorder %s94, %s95
      %p107 = scmp.eq.s32.totalorder %s22, 1
      %p108 = por %p106, %p107
      %p110 = scmp.ne.s32.totalorder %s95, %s109
      %p111 = scmp.eq.s32.totalorder %s22, 0
      %p112 = por %p110, %p111
      %s114 = sadd.s32 %s113, 1
      %p117 = scmp.eq.s32.totalorder %s16, 1
      %p118 = scmp.ne.s32.totalorder %s113, %s115
      %p119 = scmp.eq.s32.totalorder %s16, 0
      %p120 = por %p118, %p119
      %p121 = scmp.ne.s32.totalorder %s113, %s115
      %p122 = scmp.eq.s32.totalorder %s21, 1
      %p123 = por %p121, %p122
      %p124 = scmp.ne.s32.totalorder %s115, %s116
      %p125 = scmp.eq.s32.totalorder %s21, 0
      %p126 = por %p124, %p125
      %p127 = scmp.ne.s32.totalorder %s115, %s116
      %p128 = scmp.eq.s32.totalorder %s22, 1
      %p129 = por %p127, %p128
      %p131 = scmp.ne.s32.totalorder %s116, %s130
      %p132 = scmp.eq.s32.totalorder %s22, 0
      %p133 = por %p131, %p132
      %s135 = sadd.s32 %s134, 1
      %p138 = scmp.eq.s32.totalorder %s16, 1
      %p139 = scmp.ne.s32.totalorder %s134, %s136
      %p140 = scmp.eq.s32.totalorder %s16, 0
      %p141 = por %p139, %p140
      %p142 = scmp.ne.s32.totalorder %s134, %s136
      %p143 = scmp.eq.s32.totalorder %s21, 1
      %p144 = por %p142, %p143
      %p145 = scmp.ne.s32.totalorder %s136, %s137
      %p146 = scmp.eq.s32.totalorder %s21, 0
      %p147 = por %p145, %p146
      %p148 = scmp.ne.s32.totalorder %s136, %s137
      %p149 = scmp.eq.s32.totalorder %s22, 1
      %p150 = por %p148, %p149
      %p152 = scmp.ne.s32.totalorder %s137, %s151
      %p153 = scmp.eq.s32.totalorder %s22, 0
      %p154 = por %p152, %p153
      %s156 = sadd.s32 %s155, 1
      %p159 = scmp.eq.s32.totalorder %s16, 1
      %p160 = scmp.ne.s32.totalorder %s155, %s157
      %p161 = scmp.eq.s32.totalorder %s16, 0
      %p162 = por %p160, %p161
      %p163 = scmp.ne.s32.totalorder %s155, %s157
      %p164 = scmp.eq.s32.totalorder %s21, 1
      %p165 = por %p163, %p164
      %p166 = scmp.ne.s32.totalorder %s157, %s158
      %p167 = scmp.eq.s32.totalorder %s21, 0
      %p168 = por %p166, %p167
      %p169 = scmp.ne.s32.totalorder %s157, %s158
      %p170 = scmp.eq.s32.totalorder %s22, 1
      %p171 = por %p169, %p170
      %p173 = scmp.ne.s32.totalorder %s158, %s172
      %p174 = scmp.eq.s32.totalorder %s22, 0
      %p175 = por %p173, %p174
      %s176 = ssub.s32 %s16, %s23
      %p177 = scmp.eq.s32.totalorder %s176, 0
      %s179 = sadd.s32 %s178, 1
      %s180 = scalar_select %p177, %s178, %s179
      %p183 = pneg %p177
      %p184 = scmp.eq.s32.totalorder %s16, 1
      %p185 = por %p183, %p184
      %p186 = scmp.ne.s32.totalorder %s178, %s181
      %p187 = scmp.eq.s32.totalorder %s16, 0
      %p188 = por %p186, %p187
      %p189 = scmp.ne.s32.totalorder %s178, %s181
      %p190 = scmp.eq.s32.totalorder %s21, 1
      %p191 = por %p189, %p190
      %p192 = scmp.ne.s32.totalorder %s181, %s182
      %p193 = scmp.eq.s32.totalorder %s21, 0
      %p194 = por %p192, %p193
      %p195 = scmp.ne.s32.totalorder %s181, %s182
      %p196 = scmp.eq.s32.totalorder %s22, 1
      %p197 = por %p195, %p196
      %p199 = scmp.ne.s32.totalorder %s182, %s198
      %p200 = scmp.eq.s32.totalorder %s22, 0
      %p201 = por %p199, %p200
      %p202 = scmp.le.s32.totalorder 1, %s16
      %p203 = scmp.lt.s32.totalorder %s16, 3
      %p204 = pnand %p202, %p203
      %p205 = pneg %p204
      // Predicated region
      $region9: #{deformable_transformer_decoder_forward.19} parent=5 // pred_check
        _
      $region10: #{deformable_transformer_decoder_forward.19} parent=5 // pred_check_branch
        %207 = sbr.rel (%p204) target = $region12
      $region11: #{deformable_transformer_decoder_forward.19} parent=5 // pred_region
        %s208 = ssub.s32 %s16, 1
        // Predicated region
        $region13: #{deformable_transformer_decoder_forward.19} parent=11 // pred_check
          %p209 = pneg %p63
        $region14: #{deformable_transformer_decoder_forward.19} parent=11 // pred_check_branch
          %211 = sbr.rel (%p209) target = $region16
        $region15: #{deformable_transformer_decoder_forward.19} parent=11 // pred_region
          _
        $region16: #{deformable_transformer_decoder_forward.19} parent=11 // pred_fallthru
          _
        // Predicated region
        $region17: #{deformable_transformer_decoder_forward.19} parent=11 // pred_check
          %p212 = pneg %p84
        $region18: #{deformable_transformer_decoder_forward.19} parent=11 // pred_check_branch
          %214 = sbr.rel (%p212) target = $region20
        $region19: #{deformable_transformer_decoder_forward.19} parent=11 // pred_region
          _
        $region20: #{deformable_transformer_decoder_forward.19} parent=11 // pred_fallthru
          _
        // Predicated region
        $region21: #{deformable_transformer_decoder_forward.19} parent=11 // pred_check
          %p215 = pneg %p105
        $region22: #{deformable_transformer_decoder_forward.19} parent=11 // pred_check_branch
          %217 = sbr.rel (%p215) target = $region24
        $region23: #{deformable_transformer_decoder_forward.19} parent=11 // pred_region
          _
        $region24: #{deformable_transformer_decoder_forward.19} parent=11 // pred_fallthru
          _
        // Predicated region
        $region25: #{deformable_transformer_decoder_forward.19} parent=11 // pred_check
          %p218 = pneg %p126
        $region26: #{deformable_transformer_decoder_forward.19} parent=11 // pred_check_branch
          %220 = sbr.rel (%p218) target = $region28
        $region27: #{deformable_transformer_decoder_forward.19} parent=11 // pred_region
          _
        $region28: #{deformable_transformer_decoder_forward.19} parent=11 // pred_fallthru
          _
        // Predicated region
        $region29: #{deformable_transformer_decoder_forward.19} parent=11 // pred_check
          %p221 = pneg %p147
        $region30: #{deformable_transformer_decoder_forward.19} parent=11 // pred_check_branch
          %223 = sbr.rel (%p221) target = $region32
        $region31: #{deformable_transformer_decoder_forward.19} parent=11 // pred_region
          _
        $region32: #{deformable_transformer_decoder_forward.19} parent=11 // pred_fallthru
          _
        // Predicated region
        $region33: #{deformable_transformer_decoder_forward.19} parent=11 // pred_check
          %p224 = pneg %p168
        $region34: #{deformable_transformer_decoder_forward.19} parent=11 // pred_check_branch
          %226 = sbr.rel (%p224) target = $region36
        $region35: #{deformable_transformer_decoder_forward.19} parent=11 // pred_region
          _
        $region36: #{deformable_transformer_decoder_forward.19} parent=11 // pred_fallthru
          _
      $region12: #{deformable_transformer_decoder_forward.19} parent=5 // pred_fallthru
        _
      %p227 = scmp.lt.s32.totalorder %s16, 2
      // Predicated region
      $region37: #{deformable_transformer_decoder_forward.19} parent=5 // pred_check
        %p228 = pneg %p227
      $region38: #{deformable_transformer_decoder_forward.19} parent=5 // pred_check_branch
        %230 = sbr.rel (%p228) target = $region40
      $region39: #{deformable_transformer_decoder_forward.19} parent=5 // pred_region
        // Predicated region
        $region41: #{deformable_transformer_decoder_forward.19} parent=39 // pred_check
          %p231 = pneg %p36
        $region42: #{deformable_transformer_decoder_forward.19} parent=39 // pred_check_branch
          %233 = sbr.rel (%p231) target = $region44
        $region43: #{deformable_transformer_decoder_forward.19} parent=39 // pred_region
          %p234 = scmp.lt.s32.totalorder %s16, 1
          %s235 = scalar_select %p234, %s16, 1
          %s236 = smul.addr %s235, 8
          %s237 = scalar_lea.vmem %s0, %s236
        $region44: #{deformable_transformer_decoder_forward.19} parent=39 // pred_fallthru
          _
      $region40: #{deformable_transformer_decoder_forward.19} parent=5 // pred_fallthru
        _
      %p238 = scmp.le.s32.totalorder 1, %s16
      %p239 = scmp.lt.s32.totalorder %s16, 3
      %p240 = pnand %p238, %p239
      %p241 = pneg %p240
      // Predicated region
      $region45: #{deformable_transformer_decoder_forward.19} parent=5 // pred_check
        _
      $region46: #{deformable_transformer_decoder_forward.19} parent=5 // pred_check_branch
        %243 = sbr.rel (%p240) target = $region48
      $region47: #{deformable_transformer_decoder_forward.19} parent=5 // pred_region
        %s244 = ssub.s32 %s16, 1
        %p245 = scmp.lt.s32.totalorder %s21, 1
        %s246 = scalar_select %p245, %s21, 1
        %s247 = smul.addr %s246, 8
        %s248 = scalar_lea.vmem %s0, %s247
        %p249 = pneg %p42
        %p250 = pneg %p39
        %p251 = pneg %p63
        %p252 = pneg %p60
        %p253 = pneg %p84
        %p254 = pneg %p81
        %p255 = pneg %p105
        %p256 = pneg %p102
        %p257 = pneg %p126
        %p258 = pneg %p123
        %p259 = pneg %p147
        %p260 = pneg %p144
        %p261 = pneg %p168
        %p262 = pneg %p165
        %p263 = pneg %p194
        %p264 = pneg %p191
        %s265 = sand.u32 %s181, 1
        %s266 = scalar_lea.sflag [#allocation3], %s265
        %s267 = sand.u32 %s181, 1
        %s268 = smul.addr %s267, 8
        %s269 = scalar_lea.vmem [#allocation2], %s268
        %p270 = scmp.lt.s32.totalorder %s21, 1
        %s271 = scalar_select %p270, %s21, 1
        %s272 = smul.addr %s271, 8
        %s273 = scalar_lea.vmem %s0, %s272
        %v275 = vld [vmem:[%s273] sm:$0xff]
        %v276 = vpack.c.bf16 %v275, %v275
        %v277 = vld [vmem:[%s1] sm:$0xff]
        %v278 = vld [vmem:[%s1 + $0x8] sm:$0xff]
        %v279 = vld [vmem:[%s1 + $0x10] sm:$0xff]
        %v280 = vld [vmem:[%s1 + $0x18] sm:$0xff]
        %v281 = vpack.c.bf16 %v278, %v277
        %v282 = vpack.c.bf16 %v280, %v279
        %v283 = vld [vmem:[%s2] sm:$0x1]
        %v285 = vlaneseq
        %v286 = vshrl.u32 %v285, 7
        %v287 = vsub.s32 0, %v286
        %v288 = vrot.slane %v283, %v287
        %vm290 = vcmask 261120
        %v292 = vsel %vm290, %v276, 0
        %294 = vmatprep.subr.bf16.mxu0 0
        %295 = vmatpush1.bf16.msra.mxu0 0
        %296 = vmatprep.subr.bf16.mxu0 0
        %297 = vmatpush1.bf16.msra.mxu0 0
        %298 = vmatprep.subr.bf16.mxu0 0
        %299 = vmatpush1.bf16.msra.mxu0 0
        %300 = vmatprep.subr.bf16.mxu0 0
        %301 = vmatpush1.bf16.msra.mxu0 0
        %302 = vmatprep.subr.bf16.mxu0 0
        %303 = vmatpush1.bf16.msra.mxu0 0
        %304 = vmatprep.subr.bf16.mxu0 0
        %305 = vmatpush1.bf16.msra.mxu0 0
        %306 = vmatprep.subr.bf16.mxu0 0
        %307 = vmatpush1.bf16.msra.mxu0 %v282
        %308 = vmatprep.subr.bf16.mxu0 0
        %309 = vmatpush1.bf16.msra.mxu0 %v281
        %310 = vmatprep.subr.bf16.mxu0 0
        %311 = vmatpush2.bf16.msra.mxu0 0
        %312 = vmatprep.subr.bf16.mxu0 0
        %313 = vmatpush2.bf16.msra.mxu0 0
        %314 = vmatprep.subr.bf16.mxu0 0
        %315 = vmatpush2.bf16.msra.mxu0 0
        %316 = vmatprep.subr.bf16.mxu0 0
        %317 = vmatpush2.bf16.msra.mxu0 0
        %318 = vmatprep.subr.bf16.mxu0 0
        %319 = vmatpush2.bf16.msra.mxu0 0
        %320 = vmatprep.subr.bf16.mxu0 0
        %321 = vmatpush2.bf16.msra.mxu0 0
        %322 = vmatprep.subr.bf16.mxu0 0
        %323 = vmatpush2.bf16.msra.mxu0 0
        %324 = vmatprep.subr.bf16.mxu0 0
        %325 = vmatpush2.bf16.msra.mxu0 0
        %326 = vmatprep.mubr.bf16.mxu0 0
        %327 = vmatmul.mubr.bf16.gmra.mxu0 %v292
        %v328 = vpop.f32.mrf.mxu0
        %v329 = vadd.f32 %v288, %v328
        %v330 = vpop.f32.mrf.mxu0
        %v331 = vpop.f32.mrf.mxu0
        %v332 = vpop.f32.mrf.mxu0
        %333 = vdwg.mxu0
        %v334 = vmax.f32 %v329, 0.0
        %v335 = vpack.c.bf16 %v334, %v334
        %v336 = vld [vmem:[%s3] sm:$0xff]
        %v337 = vld [vmem:[%s3 + $0x8] sm:$0xff]
        %v338 = vld [vmem:[%s3 + $0x10] sm:$0xff]
        %v339 = vld [vmem:[%s3 + $0x18] sm:$0xff]
        %v340 = vld [vmem:[%s3 + $0x20] sm:$0xff]
        %v341 = vld [vmem:[%s3 + $0x28] sm:$0xff]
        %v342 = vld [vmem:[%s3 + $0x30] sm:$0xff]
        %v343 = vld [vmem:[%s3 + $0x38] sm:$0xff]
        %v344 = vpack.c.bf16 %v337, %v336
        %v345 = vpack.c.bf16 %v339, %v338
        %v346 = vpack.c.bf16 %v341, %v340
        %v347 = vpack.c.bf16 %v343, %v342
        %v348 = vld [vmem:[%s4] sm:$0x1]
        %v350 = vlaneseq
        %v351 = vshrl.u32 %v350, 7
        %v352 = vsub.s32 0, %v351
        %v353 = vrot.slane %v348, %v352
        %vm355 = vcmask 523264
        %v357 = vsel %vm355, %v335, 0
        %359 = vmatprep.subr.bf16.mxu0 0
        %360 = vmatpush1.bf16.msra.mxu0 0
        %361 = vmatprep.subr.bf16.mxu0 0
        %362 = vmatpush1.bf16.msra.mxu0 0
        %363 = vmatprep.subr.bf16.mxu0 0
        %364 = vmatpush1.bf16.msra.mxu0 0
        %365 = vmatprep.subr.bf16.mxu0 0
        %366 = vmatpush1.bf16.msra.mxu0 0
        %367 = vmatprep.subr.bf16.mxu0 0
        %368 = vmatpush1.bf16.msra.mxu0 %v347
        %369 = vmatprep.subr.bf16.mxu0 0
        %370 = vmatpush1.bf16.msra.mxu0 %v346
        %371 = vmatprep.subr.bf16.mxu0 0
        %372 = vmatpush1.bf16.msra.mxu0 %v345
        %373 = vmatprep.subr.bf16.mxu0 0
        %374 = vmatpush1.bf16.msra.mxu0 %v344
        %375 = vmatprep.subr.bf16.mxu0 0
        %376 = vmatpush2.bf16.msra.mxu0 0
        %377 = vmatprep.subr.bf16.mxu0 0
        %378 = vmatpush2.bf16.msra.mxu0 0
        %379 = vmatprep.subr.bf16.mxu0 0
        %380 = vmatpush2.bf16.msra.mxu0 0
        %381 = vmatprep.subr.bf16.mxu0 0
        %382 = vmatpush2.bf16.msra.mxu0 0
        %383 = vmatprep.subr.bf16.mxu0 0
        %384 = vmatpush2.bf16.msra.mxu0 0
        %385 = vmatprep.subr.bf16.mxu0 0
        %386 = vmatpush2.bf16.msra.mxu0 0
        %387 = vmatprep.subr.bf16.mxu0 0
        %388 = vmatpush2.bf16.msra.mxu0 0
        %389 = vmatprep.subr.bf16.mxu0 0
        %390 = vmatpush2.bf16.msra.mxu0 0
        %391 = vmatprep.mubr.bf16.mxu0 0
        %392 = vmatmul.mubr.bf16.gmra.mxu0 %v357
        %v393 = vpop.f32.mrf.mxu0
        %v394 = vadd.f32 %v353, %v393
        %v395 = vpop.f32.mrf.mxu0
        %v396 = vpop.f32.mrf.mxu0
        %v397 = vpop.f32.mrf.mxu0
        %398 = vdwg.mxu0
        %v399 = vadd.f32 %v275, %v394
        %v400 = vsel %vm290, %v399, 0.0
        %401 = vadd.xlane.f32.xlu0 %v400
        %v402 = vpop.xlane.xlu0 %401
        %v403 = vrcp.pop 32.0
        %v404 = vmul.f32 %v402, %v403
        %v405 = vsub.f32 %v399, %v404
        %v406 = vmul.f32 %v405, %v405
        %v407 = vsel %vm290, %v406, 0.0
        %408 = vadd.xlane.f32.xlu0 %v407
        %v409 = vpop.xlane.xlu0 %408
        %v410 = vmul.f32 %v409, %v403
        %v411 = vadd.f32 %v410, 1e-05
        %v412 = vrsqrt.pop %v411
        %v413 = vmul.f32 %v405, %v412
        %v414 = vld [vmem:[%s5] sm:$0x1]
        %v416 = vlaneseq
        %v417 = vshrl.u32 %v416, 7
        %v418 = vsub.s32 0, %v417
        %v419 = vrot.slane %v414, %v418
        %v421 = vmul.f32 %v413, %v419
        %v422 = vld [vmem:[%s6] sm:$0x1]
        %v424 = vlaneseq
        %v425 = vshrl.u32 %v424, 7
        %v426 = vsub.s32 0, %v425
        %v427 = vrot.slane %v422, %v426
        %v429 = vadd.f32 %v421, %v427
        %430 = vst.msk [vmem:[%s269] sm:$0xff] %vm290, %v429
        %s431 = sand.u32 %s181, 1
        %s432 = scalar_lea.sflag [#allocation3], %s431
        %s433 = sand.u32 %s181, 1
        %s434 = smul.addr %s433, 8
        %s435 = scalar_lea.vmem [#allocation2], %s434
        // Predicated region
        $region49: #{deformable_transformer_decoder_forward.19} parent=47 // pred_check
          %p436 = pneg %p191
        $region50: #{deformable_transformer_decoder_forward.19} parent=47 // pred_check_branch
          %438 = sbr.rel (%p436) target = $region52
        $region51: #{deformable_transformer_decoder_forward.19} parent=47 // pred_region
          %s440 = ssub.s32 128, 128
          %441 = vsyncadd %s432, %s440
          %s442 = smul.addr %s21, 128
          %s443 = scalar_lea.hbm %s7, %s442
          %s445 = sshll.u32 %s435, 4
          %s446 = int_to_ptr.vmem [resolvable:$true] %s445
          %448 = dma.vmem_to_hbm [thread:$0]  %s446, 128, %s443, %s432
        $region52: #{deformable_transformer_decoder_forward.19} parent=47 // pred_fallthru
          _
      $region48: #{deformable_transformer_decoder_forward.19} parent=5 // pred_fallthru
        _
      %p449 = scmp.le.s32.totalorder 2, %s16
      // Predicated region
      $region53: #{deformable_transformer_decoder_forward.19} parent=5 // pred_check
        %p450 = pneg %p449
      $region54: #{deformable_transformer_decoder_forward.19} parent=5 // pred_check_branch
        %452 = sbr.rel (%p450) target = $region56
      $region55: #{deformable_transformer_decoder_forward.19} parent=5 // pred_region
        %s453 = ssub.s32 %s16, 2
        // Predicated region
        $region57: #{deformable_transformer_decoder_forward.19} parent=55 // pred_check
          %p454 = pneg %p197
        $region58: #{deformable_transformer_decoder_forward.19} parent=55 // pred_check_branch
          %456 = sbr.rel (%p454) target = $region60
        $region59: #{deformable_transformer_decoder_forward.19} parent=55 // pred_region
          %s457 = sand.u32 %s182, 1
          %s458 = scalar_lea.sflag [#allocation3], %s457
          %s459 = sand.u32 %s182, 1
          %s460 = smul.addr %s459, 8
          %s461 = scalar_lea.vmem [#allocation2], %s460
          %462 = dma.done %s458, 128
        $region60: #{deformable_transformer_decoder_forward.19} parent=55 // pred_fallthru
          _
      $region56: #{deformable_transformer_decoder_forward.19} parent=5 // pred_fallthru
        _
    $region6: #{deformable_transformer_decoder_forward.19} parent=1 // loop_footer
      %s20 = sadd.s32 1, %s16
    $region7: #{deformable_transformer_decoder_forward.19} parent=1 // loop_footer_branch
      %15 = sbr.rel target = $region3
    $region8: #{deformable_transformer_decoder_forward.19} parent=1 // loop_exit
      _
    %463 = vsyncpa [#allocation3], 1
    %s464 = scalar_lea.sflag [#allocation3], 1
    %465 = vsyncpa %s464, 1

</llo_original>
